<compile_context>
chip_gen: v5e
topology: v5e:2x2
jax: 0.10.0
libtpu: 0.0.40
codegen_flags: <defaults>
</compile_context>

<pallas_src>
import functools

import jax
import jax.numpy as jnp
from jax.experimental import pallas as pl
from jax.experimental.pallas import tpu as pltpu


# ----------------------------------------------------------------------------
# Fused conv + bias + ReLU + 2x2 max-pool Pallas kernel
# ----------------------------------------------------------------------------

def _conv_relu_pool_kernel(x_ref, w_ref, b_ref, o_ref, *, KH, KW, Ho, Wo):
    """Per batch element:
         y[h, w, :] = relu(sum_{kh,kw} x[h+kh, kw:kw+Wo, :] @ W[kh,kw] + b)
         out[r, j, :] = max over the 2x2 window of y       (stride-2 pool)

    x_ref: [1, Hp, Wp, Cp]   (bf16, spatially + channel padded input)
    w_ref: [KH*KW, Cp, Cop]  (bf16)
    b_ref: [1, Cop]          (f32)
    o_ref: [1, Ho//2, Wo//2, Cop]
    """
    Cop = o_ref.shape[-1]
    Wo2 = Wo // 2
    b = b_ref[...]                                           # [1, Cop] f32

    # Selection matrices for the horizontal (width) half of the 2x2 pool:
    # (s_even @ y)[j] = y[2j],  (s_odd @ y)[j] = y[2j+1].  Built once per
    # grid step from 2-D iotas; the tiny matmuls ride the otherwise-idle MXU.
    col = jax.lax.broadcasted_iota(jnp.int32, (Wo2, Wo), 1)
    row2 = 2 * jax.lax.broadcasted_iota(jnp.int32, (Wo2, Wo), 0)
    s_even = (col == row2).astype(jnp.float32)               # [Wo2, Wo]
    s_odd = (col == row2 + 1).astype(jnp.float32)            # [Wo2, Wo]

    def conv_row(h):
        # One pre-pool output row: shift-accumulate KH*KW sub-matmuls taken
        # as static slices of the VMEM-resident input block (in-kernel im2col).
        acc = jnp.zeros((Wo, Cop), jnp.float32)
        for kh in range(KH):
            for kw in range(KW):
                xs = x_ref[0, h + kh, kw:kw + Wo, :]          # [Wo, Cp] bf16
                acc = acc + jnp.dot(xs, w_ref[kh * KW + kw],
                                    preferred_element_type=jnp.float32)
        return jnp.maximum(acc + b, 0.0)                      # bias + ReLU

    def body(r, carry):
        ym = jnp.maximum(conv_row(2 * r), conv_row(2 * r + 1))   # vertical max
        hp = jnp.maximum(                                        # horizontal max
            jnp.dot(s_even, ym, preferred_element_type=jnp.float32),
            jnp.dot(s_odd, ym, preferred_element_type=jnp.float32))
        o_ref[0, r] = hp.astype(o_ref.dtype)                     # [Wo2, Cop]
        return carry

    jax.lax.fori_loop(0, o_ref.shape[1], body, 0)


def conv_relu_pool(x, w, b, *, KH, KW):
    """x: [B, Hp, Wp, Cp] bf16; w: [KH*KW, Cp, Cop] bf16; b: [1, Cop] f32."""
    B, Hp, Wp, Cp = x.shape
    KK, Cp2, Cop = w.shape
    assert KK == KH * KW and Cp2 == Cp
    Ho, Wo = Hp - KH + 1, Wp - KW + 1
    assert Ho % 2 == 0 and Wo % 2 == 0

    kernel = functools.partial(_conv_relu_pool_kernel, KH=KH, KW=KW, Ho=Ho, Wo=Wo)
    return pl.pallas_call(
        kernel,
        out_shape=jax.ShapeDtypeStruct((B, Ho // 2, Wo // 2, Cop), jnp.bfloat16),
        grid=(B,),
        in_specs=[
            pl.BlockSpec((1, Hp, Wp, Cp), lambda i: (i, 0, 0, 0)),
            pl.BlockSpec((KK, Cp, Cop), lambda i: (0, 0, 0)),   # resident weights
            pl.BlockSpec((1, Cop), lambda i: (0, 0)),           # resident bias
        ],
        out_specs=pl.BlockSpec((1, Ho // 2, Wo // 2, Cop), lambda i: (i, 0, 0, 0)),
        compiler_params=pltpu.CompilerParams(
            dimension_semantics=("parallel",),
            vmem_limit_bytes=32 * 1024 * 1024),
    )(x, w, b)


# ----------------------------------------------------------------------------
# Fused fc5 + ReLU + fc6 Pallas kernel (M-tiled grid)
# ----------------------------------------------------------------------------

def _fc_fused_kernel(x_ref, w5_ref, b5_ref, w6_ref, b6_ref, o_ref):
    h = jnp.dot(x_ref[...], w5_ref[...], preferred_element_type=jnp.float32)
    h = jnp.maximum(h + b5_ref[...], 0.0)                     # fc5 + ReLU
    o = jnp.dot(h.astype(w6_ref.dtype), w6_ref[...],
                preferred_element_type=jnp.float32)           # fc6
    o_ref[...] = (o + b6_ref[...]).astype(o_ref.dtype)


def fc5_fc6_fused(x, w5, b5, w6, b6, *, tile_m=256):
    B, K = x.shape
    K2, H = w5.shape
    H2, N = w6.shape
    assert K == K2 and H == H2
    tm = B if B <= tile_m else tile_m
    return pl.pallas_call(
        _fc_fused_kernel,
        out_shape=jax.ShapeDtypeStruct((B, N), jnp.float32),
        grid=(pl.cdiv(B, tm),),
        in_specs=[
            pl.BlockSpec((tm, K), lambda i: (i, 0)),
            pl.BlockSpec((K, H), lambda i: (0, 0)),
            pl.BlockSpec((1, H), lambda i: (0, 0)),
            pl.BlockSpec((H, N), lambda i: (0, 0)),
            pl.BlockSpec((1, N), lambda i: (0, 0)),
        ],
        out_specs=pl.BlockSpec((tm, N), lambda i: (i, 0)),
        compiler_params=pltpu.CompilerParams(
            dimension_semantics=("parallel",),
            vmem_limit_bytes=32 * 1024 * 1024),
    )(x, w5, b5, w6, b6)


# ----------------------------------------------------------------------------
# Tensor-ring parameter construction (plain-JAX setup glue)
# ----------------------------------------------------------------------------

def _tr_ring_contract(key, dims, ranks, scale=0.3):
    """Build a ring of 3-way TR cores and contract into a dense tensor."""
    n = len(dims)
    assert len(ranks) == n
    keys = jax.random.split(key, n)
    cores = [
        scale * jax.random.normal(
            keys[i], (ranks[i], dims[i], ranks[(i + 1) % n]), jnp.float32)
        for i in range(n)
    ]
    mode = 'abcdefghijklmn'
    bond = 'ABCDEFGHIJKLMN'
    terms = [bond[i] + mode[i] + bond[(i + 1) % n] for i in range(n)]
    eq = ','.join(terms) + '->' + mode[:n]
    return jnp.einsum(eq, *cores)


def tr_linear_weight(key, input_shape, output_shape, ranks):
    """TensorRingLinear weight, contracted to dense [in_features, out_features]."""
    dims = list(input_shape) + list(output_shape)
    w = _tr_ring_contract(key, dims, list(ranks))
    in_dim, out_dim = 1, 1
    for d in input_shape:
        in_dim *= d
    for d in output_shape:
        out_dim *= d
    return w.reshape(in_dim, out_dim)


def tr_conv_weight(key, input_ranks, output_ranks, input_shape, output_shape,
                   kernel_size):
    """TensorRingConvolution weight, contracted to dense [KH, KW, Cin, Cout]."""
    dims = list(input_shape) + [kernel_size * kernel_size] + list(output_shape)
    ranks = list(input_ranks) + list(output_ranks)
    w = _tr_ring_contract(key, dims, ranks)
    ci, co = 1, 1
    for d in input_shape:
        ci *= d
    for d in output_shape:
        co *= d
    w = w.reshape(ci, kernel_size, kernel_size, co)     # [Cin, KH, KW, Cout]
    return jnp.transpose(w, (1, 2, 0, 3))               # [KH, KW, Cin, Cout]


# Padded (lane-friendly) channel widths carried through the net.
C1_IN_PAD = 8       # conv1 input channels   1 -> 8
C1_OUT_PAD = 32     # conv1 output channels 20 -> 32
C3_OUT_PAD = 64     # conv3 output channels 50 -> 64
NC_PAD = 128        # logits               10 -> 128 (sliced in the wrapper)
FC5_HID = 320


def init_params(key, num_classes=10):
    RANK = [5] * 20                                      # `rank = 5` in __init__
    ks = jax.random.split(key, 4)

    # Dense TR-contracted weights in PyTorch layouts.
    w1 = tr_conv_weight(ks[0], [RANK[0], RANK[1]], [RANK[2], RANK[3]],
                        [1], [4, 5], 5)                  # [5, 5, 1, 20]
    w3 = tr_conv_weight(ks[1], [RANK[4], RANK[5], RANK[6]],
                        [RANK[7], RANK[8]], [4, 5], [5, 10], 5)   # [5, 5, 20, 50]
    w5 = tr_linear_weight(ks[2], [5, 5, 5, 10], [5, 8, 8], RANK[9:16])   # [1250, 320]
    w6 = tr_linear_weight(ks[3], [5, 8, 8], [num_classes], RANK[16:20])  # [320, nc]

    def pad_conv(w, cin_pad, cout_pad):
        KH, KW, ci, co = w.shape
        w = jnp.pad(w, ((0, 0), (0, 0), (0, cin_pad - ci), (0, cout_pad - co)))
        return w.reshape(KH * KW, cin_pad, cout_pad).astype(jnp.bfloat16)

    # fc5: fold the PyTorch NCHW-flatten into the weight rows so the padded
    # NHWC-flattened activation ([B, 5*5*64]) feeds it directly.
    # PyTorch row index = c*25 + h*5 + w  ->  padded NHWC index = (h*5+w)*64 + c.
    w5p = w5.reshape(50, 5, 5, FC5_HID).transpose(1, 2, 0, 3)     # [h, w, c, out]
    w5p = jnp.pad(w5p, ((0, 0), (0, 0), (0, C3_OUT_PAD - 50), (0, 0)))
    w5p = w5p.reshape(5 * 5 * C3_OUT_PAD, FC5_HID).astype(jnp.bfloat16)

    w6p = jnp.pad(w6, ((0, 0), (0, NC_PAD - num_classes))).astype(jnp.bfloat16)

    return {
        'c1_w': pad_conv(w1, C1_IN_PAD, C1_OUT_PAD),     # [25,  8, 32] bf16
        'c1_b': jnp.zeros((1, C1_OUT_PAD), jnp.float32),
        'c3_w': pad_conv(w3, C1_OUT_PAD, C3_OUT_PAD),    # [25, 32, 64] bf16
        'c3_b': jnp.zeros((1, C3_OUT_PAD), jnp.float32),
        'fc5_w': w5p,                                    # [1600, 320] bf16
        'fc5_b': jnp.zeros((1, FC5_HID), jnp.float32),
        'fc6_w': w6p,                                    # [320, 128] bf16
        'fc6_b': jnp.zeros((1, NC_PAD), jnp.float32),
    }


# ----------------------------------------------------------------------------
# Forward pass (matches LeNet5_Mnist_Tensor.forward)
# ----------------------------------------------------------------------------

def lenet5_tr_forward(img_nchw, params, num_classes=10):
    B = img_nchw.shape[0]
    x = jnp.transpose(img_nchw, (0, 2, 3, 1)).astype(jnp.bfloat16)   # NCHW -> NHWC
    # conv1 spatial padding (2) + channel padding to the lane-friendly width.
    x = jnp.pad(x, ((0, 0), (2, 2), (2, 2), (0, C1_IN_PAD - x.shape[-1])))

    x = conv_relu_pool(x, params['c1_w'], params['c1_b'], KH=5, KW=5)  # [B,14,14,32]
    x = conv_relu_pool(x, params['c3_w'], params['c3_b'], KH=5, KW=5)  # [B, 5, 5,64]

    x = x.reshape(B, -1)                                 # padded NHWC flatten [B,1600]
    logits = fc5_fc6_fused(x, params['fc5_w'], params['fc5_b'],
                           params['fc6_w'], params['fc6_b'])           # [B, 128]
    return logits[:, :num_classes]                       # [B, num_classes] f32


if __name__ == "__main__":
    key = jax.random.PRNGKey(0)
    k_img, k_params = jax.random.split(key)

    # Forward implies MNIST-shaped input: 1 channel, 28x28 (flatten -> 1250).
    img = jax.random.normal(k_img, (2, 1, 28, 28), jnp.float32)
    params = init_params(k_params, num_classes=10)

    out = jax.jit(lenet5_tr_forward)(img, params)
    out = jax.block_until_ready(out)

    assert out.shape == (2, 10), out.shape
    assert out.dtype == jnp.float32
    assert bool(jnp.all(jnp.isfinite(out)))
    print("KERNEL_OK")
</pallas_src>

<mosaic_0001>
module attributes {stable_mosaic.version = 11 : i64} {
  func.func @_conv_relu_pool_kernel(%arg0: i32, %arg1: memref<1x32x32x8xbf16, #tpu.memory_space<vmem>>, %arg2: memref<25x8x32xbf16, #tpu.memory_space<vmem>>, %arg3: memref<1x32xf32, #tpu.memory_space<vmem>>, %arg4: memref<1x14x14x32xbf16, #tpu.memory_space<vmem>>) attributes {dimension_semantics = [#tpu.dimension_semantics<parallel>], iteration_bounds = array<i64: 2>, scalar_prefetch = 0 : i64, scratch_operands = 0 : i64, tpu.core_type = #tpu.core_type<tc>, window_params = [{transform_indices = @transform_0, window_bounds = array<i64: 1, 32, 32, 8>}, {pipeline_mode = #tpu.pipeline_mode<synchronous>, transform_indices = @transform_1, window_bounds = array<i64: 25, 8, 32>}, {pipeline_mode = #tpu.pipeline_mode<synchronous>, transform_indices = @transform_2, window_bounds = array<i64: 1, 32>}, {transform_indices = @transform_3, window_bounds = array<i64: 1, 14, 14, 32>}]} {
    %c0 = arith.constant 0 : index
    %c0_0 = arith.constant 0 : index
    %0 = vector.load %arg3[%c0, %c0_0] : memref<1x32xf32, #tpu.memory_space<vmem>>, vector<1x32xf32>
    %1 = tpu.iota {dimensions = array<i32: 1>} : vector<14x28xi32>
    %2 = tpu.iota {dimensions = array<i32: 0>} : vector<14x28xi32>
    %c2_i32 = arith.constant 2 : i32
    %3 = vector.broadcast %c2_i32 : i32 to vector<14x28xi32>
    %4 = arith.muli %3, %2 : vector<14x28xi32>
    %5 = arith.cmpi eq, %1, %4 : vector<14x28xi32>
    %6 = arith.extui %5 : vector<14x28xi1> to vector<14x28xi32>
    %7 = arith.sitofp %6 : vector<14x28xi32> to vector<14x28xf32>
    %c1_i32 = arith.constant 1 : i32
    %8 = vector.broadcast %c1_i32 : i32 to vector<14x28xi32>
    %9 = arith.addi %4, %8 : vector<14x28xi32>
    %10 = arith.cmpi eq, %1, %9 : vector<14x28xi32>
    %11 = arith.extui %10 : vector<14x28xi1> to vector<14x28xi32>
    %12 = arith.sitofp %11 : vector<14x28xi32> to vector<14x28xf32>
    %c0_i32 = arith.constant 0 : i32
    %c14_i32 = arith.constant 14 : i32
    %13 = arith.addi %c0_i32, %c14_i32 : i32
    %c1_i32_1 = arith.constant 1 : i32
    scf.for %arg5 = %c0_i32 to %13 step %c1_i32_1  : i32 {
      %c2_i32_3 = arith.constant 2 : i32
      %14 = arith.muli %c2_i32_3, %arg5 : i32
      %cst = arith.constant 0.000000e+00 : f32
      %15 = vector.broadcast %cst : f32 to vector<28x32xf32>
      %c0_i32_4 = arith.constant 0 : i32
      %16 = arith.addi %14, %c0_i32_4 : i32
      %c0_5 = arith.constant 0 : index
      %17 = arith.index_cast %16 : i32 to index
      %c0_6 = arith.constant 0 : index
      %c0_7 = arith.constant 0 : index
      %18 = vector.load %arg1[%c0_5, %17, %c0_6, %c0_7] : memref<1x32x32x8xbf16, #tpu.memory_space<vmem>>, vector<1x1x28x8xbf16>
      %19 = vector.shape_cast %18 : vector<1x1x28x8xbf16> to vector<28x8xbf16>
      %c0_8 = arith.constant 0 : index
      %c0_9 = arith.constant 0 : index
      %c0_10 = arith.constant 0 : index
      %20 = vector.load %arg2[%c0_8, %c0_9, %c0_10] : memref<25x8x32xbf16, #tpu.memory_space<vmem>>, vector<1x8x32xbf16>
      %21 = vector.shape_cast %20 : vector<1x8x32xbf16> to vector<8x32xbf16>
      %cst_11 = arith.constant dense<0.000000e+00> : vector<28x32xf32>
      %22 = tpu.matmul %19, %21, %cst_11 {dimension_numbers = #tpu.dot_dimension_numbers<[1], [0], [0], [1], [0, 0, 1, 1], [], []>} : vector<28x8xbf16>, vector<8x32xbf16>, vector<28x32xf32> -> vector<28x32xf32>
      %23 = arith.addf %15, %22 : vector<28x32xf32>
      %c0_i32_12 = arith.constant 0 : i32
      %24 = arith.addi %14, %c0_i32_12 : i32
      %c0_13 = arith.constant 0 : index
      %25 = arith.index_cast %24 : i32 to index
      %c1 = arith.constant 1 : index
      %c0_14 = arith.constant 0 : index
      %26 = vector.load %arg1[%c0_13, %25, %c1, %c0_14] : memref<1x32x32x8xbf16, #tpu.memory_space<vmem>>, vector<1x1x28x8xbf16>
      %27 = vector.shape_cast %26 : vector<1x1x28x8xbf16> to vector<28x8xbf16>
      %c1_15 = arith.constant 1 : index
      %c0_16 = arith.constant 0 : index
      %c0_17 = arith.constant 0 : index
      %28 = vector.load %arg2[%c1_15, %c0_16, %c0_17] : memref<25x8x32xbf16, #tpu.memory_space<vmem>>, vector<1x8x32xbf16>
      %29 = vector.shape_cast %28 : vector<1x8x32xbf16> to vector<8x32xbf16>
      %cst_18 = arith.constant dense<0.000000e+00> : vector<28x32xf32>
      %30 = tpu.matmul %27, %29, %cst_18 {dimension_numbers = #tpu.dot_dimension_numbers<[1], [0], [0], [1], [0, 0, 1, 1], [], []>} : vector<28x8xbf16>, vector<8x32xbf16>, vector<28x32xf32> -> vector<28x32xf32>
      %31 = arith.addf %23, %30 : vector<28x32xf32>
      %c0_i32_19 = arith.constant 0 : i32
      %32 = arith.addi %14, %c0_i32_19 : i32
      %c0_20 = arith.constant 0 : index
      %33 = arith.index_cast %32 : i32 to index
      %c2 = arith.constant 2 : index
      %c0_21 = arith.constant 0 : index
      %34 = vector.load %arg1[%c0_20, %33, %c2, %c0_21] : memref<1x32x32x8xbf16, #tpu.memory_space<vmem>>, vector<1x1x28x8xbf16>
      %35 = vector.shape_cast %34 : vector<1x1x28x8xbf16> to vector<28x8xbf16>
      %c2_22 = arith.constant 2 : index
      %c0_23 = arith.constant 0 : index
      %c0_24 = arith.constant 0 : index
      %36 = vector.load %arg2[%c2_22, %c0_23, %c0_24] : memref<25x8x32xbf16, #tpu.memory_space<vmem>>, vector<1x8x32xbf16>
      %37 = vector.shape_cast %36 : vector<1x8x32xbf16> to vector<8x32xbf16>
      %cst_25 = arith.constant dense<0.000000e+00> : vector<28x32xf32>
      %38 = tpu.matmul %35, %37, %cst_25 {dimension_numbers = #tpu.dot_dimension_numbers<[1], [0], [0], [1], [0, 0, 1, 1], [], []>} : vector<28x8xbf16>, vector<8x32xbf16>, vector<28x32xf32> -> vector<28x32xf32>
      %39 = arith.addf %31, %38 : vector<28x32xf32>
      %c0_i32_26 = arith.constant 0 : i32
      %40 = arith.addi %14, %c0_i32_26 : i32
      %c0_27 = arith.constant 0 : index
      %41 = arith.index_cast %40 : i32 to index
      %c3 = arith.constant 3 : index
      %c0_28 = arith.constant 0 : index
      %42 = vector.load %arg1[%c0_27, %41, %c3, %c0_28] : memref<1x32x32x8xbf16, #tpu.memory_space<vmem>>, vector<1x1x28x8xbf16>
      %43 = vector.shape_cast %42 : vector<1x1x28x8xbf16> to vector<28x8xbf16>
      %c3_29 = arith.constant 3 : index
      %c0_30 = arith.constant 0 : index
      %c0_31 = arith.constant 0 : index
      %44 = vector.load %arg2[%c3_29, %c0_30, %c0_31] : memref<25x8x32xbf16, #tpu.memory_space<vmem>>, vector<1x8x32xbf16>
      %45 = vector.shape_cast %44 : vector<1x8x32xbf16> to vector<8x32xbf16>
      %cst_32 = arith.constant dense<0.000000e+00> : vector<28x32xf32>
      %46 = tpu.matmul %43, %45, %cst_32 {dimension_numbers = #tpu.dot_dimension_numbers<[1], [0], [0], [1], [0, 0, 1, 1], [], []>} : vector<28x8xbf16>, vector<8x32xbf16>, vector<28x32xf32> -> vector<28x32xf32>
      %47 = arith.addf %39, %46 : vector<28x32xf32>
      %c0_i32_33 = arith.constant 0 : i32
      %48 = arith.addi %14, %c0_i32_33 : i32
      %c0_34 = arith.constant 0 : index
      %49 = arith.index_cast %48 : i32 to index
      %c4 = arith.constant 4 : index
      %c0_35 = arith.constant 0 : index
      %50 = vector.load %arg1[%c0_34, %49, %c4, %c0_35] : memref<1x32x32x8xbf16, #tpu.memory_space<vmem>>, vector<1x1x28x8xbf16>
      %51 = vector.shape_cast %50 : vector<1x1x28x8xbf16> to vector<28x8xbf16>
      %c4_36 = arith.constant 4 : index
      %c0_37 = arith.constant 0 : index
      %c0_38 = arith.constant 0 : index
      %52 = vector.load %arg2[%c4_36, %c0_37, %c0_38] : memref<25x8x32xbf16, #tpu.memory_space<vmem>>, vector<1x8x32xbf16>
      %53 = vector.shape_cast %52 : vector<1x8x32xbf16> to vector<8x32xbf16>
      %cst_39 = arith.constant dense<0.000000e+00> : vector<28x32xf32>
      %54 = tpu.matmul %51, %53, %cst_39 {dimension_numbers = #tpu.dot_dimension_numbers<[1], [0], [0], [1], [0, 0, 1, 1], [], []>} : vector<28x8xbf16>, vector<8x32xbf16>, vector<28x32xf32> -> vector<28x32xf32>
      %55 = arith.addf %47, %54 : vector<28x32xf32>
      %c1_i32_40 = arith.constant 1 : i32
      %56 = arith.addi %14, %c1_i32_40 : i32
      %c0_41 = arith.constant 0 : index
      %57 = arith.index_cast %56 : i32 to index
      %c0_42 = arith.constant 0 : index
      %c0_43 = arith.constant 0 : index
      %58 = vector.load %arg1[%c0_41, %57, %c0_42, %c0_43] : memref<1x32x32x8xbf16, #tpu.memory_space<vmem>>, vector<1x1x28x8xbf16>
      %59 = vector.shape_cast %58 : vector<1x1x28x8xbf16> to vector<28x8xbf16>
      %c5 = arith.constant 5 : index
      %c0_44 = arith.constant 0 : index
      %c0_45 = arith.constant 0 : index
      %60 = vector.load %arg2[%c5, %c0_44, %c0_45] : memref<25x8x32xbf16, #tpu.memory_space<vmem>>, vector<1x8x32xbf16>
      %61 = vector.shape_cast %60 : vector<1x8x32xbf16> to vector<8x32xbf16>
      %cst_46 = arith.constant dense<0.000000e+00> : vector<28x32xf32>
      %62 = tpu.matmul %59, %61, %cst_46 {dimension_numbers = #tpu.dot_dimension_numbers<[1], [0], [0], [1], [0, 0, 1, 1], [], []>} : vector<28x8xbf16>, vector<8x32xbf16>, vector<28x32xf32> -> vector<28x32xf32>
      %63 = arith.addf %55, %62 : vector<28x32xf32>
      %c1_i32_47 = arith.constant 1 : i32
      %64 = arith.addi %14, %c1_i32_47 : i32
      %c0_48 = arith.constant 0 : index
      %65 = arith.index_cast %64 : i32 to index
      %c1_49 = arith.constant 1 : index
      %c0_50 = arith.constant 0 : index
      %66 = vector.load %arg1[%c0_48, %65, %c1_49, %c0_50] : memref<1x32x32x8xbf16, #tpu.memory_space<vmem>>, vector<1x1x28x8xbf16>
      %67 = vector.shape_cast %66 : vector<1x1x28x8xbf16> to vector<28x8xbf16>
      %c6 = arith.constant 6 : index
      %c0_51 = arith.constant 0 : index
      %c0_52 = arith.constant 0 : index
      %68 = vector.load %arg2[%c6, %c0_51, %c0_52] : memref<25x8x32xbf16, #tpu.memory_space<vmem>>, vector<1x8x32xbf16>
      %69 = vector.shape_cast %68 : vector<1x8x32xbf16> to vector<8x32xbf16>
      %cst_53 = arith.constant dense<0.000000e+00> : vector<28x32xf32>
      %70 = tpu.matmul %67, %69, %cst_53 {dimension_numbers = #tpu.dot_dimension_numbers<[1], [0], [0], [1], [0, 0, 1, 1], [], []>} : vector<28x8xbf16>, vector<8x32xbf16>, vector<28x32xf32> -> vector<28x32xf32>
      %71 = arith.addf %63, %70 : vector<28x32xf32>
      %c1_i32_54 = arith.constant 1 : i32
      %72 = arith.addi %14, %c1_i32_54 : i32
      %c0_55 = arith.constant 0 : index
      %73 = arith.index_cast %72 : i32 to index
      %c2_56 = arith.constant 2 : index
      %c0_57 = arith.constant 0 : index
      %74 = vector.load %arg1[%c0_55, %73, %c2_56, %c0_57] : memref<1x32x32x8xbf16, #tpu.memory_space<vmem>>, vector<1x1x28x8xbf16>
      %75 = vector.shape_cast %74 : vector<1x1x28x8xbf16> to vector<28x8xbf16>
      %c7 = arith.constant 7 : index
      %c0_58 = arith.constant 0 : index
      %c0_59 = arith.constant 0 : index
      %76 = vector.load %arg2[%c7, %c0_58, %c0_59] : memref<25x8x32xbf16, #tpu.memory_space<vmem>>, vector<1x8x32xbf16>
      %77 = vector.shape_cast %76 : vector<1x8x32xbf16> to vector<8x32xbf16>
      %cst_60 = arith.constant dense<0.000000e+00> : vector<28x32xf32>
      %78 = tpu.matmul %75, %77, %cst_60 {dimension_numbers = #tpu.dot_dimension_numbers<[1], [0], [0], [1], [0, 0, 1, 1], [], []>} : vector<28x8xbf16>, vector<8x32xbf16>, vector<28x32xf32> -> vector<28x32xf32>
      %79 = arith.addf %71, %78 : vector<28x32xf32>
      %c1_i32_61 = arith.constant 1 : i32
      %80 = arith.addi %14, %c1_i32_61 : i32
      %c0_62 = arith.constant 0 : index
      %81 = arith.index_cast %80 : i32 to index
      %c3_63 = arith.constant 3 : index
      %c0_64 = arith.constant 0 : index
      %82 = vector.load %arg1[%c0_62, %81, %c3_63, %c0_64] : memref<1x32x32x8xbf16, #tpu.memory_space<vmem>>, vector<1x1x28x8xbf16>
      %83 = vector.shape_cast %82 : vector<1x1x28x8xbf16> to vector<28x8xbf16>
      %c8 = arith.constant 8 : index
      %c0_65 = arith.constant 0 : index
      %c0_66 = arith.constant 0 : index
      %84 = vector.load %arg2[%c8, %c0_65, %c0_66] : memref<25x8x32xbf16, #tpu.memory_space<vmem>>, vector<1x8x32xbf16>
      %85 = vector.shape_cast %84 : vector<1x8x32xbf16> to vector<8x32xbf16>
      %cst_67 = arith.constant dense<0.000000e+00> : vector<28x32xf32>
      %86 = tpu.matmul %83, %85, %cst_67 {dimension_numbers = #tpu.dot_dimension_numbers<[1], [0], [0], [1], [0, 0, 1, 1], [], []>} : vector<28x8xbf16>, vector<8x32xbf16>, vector<28x32xf32> -> vector<28x32xf32>
      %87 = arith.addf %79, %86 : vector<28x32xf32>
      %c1_i32_68 = arith.constant 1 : i32
      %88 = arith.addi %14, %c1_i32_68 : i32
      %c0_69 = arith.constant 0 : index
      %89 = arith.index_cast %88 : i32 to index
      %c4_70 = arith.constant 4 : index
      %c0_71 = arith.constant 0 : index
      %90 = vector.load %arg1[%c0_69, %89, %c4_70, %c0_71] : memref<1x32x32x8xbf16, #tpu.memory_space<vmem>>, vector<1x1x28x8xbf16>
      %91 = vector.shape_cast %90 : vector<1x1x28x8xbf16> to vector<28x8xbf16>
      %c9 = arith.constant 9 : index
      %c0_72 = arith.constant 0 : index
      %c0_73 = arith.constant 0 : index
      %92 = vector.load %arg2[%c9, %c0_72, %c0_73] : memref<25x8x32xbf16, #tpu.memory_space<vmem>>, vector<1x8x32xbf16>
      %93 = vector.shape_cast %92 : vector<1x8x32xbf16> to vector<8x32xbf16>
      %cst_74 = arith.constant dense<0.000000e+00> : vector<28x32xf32>
      %94 = tpu.matmul %91, %93, %cst_74 {dimension_numbers = #tpu.dot_dimension_numbers<[1], [0], [0], [1], [0, 0, 1, 1], [], []>} : vector<28x8xbf16>, vector<8x32xbf16>, vector<28x32xf32> -> vector<28x32xf32>
      %95 = arith.addf %87, %94 : vector<28x32xf32>
      %c2_i32_75 = arith.constant 2 : i32
      %96 = arith.addi %14, %c2_i32_75 : i32
      %c0_76 = arith.constant 0 : index
      %97 = arith.index_cast %96 : i32 to index
      %c0_77 = arith.constant 0 : index
      %c0_78 = arith.constant 0 : index
      %98 = vector.load %arg1[%c0_76, %97, %c0_77, %c0_78] : memref<1x32x32x8xbf16, #tpu.memory_space<vmem>>, vector<1x1x28x8xbf16>
      %99 = vector.shape_cast %98 : vector<1x1x28x8xbf16> to vector<28x8xbf16>
      %c10 = arith.constant 10 : index
      %c0_79 = arith.constant 0 : index
      %c0_80 = arith.constant 0 : index
      %100 = vector.load %arg2[%c10, %c0_79, %c0_80] : memref<25x8x32xbf16, #tpu.memory_space<vmem>>, vector<1x8x32xbf16>
      %101 = vector.shape_cast %100 : vector<1x8x32xbf16> to vector<8x32xbf16>
      %cst_81 = arith.constant dense<0.000000e+00> : vector<28x32xf32>
      %102 = tpu.matmul %99, %101, %cst_81 {dimension_numbers = #tpu.dot_dimension_numbers<[1], [0], [0], [1], [0, 0, 1, 1], [], []>} : vector<28x8xbf16>, vector<8x32xbf16>, vector<28x32xf32> -> vector<28x32xf32>
      %103 = arith.addf %95, %102 : vector<28x32xf32>
      %c2_i32_82 = arith.constant 2 : i32
      %104 = arith.addi %14, %c2_i32_82 : i32
      %c0_83 = arith.constant 0 : index
      %105 = arith.index_cast %104 : i32 to index
      %c1_84 = arith.constant 1 : index
      %c0_85 = arith.constant 0 : index
      %106 = vector.load %arg1[%c0_83, %105, %c1_84, %c0_85] : memref<1x32x32x8xbf16, #tpu.memory_space<vmem>>, vector<1x1x28x8xbf16>
      %107 = vector.shape_cast %106 : vector<1x1x28x8xbf16> to vector<28x8xbf16>
      %c11 = arith.constant 11 : index
      %c0_86 = arith.constant 0 : index
      %c0_87 = arith.constant 0 : index
      %108 = vector.load %arg2[%c11, %c0_86, %c0_87] : memref<25x8x32xbf16, #tpu.memory_space<vmem>>, vector<1x8x32xbf16>
      %109 = vector.shape_cast %108 : vector<1x8x32xbf16> to vector<8x32xbf16>
      %cst_88 = arith.constant dense<0.000000e+00> : vector<28x32xf32>
      %110 = tpu.matmul %107, %109, %cst_88 {dimension_numbers = #tpu.dot_dimension_numbers<[1], [0], [0], [1], [0, 0, 1, 1], [], []>} : vector<28x8xbf16>, vector<8x32xbf16>, vector<28x32xf32> -> vector<28x32xf32>
      %111 = arith.addf %103, %110 : vector<28x32xf32>
      %c2_i32_89 = arith.constant 2 : i32
      %112 = arith.addi %14, %c2_i32_89 : i32
      %c0_90 = arith.constant 0 : index
      %113 = arith.index_cast %112 : i32 to index
      %c2_91 = arith.constant 2 : index
      %c0_92 = arith.constant 0 : index
      %114 = vector.load %arg1[%c0_90, %113, %c2_91, %c0_92] : memref<1x32x32x8xbf16, #tpu.memory_space<vmem>>, vector<1x1x28x8xbf16>
      %115 = vector.shape_cast %114 : vector<1x1x28x8xbf16> to vector<28x8xbf16>
      %c12 = arith.constant 12 : index
      %c0_93 = arith.constant 0 : index
      %c0_94 = arith.constant 0 : index
      %116 = vector.load %arg2[%c12, %c0_93, %c0_94] : memref<25x8x32xbf16, #tpu.memory_space<vmem>>, vector<1x8x32xbf16>
      %117 = vector.shape_cast %116 : vector<1x8x32xbf16> to vector<8x32xbf16>
      %cst_95 = arith.constant dense<0.000000e+00> : vector<28x32xf32>
      %118 = tpu.matmul %115, %117, %cst_95 {dimension_numbers = #tpu.dot_dimension_numbers<[1], [0], [0], [1], [0, 0, 1, 1], [], []>} : vector<28x8xbf16>, vector<8x32xbf16>, vector<28x32xf32> -> vector<28x32xf32>
      %119 = arith.addf %111, %118 : vector<28x32xf32>
      %c2_i32_96 = arith.constant 2 : i32
      %120 = arith.addi %14, %c2_i32_96 : i32
      %c0_97 = arith.constant 0 : index
      %121 = arith.index_cast %120 : i32 to index
      %c3_98 = arith.constant 3 : index
      %c0_99 = arith.constant 0 : index
      %122 = vector.load %arg1[%c0_97, %121, %c3_98, %c0_99] : memref<1x32x32x8xbf16, #tpu.memory_space<vmem>>, vector<1x1x28x8xbf16>
      %123 = vector.shape_cast %122 : vector<1x1x28x8xbf16> to vector<28x8xbf16>
      %c13 = arith.constant 13 : index
      %c0_100 = arith.constant 0 : index
      %c0_101 = arith.constant 0 : index
      %124 = vector.load %arg2[%c13, %c0_100, %c0_101] : memref<25x8x32xbf16, #tpu.memory_space<vmem>>, vector<1x8x32xbf16>
      %125 = vector.shape_cast %124 : vector<1x8x32xbf16> to vector<8x32xbf16>
      %cst_102 = arith.constant dense<0.000000e+00> : vector<28x32xf32>
      %126 = tpu.matmul %123, %125, %cst_102 {dimension_numbers = #tpu.dot_dimension_numbers<[1], [0], [0], [1], [0, 0, 1, 1], [], []>} : vector<28x8xbf16>, vector<8x32xbf16>, vector<28x32xf32> -> vector<28x32xf32>
      %127 = arith.addf %119, %126 : vector<28x32xf32>
      %c2_i32_103 = arith.constant 2 : i32
      %128 = arith.addi %14, %c2_i32_103 : i32
      %c0_104 = arith.constant 0 : index
      %129 = arith.index_cast %128 : i32 to index
      %c4_105 = arith.constant 4 : index
      %c0_106 = arith.constant 0 : index
      %130 = vector.load %arg1[%c0_104, %129, %c4_105, %c0_106] : memref<1x32x32x8xbf16, #tpu.memory_space<vmem>>, vector<1x1x28x8xbf16>
      %131 = vector.shape_cast %130 : vector<1x1x28x8xbf16> to vector<28x8xbf16>
      %c14 = arith.constant 14 : index
      %c0_107 = arith.constant 0 : index
      %c0_108 = arith.constant 0 : index
      %132 = vector.load %arg2[%c14, %c0_107, %c0_108] : memref<25x8x32xbf16, #tpu.memory_space<vmem>>, vector<1x8x32xbf16>
      %133 = vector.shape_cast %132 : vector<1x8x32xbf16> to vector<8x32xbf16>
      %cst_109 = arith.constant dense<0.000000e+00> : vector<28x32xf32>
      %134 = tpu.matmul %131, %133, %cst_109 {dimension_numbers = #tpu.dot_dimension_numbers<[1], [0], [0], [1], [0, 0, 1, 1], [], []>} : vector<28x8xbf16>, vector<8x32xbf16>, vector<28x32xf32> -> vector<28x32xf32>
      %135 = arith.addf %127, %134 : vector<28x32xf32>
      %c3_i32 = arith.constant 3 : i32
      %136 = arith.addi %14, %c3_i32 : i32
      %c0_110 = arith.constant 0 : index
      %137 = arith.index_cast %136 : i32 to index
      %c0_111 = arith.constant 0 : index
      %c0_112 = arith.constant 0 : index
      %138 = vector.load %arg1[%c0_110, %137, %c0_111, %c0_112] : memref<1x32x32x8xbf16, #tpu.memory_space<vmem>>, vector<1x1x28x8xbf16>
      %139 = vector.shape_cast %138 : vector<1x1x28x8xbf16> to vector<28x8xbf16>
      %c15 = arith.constant 15 : index
      %c0_113 = arith.constant 0 : index
      %c0_114 = arith.constant 0 : index
      %140 = vector.load %arg2[%c15, %c0_113, %c0_114] : memref<25x8x32xbf16, #tpu.memory_space<vmem>>, vector<1x8x32xbf16>
      %141 = vector.shape_cast %140 : vector<1x8x32xbf16> to vector<8x32xbf16>
      %cst_115 = arith.constant dense<0.000000e+00> : vector<28x32xf32>
      %142 = tpu.matmul %139, %141, %cst_115 {dimension_numbers = #tpu.dot_dimension_numbers<[1], [0], [0], [1], [0, 0, 1, 1], [], []>} : vector<28x8xbf16>, vector<8x32xbf16>, vector<28x32xf32> -> vector<28x32xf32>
      %143 = arith.addf %135, %142 : vector<28x32xf32>
      %c3_i32_116 = arith.constant 3 : i32
      %144 = arith.addi %14, %c3_i32_116 : i32
      %c0_117 = arith.constant 0 : index
      %145 = arith.index_cast %144 : i32 to index
      %c1_118 = arith.constant 1 : index
      %c0_119 = arith.constant 0 : index
      %146 = vector.load %arg1[%c0_117, %145, %c1_118, %c0_119] : memref<1x32x32x8xbf16, #tpu.memory_space<vmem>>, vector<1x1x28x8xbf16>
      %147 = vector.shape_cast %146 : vector<1x1x28x8xbf16> to vector<28x8xbf16>
      %c16 = arith.constant 16 : index
      %c0_120 = arith.constant 0 : index
      %c0_121 = arith.constant 0 : index
      %148 = vector.load %arg2[%c16, %c0_120, %c0_121] : memref<25x8x32xbf16, #tpu.memory_space<vmem>>, vector<1x8x32xbf16>
      %149 = vector.shape_cast %148 : vector<1x8x32xbf16> to vector<8x32xbf16>
      %cst_122 = arith.constant dense<0.000000e+00> : vector<28x32xf32>
      %150 = tpu.matmul %147, %149, %cst_122 {dimension_numbers = #tpu.dot_dimension_numbers<[1], [0], [0], [1], [0, 0, 1, 1], [], []>} : vector<28x8xbf16>, vector<8x32xbf16>, vector<28x32xf32> -> vector<28x32xf32>
      %151 = arith.addf %143, %150 : vector<28x32xf32>
      %c3_i32_123 = arith.constant 3 : i32
      %152 = arith.addi %14, %c3_i32_123 : i32
      %c0_124 = arith.constant 0 : index
      %153 = arith.index_cast %152 : i32 to index
      %c2_125 = arith.constant 2 : index
      %c0_126 = arith.constant 0 : index
      %154 = vector.load %arg1[%c0_124, %153, %c2_125, %c0_126] : memref<1x32x32x8xbf16, #tpu.memory_space<vmem>>, vector<1x1x28x8xbf16>
      %155 = vector.shape_cast %154 : vector<1x1x28x8xbf16> to vector<28x8xbf16>
      %c17 = arith.constant 17 : index
      %c0_127 = arith.constant 0 : index
      %c0_128 = arith.constant 0 : index
      %156 = vector.load %arg2[%c17, %c0_127, %c0_128] : memref<25x8x32xbf16, #tpu.memory_space<vmem>>, vector<1x8x32xbf16>
      %157 = vector.shape_cast %156 : vector<1x8x32xbf16> to vector<8x32xbf16>
      %cst_129 = arith.constant dense<0.000000e+00> : vector<28x32xf32>
      %158 = tpu.matmul %155, %157, %cst_129 {dimension_numbers = #tpu.dot_dimension_numbers<[1], [0], [0], [1], [0, 0, 1, 1], [], []>} : vector<28x8xbf16>, vector<8x32xbf16>, vector<28x32xf32> -> vector<28x32xf32>
      %159 = arith.addf %151, %158 : vector<28x32xf32>
      %c3_i32_130 = arith.constant 3 : i32
      %160 = arith.addi %14, %c3_i32_130 : i32
      %c0_131 = arith.constant 0 : index
      %161 = arith.index_cast %160 : i32 to index
      %c3_132 = arith.constant 3 : index
      %c0_133 = arith.constant 0 : index
      %162 = vector.load %arg1[%c0_131, %161, %c3_132, %c0_133] : memref<1x32x32x8xbf16, #tpu.memory_space<vmem>>, vector<1x1x28x8xbf16>
      %163 = vector.shape_cast %162 : vector<1x1x28x8xbf16> to vector<28x8xbf16>
      %c18 = arith.constant 18 : index
      %c0_134 = arith.constant 0 : index
      %c0_135 = arith.constant 0 : index
      %164 = vector.load %arg2[%c18, %c0_134, %c0_135] : memref<25x8x32xbf16, #tpu.memory_space<vmem>>, vector<1x8x32xbf16>
      %165 = vector.shape_cast %164 : vector<1x8x32xbf16> to vector<8x32xbf16>
      %cst_136 = arith.constant dense<0.000000e+00> : vector<28x32xf32>
      %166 = tpu.matmul %163, %165, %cst_136 {dimension_numbers = #tpu.dot_dimension_numbers<[1], [0], [0], [1], [0, 0, 1, 1], [], []>} : vector<28x8xbf16>, vector<8x32xbf16>, vector<28x32xf32> -> vector<28x32xf32>
      %167 = arith.addf %159, %166 : vector<28x32xf32>
      %c3_i32_137 = arith.constant 3 : i32
      %168 = arith.addi %14, %c3_i32_137 : i32
      %c0_138 = arith.constant 0 : index
      %169 = arith.index_cast %168 : i32 to index
      %c4_139 = arith.constant 4 : index
      %c0_140 = arith.constant 0 : index
      %170 = vector.load %arg1[%c0_138, %169, %c4_139, %c0_140] : memref<1x32x32x8xbf16, #tpu.memory_space<vmem>>, vector<1x1x28x8xbf16>
      %171 = vector.shape_cast %170 : vector<1x1x28x8xbf16> to vector<28x8xbf16>
      %c19 = arith.constant 19 : index
      %c0_141 = arith.constant 0 : index
      %c0_142 = arith.constant 0 : index
      %172 = vector.load %arg2[%c19, %c0_141, %c0_142] : memref<25x8x32xbf16, #tpu.memory_space<vmem>>, vector<1x8x32xbf16>
      %173 = vector.shape_cast %172 : vector<1x8x32xbf16> to vector<8x32xbf16>
      %cst_143 = arith.constant dense<0.000000e+00> : vector<28x32xf32>
      %174 = tpu.matmul %171, %173, %cst_143 {dimension_numbers = #tpu.dot_dimension_numbers<[1], [0], [0], [1], [0, 0, 1, 1], [], []>} : vector<28x8xbf16>, vector<8x32xbf16>, vector<28x32xf32> -> vector<28x32xf32>
      %175 = arith.addf %167, %174 : vector<28x32xf32>
      %c4_i32 = arith.constant 4 : i32
      %176 = arith.addi %14, %c4_i32 : i32
      %c0_144 = arith.constant 0 : index
      %177 = arith.index_cast %176 : i32 to index
      %c0_145 = arith.constant 0 : index
      %c0_146 = arith.constant 0 : index
      %178 = vector.load %arg1[%c0_144, %177, %c0_145, %c0_146] : memref<1x32x32x8xbf16, #tpu.memory_space<vmem>>, vector<1x1x28x8xbf16>
      %179 = vector.shape_cast %178 : vector<1x1x28x8xbf16> to vector<28x8xbf16>
      %c20 = arith.constant 20 : index
      %c0_147 = arith.constant 0 : index
      %c0_148 = arith.constant 0 : index
      %180 = vector.load %arg2[%c20, %c0_147, %c0_148] : memref<25x8x32xbf16, #tpu.memory_space<vmem>>, vector<1x8x32xbf16>
      %181 = vector.shape_cast %180 : vector<1x8x32xbf16> to vector<8x32xbf16>
      %cst_149 = arith.constant dense<0.000000e+00> : vector<28x32xf32>
      %182 = tpu.matmul %179, %181, %cst_149 {dimension_numbers = #tpu.dot_dimension_numbers<[1], [0], [0], [1], [0, 0, 1, 1], [], []>} : vector<28x8xbf16>, vector<8x32xbf16>, vector<28x32xf32> -> vector<28x32xf32>
      %183 = arith.addf %175, %182 : vector<28x32xf32>
      %c4_i32_150 = arith.constant 4 : i32
      %184 = arith.addi %14, %c4_i32_150 : i32
      %c0_151 = arith.constant 0 : index
      %185 = arith.index_cast %184 : i32 to index
      %c1_152 = arith.constant 1 : index
      %c0_153 = arith.constant 0 : index
      %186 = vector.load %arg1[%c0_151, %185, %c1_152, %c0_153] : memref<1x32x32x8xbf16, #tpu.memory_space<vmem>>, vector<1x1x28x8xbf16>
      %187 = vector.shape_cast %186 : vector<1x1x28x8xbf16> to vector<28x8xbf16>
      %c21 = arith.constant 21 : index
      %c0_154 = arith.constant 0 : index
      %c0_155 = arith.constant 0 : index
      %188 = vector.load %arg2[%c21, %c0_154, %c0_155] : memref<25x8x32xbf16, #tpu.memory_space<vmem>>, vector<1x8x32xbf16>
      %189 = vector.shape_cast %188 : vector<1x8x32xbf16> to vector<8x32xbf16>
      %cst_156 = arith.constant dense<0.000000e+00> : vector<28x32xf32>
      %190 = tpu.matmul %187, %189, %cst_156 {dimension_numbers = #tpu.dot_dimension_numbers<[1], [0], [0], [1], [0, 0, 1, 1], [], []>} : vector<28x8xbf16>, vector<8x32xbf16>, vector<28x32xf32> -> vector<28x32xf32>
      %191 = arith.addf %183, %190 : vector<28x32xf32>
      %c4_i32_157 = arith.constant 4 : i32
      %192 = arith.addi %14, %c4_i32_157 : i32
      %c0_158 = arith.constant 0 : index
      %193 = arith.index_cast %192 : i32 to index
      %c2_159 = arith.constant 2 : index
      %c0_160 = arith.constant 0 : index
      %194 = vector.load %arg1[%c0_158, %193, %c2_159, %c0_160] : memref<1x32x32x8xbf16, #tpu.memory_space<vmem>>, vector<1x1x28x8xbf16>
      %195 = vector.shape_cast %194 : vector<1x1x28x8xbf16> to vector<28x8xbf16>
      %c22 = arith.constant 22 : index
      %c0_161 = arith.constant 0 : index
      %c0_162 = arith.constant 0 : index
      %196 = vector.load %arg2[%c22, %c0_161, %c0_162] : memref<25x8x32xbf16, #tpu.memory_space<vmem>>, vector<1x8x32xbf16>
      %197 = vector.shape_cast %196 : vector<1x8x32xbf16> to vector<8x32xbf16>
      %cst_163 = arith.constant dense<0.000000e+00> : vector<28x32xf32>
      %198 = tpu.matmul %195, %197, %cst_163 {dimension_numbers = #tpu.dot_dimension_numbers<[1], [0], [0], [1], [0, 0, 1, 1], [], []>} : vector<28x8xbf16>, vector<8x32xbf16>, vector<28x32xf32> -> vector<28x32xf32>
      %199 = arith.addf %191, %198 : vector<28x32xf32>
      %c4_i32_164 = arith.constant 4 : i32
      %200 = arith.addi %14, %c4_i32_164 : i32
      %c0_165 = arith.constant 0 : index
      %201 = arith.index_cast %200 : i32 to index
      %c3_166 = arith.constant 3 : index
      %c0_167 = arith.constant 0 : index
      %202 = vector.load %arg1[%c0_165, %201, %c3_166, %c0_167] : memref<1x32x32x8xbf16, #tpu.memory_space<vmem>>, vector<1x1x28x8xbf16>
      %203 = vector.shape_cast %202 : vector<1x1x28x8xbf16> to vector<28x8xbf16>
      %c23 = arith.constant 23 : index
      %c0_168 = arith.constant 0 : index
      %c0_169 = arith.constant 0 : index
      %204 = vector.load %arg2[%c23, %c0_168, %c0_169] : memref<25x8x32xbf16, #tpu.memory_space<vmem>>, vector<1x8x32xbf16>
      %205 = vector.shape_cast %204 : vector<1x8x32xbf16> to vector<8x32xbf16>
      %cst_170 = arith.constant dense<0.000000e+00> : vector<28x32xf32>
      %206 = tpu.matmul %203, %205, %cst_170 {dimension_numbers = #tpu.dot_dimension_numbers<[1], [0], [0], [1], [0, 0, 1, 1], [], []>} : vector<28x8xbf16>, vector<8x32xbf16>, vector<28x32xf32> -> vector<28x32xf32>
      %207 = arith.addf %199, %206 : vector<28x32xf32>
      %c4_i32_171 = arith.constant 4 : i32
      %208 = arith.addi %14, %c4_i32_171 : i32
      %c0_172 = arith.constant 0 : index
      %209 = arith.index_cast %208 : i32 to index
      %c4_173 = arith.constant 4 : index
      %c0_174 = arith.constant 0 : index
      %210 = vector.load %arg1[%c0_172, %209, %c4_173, %c0_174] : memref<1x32x32x8xbf16, #tpu.memory_space<vmem>>, vector<1x1x28x8xbf16>
      %211 = vector.shape_cast %210 : vector<1x1x28x8xbf16> to vector<28x8xbf16>
      %c24 = arith.constant 24 : index
      %c0_175 = arith.constant 0 : index
      %c0_176 = arith.constant 0 : index
      %212 = vector.load %arg2[%c24, %c0_175, %c0_176] : memref<25x8x32xbf16, #tpu.memory_space<vmem>>, vector<1x8x32xbf16>
      %213 = vector.shape_cast %212 : vector<1x8x32xbf16> to vector<8x32xbf16>
      %cst_177 = arith.constant dense<0.000000e+00> : vector<28x32xf32>
      %214 = tpu.matmul %211, %213, %cst_177 {dimension_numbers = #tpu.dot_dimension_numbers<[1], [0], [0], [1], [0, 0, 1, 1], [], []>} : vector<28x8xbf16>, vector<8x32xbf16>, vector<28x32xf32> -> vector<28x32xf32>
      %215 = arith.addf %207, %214 : vector<28x32xf32>
      %216 = vector.broadcast %0 : vector<1x32xf32> to vector<28x32xf32>
      %217 = arith.addf %215, %216 : vector<28x32xf32>
      %cst_178 = arith.constant 0.000000e+00 : f32
      %218 = vector.broadcast %cst_178 : f32 to vector<28x32xf32>
      %219 = arith.maximumf %217, %218 : vector<28x32xf32>
      %c2_i32_179 = arith.constant 2 : i32
      %220 = arith.muli %c2_i32_179, %arg5 : i32
      %c1_i32_180 = arith.constant 1 : i32
      %221 = arith.addi %220, %c1_i32_180 : i32
      %cst_181 = arith.constant 0.000000e+00 : f32
      %222 = vector.broadcast %cst_181 : f32 to vector<28x32xf32>
      %c0_i32_182 = arith.constant 0 : i32
      %223 = arith.addi %221, %c0_i32_182 : i32
      %c0_183 = arith.constant 0 : index
      %224 = arith.index_cast %223 : i32 to index
      %c0_184 = arith.constant 0 : index
      %c0_185 = arith.constant 0 : index
      %225 = vector.load %arg1[%c0_183, %224, %c0_184, %c0_185] : memref<1x32x32x8xbf16, #tpu.memory_space<vmem>>, vector<1x1x28x8xbf16>
      %226 = vector.shape_cast %225 : vector<1x1x28x8xbf16> to vector<28x8xbf16>
      %c0_186 = arith.constant 0 : index
      %c0_187 = arith.constant 0 : index
      %c0_188 = arith.constant 0 : index
      %227 = vector.load %arg2[%c0_186, %c0_187, %c0_188] : memref<25x8x32xbf16, #tpu.memory_space<vmem>>, vector<1x8x32xbf16>
      %228 = vector.shape_cast %227 : vector<1x8x32xbf16> to vector<8x32xbf16>
      %cst_189 = arith.constant dense<0.000000e+00> : vector<28x32xf32>
      %229 = tpu.matmul %226, %228, %cst_189 {dimension_numbers = #tpu.dot_dimension_numbers<[1], [0], [0], [1], [0, 0, 1, 1], [], []>} : vector<28x8xbf16>, vector<8x32xbf16>, vector<28x32xf32> -> vector<28x32xf32>
      %230 = arith.addf %222, %229 : vector<28x32xf32>
      %c0_i32_190 = arith.constant 0 : i32
      %231 = arith.addi %221, %c0_i32_190 : i32
      %c0_191 = arith.constant 0 : index
      %232 = arith.index_cast %231 : i32 to index
      %c1_192 = arith.constant 1 : index
      %c0_193 = arith.constant 0 : index
      %233 = vector.load %arg1[%c0_191, %232, %c1_192, %c0_193] : memref<1x32x32x8xbf16, #tpu.memory_space<vmem>>, vector<1x1x28x8xbf16>
      %234 = vector.shape_cast %233 : vector<1x1x28x8xbf16> to vector<28x8xbf16>
      %c1_194 = arith.constant 1 : index
      %c0_195 = arith.constant 0 : index
      %c0_196 = arith.constant 0 : index
      %235 = vector.load %arg2[%c1_194, %c0_195, %c0_196] : memref<25x8x32xbf16, #tpu.memory_space<vmem>>, vector<1x8x32xbf16>
      %236 = vector.shape_cast %235 : vector<1x8x32xbf16> to vector<8x32xbf16>
      %cst_197 = arith.constant dense<0.000000e+00> : vector<28x32xf32>
      %237 = tpu.matmul %234, %236, %cst_197 {dimension_numbers = #tpu.dot_dimension_numbers<[1], [0], [0], [1], [0, 0, 1, 1], [], []>} : vector<28x8xbf16>, vector<8x32xbf16>, vector<28x32xf32> -> vector<28x32xf32>
      %238 = arith.addf %230, %237 : vector<28x32xf32>
      %c0_i32_198 = arith.constant 0 : i32
      %239 = arith.addi %221, %c0_i32_198 : i32
      %c0_199 = arith.constant 0 : index
      %240 = arith.index_cast %239 : i32 to index
      %c2_200 = arith.constant 2 : index
      %c0_201 = arith.constant 0 : index
      %241 = vector.load %arg1[%c0_199, %240, %c2_200, %c0_201] : memref<1x32x32x8xbf16, #tpu.memory_space<vmem>>, vector<1x1x28x8xbf16>
      %242 = vector.shape_cast %241 : vector<1x1x28x8xbf16> to vector<28x8xbf16>
      %c2_202 = arith.constant 2 : index
      %c0_203 = arith.constant 0 : index
      %c0_204 = arith.constant 0 : index
      %243 = vector.load %arg2[%c2_202, %c0_203, %c0_204] : memref<25x8x32xbf16, #tpu.memory_space<vmem>>, vector<1x8x32xbf16>
      %244 = vector.shape_cast %243 : vector<1x8x32xbf16> to vector<8x32xbf16>
      %cst_205 = arith.constant dense<0.000000e+00> : vector<28x32xf32>
      %245 = tpu.matmul %242, %244, %cst_205 {dimension_numbers = #tpu.dot_dimension_numbers<[1], [0], [0], [1], [0, 0, 1, 1], [], []>} : vector<28x8xbf16>, vector<8x32xbf16>, vector<28x32xf32> -> vector<28x32xf32>
      %246 = arith.addf %238, %245 : vector<28x32xf32>
      %c0_i32_206 = arith.constant 0 : i32
      %247 = arith.addi %221, %c0_i32_206 : i32
      %c0_207 = arith.constant 0 : index
      %248 = arith.index_cast %247 : i32 to index
      %c3_208 = arith.constant 3 : index
      %c0_209 = arith.constant 0 : index
      %249 = vector.load %arg1[%c0_207, %248, %c3_208, %c0_209] : memref<1x32x32x8xbf16, #tpu.memory_space<vmem>>, vector<1x1x28x8xbf16>
      %250 = vector.shape_cast %249 : vector<1x1x28x8xbf16> to vector<28x8xbf16>
      %c3_210 = arith.constant 3 : index
      %c0_211 = arith.constant 0 : index
      %c0_212 = arith.constant 0 : index
      %251 = vector.load %arg2[%c3_210, %c0_211, %c0_212] : memref<25x8x32xbf16, #tpu.memory_space<vmem>>, vector<1x8x32xbf16>
      %252 = vector.shape_cast %251 : vector<1x8x32xbf16> to vector<8x32xbf16>
      %cst_213 = arith.constant dense<0.000000e+00> : vector<28x32xf32>
      %253 = tpu.matmul %250, %252, %cst_213 {dimension_numbers = #tpu.dot_dimension_numbers<[1], [0], [0], [1], [0, 0, 1, 1], [], []>} : vector<28x8xbf16>, vector<8x32xbf16>, vector<28x32xf32> -> vector<28x32xf32>
      %254 = arith.addf %246, %253 : vector<28x32xf32>
      %c0_i32_214 = arith.constant 0 : i32
      %255 = arith.addi %221, %c0_i32_214 : i32
      %c0_215 = arith.constant 0 : index
      %256 = arith.index_cast %255 : i32 to index
      %c4_216 = arith.constant 4 : index
      %c0_217 = arith.constant 0 : index
      %257 = vector.load %arg1[%c0_215, %256, %c4_216, %c0_217] : memref<1x32x32x8xbf16, #tpu.memory_space<vmem>>, vector<1x1x28x8xbf16>
      %258 = vector.shape_cast %257 : vector<1x1x28x8xbf16> to vector<28x8xbf16>
      %c4_218 = arith.constant 4 : index
      %c0_219 = arith.constant 0 : index
      %c0_220 = arith.constant 0 : index
      %259 = vector.load %arg2[%c4_218, %c0_219, %c0_220] : memref<25x8x32xbf16, #tpu.memory_space<vmem>>, vector<1x8x32xbf16>
      %260 = vector.shape_cast %259 : vector<1x8x32xbf16> to vector<8x32xbf16>
      %cst_221 = arith.constant dense<0.000000e+00> : vector<28x32xf32>
      %261 = tpu.matmul %258, %260, %cst_221 {dimension_numbers = #tpu.dot_dimension_numbers<[1], [0], [0], [1], [0, 0, 1, 1], [], []>} : vector<28x8xbf16>, vector<8x32xbf16>, vector<28x32xf32> -> vector<28x32xf32>
      %262 = arith.addf %254, %261 : vector<28x32xf32>
      %c1_i32_222 = arith.constant 1 : i32
      %263 = arith.addi %221, %c1_i32_222 : i32
      %c0_223 = arith.constant 0 : index
      %264 = arith.index_cast %263 : i32 to index
      %c0_224 = arith.constant 0 : index
      %c0_225 = arith.constant 0 : index
      %265 = vector.load %arg1[%c0_223, %264, %c0_224, %c0_225] : memref<1x32x32x8xbf16, #tpu.memory_space<vmem>>, vector<1x1x28x8xbf16>
      %266 = vector.shape_cast %265 : vector<1x1x28x8xbf16> to vector<28x8xbf16>
      %c5_226 = arith.constant 5 : index
      %c0_227 = arith.constant 0 : index
      %c0_228 = arith.constant 0 : index
      %267 = vector.load %arg2[%c5_226, %c0_227, %c0_228] : memref<25x8x32xbf16, #tpu.memory_space<vmem>>, vector<1x8x32xbf16>
      %268 = vector.shape_cast %267 : vector<1x8x32xbf16> to vector<8x32xbf16>
      %cst_229 = arith.constant dense<0.000000e+00> : vector<28x32xf32>
      %269 = tpu.matmul %266, %268, %cst_229 {dimension_numbers = #tpu.dot_dimension_numbers<[1], [0], [0], [1], [0, 0, 1, 1], [], []>} : vector<28x8xbf16>, vector<8x32xbf16>, vector<28x32xf32> -> vector<28x32xf32>
      %270 = arith.addf %262, %269 : vector<28x32xf32>
      %c1_i32_230 = arith.constant 1 : i32
      %271 = arith.addi %221, %c1_i32_230 : i32
      %c0_231 = arith.constant 0 : index
      %272 = arith.index_cast %271 : i32 to index
      %c1_232 = arith.constant 1 : index
      %c0_233 = arith.constant 0 : index
      %273 = vector.load %arg1[%c0_231, %272, %c1_232, %c0_233] : memref<1x32x32x8xbf16, #tpu.memory_space<vmem>>, vector<1x1x28x8xbf16>
      %274 = vector.shape_cast %273 : vector<1x1x28x8xbf16> to vector<28x8xbf16>
      %c6_234 = arith.constant 6 : index
      %c0_235 = arith.constant 0 : index
      %c0_236 = arith.constant 0 : index
      %275 = vector.load %arg2[%c6_234, %c0_235, %c0_236] : memref<25x8x32xbf16, #tpu.memory_space<vmem>>, vector<1x8x32xbf16>
      %276 = vector.shape_cast %275 : vector<1x8x32xbf16> to vector<8x32xbf16>
      %cst_237 = arith.constant dense<0.000000e+00> : vector<28x32xf32>
      %277 = tpu.matmul %274, %276, %cst_237 {dimension_numbers = #tpu.dot_dimension_numbers<[1], [0], [0], [1], [0, 0, 1, 1], [], []>} : vector<28x8xbf16>, vector<8x32xbf16>, vector<28x32xf32> -> vector<28x32xf32>
      %278 = arith.addf %270, %277 : vector<28x32xf32>
      %c1_i32_238 = arith.constant 1 : i32
      %279 = arith.addi %221, %c1_i32_238 : i32
      %c0_239 = arith.constant 0 : index
      %280 = arith.index_cast %279 : i32 to index
      %c2_240 = arith.constant 2 : index
      %c0_241 = arith.constant 0 : index
      %281 = vector.load %arg1[%c0_239, %280, %c2_240, %c0_241] : memref<1x32x32x8xbf16, #tpu.memory_space<vmem>>, vector<1x1x28x8xbf16>
      %282 = vector.shape_cast %281 : vector<1x1x28x8xbf16> to vector<28x8xbf16>
      %c7_242 = arith.constant 7 : index
      %c0_243 = arith.constant 0 : index
      %c0_244 = arith.constant 0 : index
      %283 = vector.load %arg2[%c7_242, %c0_243, %c0_244] : memref<25x8x32xbf16, #tpu.memory_space<vmem>>, vector<1x8x32xbf16>
      %284 = vector.shape_cast %283 : vector<1x8x32xbf16> to vector<8x32xbf16>
      %cst_245 = arith.constant dense<0.000000e+00> : vector<28x32xf32>
      %285 = tpu.matmul %282, %284, %cst_245 {dimension_numbers = #tpu.dot_dimension_numbers<[1], [0], [0], [1], [0, 0, 1, 1], [], []>} : vector<28x8xbf16>, vector<8x32xbf16>, vector<28x32xf32> -> vector<28x32xf32>
      %286 = arith.addf %278, %285 : vector<28x32xf32>
      %c1_i32_246 = arith.constant 1 : i32
      %287 = arith.addi %221, %c1_i32_246 : i32
      %c0_247 = arith.constant 0 : index
      %288 = arith.index_cast %287 : i32 to index
      %c3_248 = arith.constant 3 : index
      %c0_249 = arith.constant 0 : index
      %289 = vector.load %arg1[%c0_247, %288, %c3_248, %c0_249] : memref<1x32x32x8xbf16, #tpu.memory_space<vmem>>, vector<1x1x28x8xbf16>
      %290 = vector.shape_cast %289 : vector<1x1x28x8xbf16> to vector<28x8xbf16>
      %c8_250 = arith.constant 8 : index
      %c0_251 = arith.constant 0 : index
      %c0_252 = arith.constant 0 : index
      %291 = vector.load %arg2[%c8_250, %c0_251, %c0_252] : memref<25x8x32xbf16, #tpu.memory_space<vmem>>, vector<1x8x32xbf16>
      %292 = vector.shape_cast %291 : vector<1x8x32xbf16> to vector<8x32xbf16>
      %cst_253 = arith.constant dense<0.000000e+00> : vector<28x32xf32>
      %293 = tpu.matmul %290, %292, %cst_253 {dimension_numbers = #tpu.dot_dimension_numbers<[1], [0], [0], [1], [0, 0, 1, 1], [], []>} : vector<28x8xbf16>, vector<8x32xbf16>, vector<28x32xf32> -> vector<28x32xf32>
      %294 = arith.addf %286, %293 : vector<28x32xf32>
      %c1_i32_254 = arith.constant 1 : i32
      %295 = arith.addi %221, %c1_i32_254 : i32
      %c0_255 = arith.constant 0 : index
      %296 = arith.index_cast %295 : i32 to index
      %c4_256 = arith.constant 4 : index
      %c0_257 = arith.constant 0 : index
      %297 = vector.load %arg1[%c0_255, %296, %c4_256, %c0_257] : memref<1x32x32x8xbf16, #tpu.memory_space<vmem>>, vector<1x1x28x8xbf16>
      %298 = vector.shape_cast %297 : vector<1x1x28x8xbf16> to vector<28x8xbf16>
      %c9_258 = arith.constant 9 : index
      %c0_259 = arith.constant 0 : index
      %c0_260 = arith.constant 0 : index
      %299 = vector.load %arg2[%c9_258, %c0_259, %c0_260] : memref<25x8x32xbf16, #tpu.memory_space<vmem>>, vector<1x8x32xbf16>
      %300 = vector.shape_cast %299 : vector<1x8x32xbf16> to vector<8x32xbf16>
      %cst_261 = arith.constant dense<0.000000e+00> : vector<28x32xf32>
      %301 = tpu.matmul %298, %300, %cst_261 {dimension_numbers = #tpu.dot_dimension_numbers<[1], [0], [0], [1], [0, 0, 1, 1], [], []>} : vector<28x8xbf16>, vector<8x32xbf16>, vector<28x32xf32> -> vector<28x32xf32>
      %302 = arith.addf %294, %301 : vector<28x32xf32>
      %c2_i32_262 = arith.constant 2 : i32
      %303 = arith.addi %221, %c2_i32_262 : i32
      %c0_263 = arith.constant 0 : index
      %304 = arith.index_cast %303 : i32 to index
      %c0_264 = arith.constant 0 : index
      %c0_265 = arith.constant 0 : index
      %305 = vector.load %arg1[%c0_263, %304, %c0_264, %c0_265] : memref<1x32x32x8xbf16, #tpu.memory_space<vmem>>, vector<1x1x28x8xbf16>
      %306 = vector.shape_cast %305 : vector<1x1x28x8xbf16> to vector<28x8xbf16>
      %c10_266 = arith.constant 10 : index
      %c0_267 = arith.constant 0 : index
      %c0_268 = arith.constant 0 : index
      %307 = vector.load %arg2[%c10_266, %c0_267, %c0_268] : memref<25x8x32xbf16, #tpu.memory_space<vmem>>, vector<1x8x32xbf16>
      %308 = vector.shape_cast %307 : vector<1x8x32xbf16> to vector<8x32xbf16>
      %cst_269 = arith.constant dense<0.000000e+00> : vector<28x32xf32>
      %309 = tpu.matmul %306, %308, %cst_269 {dimension_numbers = #tpu.dot_dimension_numbers<[1], [0], [0], [1], [0, 0, 1, 1], [], []>} : vector<28x8xbf16>, vector<8x32xbf16>, vector<28x32xf32> -> vector<28x32xf32>
      %310 = arith.addf %302, %309 : vector<28x32xf32>
      %c2_i32_270 = arith.constant 2 : i32
      %311 = arith.addi %221, %c2_i32_270 : i32
      %c0_271 = arith.constant 0 : index
      %312 = arith.index_cast %311 : i32 to index
      %c1_272 = arith.constant 1 : index
      %c0_273 = arith.constant 0 : index
      %313 = vector.load %arg1[%c0_271, %312, %c1_272, %c0_273] : memref<1x32x32x8xbf16, #tpu.memory_space<vmem>>, vector<1x1x28x8xbf16>
      %314 = vector.shape_cast %313 : vector<1x1x28x8xbf16> to vector<28x8xbf16>
      %c11_274 = arith.constant 11 : index
      %c0_275 = arith.constant 0 : index
      %c0_276 = arith.constant 0 : index
      %315 = vector.load %arg2[%c11_274, %c0_275, %c0_276] : memref<25x8x32xbf16, #tpu.memory_space<vmem>>, vector<1x8x32xbf16>
      %316 = vector.shape_cast %315 : vector<1x8x32xbf16> to vector<8x32xbf16>
      %cst_277 = arith.constant dense<0.000000e+00> : vector<28x32xf32>
      %317 = tpu.matmul %314, %316, %cst_277 {dimension_numbers = #tpu.dot_dimension_numbers<[1], [0], [0], [1], [0, 0, 1, 1], [], []>} : vector<28x8xbf16>, vector<8x32xbf16>, vector<28x32xf32> -> vector<28x32xf32>
      %318 = arith.addf %310, %317 : vector<28x32xf32>
      %c2_i32_278 = arith.constant 2 : i32
      %319 = arith.addi %221, %c2_i32_278 : i32
      %c0_279 = arith.constant 0 : index
      %320 = arith.index_cast %319 : i32 to index
      %c2_280 = arith.constant 2 : index
      %c0_281 = arith.constant 0 : index
      %321 = vector.load %arg1[%c0_279, %320, %c2_280, %c0_281] : memref<1x32x32x8xbf16, #tpu.memory_space<vmem>>, vector<1x1x28x8xbf16>
      %322 = vector.shape_cast %321 : vector<1x1x28x8xbf16> to vector<28x8xbf16>
      %c12_282 = arith.constant 12 : index
      %c0_283 = arith.constant 0 : index
      %c0_284 = arith.constant 0 : index
      %323 = vector.load %arg2[%c12_282, %c0_283, %c0_284] : memref<25x8x32xbf16, #tpu.memory_space<vmem>>, vector<1x8x32xbf16>
      %324 = vector.shape_cast %323 : vector<1x8x32xbf16> to vector<8x32xbf16>
      %cst_285 = arith.constant dense<0.000000e+00> : vector<28x32xf32>
      %325 = tpu.matmul %322, %324, %cst_285 {dimension_numbers = #tpu.dot_dimension_numbers<[1], [0], [0], [1], [0, 0, 1, 1], [], []>} : vector<28x8xbf16>, vector<8x32xbf16>, vector<28x32xf32> -> vector<28x32xf32>
      %326 = arith.addf %318, %325 : vector<28x32xf32>
      %c2_i32_286 = arith.constant 2 : i32
      %327 = arith.addi %221, %c2_i32_286 : i32
      %c0_287 = arith.constant 0 : index
      %328 = arith.index_cast %327 : i32 to index
      %c3_288 = arith.constant 3 : index
      %c0_289 = arith.constant 0 : index
      %329 = vector.load %arg1[%c0_287, %328, %c3_288, %c0_289] : memref<1x32x32x8xbf16, #tpu.memory_space<vmem>>, vector<1x1x28x8xbf16>
      %330 = vector.shape_cast %329 : vector<1x1x28x8xbf16> to vector<28x8xbf16>
      %c13_290 = arith.constant 13 : index
      %c0_291 = arith.constant 0 : index
      %c0_292 = arith.constant 0 : index
      %331 = vector.load %arg2[%c13_290, %c0_291, %c0_292] : memref<25x8x32xbf16, #tpu.memory_space<vmem>>, vector<1x8x32xbf16>
      %332 = vector.shape_cast %331 : vector<1x8x32xbf16> to vector<8x32xbf16>
      %cst_293 = arith.constant dense<0.000000e+00> : vector<28x32xf32>
      %333 = tpu.matmul %330, %332, %cst_293 {dimension_numbers = #tpu.dot_dimension_numbers<[1], [0], [0], [1], [0, 0, 1, 1], [], []>} : vector<28x8xbf16>, vector<8x32xbf16>, vector<28x32xf32> -> vector<28x32xf32>
      %334 = arith.addf %326, %333 : vector<28x32xf32>
      %c2_i32_294 = arith.constant 2 : i32
      %335 = arith.addi %221, %c2_i32_294 : i32
      %c0_295 = arith.constant 0 : index
      %336 = arith.index_cast %335 : i32 to index
      %c4_296 = arith.constant 4 : index
      %c0_297 = arith.constant 0 : index
      %337 = vector.load %arg1[%c0_295, %336, %c4_296, %c0_297] : memref<1x32x32x8xbf16, #tpu.memory_space<vmem>>, vector<1x1x28x8xbf16>
      %338 = vector.shape_cast %337 : vector<1x1x28x8xbf16> to vector<28x8xbf16>
      %c14_298 = arith.constant 14 : index
      %c0_299 = arith.constant 0 : index
      %c0_300 = arith.constant 0 : index
      %339 = vector.load %arg2[%c14_298, %c0_299, %c0_300] : memref<25x8x32xbf16, #tpu.memory_space<vmem>>, vector<1x8x32xbf16>
      %340 = vector.shape_cast %339 : vector<1x8x32xbf16> to vector<8x32xbf16>
      %cst_301 = arith.constant dense<0.000000e+00> : vector<28x32xf32>
      %341 = tpu.matmul %338, %340, %cst_301 {dimension_numbers = #tpu.dot_dimension_numbers<[1], [0], [0], [1], [0, 0, 1, 1], [], []>} : vector<28x8xbf16>, vector<8x32xbf16>, vector<28x32xf32> -> vector<28x32xf32>
      %342 = arith.addf %334, %341 : vector<28x32xf32>
      %c3_i32_302 = arith.constant 3 : i32
      %343 = arith.addi %221, %c3_i32_302 : i32
      %c0_303 = arith.constant 0 : index
      %344 = arith.index_cast %343 : i32 to index
      %c0_304 = arith.constant 0 : index
      %c0_305 = arith.constant 0 : index
      %345 = vector.load %arg1[%c0_303, %344, %c0_304, %c0_305] : memref<1x32x32x8xbf16, #tpu.memory_space<vmem>>, vector<1x1x28x8xbf16>
      %346 = vector.shape_cast %345 : vector<1x1x28x8xbf16> to vector<28x8xbf16>
      %c15_306 = arith.constant 15 : index
      %c0_307 = arith.constant 0 : index
      %c0_308 = arith.constant 0 : index
      %347 = vector.load %arg2[%c15_306, %c0_307, %c0_308] : memref<25x8x32xbf16, #tpu.memory_space<vmem>>, vector<1x8x32xbf16>
      %348 = vector.shape_cast %347 : vector<1x8x32xbf16> to vector<8x32xbf16>
      %cst_309 = arith.constant dense<0.000000e+00> : vector<28x32xf32>
      %349 = tpu.matmul %346, %348, %cst_309 {dimension_numbers = #tpu.dot_dimension_numbers<[1], [0], [0], [1], [0, 0, 1, 1], [], []>} : vector<28x8xbf16>, vector<8x32xbf16>, vector<28x32xf32> -> vector<28x32xf32>
      %350 = arith.addf %342, %349 : vector<28x32xf32>
      %c3_i32_310 = arith.constant 3 : i32
      %351 = arith.addi %221, %c3_i32_310 : i32
      %c0_311 = arith.constant 0 : index
      %352 = arith.index_cast %351 : i32 to index
      %c1_312 = arith.constant 1 : index
      %c0_313 = arith.constant 0 : index
      %353 = vector.load %arg1[%c0_311, %352, %c1_312, %c0_313] : memref<1x32x32x8xbf16, #tpu.memory_space<vmem>>, vector<1x1x28x8xbf16>
      %354 = vector.shape_cast %353 : vector<1x1x28x8xbf16> to vector<28x8xbf16>
      %c16_314 = arith.constant 16 : index
      %c0_315 = arith.constant 0 : index
      %c0_316 = arith.constant 0 : index
      %355 = vector.load %arg2[%c16_314, %c0_315, %c0_316] : memref<25x8x32xbf16, #tpu.memory_space<vmem>>, vector<1x8x32xbf16>
      %356 = vector.shape_cast %355 : vector<1x8x32xbf16> to vector<8x32xbf16>
      %cst_317 = arith.constant dense<0.000000e+00> : vector<28x32xf32>
      %357 = tpu.matmul %354, %356, %cst_317 {dimension_numbers = #tpu.dot_dimension_numbers<[1], [0], [0], [1], [0, 0, 1, 1], [], []>} : vector<28x8xbf16>, vector<8x32xbf16>, vector<28x32xf32> -> vector<28x32xf32>
      %358 = arith.addf %350, %357 : vector<28x32xf32>
      %c3_i32_318 = arith.constant 3 : i32
      %359 = arith.addi %221, %c3_i32_318 : i32
      %c0_319 = arith.constant 0 : index
      %360 = arith.index_cast %359 : i32 to index
      %c2_320 = arith.constant 2 : index
      %c0_321 = arith.constant 0 : index
      %361 = vector.load %arg1[%c0_319, %360, %c2_320, %c0_321] : memref<1x32x32x8xbf16, #tpu.memory_space<vmem>>, vector<1x1x28x8xbf16>
      %362 = vector.shape_cast %361 : vector<1x1x28x8xbf16> to vector<28x8xbf16>
      %c17_322 = arith.constant 17 : index
      %c0_323 = arith.constant 0 : index
      %c0_324 = arith.constant 0 : index
      %363 = vector.load %arg2[%c17_322, %c0_323, %c0_324] : memref<25x8x32xbf16, #tpu.memory_space<vmem>>, vector<1x8x32xbf16>
      %364 = vector.shape_cast %363 : vector<1x8x32xbf16> to vector<8x32xbf16>
      %cst_325 = arith.constant dense<0.000000e+00> : vector<28x32xf32>
      %365 = tpu.matmul %362, %364, %cst_325 {dimension_numbers = #tpu.dot_dimension_numbers<[1], [0], [0], [1], [0, 0, 1, 1], [], []>} : vector<28x8xbf16>, vector<8x32xbf16>, vector<28x32xf32> -> vector<28x32xf32>
      %366 = arith.addf %358, %365 : vector<28x32xf32>
      %c3_i32_326 = arith.constant 3 : i32
      %367 = arith.addi %221, %c3_i32_326 : i32
      %c0_327 = arith.constant 0 : index
      %368 = arith.index_cast %367 : i32 to index
      %c3_328 = arith.constant 3 : index
      %c0_329 = arith.constant 0 : index
      %369 = vector.load %arg1[%c0_327, %368, %c3_328, %c0_329] : memref<1x32x32x8xbf16, #tpu.memory_space<vmem>>, vector<1x1x28x8xbf16>
      %370 = vector.shape_cast %369 : vector<1x1x28x8xbf16> to vector<28x8xbf16>
      %c18_330 = arith.constant 18 : index
      %c0_331 = arith.constant 0 : index
      %c0_332 = arith.constant 0 : index
      %371 = vector.load %arg2[%c18_330, %c0_331, %c0_332] : memref<25x8x32xbf16, #tpu.memory_space<vmem>>, vector<1x8x32xbf16>
      %372 = vector.shape_cast %371 : vector<1x8x32xbf16> to vector<8x32xbf16>
      %cst_333 = arith.constant dense<0.000000e+00> : vector<28x32xf32>
      %373 = tpu.matmul %370, %372, %cst_333 {dimension_numbers = #tpu.dot_dimension_numbers<[1], [0], [0], [1], [0, 0, 1, 1], [], []>} : vector<28x8xbf16>, vector<8x32xbf16>, vector<28x32xf32> -> vector<28x32xf32>
      %374 = arith.addf %366, %373 : vector<28x32xf32>
      %c3_i32_334 = arith.constant 3 : i32
      %375 = arith.addi %221, %c3_i32_334 : i32
      %c0_335 = arith.constant 0 : index
      %376 = arith.index_cast %375 : i32 to index
      %c4_336 = arith.constant 4 : index
      %c0_337 = arith.constant 0 : index
      %377 = vector.load %arg1[%c0_335, %376, %c4_336, %c0_337] : memref<1x32x32x8xbf16, #tpu.memory_space<vmem>>, vector<1x1x28x8xbf16>
      %378 = vector.shape_cast %377 : vector<1x1x28x8xbf16> to vector<28x8xbf16>
      %c19_338 = arith.constant 19 : index
      %c0_339 = arith.constant 0 : index
      %c0_340 = arith.constant 0 : index
      %379 = vector.load %arg2[%c19_338, %c0_339, %c0_340] : memref<25x8x32xbf16, #tpu.memory_space<vmem>>, vector<1x8x32xbf16>
      %380 = vector.shape_cast %379 : vector<1x8x32xbf16> to vector<8x32xbf16>
      %cst_341 = arith.constant dense<0.000000e+00> : vector<28x32xf32>
      %381 = tpu.matmul %378, %380, %cst_341 {dimension_numbers = #tpu.dot_dimension_numbers<[1], [0], [0], [1], [0, 0, 1, 1], [], []>} : vector<28x8xbf16>, vector<8x32xbf16>, vector<28x32xf32> -> vector<28x32xf32>
      %382 = arith.addf %374, %381 : vector<28x32xf32>
      %c4_i32_342 = arith.constant 4 : i32
      %383 = arith.addi %221, %c4_i32_342 : i32
      %c0_343 = arith.constant 0 : index
      %384 = arith.index_cast %383 : i32 to index
      %c0_344 = arith.constant 0 : index
      %c0_345 = arith.constant 0 : index
      %385 = vector.load %arg1[%c0_343, %384, %c0_344, %c0_345] : memref<1x32x32x8xbf16, #tpu.memory_space<vmem>>, vector<1x1x28x8xbf16>
      %386 = vector.shape_cast %385 : vector<1x1x28x8xbf16> to vector<28x8xbf16>
      %c20_346 = arith.constant 20 : index
      %c0_347 = arith.constant 0 : index
      %c0_348 = arith.constant 0 : index
      %387 = vector.load %arg2[%c20_346, %c0_347, %c0_348] : memref<25x8x32xbf16, #tpu.memory_space<vmem>>, vector<1x8x32xbf16>
      %388 = vector.shape_cast %387 : vector<1x8x32xbf16> to vector<8x32xbf16>
      %cst_349 = arith.constant dense<0.000000e+00> : vector<28x32xf32>
      %389 = tpu.matmul %386, %388, %cst_349 {dimension_numbers = #tpu.dot_dimension_numbers<[1], [0], [0], [1], [0, 0, 1, 1], [], []>} : vector<28x8xbf16>, vector<8x32xbf16>, vector<28x32xf32> -> vector<28x32xf32>
      %390 = arith.addf %382, %389 : vector<28x32xf32>
      %c4_i32_350 = arith.constant 4 : i32
      %391 = arith.addi %221, %c4_i32_350 : i32
      %c0_351 = arith.constant 0 : index
      %392 = arith.index_cast %391 : i32 to index
      %c1_352 = arith.constant 1 : index
      %c0_353 = arith.constant 0 : index
      %393 = vector.load %arg1[%c0_351, %392, %c1_352, %c0_353] : memref<1x32x32x8xbf16, #tpu.memory_space<vmem>>, vector<1x1x28x8xbf16>
      %394 = vector.shape_cast %393 : vector<1x1x28x8xbf16> to vector<28x8xbf16>
      %c21_354 = arith.constant 21 : index
      %c0_355 = arith.constant 0 : index
      %c0_356 = arith.constant 0 : index
      %395 = vector.load %arg2[%c21_354, %c0_355, %c0_356] : memref<25x8x32xbf16, #tpu.memory_space<vmem>>, vector<1x8x32xbf16>
      %396 = vector.shape_cast %395 : vector<1x8x32xbf16> to vector<8x32xbf16>
      %cst_357 = arith.constant dense<0.000000e+00> : vector<28x32xf32>
      %397 = tpu.matmul %394, %396, %cst_357 {dimension_numbers = #tpu.dot_dimension_numbers<[1], [0], [0], [1], [0, 0, 1, 1], [], []>} : vector<28x8xbf16>, vector<8x32xbf16>, vector<28x32xf32> -> vector<28x32xf32>
      %398 = arith.addf %390, %397 : vector<28x32xf32>
      %c4_i32_358 = arith.constant 4 : i32
      %399 = arith.addi %221, %c4_i32_358 : i32
      %c0_359 = arith.constant 0 : index
      %400 = arith.index_cast %399 : i32 to index
      %c2_360 = arith.constant 2 : index
      %c0_361 = arith.constant 0 : index
      %401 = vector.load %arg1[%c0_359, %400, %c2_360, %c0_361] : memref<1x32x32x8xbf16, #tpu.memory_space<vmem>>, vector<1x1x28x8xbf16>
      %402 = vector.shape_cast %401 : vector<1x1x28x8xbf16> to vector<28x8xbf16>
      %c22_362 = arith.constant 22 : index
      %c0_363 = arith.constant 0 : index
      %c0_364 = arith.constant 0 : index
      %403 = vector.load %arg2[%c22_362, %c0_363, %c0_364] : memref<25x8x32xbf16, #tpu.memory_space<vmem>>, vector<1x8x32xbf16>
      %404 = vector.shape_cast %403 : vector<1x8x32xbf16> to vector<8x32xbf16>
      %cst_365 = arith.constant dense<0.000000e+00> : vector<28x32xf32>
      %405 = tpu.matmul %402, %404, %cst_365 {dimension_numbers = #tpu.dot_dimension_numbers<[1], [0], [0], [1], [0, 0, 1, 1], [], []>} : vector<28x8xbf16>, vector<8x32xbf16>, vector<28x32xf32> -> vector<28x32xf32>
      %406 = arith.addf %398, %405 : vector<28x32xf32>
      %c4_i32_366 = arith.constant 4 : i32
      %407 = arith.addi %221, %c4_i32_366 : i32
      %c0_367 = arith.constant 0 : index
      %408 = arith.index_cast %407 : i32 to index
      %c3_368 = arith.constant 3 : index
      %c0_369 = arith.constant 0 : index
      %409 = vector.load %arg1[%c0_367, %408, %c3_368, %c0_369] : memref<1x32x32x8xbf16, #tpu.memory_space<vmem>>, vector<1x1x28x8xbf16>
      %410 = vector.shape_cast %409 : vector<1x1x28x8xbf16> to vector<28x8xbf16>
      %c23_370 = arith.constant 23 : index
      %c0_371 = arith.constant 0 : index
      %c0_372 = arith.constant 0 : index
      %411 = vector.load %arg2[%c23_370, %c0_371, %c0_372] : memref<25x8x32xbf16, #tpu.memory_space<vmem>>, vector<1x8x32xbf16>
      %412 = vector.shape_cast %411 : vector<1x8x32xbf16> to vector<8x32xbf16>
      %cst_373 = arith.constant dense<0.000000e+00> : vector<28x32xf32>
      %413 = tpu.matmul %410, %412, %cst_373 {dimension_numbers = #tpu.dot_dimension_numbers<[1], [0], [0], [1], [0, 0, 1, 1], [], []>} : vector<28x8xbf16>, vector<8x32xbf16>, vector<28x32xf32> -> vector<28x32xf32>
      %414 = arith.addf %406, %413 : vector<28x32xf32>
      %c4_i32_374 = arith.constant 4 : i32
      %415 = arith.addi %221, %c4_i32_374 : i32
      %c0_375 = arith.constant 0 : index
      %416 = arith.index_cast %415 : i32 to index
      %c4_376 = arith.constant 4 : index
      %c0_377 = arith.constant 0 : index
      %417 = vector.load %arg1[%c0_375, %416, %c4_376, %c0_377] : memref<1x32x32x8xbf16, #tpu.memory_space<vmem>>, vector<1x1x28x8xbf16>
      %418 = vector.shape_cast %417 : vector<1x1x28x8xbf16> to vector<28x8xbf16>
      %c24_378 = arith.constant 24 : index
      %c0_379 = arith.constant 0 : index
      %c0_380 = arith.constant 0 : index
      %419 = vector.load %arg2[%c24_378, %c0_379, %c0_380] : memref<25x8x32xbf16, #tpu.memory_space<vmem>>, vector<1x8x32xbf16>
      %420 = vector.shape_cast %419 : vector<1x8x32xbf16> to vector<8x32xbf16>
      %cst_381 = arith.constant dense<0.000000e+00> : vector<28x32xf32>
      %421 = tpu.matmul %418, %420, %cst_381 {dimension_numbers = #tpu.dot_dimension_numbers<[1], [0], [0], [1], [0, 0, 1, 1], [], []>} : vector<28x8xbf16>, vector<8x32xbf16>, vector<28x32xf32> -> vector<28x32xf32>
      %422 = arith.addf %414, %421 : vector<28x32xf32>
      %423 = vector.broadcast %0 : vector<1x32xf32> to vector<28x32xf32>
      %424 = arith.addf %422, %423 : vector<28x32xf32>
      %cst_382 = arith.constant 0.000000e+00 : f32
      %425 = vector.broadcast %cst_382 : f32 to vector<28x32xf32>
      %426 = arith.maximumf %424, %425 : vector<28x32xf32>
      %427 = arith.maximumf %219, %426 : vector<28x32xf32>
      %cst_383 = arith.constant dense<0.000000e+00> : vector<14x32xf32>
      %428 = tpu.matmul %7, %427, %cst_383 {dimension_numbers = #tpu.dot_dimension_numbers<[1], [0], [0], [1], [0, 0, 1, 1], [], []>} : vector<14x28xf32>, vector<28x32xf32>, vector<14x32xf32> -> vector<14x32xf32>
      %cst_384 = arith.constant dense<0.000000e+00> : vector<14x32xf32>
      %429 = tpu.matmul %12, %427, %cst_384 {dimension_numbers = #tpu.dot_dimension_numbers<[1], [0], [0], [1], [0, 0, 1, 1], [], []>} : vector<14x28xf32>, vector<28x32xf32>, vector<14x32xf32> -> vector<14x32xf32>
      %430 = arith.maximumf %428, %429 : vector<14x32xf32>
      %431 = arith.truncf %430 : vector<14x32xf32> to vector<14x32xbf16>
      %c0_385 = arith.constant 0 : index
      %432 = arith.index_cast %arg5 : i32 to index
      %c0_386 = arith.constant 0 : index
      %c0_387 = arith.constant 0 : index
      %433 = vector.load %arg4[%c0_385, %432, %c0_386, %c0_387] : memref<1x14x14x32xbf16, #tpu.memory_space<vmem>>, vector<1x1x14x32xbf16>
      %434 = vector.shape_cast %433 : vector<1x1x14x32xbf16> to vector<14x32xbf16>
      %435 = vector.shape_cast %431 : vector<14x32xbf16> to vector<1x1x14x32xbf16>
      tpu.vector_store %arg4[%c0_385, %432, %c0_386, %c0_387], %435 {strides = array<i32>} : memref<1x14x14x32xbf16, #tpu.memory_space<vmem>>, vector<1x1x14x32xbf16>,
    }
    %c14_i32_2 = arith.constant 14 : i32
    return
  }
  func.func @transform_0(%arg0: i32) -> (i32, i32, i32, i32) {
    %c0_i32 = arith.constant 0 : i32
    %c0_i32_0 = arith.constant 0 : i32
    %c0_i32_1 = arith.constant 0 : i32
    %c0_i32_2 = arith.constant 0 : i32
    return %arg0, %c0_i32, %c0_i32_0, %c0_i32_1 : i32, i32, i32, i32
  }
  func.func @transform_1(%arg0: i32) -> (i32, i32, i32) {
    %c0_i32 = arith.constant 0 : i32
    %c0_i32_0 = arith.constant 0 : i32
    %c0_i32_1 = arith.constant 0 : i32
    %c0_i32_2 = arith.constant 0 : i32
    return %c0_i32, %c0_i32_0, %c0_i32_1 : i32, i32, i32
  }
  func.func @transform_2(%arg0: i32) -> (i32, i32) {
    %c0_i32 = arith.constant 0 : i32
    %c0_i32_0 = arith.constant 0 : i32
    %c0_i32_1 = arith.constant 0 : i32
    return %c0_i32, %c0_i32_0 : i32, i32
  }
  func.func @transform_3(%arg0: i32) -> (i32, i32, i32, i32) {
    %c0_i32 = arith.constant 0 : i32
    %c0_i32_0 = arith.constant 0 : i32
    %c0_i32_1 = arith.constant 0 : i32
    %c0_i32_2 = arith.constant 0 : i32
    return %arg0, %c0_i32, %c0_i32_0, %c0_i32_1 : i32, i32, i32, i32
  }
}

module attributes {stable_mosaic.version = 11 : i64} {
  func.func @_conv_relu_pool_kernel(%arg0: i32, %arg1: memref<1x14x14x32xbf16, #tpu.memory_space<vmem>>, %arg2: memref<25x32x64xbf16, #tpu.memory_space<vmem>>, %arg3: memref<1x64xf32, #tpu.memory_space<vmem>>, %arg4: memref<1x5x5x64xbf16, #tpu.memory_space<vmem>>) attributes {dimension_semantics = [#tpu.dimension_semantics<parallel>], iteration_bounds = array<i64: 2>, scalar_prefetch = 0 : i64, scratch_operands = 0 : i64, tpu.core_type = #tpu.core_type<tc>, window_params = [{transform_indices = @transform_0, window_bounds = array<i64: 1, 14, 14, 32>}, {pipeline_mode = #tpu.pipeline_mode<synchronous>, transform_indices = @transform_1, window_bounds = array<i64: 25, 32, 64>}, {pipeline_mode = #tpu.pipeline_mode<synchronous>, transform_indices = @transform_2, window_bounds = array<i64: 1, 64>}, {transform_indices = @transform_3, window_bounds = array<i64: 1, 5, 5, 64>}]} {
    %c0 = arith.constant 0 : index
    %c0_0 = arith.constant 0 : index
    %0 = vector.load %arg3[%c0, %c0_0] : memref<1x64xf32, #tpu.memory_space<vmem>>, vector<1x64xf32>
    %1 = tpu.iota {dimensions = array<i32: 1>} : vector<5x10xi32>
    %2 = tpu.iota {dimensions = array<i32: 0>} : vector<5x10xi32>
    %c2_i32 = arith.constant 2 : i32
    %3 = vector.broadcast %c2_i32 : i32 to vector<5x10xi32>
    %4 = arith.muli %3, %2 : vector<5x10xi32>
    %5 = arith.cmpi eq, %1, %4 : vector<5x10xi32>
    %6 = arith.extui %5 : vector<5x10xi1> to vector<5x10xi32>
    %7 = arith.sitofp %6 : vector<5x10xi32> to vector<5x10xf32>
    %c1_i32 = arith.constant 1 : i32
    %8 = vector.broadcast %c1_i32 : i32 to vector<5x10xi32>
    %9 = arith.addi %4, %8 : vector<5x10xi32>
    %10 = arith.cmpi eq, %1, %9 : vector<5x10xi32>
    %11 = arith.extui %10 : vector<5x10xi1> to vector<5x10xi32>
    %12 = arith.sitofp %11 : vector<5x10xi32> to vector<5x10xf32>
    %c0_i32 = arith.constant 0 : i32
    %c5_i32 = arith.constant 5 : i32
    %13 = arith.addi %c0_i32, %c5_i32 : i32
    %c1_i32_1 = arith.constant 1 : i32
    scf.for %arg5 = %c0_i32 to %13 step %c1_i32_1  : i32 {
      %c2_i32_3 = arith.constant 2 : i32
      %14 = arith.muli %c2_i32_3, %arg5 : i32
      %cst = arith.constant 0.000000e+00 : f32
      %15 = vector.broadcast %cst : f32 to vector<10x64xf32>
      %c0_i32_4 = arith.constant 0 : i32
      %16 = arith.addi %14, %c0_i32_4 : i32
      %c0_5 = arith.constant 0 : index
      %17 = arith.index_cast %16 : i32 to index
      %c0_6 = arith.constant 0 : index
      %c0_7 = arith.constant 0 : index
      %18 = vector.load %arg1[%c0_5, %17, %c0_6, %c0_7] : memref<1x14x14x32xbf16, #tpu.memory_space<vmem>>, vector<1x1x10x32xbf16>
      %19 = vector.shape_cast %18 : vector<1x1x10x32xbf16> to vector<10x32xbf16>
      %c0_8 = arith.constant 0 : index
      %c0_9 = arith.constant 0 : index
      %c0_10 = arith.constant 0 : index
      %20 = vector.load %arg2[%c0_8, %c0_9, %c0_10] : memref<25x32x64xbf16, #tpu.memory_space<vmem>>, vector<1x32x64xbf16>
      %21 = vector.shape_cast %20 : vector<1x32x64xbf16> to vector<32x64xbf16>
      %cst_11 = arith.constant dense<0.000000e+00> : vector<10x64xf32>
      %22 = tpu.matmul %19, %21, %cst_11 {dimension_numbers = #tpu.dot_dimension_numbers<[1], [0], [0], [1], [0, 0, 1, 1], [], []>} : vector<10x32xbf16>, vector<32x64xbf16>, vector<10x64xf32> -> vector<10x64xf32>
      %23 = arith.addf %15, %22 : vector<10x64xf32>
      %c0_i32_12 = arith.constant 0 : i32
      %24 = arith.addi %14, %c0_i32_12 : i32
      %c0_13 = arith.constant 0 : index
      %25 = arith.index_cast %24 : i32 to index
      %c1 = arith.constant 1 : index
      %c0_14 = arith.constant 0 : index
      %26 = vector.load %arg1[%c0_13, %25, %c1, %c0_14] : memref<1x14x14x32xbf16, #tpu.memory_space<vmem>>, vector<1x1x10x32xbf16>
      %27 = vector.shape_cast %26 : vector<1x1x10x32xbf16> to vector<10x32xbf16>
      %c1_15 = arith.constant 1 : index
      %c0_16 = arith.constant 0 : index
      %c0_17 = arith.constant 0 : index
      %28 = vector.load %arg2[%c1_15, %c0_16, %c0_17] : memref<25x32x64xbf16, #tpu.memory_space<vmem>>, vector<1x32x64xbf16>
      %29 = vector.shape_cast %28 : vector<1x32x64xbf16> to vector<32x64xbf16>
      %cst_18 = arith.constant dense<0.000000e+00> : vector<10x64xf32>
      %30 = tpu.matmul %27, %29, %cst_18 {dimension_numbers = #tpu.dot_dimension_numbers<[1], [0], [0], [1], [0, 0, 1, 1], [], []>} : vector<10x32xbf16>, vector<32x64xbf16>, vector<10x64xf32> -> vector<10x64xf32>
      %31 = arith.addf %23, %30 : vector<10x64xf32>
      %c0_i32_19 = arith.constant 0 : i32
      %32 = arith.addi %14, %c0_i32_19 : i32
      %c0_20 = arith.constant 0 : index
      %33 = arith.index_cast %32 : i32 to index
      %c2 = arith.constant 2 : index
      %c0_21 = arith.constant 0 : index
      %34 = vector.load %arg1[%c0_20, %33, %c2, %c0_21] : memref<1x14x14x32xbf16, #tpu.memory_space<vmem>>, vector<1x1x10x32xbf16>
      %35 = vector.shape_cast %34 : vector<1x1x10x32xbf16> to vector<10x32xbf16>
      %c2_22 = arith.constant 2 : index
      %c0_23 = arith.constant 0 : index
      %c0_24 = arith.constant 0 : index
      %36 = vector.load %arg2[%c2_22, %c0_23, %c0_24] : memref<25x32x64xbf16, #tpu.memory_space<vmem>>, vector<1x32x64xbf16>
      %37 = vector.shape_cast %36 : vector<1x32x64xbf16> to vector<32x64xbf16>
      %cst_25 = arith.constant dense<0.000000e+00> : vector<10x64xf32>
      %38 = tpu.matmul %35, %37, %cst_25 {dimension_numbers = #tpu.dot_dimension_numbers<[1], [0], [0], [1], [0, 0, 1, 1], [], []>} : vector<10x32xbf16>, vector<32x64xbf16>, vector<10x64xf32> -> vector<10x64xf32>
      %39 = arith.addf %31, %38 : vector<10x64xf32>
      %c0_i32_26 = arith.constant 0 : i32
      %40 = arith.addi %14, %c0_i32_26 : i32
      %c0_27 = arith.constant 0 : index
      %41 = arith.index_cast %40 : i32 to index
      %c3 = arith.constant 3 : index
      %c0_28 = arith.constant 0 : index
      %42 = vector.load %arg1[%c0_27, %41, %c3, %c0_28] : memref<1x14x14x32xbf16, #tpu.memory_space<vmem>>, vector<1x1x10x32xbf16>
      %43 = vector.shape_cast %42 : vector<1x1x10x32xbf16> to vector<10x32xbf16>
      %c3_29 = arith.constant 3 : index
      %c0_30 = arith.constant 0 : index
      %c0_31 = arith.constant 0 : index
      %44 = vector.load %arg2[%c3_29, %c0_30, %c0_31] : memref<25x32x64xbf16, #tpu.memory_space<vmem>>, vector<1x32x64xbf16>
      %45 = vector.shape_cast %44 : vector<1x32x64xbf16> to vector<32x64xbf16>
      %cst_32 = arith.constant dense<0.000000e+00> : vector<10x64xf32>
      %46 = tpu.matmul %43, %45, %cst_32 {dimension_numbers = #tpu.dot_dimension_numbers<[1], [0], [0], [1], [0, 0, 1, 1], [], []>} : vector<10x32xbf16>, vector<32x64xbf16>, vector<10x64xf32> -> vector<10x64xf32>
      %47 = arith.addf %39, %46 : vector<10x64xf32>
      %c0_i32_33 = arith.constant 0 : i32
      %48 = arith.addi %14, %c0_i32_33 : i32
      %c0_34 = arith.constant 0 : index
      %49 = arith.index_cast %48 : i32 to index
      %c4 = arith.constant 4 : index
      %c0_35 = arith.constant 0 : index
      %50 = vector.load %arg1[%c0_34, %49, %c4, %c0_35] : memref<1x14x14x32xbf16, #tpu.memory_space<vmem>>, vector<1x1x10x32xbf16>
      %51 = vector.shape_cast %50 : vector<1x1x10x32xbf16> to vector<10x32xbf16>
      %c4_36 = arith.constant 4 : index
      %c0_37 = arith.constant 0 : index
      %c0_38 = arith.constant 0 : index
      %52 = vector.load %arg2[%c4_36, %c0_37, %c0_38] : memref<25x32x64xbf16, #tpu.memory_space<vmem>>, vector<1x32x64xbf16>
      %53 = vector.shape_cast %52 : vector<1x32x64xbf16> to vector<32x64xbf16>
      %cst_39 = arith.constant dense<0.000000e+00> : vector<10x64xf32>
      %54 = tpu.matmul %51, %53, %cst_39 {dimension_numbers = #tpu.dot_dimension_numbers<[1], [0], [0], [1], [0, 0, 1, 1], [], []>} : vector<10x32xbf16>, vector<32x64xbf16>, vector<10x64xf32> -> vector<10x64xf32>
      %55 = arith.addf %47, %54 : vector<10x64xf32>
      %c1_i32_40 = arith.constant 1 : i32
      %56 = arith.addi %14, %c1_i32_40 : i32
      %c0_41 = arith.constant 0 : index
      %57 = arith.index_cast %56 : i32 to index
      %c0_42 = arith.constant 0 : index
      %c0_43 = arith.constant 0 : index
      %58 = vector.load %arg1[%c0_41, %57, %c0_42, %c0_43] : memref<1x14x14x32xbf16, #tpu.memory_space<vmem>>, vector<1x1x10x32xbf16>
      %59 = vector.shape_cast %58 : vector<1x1x10x32xbf16> to vector<10x32xbf16>
      %c5 = arith.constant 5 : index
      %c0_44 = arith.constant 0 : index
      %c0_45 = arith.constant 0 : index
      %60 = vector.load %arg2[%c5, %c0_44, %c0_45] : memref<25x32x64xbf16, #tpu.memory_space<vmem>>, vector<1x32x64xbf16>
      %61 = vector.shape_cast %60 : vector<1x32x64xbf16> to vector<32x64xbf16>
      %cst_46 = arith.constant dense<0.000000e+00> : vector<10x64xf32>
      %62 = tpu.matmul %59, %61, %cst_46 {dimension_numbers = #tpu.dot_dimension_numbers<[1], [0], [0], [1], [0, 0, 1, 1], [], []>} : vector<10x32xbf16>, vector<32x64xbf16>, vector<10x64xf32> -> vector<10x64xf32>
      %63 = arith.addf %55, %62 : vector<10x64xf32>
      %c1_i32_47 = arith.constant 1 : i32
      %64 = arith.addi %14, %c1_i32_47 : i32
      %c0_48 = arith.constant 0 : index
      %65 = arith.index_cast %64 : i32 to index
      %c1_49 = arith.constant 1 : index
      %c0_50 = arith.constant 0 : index
      %66 = vector.load %arg1[%c0_48, %65, %c1_49, %c0_50] : memref<1x14x14x32xbf16, #tpu.memory_space<vmem>>, vector<1x1x10x32xbf16>
      %67 = vector.shape_cast %66 : vector<1x1x10x32xbf16> to vector<10x32xbf16>
      %c6 = arith.constant 6 : index
      %c0_51 = arith.constant 0 : index
      %c0_52 = arith.constant 0 : index
      %68 = vector.load %arg2[%c6, %c0_51, %c0_52] : memref<25x32x64xbf16, #tpu.memory_space<vmem>>, vector<1x32x64xbf16>
      %69 = vector.shape_cast %68 : vector<1x32x64xbf16> to vector<32x64xbf16>
      %cst_53 = arith.constant dense<0.000000e+00> : vector<10x64xf32>
      %70 = tpu.matmul %67, %69, %cst_53 {dimension_numbers = #tpu.dot_dimension_numbers<[1], [0], [0], [1], [0, 0, 1, 1], [], []>} : vector<10x32xbf16>, vector<32x64xbf16>, vector<10x64xf32> -> vector<10x64xf32>
      %71 = arith.addf %63, %70 : vector<10x64xf32>
      %c1_i32_54 = arith.constant 1 : i32
      %72 = arith.addi %14, %c1_i32_54 : i32
      %c0_55 = arith.constant 0 : index
      %73 = arith.index_cast %72 : i32 to index
      %c2_56 = arith.constant 2 : index
      %c0_57 = arith.constant 0 : index
      %74 = vector.load %arg1[%c0_55, %73, %c2_56, %c0_57] : memref<1x14x14x32xbf16, #tpu.memory_space<vmem>>, vector<1x1x10x32xbf16>
      %75 = vector.shape_cast %74 : vector<1x1x10x32xbf16> to vector<10x32xbf16>
      %c7 = arith.constant 7 : index
      %c0_58 = arith.constant 0 : index
      %c0_59 = arith.constant 0 : index
      %76 = vector.load %arg2[%c7, %c0_58, %c0_59] : memref<25x32x64xbf16, #tpu.memory_space<vmem>>, vector<1x32x64xbf16>
      %77 = vector.shape_cast %76 : vector<1x32x64xbf16> to vector<32x64xbf16>
      %cst_60 = arith.constant dense<0.000000e+00> : vector<10x64xf32>
      %78 = tpu.matmul %75, %77, %cst_60 {dimension_numbers = #tpu.dot_dimension_numbers<[1], [0], [0], [1], [0, 0, 1, 1], [], []>} : vector<10x32xbf16>, vector<32x64xbf16>, vector<10x64xf32> -> vector<10x64xf32>
      %79 = arith.addf %71, %78 : vector<10x64xf32>
      %c1_i32_61 = arith.constant 1 : i32
      %80 = arith.addi %14, %c1_i32_61 : i32
      %c0_62 = arith.constant 0 : index
      %81 = arith.index_cast %80 : i32 to index
      %c3_63 = arith.constant 3 : index
      %c0_64 = arith.constant 0 : index
      %82 = vector.load %arg1[%c0_62, %81, %c3_63, %c0_64] : memref<1x14x14x32xbf16, #tpu.memory_space<vmem>>, vector<1x1x10x32xbf16>
      %83 = vector.shape_cast %82 : vector<1x1x10x32xbf16> to vector<10x32xbf16>
      %c8 = arith.constant 8 : index
      %c0_65 = arith.constant 0 : index
      %c0_66 = arith.constant 0 : index
      %84 = vector.load %arg2[%c8, %c0_65, %c0_66] : memref<25x32x64xbf16, #tpu.memory_space<vmem>>, vector<1x32x64xbf16>
      %85 = vector.shape_cast %84 : vector<1x32x64xbf16> to vector<32x64xbf16>
      %cst_67 = arith.constant dense<0.000000e+00> : vector<10x64xf32>
      %86 = tpu.matmul %83, %85, %cst_67 {dimension_numbers = #tpu.dot_dimension_numbers<[1], [0], [0], [1], [0, 0, 1, 1], [], []>} : vector<10x32xbf16>, vector<32x64xbf16>, vector<10x64xf32> -> vector<10x64xf32>
      %87 = arith.addf %79, %86 : vector<10x64xf32>
      %c1_i32_68 = arith.constant 1 : i32
      %88 = arith.addi %14, %c1_i32_68 : i32
      %c0_69 = arith.constant 0 : index
      %89 = arith.index_cast %88 : i32 to index
      %c4_70 = arith.constant 4 : index
      %c0_71 = arith.constant 0 : index
      %90 = vector.load %arg1[%c0_69, %89, %c4_70, %c0_71] : memref<1x14x14x32xbf16, #tpu.memory_space<vmem>>, vector<1x1x10x32xbf16>
      %91 = vector.shape_cast %90 : vector<1x1x10x32xbf16> to vector<10x32xbf16>
      %c9 = arith.constant 9 : index
      %c0_72 = arith.constant 0 : index
      %c0_73 = arith.constant 0 : index
      %92 = vector.load %arg2[%c9, %c0_72, %c0_73] : memref<25x32x64xbf16, #tpu.memory_space<vmem>>, vector<1x32x64xbf16>
      %93 = vector.shape_cast %92 : vector<1x32x64xbf16> to vector<32x64xbf16>
      %cst_74 = arith.constant dense<0.000000e+00> : vector<10x64xf32>
      %94 = tpu.matmul %91, %93, %cst_74 {dimension_numbers = #tpu.dot_dimension_numbers<[1], [0], [0], [1], [0, 0, 1, 1], [], []>} : vector<10x32xbf16>, vector<32x64xbf16>, vector<10x64xf32> -> vector<10x64xf32>
      %95 = arith.addf %87, %94 : vector<10x64xf32>
      %c2_i32_75 = arith.constant 2 : i32
      %96 = arith.addi %14, %c2_i32_75 : i32
      %c0_76 = arith.constant 0 : index
      %97 = arith.index_cast %96 : i32 to index
      %c0_77 = arith.constant 0 : index
      %c0_78 = arith.constant 0 : index
      %98 = vector.load %arg1[%c0_76, %97, %c0_77, %c0_78] : memref<1x14x14x32xbf16, #tpu.memory_space<vmem>>, vector<1x1x10x32xbf16>
      %99 = vector.shape_cast %98 : vector<1x1x10x32xbf16> to vector<10x32xbf16>
      %c10 = arith.constant 10 : index
      %c0_79 = arith.constant 0 : index
      %c0_80 = arith.constant 0 : index
      %100 = vector.load %arg2[%c10, %c0_79, %c0_80] : memref<25x32x64xbf16, #tpu.memory_space<vmem>>, vector<1x32x64xbf16>
      %101 = vector.shape_cast %100 : vector<1x32x64xbf16> to vector<32x64xbf16>
      %cst_81 = arith.constant dense<0.000000e+00> : vector<10x64xf32>
      %102 = tpu.matmul %99, %101, %cst_81 {dimension_numbers = #tpu.dot_dimension_numbers<[1], [0], [0], [1], [0, 0, 1, 1], [], []>} : vector<10x32xbf16>, vector<32x64xbf16>, vector<10x64xf32> -> vector<10x64xf32>
      %103 = arith.addf %95, %102 : vector<10x64xf32>
      %c2_i32_82 = arith.constant 2 : i32
      %104 = arith.addi %14, %c2_i32_82 : i32
      %c0_83 = arith.constant 0 : index
      %105 = arith.index_cast %104 : i32 to index
      %c1_84 = arith.constant 1 : index
      %c0_85 = arith.constant 0 : index
      %106 = vector.load %arg1[%c0_83, %105, %c1_84, %c0_85] : memref<1x14x14x32xbf16, #tpu.memory_space<vmem>>, vector<1x1x10x32xbf16>
      %107 = vector.shape_cast %106 : vector<1x1x10x32xbf16> to vector<10x32xbf16>
      %c11 = arith.constant 11 : index
      %c0_86 = arith.constant 0 : index
      %c0_87 = arith.constant 0 : index
      %108 = vector.load %arg2[%c11, %c0_86, %c0_87] : memref<25x32x64xbf16, #tpu.memory_space<vmem>>, vector<1x32x64xbf16>
      %109 = vector.shape_cast %108 : vector<1x32x64xbf16> to vector<32x64xbf16>
      %cst_88 = arith.constant dense<0.000000e+00> : vector<10x64xf32>
      %110 = tpu.matmul %107, %109, %cst_88 {dimension_numbers = #tpu.dot_dimension_numbers<[1], [0], [0], [1], [0, 0, 1, 1], [], []>} : vector<10x32xbf16>, vector<32x64xbf16>, vector<10x64xf32> -> vector<10x64xf32>
      %111 = arith.addf %103, %110 : vector<10x64xf32>
      %c2_i32_89 = arith.constant 2 : i32
      %112 = arith.addi %14, %c2_i32_89 : i32
      %c0_90 = arith.constant 0 : index
      %113 = arith.index_cast %112 : i32 to index
      %c2_91 = arith.constant 2 : index
      %c0_92 = arith.constant 0 : index
      %114 = vector.load %arg1[%c0_90, %113, %c2_91, %c0_92] : memref<1x14x14x32xbf16, #tpu.memory_space<vmem>>, vector<1x1x10x32xbf16>
      %115 = vector.shape_cast %114 : vector<1x1x10x32xbf16> to vector<10x32xbf16>
      %c12 = arith.constant 12 : index
      %c0_93 = arith.constant 0 : index
      %c0_94 = arith.constant 0 : index
      %116 = vector.load %arg2[%c12, %c0_93, %c0_94] : memref<25x32x64xbf16, #tpu.memory_space<vmem>>, vector<1x32x64xbf16>
      %117 = vector.shape_cast %116 : vector<1x32x64xbf16> to vector<32x64xbf16>
      %cst_95 = arith.constant dense<0.000000e+00> : vector<10x64xf32>
      %118 = tpu.matmul %115, %117, %cst_95 {dimension_numbers = #tpu.dot_dimension_numbers<[1], [0], [0], [1], [0, 0, 1, 1], [], []>} : vector<10x32xbf16>, vector<32x64xbf16>, vector<10x64xf32> -> vector<10x64xf32>
      %119 = arith.addf %111, %118 : vector<10x64xf32>
      %c2_i32_96 = arith.constant 2 : i32
      %120 = arith.addi %14, %c2_i32_96 : i32
      %c0_97 = arith.constant 0 : index
      %121 = arith.index_cast %120 : i32 to index
      %c3_98 = arith.constant 3 : index
      %c0_99 = arith.constant 0 : index
      %122 = vector.load %arg1[%c0_97, %121, %c3_98, %c0_99] : memref<1x14x14x32xbf16, #tpu.memory_space<vmem>>, vector<1x1x10x32xbf16>
      %123 = vector.shape_cast %122 : vector<1x1x10x32xbf16> to vector<10x32xbf16>
      %c13 = arith.constant 13 : index
      %c0_100 = arith.constant 0 : index
      %c0_101 = arith.constant 0 : index
      %124 = vector.load %arg2[%c13, %c0_100, %c0_101] : memref<25x32x64xbf16, #tpu.memory_space<vmem>>, vector<1x32x64xbf16>
      %125 = vector.shape_cast %124 : vector<1x32x64xbf16> to vector<32x64xbf16>
      %cst_102 = arith.constant dense<0.000000e+00> : vector<10x64xf32>
      %126 = tpu.matmul %123, %125, %cst_102 {dimension_numbers = #tpu.dot_dimension_numbers<[1], [0], [0], [1], [0, 0, 1, 1], [], []>} : vector<10x32xbf16>, vector<32x64xbf16>, vector<10x64xf32> -> vector<10x64xf32>
      %127 = arith.addf %119, %126 : vector<10x64xf32>
      %c2_i32_103 = arith.constant 2 : i32
      %128 = arith.addi %14, %c2_i32_103 : i32
      %c0_104 = arith.constant 0 : index
      %129 = arith.index_cast %128 : i32 to index
      %c4_105 = arith.constant 4 : index
      %c0_106 = arith.constant 0 : index
      %130 = vector.load %arg1[%c0_104, %129, %c4_105, %c0_106] : memref<1x14x14x32xbf16, #tpu.memory_space<vmem>>, vector<1x1x10x32xbf16>
      %131 = vector.shape_cast %130 : vector<1x1x10x32xbf16> to vector<10x32xbf16>
      %c14 = arith.constant 14 : index
      %c0_107 = arith.constant 0 : index
      %c0_108 = arith.constant 0 : index
      %132 = vector.load %arg2[%c14, %c0_107, %c0_108] : memref<25x32x64xbf16, #tpu.memory_space<vmem>>, vector<1x32x64xbf16>
      %133 = vector.shape_cast %132 : vector<1x32x64xbf16> to vector<32x64xbf16>
      %cst_109 = arith.constant dense<0.000000e+00> : vector<10x64xf32>
      %134 = tpu.matmul %131, %133, %cst_109 {dimension_numbers = #tpu.dot_dimension_numbers<[1], [0], [0], [1], [0, 0, 1, 1], [], []>} : vector<10x32xbf16>, vector<32x64xbf16>, vector<10x64xf32> -> vector<10x64xf32>
      %135 = arith.addf %127, %134 : vector<10x64xf32>
      %c3_i32 = arith.constant 3 : i32
      %136 = arith.addi %14, %c3_i32 : i32
      %c0_110 = arith.constant 0 : index
      %137 = arith.index_cast %136 : i32 to index
      %c0_111 = arith.constant 0 : index
      %c0_112 = arith.constant 0 : index
      %138 = vector.load %arg1[%c0_110, %137, %c0_111, %c0_112] : memref<1x14x14x32xbf16, #tpu.memory_space<vmem>>, vector<1x1x10x32xbf16>
      %139 = vector.shape_cast %138 : vector<1x1x10x32xbf16> to vector<10x32xbf16>
      %c15 = arith.constant 15 : index
      %c0_113 = arith.constant 0 : index
      %c0_114 = arith.constant 0 : index
      %140 = vector.load %arg2[%c15, %c0_113, %c0_114] : memref<25x32x64xbf16, #tpu.memory_space<vmem>>, vector<1x32x64xbf16>
      %141 = vector.shape_cast %140 : vector<1x32x64xbf16> to vector<32x64xbf16>
      %cst_115 = arith.constant dense<0.000000e+00> : vector<10x64xf32>
      %142 = tpu.matmul %139, %141, %cst_115 {dimension_numbers = #tpu.dot_dimension_numbers<[1], [0], [0], [1], [0, 0, 1, 1], [], []>} : vector<10x32xbf16>, vector<32x64xbf16>, vector<10x64xf32> -> vector<10x64xf32>
      %143 = arith.addf %135, %142 : vector<10x64xf32>
      %c3_i32_116 = arith.constant 3 : i32
      %144 = arith.addi %14, %c3_i32_116 : i32
      %c0_117 = arith.constant 0 : index
      %145 = arith.index_cast %144 : i32 to index
      %c1_118 = arith.constant 1 : index
      %c0_119 = arith.constant 0 : index
      %146 = vector.load %arg1[%c0_117, %145, %c1_118, %c0_119] : memref<1x14x14x32xbf16, #tpu.memory_space<vmem>>, vector<1x1x10x32xbf16>
      %147 = vector.shape_cast %146 : vector<1x1x10x32xbf16> to vector<10x32xbf16>
      %c16 = arith.constant 16 : index
      %c0_120 = arith.constant 0 : index
      %c0_121 = arith.constant 0 : index
      %148 = vector.load %arg2[%c16, %c0_120, %c0_121] : memref<25x32x64xbf16, #tpu.memory_space<vmem>>, vector<1x32x64xbf16>
      %149 = vector.shape_cast %148 : vector<1x32x64xbf16> to vector<32x64xbf16>
      %cst_122 = arith.constant dense<0.000000e+00> : vector<10x64xf32>
      %150 = tpu.matmul %147, %149, %cst_122 {dimension_numbers = #tpu.dot_dimension_numbers<[1], [0], [0], [1], [0, 0, 1, 1], [], []>} : vector<10x32xbf16>, vector<32x64xbf16>, vector<10x64xf32> -> vector<10x64xf32>
      %151 = arith.addf %143, %150 : vector<10x64xf32>
      %c3_i32_123 = arith.constant 3 : i32
      %152 = arith.addi %14, %c3_i32_123 : i32
      %c0_124 = arith.constant 0 : index
      %153 = arith.index_cast %152 : i32 to index
      %c2_125 = arith.constant 2 : index
      %c0_126 = arith.constant 0 : index
      %154 = vector.load %arg1[%c0_124, %153, %c2_125, %c0_126] : memref<1x14x14x32xbf16, #tpu.memory_space<vmem>>, vector<1x1x10x32xbf16>
      %155 = vector.shape_cast %154 : vector<1x1x10x32xbf16> to vector<10x32xbf16>
      %c17 = arith.constant 17 : index
      %c0_127 = arith.constant 0 : index
      %c0_128 = arith.constant 0 : index
      %156 = vector.load %arg2[%c17, %c0_127, %c0_128] : memref<25x32x64xbf16, #tpu.memory_space<vmem>>, vector<1x32x64xbf16>
      %157 = vector.shape_cast %156 : vector<1x32x64xbf16> to vector<32x64xbf16>
      %cst_129 = arith.constant dense<0.000000e+00> : vector<10x64xf32>
      %158 = tpu.matmul %155, %157, %cst_129 {dimension_numbers = #tpu.dot_dimension_numbers<[1], [0], [0], [1], [0, 0, 1, 1], [], []>} : vector<10x32xbf16>, vector<32x64xbf16>, vector<10x64xf32> -> vector<10x64xf32>
      %159 = arith.addf %151, %158 : vector<10x64xf32>
      %c3_i32_130 = arith.constant 3 : i32
      %160 = arith.addi %14, %c3_i32_130 : i32
      %c0_131 = arith.constant 0 : index
      %161 = arith.index_cast %160 : i32 to index
      %c3_132 = arith.constant 3 : index
      %c0_133 = arith.constant 0 : index
      %162 = vector.load %arg1[%c0_131, %161, %c3_132, %c0_133] : memref<1x14x14x32xbf16, #tpu.memory_space<vmem>>, vector<1x1x10x32xbf16>
      %163 = vector.shape_cast %162 : vector<1x1x10x32xbf16> to vector<10x32xbf16>
      %c18 = arith.constant 18 : index
      %c0_134 = arith.constant 0 : index
      %c0_135 = arith.constant 0 : index
      %164 = vector.load %arg2[%c18, %c0_134, %c0_135] : memref<25x32x64xbf16, #tpu.memory_space<vmem>>, vector<1x32x64xbf16>
      %165 = vector.shape_cast %164 : vector<1x32x64xbf16> to vector<32x64xbf16>
      %cst_136 = arith.constant dense<0.000000e+00> : vector<10x64xf32>
      %166 = tpu.matmul %163, %165, %cst_136 {dimension_numbers = #tpu.dot_dimension_numbers<[1], [0], [0], [1], [0, 0, 1, 1], [], []>} : vector<10x32xbf16>, vector<32x64xbf16>, vector<10x64xf32> -> vector<10x64xf32>
      %167 = arith.addf %159, %166 : vector<10x64xf32>
      %c3_i32_137 = arith.constant 3 : i32
      %168 = arith.addi %14, %c3_i32_137 : i32
      %c0_138 = arith.constant 0 : index
      %169 = arith.index_cast %168 : i32 to index
      %c4_139 = arith.constant 4 : index
      %c0_140 = arith.constant 0 : index
      %170 = vector.load %arg1[%c0_138, %169, %c4_139, %c0_140] : memref<1x14x14x32xbf16, #tpu.memory_space<vmem>>, vector<1x1x10x32xbf16>
      %171 = vector.shape_cast %170 : vector<1x1x10x32xbf16> to vector<10x32xbf16>
      %c19 = arith.constant 19 : index
      %c0_141 = arith.constant 0 : index
      %c0_142 = arith.constant 0 : index
      %172 = vector.load %arg2[%c19, %c0_141, %c0_142] : memref<25x32x64xbf16, #tpu.memory_space<vmem>>, vector<1x32x64xbf16>
      %173 = vector.shape_cast %172 : vector<1x32x64xbf16> to vector<32x64xbf16>
      %cst_143 = arith.constant dense<0.000000e+00> : vector<10x64xf32>
      %174 = tpu.matmul %171, %173, %cst_143 {dimension_numbers = #tpu.dot_dimension_numbers<[1], [0], [0], [1], [0, 0, 1, 1], [], []>} : vector<10x32xbf16>, vector<32x64xbf16>, vector<10x64xf32> -> vector<10x64xf32>
      %175 = arith.addf %167, %174 : vector<10x64xf32>
      %c4_i32 = arith.constant 4 : i32
      %176 = arith.addi %14, %c4_i32 : i32
      %c0_144 = arith.constant 0 : index
      %177 = arith.index_cast %176 : i32 to index
      %c0_145 = arith.constant 0 : index
      %c0_146 = arith.constant 0 : index
      %178 = vector.load %arg1[%c0_144, %177, %c0_145, %c0_146] : memref<1x14x14x32xbf16, #tpu.memory_space<vmem>>, vector<1x1x10x32xbf16>
      %179 = vector.shape_cast %178 : vector<1x1x10x32xbf16> to vector<10x32xbf16>
      %c20 = arith.constant 20 : index
      %c0_147 = arith.constant 0 : index
      %c0_148 = arith.constant 0 : index
      %180 = vector.load %arg2[%c20, %c0_147, %c0_148] : memref<25x32x64xbf16, #tpu.memory_space<vmem>>, vector<1x32x64xbf16>
      %181 = vector.shape_cast %180 : vector<1x32x64xbf16> to vector<32x64xbf16>
      %cst_149 = arith.constant dense<0.000000e+00> : vector<10x64xf32>
      %182 = tpu.matmul %179, %181, %cst_149 {dimension_numbers = #tpu.dot_dimension_numbers<[1], [0], [0], [1], [0, 0, 1, 1], [], []>} : vector<10x32xbf16>, vector<32x64xbf16>, vector<10x64xf32> -> vector<10x64xf32>
      %183 = arith.addf %175, %182 : vector<10x64xf32>
      %c4_i32_150 = arith.constant 4 : i32
      %184 = arith.addi %14, %c4_i32_150 : i32
      %c0_151 = arith.constant 0 : index
      %185 = arith.index_cast %184 : i32 to index
      %c1_152 = arith.constant 1 : index
      %c0_153 = arith.constant 0 : index
      %186 = vector.load %arg1[%c0_151, %185, %c1_152, %c0_153] : memref<1x14x14x32xbf16, #tpu.memory_space<vmem>>, vector<1x1x10x32xbf16>
      %187 = vector.shape_cast %186 : vector<1x1x10x32xbf16> to vector<10x32xbf16>
      %c21 = arith.constant 21 : index
      %c0_154 = arith.constant 0 : index
      %c0_155 = arith.constant 0 : index
      %188 = vector.load %arg2[%c21, %c0_154, %c0_155] : memref<25x32x64xbf16, #tpu.memory_space<vmem>>, vector<1x32x64xbf16>
      %189 = vector.shape_cast %188 : vector<1x32x64xbf16> to vector<32x64xbf16>
      %cst_156 = arith.constant dense<0.000000e+00> : vector<10x64xf32>
      %190 = tpu.matmul %187, %189, %cst_156 {dimension_numbers = #tpu.dot_dimension_numbers<[1], [0], [0], [1], [0, 0, 1, 1], [], []>} : vector<10x32xbf16>, vector<32x64xbf16>, vector<10x64xf32> -> vector<10x64xf32>
      %191 = arith.addf %183, %190 : vector<10x64xf32>
      %c4_i32_157 = arith.constant 4 : i32
      %192 = arith.addi %14, %c4_i32_157 : i32
      %c0_158 = arith.constant 0 : index
      %193 = arith.index_cast %192 : i32 to index
      %c2_159 = arith.constant 2 : index
      %c0_160 = arith.constant 0 : index
      %194 = vector.load %arg1[%c0_158, %193, %c2_159, %c0_160] : memref<1x14x14x32xbf16, #tpu.memory_space<vmem>>, vector<1x1x10x32xbf16>
      %195 = vector.shape_cast %194 : vector<1x1x10x32xbf16> to vector<10x32xbf16>
      %c22 = arith.constant 22 : index
      %c0_161 = arith.constant 0 : index
      %c0_162 = arith.constant 0 : index
      %196 = vector.load %arg2[%c22, %c0_161, %c0_162] : memref<25x32x64xbf16, #tpu.memory_space<vmem>>, vector<1x32x64xbf16>
      %197 = vector.shape_cast %196 : vector<1x32x64xbf16> to vector<32x64xbf16>
      %cst_163 = arith.constant dense<0.000000e+00> : vector<10x64xf32>
      %198 = tpu.matmul %195, %197, %cst_163 {dimension_numbers = #tpu.dot_dimension_numbers<[1], [0], [0], [1], [0, 0, 1, 1], [], []>} : vector<10x32xbf16>, vector<32x64xbf16>, vector<10x64xf32> -> vector<10x64xf32>
      %199 = arith.addf %191, %198 : vector<10x64xf32>
      %c4_i32_164 = arith.constant 4 : i32
      %200 = arith.addi %14, %c4_i32_164 : i32
      %c0_165 = arith.constant 0 : index
      %201 = arith.index_cast %200 : i32 to index
      %c3_166 = arith.constant 3 : index
      %c0_167 = arith.constant 0 : index
      %202 = vector.load %arg1[%c0_165, %201, %c3_166, %c0_167] : memref<1x14x14x32xbf16, #tpu.memory_space<vmem>>, vector<1x1x10x32xbf16>
      %203 = vector.shape_cast %202 : vector<1x1x10x32xbf16> to vector<10x32xbf16>
      %c23 = arith.constant 23 : index
      %c0_168 = arith.constant 0 : index
      %c0_169 = arith.constant 0 : index
      %204 = vector.load %arg2[%c23, %c0_168, %c0_169] : memref<25x32x64xbf16, #tpu.memory_space<vmem>>, vector<1x32x64xbf16>
      %205 = vector.shape_cast %204 : vector<1x32x64xbf16> to vector<32x64xbf16>
      %cst_170 = arith.constant dense<0.000000e+00> : vector<10x64xf32>
      %206 = tpu.matmul %203, %205, %cst_170 {dimension_numbers = #tpu.dot_dimension_numbers<[1], [0], [0], [1], [0, 0, 1, 1], [], []>} : vector<10x32xbf16>, vector<32x64xbf16>, vector<10x64xf32> -> vector<10x64xf32>
      %207 = arith.addf %199, %206 : vector<10x64xf32>
      %c4_i32_171 = arith.constant 4 : i32
      %208 = arith.addi %14, %c4_i32_171 : i32
      %c0_172 = arith.constant 0 : index
      %209 = arith.index_cast %208 : i32 to index
      %c4_173 = arith.constant 4 : index
      %c0_174 = arith.constant 0 : index
      %210 = vector.load %arg1[%c0_172, %209, %c4_173, %c0_174] : memref<1x14x14x32xbf16, #tpu.memory_space<vmem>>, vector<1x1x10x32xbf16>
      %211 = vector.shape_cast %210 : vector<1x1x10x32xbf16> to vector<10x32xbf16>
      %c24 = arith.constant 24 : index
      %c0_175 = arith.constant 0 : index
      %c0_176 = arith.constant 0 : index
      %212 = vector.load %arg2[%c24, %c0_175, %c0_176] : memref<25x32x64xbf16, #tpu.memory_space<vmem>>, vector<1x32x64xbf16>
      %213 = vector.shape_cast %212 : vector<1x32x64xbf16> to vector<32x64xbf16>
      %cst_177 = arith.constant dense<0.000000e+00> : vector<10x64xf32>
      %214 = tpu.matmul %211, %213, %cst_177 {dimension_numbers = #tpu.dot_dimension_numbers<[1], [0], [0], [1], [0, 0, 1, 1], [], []>} : vector<10x32xbf16>, vector<32x64xbf16>, vector<10x64xf32> -> vector<10x64xf32>
      %215 = arith.addf %207, %214 : vector<10x64xf32>
      %216 = vector.broadcast %0 : vector<1x64xf32> to vector<10x64xf32>
      %217 = arith.addf %215, %216 : vector<10x64xf32>
      %cst_178 = arith.constant 0.000000e+00 : f32
      %218 = vector.broadcast %cst_178 : f32 to vector<10x64xf32>
      %219 = arith.maximumf %217, %218 : vector<10x64xf32>
      %c2_i32_179 = arith.constant 2 : i32
      %220 = arith.muli %c2_i32_179, %arg5 : i32
      %c1_i32_180 = arith.constant 1 : i32
      %221 = arith.addi %220, %c1_i32_180 : i32
      %cst_181 = arith.constant 0.000000e+00 : f32
      %222 = vector.broadcast %cst_181 : f32 to vector<10x64xf32>
      %c0_i32_182 = arith.constant 0 : i32
      %223 = arith.addi %221, %c0_i32_182 : i32
      %c0_183 = arith.constant 0 : index
      %224 = arith.index_cast %223 : i32 to index
      %c0_184 = arith.constant 0 : index
      %c0_185 = arith.constant 0 : index
      %225 = vector.load %arg1[%c0_183, %224, %c0_184, %c0_185] : memref<1x14x14x32xbf16, #tpu.memory_space<vmem>>, vector<1x1x10x32xbf16>
      %226 = vector.shape_cast %225 : vector<1x1x10x32xbf16> to vector<10x32xbf16>
      %c0_186 = arith.constant 0 : index
      %c0_187 = arith.constant 0 : index
      %c0_188 = arith.constant 0 : index
      %227 = vector.load %arg2[%c0_186, %c0_187, %c0_188] : memref<25x32x64xbf16, #tpu.memory_space<vmem>>, vector<1x32x64xbf16>
      %228 = vector.shape_cast %227 : vector<1x32x64xbf16> to vector<32x64xbf16>
      %cst_189 = arith.constant dense<0.000000e+00> : vector<10x64xf32>
      %229 = tpu.matmul %226, %228, %cst_189 {dimension_numbers = #tpu.dot_dimension_numbers<[1], [0], [0], [1], [0, 0, 1, 1], [], []>} : vector<10x32xbf16>, vector<32x64xbf16>, vector<10x64xf32> -> vector<10x64xf32>
      %230 = arith.addf %222, %229 : vector<10x64xf32>
      %c0_i32_190 = arith.constant 0 : i32
      %231 = arith.addi %221, %c0_i32_190 : i32
      %c0_191 = arith.constant 0 : index
      %232 = arith.index_cast %231 : i32 to index
      %c1_192 = arith.constant 1 : index
      %c0_193 = arith.constant 0 : index
      %233 = vector.load %arg1[%c0_191, %232, %c1_192, %c0_193] : memref<1x14x14x32xbf16, #tpu.memory_space<vmem>>, vector<1x1x10x32xbf16>
      %234 = vector.shape_cast %233 : vector<1x1x10x32xbf16> to vector<10x32xbf16>
      %c1_194 = arith.constant 1 : index
      %c0_195 = arith.constant 0 : index
      %c0_196 = arith.constant 0 : index
      %235 = vector.load %arg2[%c1_194, %c0_195, %c0_196] : memref<25x32x64xbf16, #tpu.memory_space<vmem>>, vector<1x32x64xbf16>
      %236 = vector.shape_cast %235 : vector<1x32x64xbf16> to vector<32x64xbf16>
      %cst_197 = arith.constant dense<0.000000e+00> : vector<10x64xf32>
      %237 = tpu.matmul %234, %236, %cst_197 {dimension_numbers = #tpu.dot_dimension_numbers<[1], [0], [0], [1], [0, 0, 1, 1], [], []>} : vector<10x32xbf16>, vector<32x64xbf16>, vector<10x64xf32> -> vector<10x64xf32>
      %238 = arith.addf %230, %237 : vector<10x64xf32>
      %c0_i32_198 = arith.constant 0 : i32
      %239 = arith.addi %221, %c0_i32_198 : i32
      %c0_199 = arith.constant 0 : index
      %240 = arith.index_cast %239 : i32 to index
      %c2_200 = arith.constant 2 : index
      %c0_201 = arith.constant 0 : index
      %241 = vector.load %arg1[%c0_199, %240, %c2_200, %c0_201] : memref<1x14x14x32xbf16, #tpu.memory_space<vmem>>, vector<1x1x10x32xbf16>
      %242 = vector.shape_cast %241 : vector<1x1x10x32xbf16> to vector<10x32xbf16>
      %c2_202 = arith.constant 2 : index
      %c0_203 = arith.constant 0 : index
      %c0_204 = arith.constant 0 : index
      %243 = vector.load %arg2[%c2_202, %c0_203, %c0_204] : memref<25x32x64xbf16, #tpu.memory_space<vmem>>, vector<1x32x64xbf16>
      %244 = vector.shape_cast %243 : vector<1x32x64xbf16> to vector<32x64xbf16>
      %cst_205 = arith.constant dense<0.000000e+00> : vector<10x64xf32>
      %245 = tpu.matmul %242, %244, %cst_205 {dimension_numbers = #tpu.dot_dimension_numbers<[1], [0], [0], [1], [0, 0, 1, 1], [], []>} : vector<10x32xbf16>, vector<32x64xbf16>, vector<10x64xf32> -> vector<10x64xf32>
      %246 = arith.addf %238, %245 : vector<10x64xf32>
      %c0_i32_206 = arith.constant 0 : i32
      %247 = arith.addi %221, %c0_i32_206 : i32
      %c0_207 = arith.constant 0 : index
      %248 = arith.index_cast %247 : i32 to index
      %c3_208 = arith.constant 3 : index
      %c0_209 = arith.constant 0 : index
      %249 = vector.load %arg1[%c0_207, %248, %c3_208, %c0_209] : memref<1x14x14x32xbf16, #tpu.memory_space<vmem>>, vector<1x1x10x32xbf16>
      %250 = vector.shape_cast %249 : vector<1x1x10x32xbf16> to vector<10x32xbf16>
      %c3_210 = arith.constant 3 : index
      %c0_211 = arith.constant 0 : index
      %c0_212 = arith.constant 0 : index
      %251 = vector.load %arg2[%c3_210, %c0_211, %c0_212] : memref<25x32x64xbf16, #tpu.memory_space<vmem>>, vector<1x32x64xbf16>
      %252 = vector.shape_cast %251 : vector<1x32x64xbf16> to vector<32x64xbf16>
      %cst_213 = arith.constant dense<0.000000e+00> : vector<10x64xf32>
      %253 = tpu.matmul %250, %252, %cst_213 {dimension_numbers = #tpu.dot_dimension_numbers<[1], [0], [0], [1], [0, 0, 1, 1], [], []>} : vector<10x32xbf16>, vector<32x64xbf16>, vector<10x64xf32> -> vector<10x64xf32>
      %254 = arith.addf %246, %253 : vector<10x64xf32>
      %c0_i32_214 = arith.constant 0 : i32
      %255 = arith.addi %221, %c0_i32_214 : i32
      %c0_215 = arith.constant 0 : index
      %256 = arith.index_cast %255 : i32 to index
      %c4_216 = arith.constant 4 : index
      %c0_217 = arith.constant 0 : index
      %257 = vector.load %arg1[%c0_215, %256, %c4_216, %c0_217] : memref<1x14x14x32xbf16, #tpu.memory_space<vmem>>, vector<1x1x10x32xbf16>
      %258 = vector.shape_cast %257 : vector<1x1x10x32xbf16> to vector<10x32xbf16>
      %c4_218 = arith.constant 4 : index
      %c0_219 = arith.constant 0 : index
      %c0_220 = arith.constant 0 : index
      %259 = vector.load %arg2[%c4_218, %c0_219, %c0_220] : memref<25x32x64xbf16, #tpu.memory_space<vmem>>, vector<1x32x64xbf16>
      %260 = vector.shape_cast %259 : vector<1x32x64xbf16> to vector<32x64xbf16>
      %cst_221 = arith.constant dense<0.000000e+00> : vector<10x64xf32>
      %261 = tpu.matmul %258, %260, %cst_221 {dimension_numbers = #tpu.dot_dimension_numbers<[1], [0], [0], [1], [0, 0, 1, 1], [], []>} : vector<10x32xbf16>, vector<32x64xbf16>, vector<10x64xf32> -> vector<10x64xf32>
      %262 = arith.addf %254, %261 : vector<10x64xf32>
      %c1_i32_222 = arith.constant 1 : i32
      %263 = arith.addi %221, %c1_i32_222 : i32
      %c0_223 = arith.constant 0 : index
      %264 = arith.index_cast %263 : i32 to index
      %c0_224 = arith.constant 0 : index
      %c0_225 = arith.constant 0 : index
      %265 = vector.load %arg1[%c0_223, %264, %c0_224, %c0_225] : memref<1x14x14x32xbf16, #tpu.memory_space<vmem>>, vector<1x1x10x32xbf16>
      %266 = vector.shape_cast %265 : vector<1x1x10x32xbf16> to vector<10x32xbf16>
      %c5_226 = arith.constant 5 : index
      %c0_227 = arith.constant 0 : index
      %c0_228 = arith.constant 0 : index
      %267 = vector.load %arg2[%c5_226, %c0_227, %c0_228] : memref<25x32x64xbf16, #tpu.memory_space<vmem>>, vector<1x32x64xbf16>
      %268 = vector.shape_cast %267 : vector<1x32x64xbf16> to vector<32x64xbf16>
      %cst_229 = arith.constant dense<0.000000e+00> : vector<10x64xf32>
      %269 = tpu.matmul %266, %268, %cst_229 {dimension_numbers = #tpu.dot_dimension_numbers<[1], [0], [0], [1], [0, 0, 1, 1], [], []>} : vector<10x32xbf16>, vector<32x64xbf16>, vector<10x64xf32> -> vector<10x64xf32>
      %270 = arith.addf %262, %269 : vector<10x64xf32>
      %c1_i32_230 = arith.constant 1 : i32
      %271 = arith.addi %221, %c1_i32_230 : i32
      %c0_231 = arith.constant 0 : index
      %272 = arith.index_cast %271 : i32 to index
      %c1_232 = arith.constant 1 : index
      %c0_233 = arith.constant 0 : index
      %273 = vector.load %arg1[%c0_231, %272, %c1_232, %c0_233] : memref<1x14x14x32xbf16, #tpu.memory_space<vmem>>, vector<1x1x10x32xbf16>
      %274 = vector.shape_cast %273 : vector<1x1x10x32xbf16> to vector<10x32xbf16>
      %c6_234 = arith.constant 6 : index
      %c0_235 = arith.constant 0 : index
      %c0_236 = arith.constant 0 : index
      %275 = vector.load %arg2[%c6_234, %c0_235, %c0_236] : memref<25x32x64xbf16, #tpu.memory_space<vmem>>, vector<1x32x64xbf16>
      %276 = vector.shape_cast %275 : vector<1x32x64xbf16> to vector<32x64xbf16>
      %cst_237 = arith.constant dense<0.000000e+00> : vector<10x64xf32>
      %277 = tpu.matmul %274, %276, %cst_237 {dimension_numbers = #tpu.dot_dimension_numbers<[1], [0], [0], [1], [0, 0, 1, 1], [], []>} : vector<10x32xbf16>, vector<32x64xbf16>, vector<10x64xf32> -> vector<10x64xf32>
      %278 = arith.addf %270, %277 : vector<10x64xf32>
      %c1_i32_238 = arith.constant 1 : i32
      %279 = arith.addi %221, %c1_i32_238 : i32
      %c0_239 = arith.constant 0 : index
      %280 = arith.index_cast %279 : i32 to index
      %c2_240 = arith.constant 2 : index
      %c0_241 = arith.constant 0 : index
      %281 = vector.load %arg1[%c0_239, %280, %c2_240, %c0_241] : memref<1x14x14x32xbf16, #tpu.memory_space<vmem>>, vector<1x1x10x32xbf16>
      %282 = vector.shape_cast %281 : vector<1x1x10x32xbf16> to vector<10x32xbf16>
      %c7_242 = arith.constant 7 : index
      %c0_243 = arith.constant 0 : index
      %c0_244 = arith.constant 0 : index
      %283 = vector.load %arg2[%c7_242, %c0_243, %c0_244] : memref<25x32x64xbf16, #tpu.memory_space<vmem>>, vector<1x32x64xbf16>
      %284 = vector.shape_cast %283 : vector<1x32x64xbf16> to vector<32x64xbf16>
      %cst_245 = arith.constant dense<0.000000e+00> : vector<10x64xf32>
      %285 = tpu.matmul %282, %284, %cst_245 {dimension_numbers = #tpu.dot_dimension_numbers<[1], [0], [0], [1], [0, 0, 1, 1], [], []>} : vector<10x32xbf16>, vector<32x64xbf16>, vector<10x64xf32> -> vector<10x64xf32>
      %286 = arith.addf %278, %285 : vector<10x64xf32>
      %c1_i32_246 = arith.constant 1 : i32
      %287 = arith.addi %221, %c1_i32_246 : i32
      %c0_247 = arith.constant 0 : index
      %288 = arith.index_cast %287 : i32 to index
      %c3_248 = arith.constant 3 : index
      %c0_249 = arith.constant 0 : index
      %289 = vector.load %arg1[%c0_247, %288, %c3_248, %c0_249] : memref<1x14x14x32xbf16, #tpu.memory_space<vmem>>, vector<1x1x10x32xbf16>
      %290 = vector.shape_cast %289 : vector<1x1x10x32xbf16> to vector<10x32xbf16>
      %c8_250 = arith.constant 8 : index
      %c0_251 = arith.constant 0 : index
      %c0_252 = arith.constant 0 : index
      %291 = vector.load %arg2[%c8_250, %c0_251, %c0_252] : memref<25x32x64xbf16, #tpu.memory_space<vmem>>, vector<1x32x64xbf16>
      %292 = vector.shape_cast %291 : vector<1x32x64xbf16> to vector<32x64xbf16>
      %cst_253 = arith.constant dense<0.000000e+00> : vector<10x64xf32>
      %293 = tpu.matmul %290, %292, %cst_253 {dimension_numbers = #tpu.dot_dimension_numbers<[1], [0], [0], [1], [0, 0, 1, 1], [], []>} : vector<10x32xbf16>, vector<32x64xbf16>, vector<10x64xf32> -> vector<10x64xf32>
      %294 = arith.addf %286, %293 : vector<10x64xf32>
      %c1_i32_254 = arith.constant 1 : i32
      %295 = arith.addi %221, %c1_i32_254 : i32
      %c0_255 = arith.constant 0 : index
      %296 = arith.index_cast %295 : i32 to index
      %c4_256 = arith.constant 4 : index
      %c0_257 = arith.constant 0 : index
      %297 = vector.load %arg1[%c0_255, %296, %c4_256, %c0_257] : memref<1x14x14x32xbf16, #tpu.memory_space<vmem>>, vector<1x1x10x32xbf16>
      %298 = vector.shape_cast %297 : vector<1x1x10x32xbf16> to vector<10x32xbf16>
      %c9_258 = arith.constant 9 : index
      %c0_259 = arith.constant 0 : index
      %c0_260 = arith.constant 0 : index
      %299 = vector.load %arg2[%c9_258, %c0_259, %c0_260] : memref<25x32x64xbf16, #tpu.memory_space<vmem>>, vector<1x32x64xbf16>
      %300 = vector.shape_cast %299 : vector<1x32x64xbf16> to vector<32x64xbf16>
      %cst_261 = arith.constant dense<0.000000e+00> : vector<10x64xf32>
      %301 = tpu.matmul %298, %300, %cst_261 {dimension_numbers = #tpu.dot_dimension_numbers<[1], [0], [0], [1], [0, 0, 1, 1], [], []>} : vector<10x32xbf16>, vector<32x64xbf16>, vector<10x64xf32> -> vector<10x64xf32>
      %302 = arith.addf %294, %301 : vector<10x64xf32>
      %c2_i32_262 = arith.constant 2 : i32
      %303 = arith.addi %221, %c2_i32_262 : i32
      %c0_263 = arith.constant 0 : index
      %304 = arith.index_cast %303 : i32 to index
      %c0_264 = arith.constant 0 : index
      %c0_265 = arith.constant 0 : index
      %305 = vector.load %arg1[%c0_263, %304, %c0_264, %c0_265] : memref<1x14x14x32xbf16, #tpu.memory_space<vmem>>, vector<1x1x10x32xbf16>
      %306 = vector.shape_cast %305 : vector<1x1x10x32xbf16> to vector<10x32xbf16>
      %c10_266 = arith.constant 10 : index
      %c0_267 = arith.constant 0 : index
      %c0_268 = arith.constant 0 : index
      %307 = vector.load %arg2[%c10_266, %c0_267, %c0_268] : memref<25x32x64xbf16, #tpu.memory_space<vmem>>, vector<1x32x64xbf16>
      %308 = vector.shape_cast %307 : vector<1x32x64xbf16> to vector<32x64xbf16>
      %cst_269 = arith.constant dense<0.000000e+00> : vector<10x64xf32>
      %309 = tpu.matmul %306, %308, %cst_269 {dimension_numbers = #tpu.dot_dimension_numbers<[1], [0], [0], [1], [0, 0, 1, 1], [], []>} : vector<10x32xbf16>, vector<32x64xbf16>, vector<10x64xf32> -> vector<10x64xf32>
      %310 = arith.addf %302, %309 : vector<10x64xf32>
      %c2_i32_270 = arith.constant 2 : i32
      %311 = arith.addi %221, %c2_i32_270 : i32
      %c0_271 = arith.constant 0 : index
      %312 = arith.index_cast %311 : i32 to index
      %c1_272 = arith.constant 1 : index
      %c0_273 = arith.constant 0 : index
      %313 = vector.load %arg1[%c0_271, %312, %c1_272, %c0_273] : memref<1x14x14x32xbf16, #tpu.memory_space<vmem>>, vector<1x1x10x32xbf16>
      %314 = vector.shape_cast %313 : vector<1x1x10x32xbf16> to vector<10x32xbf16>
      %c11_274 = arith.constant 11 : index
      %c0_275 = arith.constant 0 : index
      %c0_276 = arith.constant 0 : index
      %315 = vector.load %arg2[%c11_274, %c0_275, %c0_276] : memref<25x32x64xbf16, #tpu.memory_space<vmem>>, vector<1x32x64xbf16>
      %316 = vector.shape_cast %315 : vector<1x32x64xbf16> to vector<32x64xbf16>
      %cst_277 = arith.constant dense<0.000000e+00> : vector<10x64xf32>
      %317 = tpu.matmul %314, %316, %cst_277 {dimension_numbers = #tpu.dot_dimension_numbers<[1], [0], [0], [1], [0, 0, 1, 1], [], []>} : vector<10x32xbf16>, vector<32x64xbf16>, vector<10x64xf32> -> vector<10x64xf32>
      %318 = arith.addf %310, %317 : vector<10x64xf32>
      %c2_i32_278 = arith.constant 2 : i32
      %319 = arith.addi %221, %c2_i32_278 : i32
      %c0_279 = arith.constant 0 : index
      %320 = arith.index_cast %319 : i32 to index
      %c2_280 = arith.constant 2 : index
      %c0_281 = arith.constant 0 : index
      %321 = vector.load %arg1[%c0_279, %320, %c2_280, %c0_281] : memref<1x14x14x32xbf16, #tpu.memory_space<vmem>>, vector<1x1x10x32xbf16>
      %322 = vector.shape_cast %321 : vector<1x1x10x32xbf16> to vector<10x32xbf16>
      %c12_282 = arith.constant 12 : index
      %c0_283 = arith.constant 0 : index
      %c0_284 = arith.constant 0 : index
      %323 = vector.load %arg2[%c12_282, %c0_283, %c0_284] : memref<25x32x64xbf16, #tpu.memory_space<vmem>>, vector<1x32x64xbf16>
      %324 = vector.shape_cast %323 : vector<1x32x64xbf16> to vector<32x64xbf16>
      %cst_285 = arith.constant dense<0.000000e+00> : vector<10x64xf32>
      %325 = tpu.matmul %322, %324, %cst_285 {dimension_numbers = #tpu.dot_dimension_numbers<[1], [0], [0], [1], [0, 0, 1, 1], [], []>} : vector<10x32xbf16>, vector<32x64xbf16>, vector<10x64xf32> -> vector<10x64xf32>
      %326 = arith.addf %318, %325 : vector<10x64xf32>
      %c2_i32_286 = arith.constant 2 : i32
      %327 = arith.addi %221, %c2_i32_286 : i32
      %c0_287 = arith.constant 0 : index
      %328 = arith.index_cast %327 : i32 to index
      %c3_288 = arith.constant 3 : index
      %c0_289 = arith.constant 0 : index
      %329 = vector.load %arg1[%c0_287, %328, %c3_288, %c0_289] : memref<1x14x14x32xbf16, #tpu.memory_space<vmem>>, vector<1x1x10x32xbf16>
      %330 = vector.shape_cast %329 : vector<1x1x10x32xbf16> to vector<10x32xbf16>
      %c13_290 = arith.constant 13 : index
      %c0_291 = arith.constant 0 : index
      %c0_292 = arith.constant 0 : index
      %331 = vector.load %arg2[%c13_290, %c0_291, %c0_292] : memref<25x32x64xbf16, #tpu.memory_space<vmem>>, vector<1x32x64xbf16>
      %332 = vector.shape_cast %331 : vector<1x32x64xbf16> to vector<32x64xbf16>
      %cst_293 = arith.constant dense<0.000000e+00> : vector<10x64xf32>
      %333 = tpu.matmul %330, %332, %cst_293 {dimension_numbers = #tpu.dot_dimension_numbers<[1], [0], [0], [1], [0, 0, 1, 1], [], []>} : vector<10x32xbf16>, vector<32x64xbf16>, vector<10x64xf32> -> vector<10x64xf32>
      %334 = arith.addf %326, %333 : vector<10x64xf32>
      %c2_i32_294 = arith.constant 2 : i32
      %335 = arith.addi %221, %c2_i32_294 : i32
      %c0_295 = arith.constant 0 : index
      %336 = arith.index_cast %335 : i32 to index
      %c4_296 = arith.constant 4 : index
      %c0_297 = arith.constant 0 : index
      %337 = vector.load %arg1[%c0_295, %336, %c4_296, %c0_297] : memref<1x14x14x32xbf16, #tpu.memory_space<vmem>>, vector<1x1x10x32xbf16>
      %338 = vector.shape_cast %337 : vector<1x1x10x32xbf16> to vector<10x32xbf16>
      %c14_298 = arith.constant 14 : index
      %c0_299 = arith.constant 0 : index
      %c0_300 = arith.constant 0 : index
      %339 = vector.load %arg2[%c14_298, %c0_299, %c0_300] : memref<25x32x64xbf16, #tpu.memory_space<vmem>>, vector<1x32x64xbf16>
      %340 = vector.shape_cast %339 : vector<1x32x64xbf16> to vector<32x64xbf16>
      %cst_301 = arith.constant dense<0.000000e+00> : vector<10x64xf32>
      %341 = tpu.matmul %338, %340, %cst_301 {dimension_numbers = #tpu.dot_dimension_numbers<[1], [0], [0], [1], [0, 0, 1, 1], [], []>} : vector<10x32xbf16>, vector<32x64xbf16>, vector<10x64xf32> -> vector<10x64xf32>
      %342 = arith.addf %334, %341 : vector<10x64xf32>
      %c3_i32_302 = arith.constant 3 : i32
      %343 = arith.addi %221, %c3_i32_302 : i32
      %c0_303 = arith.constant 0 : index
      %344 = arith.index_cast %343 : i32 to index
      %c0_304 = arith.constant 0 : index
      %c0_305 = arith.constant 0 : index
      %345 = vector.load %arg1[%c0_303, %344, %c0_304, %c0_305] : memref<1x14x14x32xbf16, #tpu.memory_space<vmem>>, vector<1x1x10x32xbf16>
      %346 = vector.shape_cast %345 : vector<1x1x10x32xbf16> to vector<10x32xbf16>
      %c15_306 = arith.constant 15 : index
      %c0_307 = arith.constant 0 : index
      %c0_308 = arith.constant 0 : index
      %347 = vector.load %arg2[%c15_306, %c0_307, %c0_308] : memref<25x32x64xbf16, #tpu.memory_space<vmem>>, vector<1x32x64xbf16>
      %348 = vector.shape_cast %347 : vector<1x32x64xbf16> to vector<32x64xbf16>
      %cst_309 = arith.constant dense<0.000000e+00> : vector<10x64xf32>
      %349 = tpu.matmul %346, %348, %cst_309 {dimension_numbers = #tpu.dot_dimension_numbers<[1], [0], [0], [1], [0, 0, 1, 1], [], []>} : vector<10x32xbf16>, vector<32x64xbf16>, vector<10x64xf32> -> vector<10x64xf32>
      %350 = arith.addf %342, %349 : vector<10x64xf32>
      %c3_i32_310 = arith.constant 3 : i32
      %351 = arith.addi %221, %c3_i32_310 : i32
      %c0_311 = arith.constant 0 : index
      %352 = arith.index_cast %351 : i32 to index
      %c1_312 = arith.constant 1 : index
      %c0_313 = arith.constant 0 : index
      %353 = vector.load %arg1[%c0_311, %352, %c1_312, %c0_313] : memref<1x14x14x32xbf16, #tpu.memory_space<vmem>>, vector<1x1x10x32xbf16>
      %354 = vector.shape_cast %353 : vector<1x1x10x32xbf16> to vector<10x32xbf16>
      %c16_314 = arith.constant 16 : index
      %c0_315 = arith.constant 0 : index
      %c0_316 = arith.constant 0 : index
      %355 = vector.load %arg2[%c16_314, %c0_315, %c0_316] : memref<25x32x64xbf16, #tpu.memory_space<vmem>>, vector<1x32x64xbf16>
      %356 = vector.shape_cast %355 : vector<1x32x64xbf16> to vector<32x64xbf16>
      %cst_317 = arith.constant dense<0.000000e+00> : vector<10x64xf32>
      %357 = tpu.matmul %354, %356, %cst_317 {dimension_numbers = #tpu.dot_dimension_numbers<[1], [0], [0], [1], [0, 0, 1, 1], [], []>} : vector<10x32xbf16>, vector<32x64xbf16>, vector<10x64xf32> -> vector<10x64xf32>
      %358 = arith.addf %350, %357 : vector<10x64xf32>
      %c3_i32_318 = arith.constant 3 : i32
      %359 = arith.addi %221, %c3_i32_318 : i32
      %c0_319 = arith.constant 0 : index
      %360 = arith.index_cast %359 : i32 to index
      %c2_320 = arith.constant 2 : index
      %c0_321 = arith.constant 0 : index
      %361 = vector.load %arg1[%c0_319, %360, %c2_320, %c0_321] : memref<1x14x14x32xbf16, #tpu.memory_space<vmem>>, vector<1x1x10x32xbf16>
      %362 = vector.shape_cast %361 : vector<1x1x10x32xbf16> to vector<10x32xbf16>
      %c17_322 = arith.constant 17 : index
      %c0_323 = arith.constant 0 : index
      %c0_324 = arith.constant 0 : index
      %363 = vector.load %arg2[%c17_322, %c0_323, %c0_324] : memref<25x32x64xbf16, #tpu.memory_space<vmem>>, vector<1x32x64xbf16>
      %364 = vector.shape_cast %363 : vector<1x32x64xbf16> to vector<32x64xbf16>
      %cst_325 = arith.constant dense<0.000000e+00> : vector<10x64xf32>
      %365 = tpu.matmul %362, %364, %cst_325 {dimension_numbers = #tpu.dot_dimension_numbers<[1], [0], [0], [1], [0, 0, 1, 1], [], []>} : vector<10x32xbf16>, vector<32x64xbf16>, vector<10x64xf32> -> vector<10x64xf32>
      %366 = arith.addf %358, %365 : vector<10x64xf32>
      %c3_i32_326 = arith.constant 3 : i32
      %367 = arith.addi %221, %c3_i32_326 : i32
      %c0_327 = arith.constant 0 : index
      %368 = arith.index_cast %367 : i32 to index
      %c3_328 = arith.constant 3 : index
      %c0_329 = arith.constant 0 : index
      %369 = vector.load %arg1[%c0_327, %368, %c3_328, %c0_329] : memref<1x14x14x32xbf16, #tpu.memory_space<vmem>>, vector<1x1x10x32xbf16>
      %370 = vector.shape_cast %369 : vector<1x1x10x32xbf16> to vector<10x32xbf16>
      %c18_330 = arith.constant 18 : index
      %c0_331 = arith.constant 0 : index
      %c0_332 = arith.constant 0 : index
      %371 = vector.load %arg2[%c18_330, %c0_331, %c0_332] : memref<25x32x64xbf16, #tpu.memory_space<vmem>>, vector<1x32x64xbf16>
      %372 = vector.shape_cast %371 : vector<1x32x64xbf16> to vector<32x64xbf16>
      %cst_333 = arith.constant dense<0.000000e+00> : vector<10x64xf32>
      %373 = tpu.matmul %370, %372, %cst_333 {dimension_numbers = #tpu.dot_dimension_numbers<[1], [0], [0], [1], [0, 0, 1, 1], [], []>} : vector<10x32xbf16>, vector<32x64xbf16>, vector<10x64xf32> -> vector<10x64xf32>
      %374 = arith.addf %366, %373 : vector<10x64xf32>
      %c3_i32_334 = arith.constant 3 : i32
      %375 = arith.addi %221, %c3_i32_334 : i32
      %c0_335 = arith.constant 0 : index
      %376 = arith.index_cast %375 : i32 to index
      %c4_336 = arith.constant 4 : index
      %c0_337 = arith.constant 0 : index
      %377 = vector.load %arg1[%c0_335, %376, %c4_336, %c0_337] : memref<1x14x14x32xbf16, #tpu.memory_space<vmem>>, vector<1x1x10x32xbf16>
      %378 = vector.shape_cast %377 : vector<1x1x10x32xbf16> to vector<10x32xbf16>
      %c19_338 = arith.constant 19 : index
      %c0_339 = arith.constant 0 : index
      %c0_340 = arith.constant 0 : index
      %379 = vector.load %arg2[%c19_338, %c0_339, %c0_340] : memref<25x32x64xbf16, #tpu.memory_space<vmem>>, vector<1x32x64xbf16>
      %380 = vector.shape_cast %379 : vector<1x32x64xbf16> to vector<32x64xbf16>
      %cst_341 = arith.constant dense<0.000000e+00> : vector<10x64xf32>
      %381 = tpu.matmul %378, %380, %cst_341 {dimension_numbers = #tpu.dot_dimension_numbers<[1], [0], [0], [1], [0, 0, 1, 1], [], []>} : vector<10x32xbf16>, vector<32x64xbf16>, vector<10x64xf32> -> vector<10x64xf32>
      %382 = arith.addf %374, %381 : vector<10x64xf32>
      %c4_i32_342 = arith.constant 4 : i32
      %383 = arith.addi %221, %c4_i32_342 : i32
      %c0_343 = arith.constant 0 : index
      %384 = arith.index_cast %383 : i32 to index
      %c0_344 = arith.constant 0 : index
      %c0_345 = arith.constant 0 : index
      %385 = vector.load %arg1[%c0_343, %384, %c0_344, %c0_345] : memref<1x14x14x32xbf16, #tpu.memory_space<vmem>>, vector<1x1x10x32xbf16>
      %386 = vector.shape_cast %385 : vector<1x1x10x32xbf16> to vector<10x32xbf16>
      %c20_346 = arith.constant 20 : index
      %c0_347 = arith.constant 0 : index
      %c0_348 = arith.constant 0 : index
      %387 = vector.load %arg2[%c20_346, %c0_347, %c0_348] : memref<25x32x64xbf16, #tpu.memory_space<vmem>>, vector<1x32x64xbf16>
      %388 = vector.shape_cast %387 : vector<1x32x64xbf16> to vector<32x64xbf16>
      %cst_349 = arith.constant dense<0.000000e+00> : vector<10x64xf32>
      %389 = tpu.matmul %386, %388, %cst_349 {dimension_numbers = #tpu.dot_dimension_numbers<[1], [0], [0], [1], [0, 0, 1, 1], [], []>} : vector<10x32xbf16>, vector<32x64xbf16>, vector<10x64xf32> -> vector<10x64xf32>
      %390 = arith.addf %382, %389 : vector<10x64xf32>
      %c4_i32_350 = arith.constant 4 : i32
      %391 = arith.addi %221, %c4_i32_350 : i32
      %c0_351 = arith.constant 0 : index
      %392 = arith.index_cast %391 : i32 to index
      %c1_352 = arith.constant 1 : index
      %c0_353 = arith.constant 0 : index
      %393 = vector.load %arg1[%c0_351, %392, %c1_352, %c0_353] : memref<1x14x14x32xbf16, #tpu.memory_space<vmem>>, vector<1x1x10x32xbf16>
      %394 = vector.shape_cast %393 : vector<1x1x10x32xbf16> to vector<10x32xbf16>
      %c21_354 = arith.constant 21 : index
      %c0_355 = arith.constant 0 : index
      %c0_356 = arith.constant 0 : index
      %395 = vector.load %arg2[%c21_354, %c0_355, %c0_356] : memref<25x32x64xbf16, #tpu.memory_space<vmem>>, vector<1x32x64xbf16>
      %396 = vector.shape_cast %395 : vector<1x32x64xbf16> to vector<32x64xbf16>
      %cst_357 = arith.constant dense<0.000000e+00> : vector<10x64xf32>
      %397 = tpu.matmul %394, %396, %cst_357 {dimension_numbers = #tpu.dot_dimension_numbers<[1], [0], [0], [1], [0, 0, 1, 1], [], []>} : vector<10x32xbf16>, vector<32x64xbf16>, vector<10x64xf32> -> vector<10x64xf32>
      %398 = arith.addf %390, %397 : vector<10x64xf32>
      %c4_i32_358 = arith.constant 4 : i32
      %399 = arith.addi %221, %c4_i32_358 : i32
      %c0_359 = arith.constant 0 : index
      %400 = arith.index_cast %399 : i32 to index
      %c2_360 = arith.constant 2 : index
      %c0_361 = arith.constant 0 : index
      %401 = vector.load %arg1[%c0_359, %400, %c2_360, %c0_361] : memref<1x14x14x32xbf16, #tpu.memory_space<vmem>>, vector<1x1x10x32xbf16>
      %402 = vector.shape_cast %401 : vector<1x1x10x32xbf16> to vector<10x32xbf16>
      %c22_362 = arith.constant 22 : index
      %c0_363 = arith.constant 0 : index
      %c0_364 = arith.constant 0 : index
      %403 = vector.load %arg2[%c22_362, %c0_363, %c0_364] : memref<25x32x64xbf16, #tpu.memory_space<vmem>>, vector<1x32x64xbf16>
      %404 = vector.shape_cast %403 : vector<1x32x64xbf16> to vector<32x64xbf16>
      %cst_365 = arith.constant dense<0.000000e+00> : vector<10x64xf32>
      %405 = tpu.matmul %402, %404, %cst_365 {dimension_numbers = #tpu.dot_dimension_numbers<[1], [0], [0], [1], [0, 0, 1, 1], [], []>} : vector<10x32xbf16>, vector<32x64xbf16>, vector<10x64xf32> -> vector<10x64xf32>
      %406 = arith.addf %398, %405 : vector<10x64xf32>
      %c4_i32_366 = arith.constant 4 : i32
      %407 = arith.addi %221, %c4_i32_366 : i32
      %c0_367 = arith.constant 0 : index
      %408 = arith.index_cast %407 : i32 to index
      %c3_368 = arith.constant 3 : index
      %c0_369 = arith.constant 0 : index
      %409 = vector.load %arg1[%c0_367, %408, %c3_368, %c0_369] : memref<1x14x14x32xbf16, #tpu.memory_space<vmem>>, vector<1x1x10x32xbf16>
      %410 = vector.shape_cast %409 : vector<1x1x10x32xbf16> to vector<10x32xbf16>
      %c23_370 = arith.constant 23 : index
      %c0_371 = arith.constant 0 : index
      %c0_372 = arith.constant 0 : index
      %411 = vector.load %arg2[%c23_370, %c0_371, %c0_372] : memref<25x32x64xbf16, #tpu.memory_space<vmem>>, vector<1x32x64xbf16>
      %412 = vector.shape_cast %411 : vector<1x32x64xbf16> to vector<32x64xbf16>
      %cst_373 = arith.constant dense<0.000000e+00> : vector<10x64xf32>
      %413 = tpu.matmul %410, %412, %cst_373 {dimension_numbers = #tpu.dot_dimension_numbers<[1], [0], [0], [1], [0, 0, 1, 1], [], []>} : vector<10x32xbf16>, vector<32x64xbf16>, vector<10x64xf32> -> vector<10x64xf32>
      %414 = arith.addf %406, %413 : vector<10x64xf32>
      %c4_i32_374 = arith.constant 4 : i32
      %415 = arith.addi %221, %c4_i32_374 : i32
      %c0_375 = arith.constant 0 : index
      %416 = arith.index_cast %415 : i32 to index
      %c4_376 = arith.constant 4 : index
      %c0_377 = arith.constant 0 : index
      %417 = vector.load %arg1[%c0_375, %416, %c4_376, %c0_377] : memref<1x14x14x32xbf16, #tpu.memory_space<vmem>>, vector<1x1x10x32xbf16>
      %418 = vector.shape_cast %417 : vector<1x1x10x32xbf16> to vector<10x32xbf16>
      %c24_378 = arith.constant 24 : index
      %c0_379 = arith.constant 0 : index
      %c0_380 = arith.constant 0 : index
      %419 = vector.load %arg2[%c24_378, %c0_379, %c0_380] : memref<25x32x64xbf16, #tpu.memory_space<vmem>>, vector<1x32x64xbf16>
      %420 = vector.shape_cast %419 : vector<1x32x64xbf16> to vector<32x64xbf16>
      %cst_381 = arith.constant dense<0.000000e+00> : vector<10x64xf32>
      %421 = tpu.matmul %418, %420, %cst_381 {dimension_numbers = #tpu.dot_dimension_numbers<[1], [0], [0], [1], [0, 0, 1, 1], [], []>} : vector<10x32xbf16>, vector<32x64xbf16>, vector<10x64xf32> -> vector<10x64xf32>
      %422 = arith.addf %414, %421 : vector<10x64xf32>
      %423 = vector.broadcast %0 : vector<1x64xf32> to vector<10x64xf32>
      %424 = arith.addf %422, %423 : vector<10x64xf32>
      %cst_382 = arith.constant 0.000000e+00 : f32
      %425 = vector.broadcast %cst_382 : f32 to vector<10x64xf32>
      %426 = arith.maximumf %424, %425 : vector<10x64xf32>
      %427 = arith.maximumf %219, %426 : vector<10x64xf32>
      %cst_383 = arith.constant dense<0.000000e+00> : vector<5x64xf32>
      %428 = tpu.matmul %7, %427, %cst_383 {dimension_numbers = #tpu.dot_dimension_numbers<[1], [0], [0], [1], [0, 0, 1, 1], [], []>} : vector<5x10xf32>, vector<10x64xf32>, vector<5x64xf32> -> vector<5x64xf32>
      %cst_384 = arith.constant dense<0.000000e+00> : vector<5x64xf32>
      %429 = tpu.matmul %12, %427, %cst_384 {dimension_numbers = #tpu.dot_dimension_numbers<[1], [0], [0], [1], [0, 0, 1, 1], [], []>} : vector<5x10xf32>, vector<10x64xf32>, vector<5x64xf32> -> vector<5x64xf32>
      %430 = arith.maximumf %428, %429 : vector<5x64xf32>
      %431 = arith.truncf %430 : vector<5x64xf32> to vector<5x64xbf16>
      %c0_385 = arith.constant 0 : index
      %432 = arith.index_cast %arg5 : i32 to index
      %c0_386 = arith.constant 0 : index
      %c0_387 = arith.constant 0 : index
      %433 = vector.load %arg4[%c0_385, %432, %c0_386, %c0_387] : memref<1x5x5x64xbf16, #tpu.memory_space<vmem>>, vector<1x1x5x64xbf16>
      %434 = vector.shape_cast %433 : vector<1x1x5x64xbf16> to vector<5x64xbf16>
      %435 = vector.shape_cast %431 : vector<5x64xbf16> to vector<1x1x5x64xbf16>
      tpu.vector_store %arg4[%c0_385, %432, %c0_386, %c0_387], %435 {strides = array<i32>} : memref<1x5x5x64xbf16, #tpu.memory_space<vmem>>, vector<1x1x5x64xbf16>,
    }
    %c5_i32_2 = arith.constant 5 : i32
    return
  }
  func.func @transform_0(%arg0: i32) -> (i32, i32, i32, i32) {
    %c0_i32 = arith.constant 0 : i32
    %c0_i32_0 = arith.constant 0 : i32
    %c0_i32_1 = arith.constant 0 : i32
    %c0_i32_2 = arith.constant 0 : i32
    return %arg0, %c0_i32, %c0_i32_0, %c0_i32_1 : i32, i32, i32, i32
  }
  func.func @transform_1(%arg0: i32) -> (i32, i32, i32) {
    %c0_i32 = arith.constant 0 : i32
    %c0_i32_0 = arith.constant 0 : i32
    %c0_i32_1 = arith.constant 0 : i32
    %c0_i32_2 = arith.constant 0 : i32
    return %c0_i32, %c0_i32_0, %c0_i32_1 : i32, i32, i32
  }
  func.func @transform_2(%arg0: i32) -> (i32, i32) {
    %c0_i32 = arith.constant 0 : i32
    %c0_i32_0 = arith.constant 0 : i32
    %c0_i32_1 = arith.constant 0 : i32
    return %c0_i32, %c0_i32_0 : i32, i32
  }
  func.func @transform_3(%arg0: i32) -> (i32, i32, i32, i32) {
    %c0_i32 = arith.constant 0 : i32
    %c0_i32_0 = arith.constant 0 : i32
    %c0_i32_1 = arith.constant 0 : i32
    %c0_i32_2 = arith.constant 0 : i32
    return %arg0, %c0_i32, %c0_i32_0, %c0_i32_1 : i32, i32, i32, i32
  }
}

module attributes {stable_mosaic.version = 11 : i64} {
  func.func @_fc_fused_kernel(%arg0: i32, %arg1: memref<2x1600xbf16, #tpu.memory_space<vmem>>, %arg2: memref<1600x320xbf16, #tpu.memory_space<vmem>>, %arg3: memref<1x320xf32, #tpu.memory_space<vmem>>, %arg4: memref<320x128xbf16, #tpu.memory_space<vmem>>, %arg5: memref<1x128xf32, #tpu.memory_space<vmem>>, %arg6: memref<2x128xf32, #tpu.memory_space<vmem>>) attributes {dimension_semantics = [#tpu.dimension_semantics<parallel>], iteration_bounds = array<i64: 1>, scalar_prefetch = 0 : i64, scratch_operands = 0 : i64, tpu.core_type = #tpu.core_type<tc>, window_params = [{transform_indices = @transform_0, window_bounds = array<i64: 2, 1600>}, {pipeline_mode = #tpu.pipeline_mode<synchronous>, transform_indices = @transform_1, window_bounds = array<i64: 1600, 320>}, {pipeline_mode = #tpu.pipeline_mode<synchronous>, transform_indices = @transform_2, window_bounds = array<i64: 1, 320>}, {pipeline_mode = #tpu.pipeline_mode<synchronous>, transform_indices = @transform_3, window_bounds = array<i64: 320, 128>}, {pipeline_mode = #tpu.pipeline_mode<synchronous>, transform_indices = @transform_4, window_bounds = array<i64: 1, 128>}, {transform_indices = @transform_5, window_bounds = array<i64: 2, 128>}]} {
    %c0 = arith.constant 0 : index
    %c0_0 = arith.constant 0 : index
    %0 = vector.load %arg1[%c0, %c0_0] : memref<2x1600xbf16, #tpu.memory_space<vmem>>, vector<2x1600xbf16>
    %c0_1 = arith.constant 0 : index
    %c0_2 = arith.constant 0 : index
    %1 = vector.load %arg2[%c0_1, %c0_2] : memref<1600x320xbf16, #tpu.memory_space<vmem>>, vector<1600x320xbf16>
    %cst = arith.constant dense<0.000000e+00> : vector<2x320xf32>
    %2 = tpu.matmul %0, %1, %cst {dimension_numbers = #tpu.dot_dimension_numbers<[1], [0], [0], [1], [0, 0, 1, 1], [], []>} : vector<2x1600xbf16>, vector<1600x320xbf16>, vector<2x320xf32> -> vector<2x320xf32>
    %c0_3 = arith.constant 0 : index
    %c0_4 = arith.constant 0 : index
    %3 = vector.load %arg3[%c0_3, %c0_4] : memref<1x320xf32, #tpu.memory_space<vmem>>, vector<1x320xf32>
    %4 = vector.broadcast %3 : vector<1x320xf32> to vector<2x320xf32>
    %5 = arith.addf %2, %4 : vector<2x320xf32>
    %cst_5 = arith.constant 0.000000e+00 : f32
    %6 = vector.broadcast %cst_5 : f32 to vector<2x320xf32>
    %7 = arith.maximumf %5, %6 : vector<2x320xf32>
    %8 = arith.truncf %7 : vector<2x320xf32> to vector<2x320xbf16>
    %c0_6 = arith.constant 0 : index
    %c0_7 = arith.constant 0 : index
    %9 = vector.load %arg4[%c0_6, %c0_7] : memref<320x128xbf16, #tpu.memory_space<vmem>>, vector<320x128xbf16>
    %cst_8 = arith.constant dense<0.000000e+00> : vector<2x128xf32>
    %10 = tpu.matmul %8, %9, %cst_8 {dimension_numbers = #tpu.dot_dimension_numbers<[1], [0], [0], [1], [0, 0, 1, 1], [], []>} : vector<2x320xbf16>, vector<320x128xbf16>, vector<2x128xf32> -> vector<2x128xf32>
    %c0_9 = arith.constant 0 : index
    %c0_10 = arith.constant 0 : index
    %11 = vector.load %arg5[%c0_9, %c0_10] : memref<1x128xf32, #tpu.memory_space<vmem>>, vector<1x128xf32>
    %12 = vector.broadcast %11 : vector<1x128xf32> to vector<2x128xf32>
    %13 = arith.addf %10, %12 : vector<2x128xf32>
    %c0_11 = arith.constant 0 : index
    %c0_12 = arith.constant 0 : index
    %14 = vector.load %arg6[%c0_11, %c0_12] : memref<2x128xf32, #tpu.memory_space<vmem>>, vector<2x128xf32>
    tpu.vector_store %arg6[%c0_11, %c0_12], %13 {strides = array<i32>} : memref<2x128xf32, #tpu.memory_space<vmem>>, vector<2x128xf32>,
    return
  }
  func.func @transform_0(%arg0: i32) -> (i32, i32) {
    %c0_i32 = arith.constant 0 : i32
    %c0_i32_0 = arith.constant 0 : i32
    return %arg0, %c0_i32 : i32, i32
  }
  func.func @transform_1(%arg0: i32) -> (i32, i32) {
    %c0_i32 = arith.constant 0 : i32
    %c0_i32_0 = arith.constant 0 : i32
    %c0_i32_1 = arith.constant 0 : i32
    return %c0_i32, %c0_i32_0 : i32, i32
  }
  func.func @transform_2(%arg0: i32) -> (i32, i32) {
    %c0_i32 = arith.constant 0 : i32
    %c0_i32_0 = arith.constant 0 : i32
    %c0_i32_1 = arith.constant 0 : i32
    return %c0_i32, %c0_i32_0 : i32, i32
  }
  func.func @transform_3(%arg0: i32) -> (i32, i32) {
    %c0_i32 = arith.constant 0 : i32
    %c0_i32_0 = arith.constant 0 : i32
    %c0_i32_1 = arith.constant 0 : i32
    return %c0_i32, %c0_i32_0 : i32, i32
  }
  func.func @transform_4(%arg0: i32) -> (i32, i32) {
    %c0_i32 = arith.constant 0 : i32
    %c0_i32_0 = arith.constant 0 : i32
    %c0_i32_1 = arith.constant 0 : i32
    return %c0_i32, %c0_i32_0 : i32, i32
  }
  func.func @transform_5(%arg0: i32) -> (i32, i32) {
    %c0_i32 = arith.constant 0 : i32
    %c0_i32_0 = arith.constant 0 : i32
    return %arg0, %c0_i32 : i32, i32
  }
}

</mosaic_0001>

<llo_original>
// kernel: lenet5_tr_forward.4
$region0: #{lenet5_tr_forward.4}
  #allocation0 [shape = 'u32[]', space=smem, size = 0x4, offset = 0x4, fixed_abs, tag = 'smem constant byte address 0x4 - core index']
  #allocation1 [shape = 'u32[72,128]{1,0:T(1,128)}', space=vmem, size = 0x9000, scoped, tag = 'internal scratch']
  %s0 = inlined_call_operand.vmem [shape: bf16[2,14,14,32], index: 0, kind: input, shape index: {}]
  %s1 = inlined_call_operand.vmem [shape: bf16[25,32,64], index: 1, kind: input, shape index: {}]
  %s2 = inlined_call_operand.vmem [shape: f32[1,64], index: 2, kind: input, shape index: {}]
  %s3 = inlined_call_operand.vmem [shape: bf16[2,5,5,64], index: 3, kind: output, shape index: {}]
  %s4 = sld [smem:[#allocation0]]
  $region52: #{lenet5_tr_forward.4} parent=0
    _
  %s6 = ssub.s32 1, %s4
  %s7 = scalar_select 0, %s6, %s4
  loop: start=0, step=1, limit=4
  $region2: #{lenet5_tr_forward.4} parent=0 // loop_pre_header
    _
  $region3: #{lenet5_tr_forward.4} parent=0 // loop_header
    %s9 = sphi 0, %s13
    %p10 = scmp.ge.s32.totalorder %s9, 4
    %s19 = sphi 0, %s21
    %s22 = sphi 0, %s19
    %s23 = sphi 0, %s22
    %s39 = sphi 0, %s23
    %s43 = sphi 0, %s43
    %s45 = sphi 0, %s43
    %s46 = sphi 0, %s45
    %s60 = sphi 0, %s46
    %s64 = sphi 0, %s64
    %s66 = sphi 0, %s64
    %s67 = sphi 0, %s66
    %s81 = sphi 0, %s67
    %s87 = sphi 0, %s89
    %s90 = sphi 0, %s87
    %s91 = sphi 0, %s90
    %s107 = sphi 0, %s91
  $region4: #{lenet5_tr_forward.4} parent=0 // loop_header_branch
    %12 = sbr.rel (%p10) target = $region8
  $region5: #{lenet5_tr_forward.4} parent=0 // loop_body
    %s14 = ssub.s32 %s9, 1
    %s15 = ssub.s32 %s9, 2
    %s16 = sadd.s32 %s9, 1
    %s17 = ssub.s32 %s9, %s16
    %p18 = scmp.eq.s32.totalorder %s17, 0
    %s20 = sadd.s32 %s19, 1
    %s21 = scalar_select %p18, %s19, %s20
    %p24 = pneg %p18
    %p25 = scmp.eq.s32.totalorder %s9, 1
    %p26 = por %p24, %p25
    %p27 = scmp.ne.s32.totalorder %s19, %s22
    %p28 = scmp.eq.s32.totalorder %s9, 0
    %p29 = por %p27, %p28
    %p30 = scmp.ne.s32.totalorder %s19, %s22
    %p31 = scmp.eq.s32.totalorder %s14, 1
    %p32 = por %p30, %p31
    %p33 = scmp.ne.s32.totalorder %s22, %s23
    %p34 = scmp.eq.s32.totalorder %s14, 0
    %p35 = por %p33, %p34
    %p36 = scmp.ne.s32.totalorder %s22, %s23
    %p37 = scmp.eq.s32.totalorder %s15, 1
    %p38 = por %p36, %p37
    %p40 = scmp.ne.s32.totalorder %s23, %s39
    %p41 = scmp.eq.s32.totalorder %s15, 0
    %p42 = por %p40, %p41
    %s44 = sadd.s32 %s43, 1
    %p47 = scmp.eq.s32.totalorder %s9, 1
    %p48 = scmp.ne.s32.totalorder %s43, %s45
    %p49 = scmp.eq.s32.totalorder %s9, 0
    %p50 = por %p48, %p49
    %p51 = scmp.ne.s32.totalorder %s43, %s45
    %p52 = scmp.eq.s32.totalorder %s14, 1
    %p53 = por %p51, %p52
    %p54 = scmp.ne.s32.totalorder %s45, %s46
    %p55 = scmp.eq.s32.totalorder %s14, 0
    %p56 = por %p54, %p55
    %p57 = scmp.ne.s32.totalorder %s45, %s46
    %p58 = scmp.eq.s32.totalorder %s15, 1
    %p59 = por %p57, %p58
    %p61 = scmp.ne.s32.totalorder %s46, %s60
    %p62 = scmp.eq.s32.totalorder %s15, 0
    %p63 = por %p61, %p62
    %s65 = sadd.s32 %s64, 1
    %p68 = scmp.eq.s32.totalorder %s9, 1
    %p69 = scmp.ne.s32.totalorder %s64, %s66
    %p70 = scmp.eq.s32.totalorder %s9, 0
    %p71 = por %p69, %p70
    %p72 = scmp.ne.s32.totalorder %s64, %s66
    %p73 = scmp.eq.s32.totalorder %s14, 1
    %p74 = por %p72, %p73
    %p75 = scmp.ne.s32.totalorder %s66, %s67
    %p76 = scmp.eq.s32.totalorder %s14, 0
    %p77 = por %p75, %p76
    %p78 = scmp.ne.s32.totalorder %s66, %s67
    %p79 = scmp.eq.s32.totalorder %s15, 1
    %p80 = por %p78, %p79
    %p82 = scmp.ne.s32.totalorder %s67, %s81
    %p83 = scmp.eq.s32.totalorder %s15, 0
    %p84 = por %p82, %p83
    %s85 = ssub.s32 %s9, %s16
    %p86 = scmp.eq.s32.totalorder %s85, 0
    %s88 = sadd.s32 %s87, 1
    %s89 = scalar_select %p86, %s87, %s88
    %p92 = pneg %p86
    %p93 = scmp.eq.s32.totalorder %s9, 1
    %p94 = por %p92, %p93
    %p95 = scmp.ne.s32.totalorder %s87, %s90
    %p96 = scmp.eq.s32.totalorder %s9, 0
    %p97 = por %p95, %p96
    %p98 = scmp.ne.s32.totalorder %s87, %s90
    %p99 = scmp.eq.s32.totalorder %s14, 1
    %p100 = por %p98, %p99
    %p101 = scmp.ne.s32.totalorder %s90, %s91
    %p102 = scmp.eq.s32.totalorder %s14, 0
    %p103 = por %p101, %p102
    %p104 = scmp.ne.s32.totalorder %s90, %s91
    %p105 = scmp.eq.s32.totalorder %s15, 1
    %p106 = por %p104, %p105
    %p108 = scmp.ne.s32.totalorder %s91, %s107
    %p109 = scmp.eq.s32.totalorder %s15, 0
    %p110 = por %p108, %p109
    %p111 = scmp.le.s32.totalorder 1, %s9
    %p112 = scmp.lt.s32.totalorder %s9, 3
    %p113 = pnand %p111, %p112
    %p114 = pneg %p113
    // Predicated region
    $region9: #{lenet5_tr_forward.4} parent=5 // pred_check
      _
    $region10: #{lenet5_tr_forward.4} parent=5 // pred_check_branch
      %116 = sbr.rel (%p113) target = $region12
    $region11: #{lenet5_tr_forward.4} parent=5 // pred_region
      %s117 = ssub.s32 %s9, 1
      // Predicated region
      $region13: #{lenet5_tr_forward.4} parent=11 // pred_check
        %p118 = pneg %p56
      $region14: #{lenet5_tr_forward.4} parent=11 // pred_check_branch
        %120 = sbr.rel (%p118) target = $region16
      $region15: #{lenet5_tr_forward.4} parent=11 // pred_region
        _
      $region16: #{lenet5_tr_forward.4} parent=11 // pred_fallthru
        _
      // Predicated region
      $region17: #{lenet5_tr_forward.4} parent=11 // pred_check
        %p121 = pneg %p77
      $region18: #{lenet5_tr_forward.4} parent=11 // pred_check_branch
        %123 = sbr.rel (%p121) target = $region20
      $region19: #{lenet5_tr_forward.4} parent=11 // pred_region
        _
      $region20: #{lenet5_tr_forward.4} parent=11 // pred_fallthru
        _
    $region12: #{lenet5_tr_forward.4} parent=5 // pred_fallthru
      _
    %p124 = scmp.lt.s32.totalorder %s9, 2
    // Predicated region
    $region21: #{lenet5_tr_forward.4} parent=5 // pred_check
      %p125 = pneg %p124
    $region22: #{lenet5_tr_forward.4} parent=5 // pred_check_branch
      %127 = sbr.rel (%p125) target = $region24
    $region23: #{lenet5_tr_forward.4} parent=5 // pred_region
      // Predicated region
      $region25: #{lenet5_tr_forward.4} parent=23 // pred_check
        %p128 = pneg %p29
      $region26: #{lenet5_tr_forward.4} parent=23 // pred_check_branch
        %130 = sbr.rel (%p128) target = $region28
      $region27: #{lenet5_tr_forward.4} parent=23 // pred_region
        %p131 = scmp.lt.s32.totalorder %s9, 1
        %s132 = scalar_select %p131, %s9, 1
        %s133 = smul.addr %s132, 28
        %s134 = smul.addr %s133, 4
        %s135 = scalar_lea.vmem %s0, %s134
      $region28: #{lenet5_tr_forward.4} parent=23 // pred_fallthru
        _
    $region24: #{lenet5_tr_forward.4} parent=5 // pred_fallthru
      _
    %p136 = scmp.le.s32.totalorder 1, %s9
    %p137 = scmp.lt.s32.totalorder %s9, 3
    %p138 = pnand %p136, %p137
    %p139 = pneg %p138
    // Predicated region
    $region29: #{lenet5_tr_forward.4} parent=5 // pred_check
      _
    $region30: #{lenet5_tr_forward.4} parent=5 // pred_check_branch
      %141 = sbr.rel (%p138) target = $region32
    $region31: #{lenet5_tr_forward.4} parent=5 // pred_region
      %s142 = ssub.s32 %s9, 1
      %p143 = scmp.lt.s32.totalorder %s14, 1
      %s144 = scalar_select %p143, %s14, 1
      %s145 = smul.addr %s144, 28
      %s146 = smul.addr %s145, 4
      %s147 = scalar_lea.vmem %s0, %s146
      %p148 = pneg %p35
      %p149 = pneg %p32
      %p150 = pneg %p56
      %p151 = pneg %p53
      %p152 = pneg %p77
      %p153 = pneg %p74
      %p154 = pneg %p103
      %p155 = pneg %p100
      %p156 = scmp.lt.s32.totalorder %s14, 1
      %s157 = scalar_select %p156, %s14, 1
      %s158 = smul.addr %s157, 5
      %s159 = smul.addr %s158, 4
      %s160 = scalar_lea.vmem %s3, %s159
      %p161 = scmp.lt.s32.totalorder %s14, 1
      %s162 = scalar_select %p161, %s14, 1
      %s163 = smul.addr %s162, 28
      %s164 = smul.addr %s163, 4
      %s165 = scalar_lea.vmem %s0, %s164
      %p166 = scmp.lt.s32.totalorder %s14, 1
      %s167 = scalar_select %p166, %s14, 1
      %s168 = smul.addr %s167, 5
      %s169 = smul.addr %s168, 4
      %s170 = scalar_lea.vmem %s3, %s169
      %v172 = vld [vmem:[%s2] sm:$0x1]
      %v173 = vlaneseq
      %v174 = vand.u32 %v173, 127
      %v175 = vlaneseq
      %v176 = vshrl.u32 %v175, 7
      %v177 = vmul.u32 %v176, 2
      %vm178 = vcmp.eq.s32.totalorder %v174, %v177
      %v179 = vsel %vm178, 1, 0
      %v180 = vcvt.s32.f32 %v179
      %v181 = vadd.s32 %v177, 1
      %vm182 = vcmp.eq.s32.totalorder %v174, %v181
      %v183 = vsel %vm182, 1, 0
      %v184 = vcvt.s32.f32 %v183
      loop: start=0, step=1, limit=5
      $region33: #{lenet5_tr_forward.4} parent=31 // loop_pre_header
        _
      $region34: #{lenet5_tr_forward.4} parent=31 // loop_header
        %s186 = sphi 0, %s190
        %p187 = scmp.ge.s32.totalorder %s186, 5
      $region35: #{lenet5_tr_forward.4} parent=31 // loop_header_branch
        %189 = sbr.rel (%p187) target = $region39
      $region36: #{lenet5_tr_forward.4} parent=31 // loop_body
        %s191 = smul.u32 %s186, 2
        %s192 = smul.u32 %s191, 2
        %s193 = smul.addr %s192, 4
        %s194 = scalar_lea.vmem %s165, %s193
        %v195 = vld [vmem:[%s194] sm:$0xf]
        %v196 = vld [vmem:[%s194 + $0x4] sm:$0x1]
        %v197 = vld [vmem:[%s1] sm:$0xf]
        %v198 = vld [vmem:[%s1 + $0x4] sm:$0xf]
        %v199 = vld [vmem:[%s1 + $0x8] sm:$0xf]
        %v200 = vld [vmem:[%s1 + $0xc] sm:$0xf]
        %v201 = vld [vmem:[%s194 + $0x4] sm:$0x3]
        %s202 = scalar_lea.vmem %s1, 16
        %v203 = vld [vmem:[%s202] sm:$0xf]
        %v204 = vld [vmem:[%s202 + $0x4] sm:$0xf]
        %v205 = vld [vmem:[%s202 + $0x8] sm:$0xf]
        %v206 = vld [vmem:[%s202 + $0xc] sm:$0xf]
        %v209 = vunpack.c.l.b16 %v195
        %v210 = vunpack.c.l.b16 %v201
        %v211 = vpack.c.b16 %v210, %v209
        %v213 = vshrl.u32 %v211, 16
        %v215 = vshll.u32 %v211, 16
        %v217 = vrot.slane %v215, 1
        %v218 = vor.u32 %v213, %v217
        %v223 = vunpack.c.l.b16 %v203
        %v224 = vunpack.c.l.b16 %v204
        %v225 = vunpack.c.l.b16 %v205
        %v226 = vunpack.c.l.b16 %v206
        %v227 = vpack.c.b16 %v224, %v223
        %v228 = vpack.c.b16 %v226, %v225
        %vm231 = vcmask 261120
        %v233 = vsel %vm231, %v218, 0
        %235 = vmatpush.bf16.msra.mxu0 0
        %236 = vmatpush.bf16.msra.mxu0 0
        %237 = vmatpush.bf16.msra.mxu0 0
        %238 = vmatpush.bf16.msra.mxu0 0
        %239 = vmatpush.bf16.msra.mxu0 0
        %240 = vmatpush.bf16.msra.mxu0 0
        %241 = vmatpush.bf16.msra.mxu0 %v228
        %242 = vmatpush.bf16.msra.mxu0 %v227
        %243 = vmatmul.bf16.gmra.mxu0 %v233
        %v244 = vpop.f32.mrf.mxu0
        %v245 = vadd.f32 0.0, %v244
        %v246 = vpop.f32.mrf.mxu0
        %v247 = vadd.f32 0.0, %v246
        %248 = vdwg.mxu0
        %v250 = vunpack.c.l.b16 %v196
        %v251 = vpack.c.b16 %v250, %v209
        %v256 = vunpack.c.l.b16 %v197
        %v257 = vunpack.c.l.b16 %v198
        %v258 = vunpack.c.l.b16 %v199
        %v259 = vunpack.c.l.b16 %v200
        %v260 = vpack.c.b16 %v257, %v256
        %v261 = vpack.c.b16 %v259, %v258
        %v265 = vsel %vm231, %v251, 0
        %267 = vmatpush.bf16.msra.mxu0 0
        %268 = vmatpush.bf16.msra.mxu0 0
        %269 = vmatpush.bf16.msra.mxu0 0
        %270 = vmatpush.bf16.msra.mxu0 0
        %271 = vmatpush.bf16.msra.mxu0 0
        %272 = vmatpush.bf16.msra.mxu0 0
        %273 = vmatpush.bf16.msra.mxu0 %v261
        %274 = vmatpush.bf16.msra.mxu0 %v260
        %275 = vmatmul.bf16.gmra.mxu0 %v265
        %v276 = vpop.f32.mrf.mxu0
        %v277 = vadd.f32 %v245, %v276
        %v278 = vpop.f32.mrf.mxu0
        %v279 = vadd.f32 %v247, %v278
        %280 = vdwg.mxu0
        %v281 = vld [vmem:[%s194] sm:$0xe]
        %s282 = scalar_lea.vmem %s1, 32
        %v283 = vld [vmem:[%s282] sm:$0xf]
        %v284 = vld [vmem:[%s282 + $0x4] sm:$0xf]
        %v285 = vld [vmem:[%s282 + $0x8] sm:$0xf]
        %v286 = vld [vmem:[%s282 + $0xc] sm:$0xf]
        %v288 = vunpack.c.l.b16 %v281
        %v289 = vpack.c.b16 %v210, %v288
        %v290 = vrot.slane %v289, 1
        %v295 = vunpack.c.l.b16 %v283
        %v296 = vunpack.c.l.b16 %v284
        %v297 = vunpack.c.l.b16 %v285
        %v298 = vunpack.c.l.b16 %v286
        %v299 = vpack.c.b16 %v296, %v295
        %v300 = vpack.c.b16 %v298, %v297
        %v304 = vsel %vm231, %v290, 0
        %306 = vmatpush.bf16.msra.mxu0 0
        %307 = vmatpush.bf16.msra.mxu0 0
        %308 = vmatpush.bf16.msra.mxu0 0
        %309 = vmatpush.bf16.msra.mxu0 0
        %310 = vmatpush.bf16.msra.mxu0 0
        %311 = vmatpush.bf16.msra.mxu0 0
        %312 = vmatpush.bf16.msra.mxu0 %v300
        %313 = vmatpush.bf16.msra.mxu0 %v299
        %314 = vmatmul.bf16.gmra.mxu0 %v304
        %v315 = vpop.f32.mrf.mxu0
        %v316 = vadd.f32 0.0, %v315
        %v317 = vpop.f32.mrf.mxu0
        %v318 = vadd.f32 0.0, %v317
        %319 = vdwg.mxu0
        %v320 = vadd.f32 %v277, %v316
        %v321 = vadd.f32 %v279, %v318
        %v322 = vld [vmem:[%s194 + $0x4] sm:$0x7]
        %s323 = scalar_lea.vmem %s1, 48
        %v324 = vld [vmem:[%s323] sm:$0xf]
        %v325 = vld [vmem:[%s323 + $0x4] sm:$0xf]
        %v326 = vld [vmem:[%s323 + $0x8] sm:$0xf]
        %v327 = vld [vmem:[%s323 + $0xc] sm:$0xf]
        %v329 = vunpack.c.l.b16 %v322
        %v330 = vpack.c.b16 %v329, %v288
        %v332 = vshrl.u32 %v330, 16
        %v334 = vrot.slane %v332, 1
        %v335 = vshll.u32 %v330, 16
        %v337 = vrot.slane %v335, 2
        %v338 = vor.u32 %v334, %v337
        %v343 = vunpack.c.l.b16 %v324
        %v344 = vunpack.c.l.b16 %v325
        %v345 = vunpack.c.l.b16 %v326
        %v346 = vunpack.c.l.b16 %v327
        %v347 = vpack.c.b16 %v344, %v343
        %v348 = vpack.c.b16 %v346, %v345
        %v352 = vsel %vm231, %v338, 0
        %354 = vmatpush.bf16.msra.mxu0 0
        %355 = vmatpush.bf16.msra.mxu0 0
        %356 = vmatpush.bf16.msra.mxu0 0
        %357 = vmatpush.bf16.msra.mxu0 0
        %358 = vmatpush.bf16.msra.mxu0 0
        %359 = vmatpush.bf16.msra.mxu0 0
        %360 = vmatpush.bf16.msra.mxu0 %v348
        %361 = vmatpush.bf16.msra.mxu0 %v347
        %362 = vmatmul.bf16.gmra.mxu0 %v352
        %v363 = vpop.f32.mrf.mxu0
        %v364 = vadd.f32 0.0, %v363
        %v365 = vpop.f32.mrf.mxu0
        %v366 = vadd.f32 0.0, %v365
        %367 = vdwg.mxu0
        %v368 = vadd.f32 %v320, %v364
        %v369 = vadd.f32 %v321, %v366
        %v370 = vld [vmem:[%s194] sm:$0xc]
        %s371 = scalar_lea.vmem %s1, 64
        %v372 = vld [vmem:[%s371] sm:$0xf]
        %v373 = vld [vmem:[%s371 + $0x4] sm:$0xf]
        %v374 = vld [vmem:[%s371 + $0x8] sm:$0xf]
        %v375 = vld [vmem:[%s371 + $0xc] sm:$0xf]
        %v377 = vunpack.c.l.b16 %v370
        %v378 = vpack.c.b16 %v329, %v377
        %v379 = vrot.slane %v378, 2
        %v384 = vunpack.c.l.b16 %v372
        %v385 = vunpack.c.l.b16 %v373
        %v386 = vunpack.c.l.b16 %v374
        %v387 = vunpack.c.l.b16 %v375
        %v388 = vpack.c.b16 %v385, %v384
        %v389 = vpack.c.b16 %v387, %v386
        %v393 = vsel %vm231, %v379, 0
        %395 = vmatpush.bf16.msra.mxu0 0
        %396 = vmatpush.bf16.msra.mxu0 0
        %397 = vmatpush.bf16.msra.mxu0 0
        %398 = vmatpush.bf16.msra.mxu0 0
        %399 = vmatpush.bf16.msra.mxu0 0
        %400 = vmatpush.bf16.msra.mxu0 0
        %401 = vmatpush.bf16.msra.mxu0 %v389
        %402 = vmatpush.bf16.msra.mxu0 %v388
        %403 = vmatmul.bf16.gmra.mxu0 %v393
        %v404 = vpop.f32.mrf.mxu0
        %v405 = vadd.f32 0.0, %v404
        %v406 = vpop.f32.mrf.mxu0
        %v407 = vadd.f32 0.0, %v406
        %408 = vdwg.mxu0
        %v409 = vadd.f32 %v368, %v405
        %v410 = vadd.f32 %v369, %v407
        %s411 = sadd.s32 %s191, 1
        %s412 = smul.u32 %s411, 2
        %s413 = smul.addr %s412, 4
        %s414 = scalar_lea.vmem %s165, %s413
        %v415 = vld [vmem:[%s414] sm:$0xf]
        %v416 = vld [vmem:[%s414 + $0x4] sm:$0x1]
        %s417 = scalar_lea.vmem %s1, 80
        %v418 = vld [vmem:[%s417] sm:$0xf]
        %v419 = vld [vmem:[%s417 + $0x4] sm:$0xf]
        %v420 = vld [vmem:[%s417 + $0x8] sm:$0xf]
        %v421 = vld [vmem:[%s417 + $0xc] sm:$0xf]
        %v424 = vunpack.c.l.b16 %v415
        %v425 = vunpack.c.l.b16 %v416
        %v426 = vpack.c.b16 %v425, %v424
        %v431 = vunpack.c.l.b16 %v418
        %v432 = vunpack.c.l.b16 %v419
        %v433 = vunpack.c.l.b16 %v420
        %v434 = vunpack.c.l.b16 %v421
        %v435 = vpack.c.b16 %v432, %v431
        %v436 = vpack.c.b16 %v434, %v433
        %v440 = vsel %vm231, %v426, 0
        %442 = vmatpush.bf16.msra.mxu0 0
        %443 = vmatpush.bf16.msra.mxu0 0
        %444 = vmatpush.bf16.msra.mxu0 0
        %445 = vmatpush.bf16.msra.mxu0 0
        %446 = vmatpush.bf16.msra.mxu0 0
        %447 = vmatpush.bf16.msra.mxu0 0
        %448 = vmatpush.bf16.msra.mxu0 %v436
        %449 = vmatpush.bf16.msra.mxu0 %v435
        %450 = vmatmul.bf16.gmra.mxu0 %v440
        %v451 = vpop.f32.mrf.mxu0
        %v452 = vadd.f32 0.0, %v451
        %v453 = vpop.f32.mrf.mxu0
        %v454 = vadd.f32 0.0, %v453
        %455 = vdwg.mxu0
        %v456 = vadd.f32 %v409, %v452
        %v457 = vadd.f32 %v410, %v454
        %v458 = vld [vmem:[%s414 + $0x4] sm:$0x3]
        %s459 = scalar_lea.vmem %s1, 96
        %v460 = vld [vmem:[%s459] sm:$0xf]
        %v461 = vld [vmem:[%s459 + $0x4] sm:$0xf]
        %v462 = vld [vmem:[%s459 + $0x8] sm:$0xf]
        %v463 = vld [vmem:[%s459 + $0xc] sm:$0xf]
        %v465 = vunpack.c.l.b16 %v458
        %v466 = vpack.c.b16 %v465, %v424
        %v468 = vshrl.u32 %v466, 16
        %v470 = vshll.u32 %v466, 16
        %v472 = vrot.slane %v470, 1
        %v473 = vor.u32 %v468, %v472
        %v478 = vunpack.c.l.b16 %v460
        %v479 = vunpack.c.l.b16 %v461
        %v480 = vunpack.c.l.b16 %v462
        %v481 = vunpack.c.l.b16 %v463
        %v482 = vpack.c.b16 %v479, %v478
        %v483 = vpack.c.b16 %v481, %v480
        %v487 = vsel %vm231, %v473, 0
        %489 = vmatpush.bf16.msra.mxu0 0
        %490 = vmatpush.bf16.msra.mxu0 0
        %491 = vmatpush.bf16.msra.mxu0 0
        %492 = vmatpush.bf16.msra.mxu0 0
        %493 = vmatpush.bf16.msra.mxu0 0
        %494 = vmatpush.bf16.msra.mxu0 0
        %495 = vmatpush.bf16.msra.mxu0 %v483
        %496 = vmatpush.bf16.msra.mxu0 %v482
        %497 = vmatmul.bf16.gmra.mxu0 %v487
        %v498 = vpop.f32.mrf.mxu0
        %v499 = vadd.f32 0.0, %v498
        %v500 = vpop.f32.mrf.mxu0
        %v501 = vadd.f32 0.0, %v500
        %502 = vdwg.mxu0
        %v503 = vadd.f32 %v456, %v499
        %v504 = vadd.f32 %v457, %v501
        %v505 = vld [vmem:[%s414] sm:$0xe]
        %s506 = scalar_lea.vmem %s1, 112
        %v507 = vld [vmem:[%s506] sm:$0xf]
        %v508 = vld [vmem:[%s506 + $0x4] sm:$0xf]
        %v509 = vld [vmem:[%s506 + $0x8] sm:$0xf]
        %v510 = vld [vmem:[%s506 + $0xc] sm:$0xf]
        %v512 = vunpack.c.l.b16 %v505
        %v513 = vpack.c.b16 %v465, %v512
        %v514 = vrot.slane %v513, 1
        %v519 = vunpack.c.l.b16 %v507
        %v520 = vunpack.c.l.b16 %v508
        %v521 = vunpack.c.l.b16 %v509
        %v522 = vunpack.c.l.b16 %v510
        %v523 = vpack.c.b16 %v520, %v519
        %v524 = vpack.c.b16 %v522, %v521
        %v528 = vsel %vm231, %v514, 0
        %530 = vmatpush.bf16.msra.mxu0 0
        %531 = vmatpush.bf16.msra.mxu0 0
        %532 = vmatpush.bf16.msra.mxu0 0
        %533 = vmatpush.bf16.msra.mxu0 0
        %534 = vmatpush.bf16.msra.mxu0 0
        %535 = vmatpush.bf16.msra.mxu0 0
        %536 = vmatpush.bf16.msra.mxu0 %v524
        %537 = vmatpush.bf16.msra.mxu0 %v523
        %538 = vmatmul.bf16.gmra.mxu0 %v528
        %v539 = vpop.f32.mrf.mxu0
        %v540 = vadd.f32 0.0, %v539
        %v541 = vpop.f32.mrf.mxu0
        %v542 = vadd.f32 0.0, %v541
        %543 = vdwg.mxu0
        %v544 = vadd.f32 %v503, %v540
        %v545 = vadd.f32 %v504, %v542
        %v546 = vld [vmem:[%s414 + $0x4] sm:$0x7]
        %s547 = scalar_lea.vmem %s1, 128
        %v548 = vld [vmem:[%s547] sm:$0xf]
        %v549 = vld [vmem:[%s547 + $0x4] sm:$0xf]
        %v550 = vld [vmem:[%s547 + $0x8] sm:$0xf]
        %v551 = vld [vmem:[%s547 + $0xc] sm:$0xf]
        %v553 = vunpack.c.l.b16 %v546
        %v554 = vpack.c.b16 %v553, %v512
        %v556 = vshrl.u32 %v554, 16
        %v558 = vrot.slane %v556, 1
        %v559 = vshll.u32 %v554, 16
        %v561 = vrot.slane %v559, 2
        %v562 = vor.u32 %v558, %v561
        %v567 = vunpack.c.l.b16 %v548
        %v568 = vunpack.c.l.b16 %v549
        %v569 = vunpack.c.l.b16 %v550
        %v570 = vunpack.c.l.b16 %v551
        %v571 = vpack.c.b16 %v568, %v567
        %v572 = vpack.c.b16 %v570, %v569
        %v576 = vsel %vm231, %v562, 0
        %578 = vmatpush.bf16.msra.mxu0 0
        %579 = vmatpush.bf16.msra.mxu0 0
        %580 = vmatpush.bf16.msra.mxu0 0
        %581 = vmatpush.bf16.msra.mxu0 0
        %582 = vmatpush.bf16.msra.mxu0 0
        %583 = vmatpush.bf16.msra.mxu0 0
        %584 = vmatpush.bf16.msra.mxu0 %v572
        %585 = vmatpush.bf16.msra.mxu0 %v571
        %586 = vmatmul.bf16.gmra.mxu0 %v576
        %v587 = vpop.f32.mrf.mxu0
        %v588 = vadd.f32 0.0, %v587
        %v589 = vpop.f32.mrf.mxu0
        %v590 = vadd.f32 0.0, %v589
        %591 = vdwg.mxu0
        %v592 = vadd.f32 %v544, %v588
        %v593 = vadd.f32 %v545, %v590
        %v594 = vld [vmem:[%s414] sm:$0xc]
        %s595 = scalar_lea.vmem %s1, 144
        %v596 = vld [vmem:[%s595] sm:$0xf]
        %v597 = vld [vmem:[%s595 + $0x4] sm:$0xf]
        %v598 = vld [vmem:[%s595 + $0x8] sm:$0xf]
        %v599 = vld [vmem:[%s595 + $0xc] sm:$0xf]
        %v601 = vunpack.c.l.b16 %v594
        %v602 = vpack.c.b16 %v553, %v601
        %v603 = vrot.slane %v602, 2
        %v608 = vunpack.c.l.b16 %v596
        %v609 = vunpack.c.l.b16 %v597
        %v610 = vunpack.c.l.b16 %v598
        %v611 = vunpack.c.l.b16 %v599
        %v612 = vpack.c.b16 %v609, %v608
        %v613 = vpack.c.b16 %v611, %v610
        %v617 = vsel %vm231, %v603, 0
        %619 = vmatpush.bf16.msra.mxu0 0
        %620 = vmatpush.bf16.msra.mxu0 0
        %621 = vmatpush.bf16.msra.mxu0 0
        %622 = vmatpush.bf16.msra.mxu0 0
        %623 = vmatpush.bf16.msra.mxu0 0
        %624 = vmatpush.bf16.msra.mxu0 0
        %625 = vmatpush.bf16.msra.mxu0 %v613
        %626 = vmatpush.bf16.msra.mxu0 %v612
        %627 = vmatmul.bf16.gmra.mxu0 %v617
        %v628 = vpop.f32.mrf.mxu0
        %v629 = vadd.f32 0.0, %v628
        %v630 = vpop.f32.mrf.mxu0
        %v631 = vadd.f32 0.0, %v630
        %632 = vdwg.mxu0
        %v633 = vadd.f32 %v592, %v629
        %v634 = vadd.f32 %v593, %v631
        %s635 = sadd.s32 %s191, 2
        %s636 = smul.u32 %s635, 2
        %s637 = smul.addr %s636, 4
        %s638 = scalar_lea.vmem %s165, %s637
        %v639 = vld [vmem:[%s638] sm:$0xf]
        %v640 = vld [vmem:[%s638 + $0x4] sm:$0x1]
        %s641 = scalar_lea.vmem %s1, 160
        %v642 = vld [vmem:[%s641] sm:$0xf]
        %v643 = vld [vmem:[%s641 + $0x4] sm:$0xf]
        %v644 = vld [vmem:[%s641 + $0x8] sm:$0xf]
        %v645 = vld [vmem:[%s641 + $0xc] sm:$0xf]
        %v648 = vunpack.c.l.b16 %v639
        %v649 = vunpack.c.l.b16 %v640
        %v650 = vpack.c.b16 %v649, %v648
        %v655 = vunpack.c.l.b16 %v642
        %v656 = vunpack.c.l.b16 %v643
        %v657 = vunpack.c.l.b16 %v644
        %v658 = vunpack.c.l.b16 %v645
        %v659 = vpack.c.b16 %v656, %v655
        %v660 = vpack.c.b16 %v658, %v657
        %v664 = vsel %vm231, %v650, 0
        %666 = vmatpush.bf16.msra.mxu0 0
        %667 = vmatpush.bf16.msra.mxu0 0
        %668 = vmatpush.bf16.msra.mxu0 0
        %669 = vmatpush.bf16.msra.mxu0 0
        %670 = vmatpush.bf16.msra.mxu0 0
        %671 = vmatpush.bf16.msra.mxu0 0
        %672 = vmatpush.bf16.msra.mxu0 %v660
        %673 = vmatpush.bf16.msra.mxu0 %v659
        %674 = vmatmul.bf16.gmra.mxu0 %v664
        %v675 = vpop.f32.mrf.mxu0
        %v676 = vadd.f32 0.0, %v675
        %v677 = vpop.f32.mrf.mxu0
        %v678 = vadd.f32 0.0, %v677
        %679 = vdwg.mxu0
        %v680 = vadd.f32 %v633, %v676
        %v681 = vadd.f32 %v634, %v678
        %v682 = vld [vmem:[%s638 + $0x4] sm:$0x3]
        %s683 = scalar_lea.vmem %s1, 176
        %v684 = vld [vmem:[%s683] sm:$0xf]
        %v685 = vld [vmem:[%s683 + $0x4] sm:$0xf]
        %v686 = vld [vmem:[%s683 + $0x8] sm:$0xf]
        %v687 = vld [vmem:[%s683 + $0xc] sm:$0xf]
        %v689 = vunpack.c.l.b16 %v682
        %v690 = vpack.c.b16 %v689, %v648
        %v692 = vshrl.u32 %v690, 16
        %v694 = vshll.u32 %v690, 16
        %v696 = vrot.slane %v694, 1
        %v697 = vor.u32 %v692, %v696
        %v702 = vunpack.c.l.b16 %v684
        %v703 = vunpack.c.l.b16 %v685
        %v704 = vunpack.c.l.b16 %v686
        %v705 = vunpack.c.l.b16 %v687
        %v706 = vpack.c.b16 %v703, %v702
        %v707 = vpack.c.b16 %v705, %v704
        %v711 = vsel %vm231, %v697, 0
        %713 = vmatpush.bf16.msra.mxu0 0
        %714 = vmatpush.bf16.msra.mxu0 0
        %715 = vmatpush.bf16.msra.mxu0 0
        %716 = vmatpush.bf16.msra.mxu0 0
        %717 = vmatpush.bf16.msra.mxu0 0
        %718 = vmatpush.bf16.msra.mxu0 0
        %719 = vmatpush.bf16.msra.mxu0 %v707
        %720 = vmatpush.bf16.msra.mxu0 %v706
        %721 = vmatmul.bf16.gmra.mxu0 %v711
        %v722 = vpop.f32.mrf.mxu0
        %v723 = vadd.f32 0.0, %v722
        %v724 = vpop.f32.mrf.mxu0
        %v725 = vadd.f32 0.0, %v724
        %726 = vdwg.mxu0
        %v727 = vadd.f32 %v680, %v723
        %v728 = vadd.f32 %v681, %v725
        %v729 = vld [vmem:[%s638] sm:$0xe]
        %s730 = scalar_lea.vmem %s1, 192
        %v731 = vld [vmem:[%s730] sm:$0xf]
        %v732 = vld [vmem:[%s730 + $0x4] sm:$0xf]
        %v733 = vld [vmem:[%s730 + $0x8] sm:$0xf]
        %v734 = vld [vmem:[%s730 + $0xc] sm:$0xf]
        %v736 = vunpack.c.l.b16 %v729
        %v737 = vpack.c.b16 %v689, %v736
        %v738 = vrot.slane %v737, 1
        %v743 = vunpack.c.l.b16 %v731
        %v744 = vunpack.c.l.b16 %v732
        %v745 = vunpack.c.l.b16 %v733
        %v746 = vunpack.c.l.b16 %v734
        %v747 = vpack.c.b16 %v744, %v743
        %v748 = vpack.c.b16 %v746, %v745
        %v752 = vsel %vm231, %v738, 0
        %754 = vmatpush.bf16.msra.mxu0 0
        %755 = vmatpush.bf16.msra.mxu0 0
        %756 = vmatpush.bf16.msra.mxu0 0
        %757 = vmatpush.bf16.msra.mxu0 0
        %758 = vmatpush.bf16.msra.mxu0 0
        %759 = vmatpush.bf16.msra.mxu0 0
        %760 = vmatpush.bf16.msra.mxu0 %v748
        %761 = vmatpush.bf16.msra.mxu0 %v747
        %762 = vmatmul.bf16.gmra.mxu0 %v752
        %v763 = vpop.f32.mrf.mxu0
        %v764 = vadd.f32 0.0, %v763
        %v765 = vpop.f32.mrf.mxu0
        %v766 = vadd.f32 0.0, %v765
        %767 = vdwg.mxu0
        %v768 = vadd.f32 %v727, %v764
        %v769 = vadd.f32 %v728, %v766
        %v770 = vld [vmem:[%s638 + $0x4] sm:$0x7]
        %s771 = scalar_lea.vmem %s1, 208
        %v772 = vld [vmem:[%s771] sm:$0xf]
        %v773 = vld [vmem:[%s771 + $0x4] sm:$0xf]
        %v774 = vld [vmem:[%s771 + $0x8] sm:$0xf]
        %v775 = vld [vmem:[%s771 + $0xc] sm:$0xf]
        %v777 = vunpack.c.l.b16 %v770
        %v778 = vpack.c.b16 %v777, %v736
        %v780 = vshrl.u32 %v778, 16
        %v782 = vrot.slane %v780, 1
        %v783 = vshll.u32 %v778, 16
        %v785 = vrot.slane %v783, 2
        %v786 = vor.u32 %v782, %v785
        %v791 = vunpack.c.l.b16 %v772
        %v792 = vunpack.c.l.b16 %v773
        %v793 = vunpack.c.l.b16 %v774
        %v794 = vunpack.c.l.b16 %v775
        %v795 = vpack.c.b16 %v792, %v791
        %v796 = vpack.c.b16 %v794, %v793
        %v800 = vsel %vm231, %v786, 0
        %802 = vmatpush.bf16.msra.mxu0 0
        %803 = vmatpush.bf16.msra.mxu0 0
        %804 = vmatpush.bf16.msra.mxu0 0
        %805 = vmatpush.bf16.msra.mxu0 0
        %806 = vmatpush.bf16.msra.mxu0 0
        %807 = vmatpush.bf16.msra.mxu0 0
        %808 = vmatpush.bf16.msra.mxu0 %v796
        %809 = vmatpush.bf16.msra.mxu0 %v795
        %810 = vmatmul.bf16.gmra.mxu0 %v800
        %v811 = vpop.f32.mrf.mxu0
        %v812 = vadd.f32 0.0, %v811
        %v813 = vpop.f32.mrf.mxu0
        %v814 = vadd.f32 0.0, %v813
        %815 = vdwg.mxu0
        %v816 = vadd.f32 %v768, %v812
        %v817 = vadd.f32 %v769, %v814
        %v818 = vld [vmem:[%s638] sm:$0xc]
        %s819 = scalar_lea.vmem %s1, 224
        %v820 = vld [vmem:[%s819] sm:$0xf]
        %v821 = vld [vmem:[%s819 + $0x4] sm:$0xf]
        %v822 = vld [vmem:[%s819 + $0x8] sm:$0xf]
        %v823 = vld [vmem:[%s819 + $0xc] sm:$0xf]
        %v825 = vunpack.c.l.b16 %v818
        %v826 = vpack.c.b16 %v777, %v825
        %v827 = vrot.slane %v826, 2
        %v832 = vunpack.c.l.b16 %v820
        %v833 = vunpack.c.l.b16 %v821
        %v834 = vunpack.c.l.b16 %v822
        %v835 = vunpack.c.l.b16 %v823
        %v836 = vpack.c.b16 %v833, %v832
        %v837 = vpack.c.b16 %v835, %v834
        %v841 = vsel %vm231, %v827, 0
        %843 = vmatpush.bf16.msra.mxu0 0
        %844 = vmatpush.bf16.msra.mxu0 0
        %845 = vmatpush.bf16.msra.mxu0 0
        %846 = vmatpush.bf16.msra.mxu0 0
        %847 = vmatpush.bf16.msra.mxu0 0
        %848 = vmatpush.bf16.msra.mxu0 0
        %849 = vmatpush.bf16.msra.mxu0 %v837
        %850 = vmatpush.bf16.msra.mxu0 %v836
        %851 = vmatmul.bf16.gmra.mxu0 %v841
        %v852 = vpop.f32.mrf.mxu0
        %v853 = vadd.f32 0.0, %v852
        %v854 = vpop.f32.mrf.mxu0
        %v855 = vadd.f32 0.0, %v854
        %856 = vdwg.mxu0
        %v857 = vadd.f32 %v816, %v853
        %v858 = vadd.f32 %v817, %v855
        %s859 = sadd.s32 %s191, 3
        %s860 = smul.u32 %s859, 2
        %s861 = smul.addr %s860, 4
        %s862 = scalar_lea.vmem %s165, %s861
        %v863 = vld [vmem:[%s862] sm:$0xf]
        %v864 = vld [vmem:[%s862 + $0x4] sm:$0x1]
        %s865 = scalar_lea.vmem %s1, 240
        %v866 = vld [vmem:[%s865] sm:$0xf]
        %v867 = vld [vmem:[%s865 + $0x4] sm:$0xf]
        %v868 = vld [vmem:[%s865 + $0x8] sm:$0xf]
        %v869 = vld [vmem:[%s865 + $0xc] sm:$0xf]
        %v872 = vunpack.c.l.b16 %v863
        %v873 = vunpack.c.l.b16 %v864
        %v874 = vpack.c.b16 %v873, %v872
        %v879 = vunpack.c.l.b16 %v866
        %v880 = vunpack.c.l.b16 %v867
        %v881 = vunpack.c.l.b16 %v868
        %v882 = vunpack.c.l.b16 %v869
        %v883 = vpack.c.b16 %v880, %v879
        %v884 = vpack.c.b16 %v882, %v881
        %v888 = vsel %vm231, %v874, 0
        %890 = vmatpush.bf16.msra.mxu0 0
        %891 = vmatpush.bf16.msra.mxu0 0
        %892 = vmatpush.bf16.msra.mxu0 0
        %893 = vmatpush.bf16.msra.mxu0 0
        %894 = vmatpush.bf16.msra.mxu0 0
        %895 = vmatpush.bf16.msra.mxu0 0
        %896 = vmatpush.bf16.msra.mxu0 %v884
        %897 = vmatpush.bf16.msra.mxu0 %v883
        %898 = vmatmul.bf16.gmra.mxu0 %v888
        %v899 = vpop.f32.mrf.mxu0
        %v900 = vadd.f32 0.0, %v899
        %v901 = vpop.f32.mrf.mxu0
        %v902 = vadd.f32 0.0, %v901
        %903 = vdwg.mxu0
        %v904 = vadd.f32 %v857, %v900
        %v905 = vadd.f32 %v858, %v902
        %v906 = vld [vmem:[%s862 + $0x4] sm:$0x3]
        %s907 = scalar_lea.vmem %s1, 256
        %v908 = vld [vmem:[%s907] sm:$0xf]
        %v909 = vld [vmem:[%s907 + $0x4] sm:$0xf]
        %v910 = vld [vmem:[%s907 + $0x8] sm:$0xf]
        %v911 = vld [vmem:[%s907 + $0xc] sm:$0xf]
        %v913 = vunpack.c.l.b16 %v906
        %v914 = vpack.c.b16 %v913, %v872
        %v916 = vshrl.u32 %v914, 16
        %v918 = vshll.u32 %v914, 16
        %v920 = vrot.slane %v918, 1
        %v921 = vor.u32 %v916, %v920
        %v926 = vunpack.c.l.b16 %v908
        %v927 = vunpack.c.l.b16 %v909
        %v928 = vunpack.c.l.b16 %v910
        %v929 = vunpack.c.l.b16 %v911
        %v930 = vpack.c.b16 %v927, %v926
        %v931 = vpack.c.b16 %v929, %v928
        %v935 = vsel %vm231, %v921, 0
        %937 = vmatpush.bf16.msra.mxu0 0
        %938 = vmatpush.bf16.msra.mxu0 0
        %939 = vmatpush.bf16.msra.mxu0 0
        %940 = vmatpush.bf16.msra.mxu0 0
        %941 = vmatpush.bf16.msra.mxu0 0
        %942 = vmatpush.bf16.msra.mxu0 0
        %943 = vmatpush.bf16.msra.mxu0 %v931
        %944 = vmatpush.bf16.msra.mxu0 %v930
        %945 = vmatmul.bf16.gmra.mxu0 %v935
        %v946 = vpop.f32.mrf.mxu0
        %v947 = vadd.f32 0.0, %v946
        %v948 = vpop.f32.mrf.mxu0
        %v949 = vadd.f32 0.0, %v948
        %950 = vdwg.mxu0
        %v951 = vadd.f32 %v904, %v947
        %v952 = vadd.f32 %v905, %v949
        %v953 = vld [vmem:[%s862] sm:$0xe]
        %s954 = scalar_lea.vmem %s1, 272
        %v955 = vld [vmem:[%s954] sm:$0xf]
        %v956 = vld [vmem:[%s954 + $0x4] sm:$0xf]
        %v957 = vld [vmem:[%s954 + $0x8] sm:$0xf]
        %v958 = vld [vmem:[%s954 + $0xc] sm:$0xf]
        %v960 = vunpack.c.l.b16 %v953
        %v961 = vpack.c.b16 %v913, %v960
        %v962 = vrot.slane %v961, 1
        %v967 = vunpack.c.l.b16 %v955
        %v968 = vunpack.c.l.b16 %v956
        %v969 = vunpack.c.l.b16 %v957
        %v970 = vunpack.c.l.b16 %v958
        %v971 = vpack.c.b16 %v968, %v967
        %v972 = vpack.c.b16 %v970, %v969
        %v976 = vsel %vm231, %v962, 0
        %978 = vmatpush.bf16.msra.mxu0 0
        %979 = vmatpush.bf16.msra.mxu0 0
        %980 = vmatpush.bf16.msra.mxu0 0
        %981 = vmatpush.bf16.msra.mxu0 0
        %982 = vmatpush.bf16.msra.mxu0 0
        %983 = vmatpush.bf16.msra.mxu0 0
        %984 = vmatpush.bf16.msra.mxu0 %v972
        %985 = vmatpush.bf16.msra.mxu0 %v971
        %986 = vmatmul.bf16.gmra.mxu0 %v976
        %v987 = vpop.f32.mrf.mxu0
        %v988 = vadd.f32 0.0, %v987
        %v989 = vpop.f32.mrf.mxu0
        %v990 = vadd.f32 0.0, %v989
        %991 = vdwg.mxu0
        %v992 = vadd.f32 %v951, %v988
        %v993 = vadd.f32 %v952, %v990
        %v994 = vld [vmem:[%s862 + $0x4] sm:$0x7]
        %s995 = scalar_lea.vmem %s1, 288
        %v996 = vld [vmem:[%s995] sm:$0xf]
        %v997 = vld [vmem:[%s995 + $0x4] sm:$0xf]
        %v998 = vld [vmem:[%s995 + $0x8] sm:$0xf]
        %v999 = vld [vmem:[%s995 + $0xc] sm:$0xf]
        %v1001 = vunpack.c.l.b16 %v994
        %v1002 = vpack.c.b16 %v1001, %v960
        %v1004 = vshrl.u32 %v1002, 16
        %v1006 = vrot.slane %v1004, 1
        %v1007 = vshll.u32 %v1002, 16
        %v1009 = vrot.slane %v1007, 2
        %v1010 = vor.u32 %v1006, %v1009
        %v1015 = vunpack.c.l.b16 %v996
        %v1016 = vunpack.c.l.b16 %v997
        %v1017 = vunpack.c.l.b16 %v998
        %v1018 = vunpack.c.l.b16 %v999
        %v1019 = vpack.c.b16 %v1016, %v1015
        %v1020 = vpack.c.b16 %v1018, %v1017
        %v1024 = vsel %vm231, %v1010, 0
        %1026 = vmatpush.bf16.msra.mxu0 0
        %1027 = vmatpush.bf16.msra.mxu0 0
        %1028 = vmatpush.bf16.msra.mxu0 0
        %1029 = vmatpush.bf16.msra.mxu0 0
        %1030 = vmatpush.bf16.msra.mxu0 0
        %1031 = vmatpush.bf16.msra.mxu0 0
        %1032 = vmatpush.bf16.msra.mxu0 %v1020
        %1033 = vmatpush.bf16.msra.mxu0 %v1019
        %1034 = vmatmul.bf16.gmra.mxu0 %v1024
        %v1035 = vpop.f32.mrf.mxu0
        %v1036 = vadd.f32 0.0, %v1035
        %v1037 = vpop.f32.mrf.mxu0
        %v1038 = vadd.f32 0.0, %v1037
        %1039 = vdwg.mxu0
        %v1040 = vadd.f32 %v992, %v1036
        %v1041 = vadd.f32 %v993, %v1038
        %v1042 = vld [vmem:[%s862] sm:$0xc]
        %s1043 = scalar_lea.vmem %s1, 304
        %v1044 = vld [vmem:[%s1043] sm:$0xf]
        %v1045 = vld [vmem:[%s1043 + $0x4] sm:$0xf]
        %v1046 = vld [vmem:[%s1043 + $0x8] sm:$0xf]
        %v1047 = vld [vmem:[%s1043 + $0xc] sm:$0xf]
        %v1049 = vunpack.c.l.b16 %v1042
        %v1050 = vpack.c.b16 %v1001, %v1049
        %v1051 = vrot.slane %v1050, 2
        %v1056 = vunpack.c.l.b16 %v1044
        %v1057 = vunpack.c.l.b16 %v1045
        %v1058 = vunpack.c.l.b16 %v1046
        %v1059 = vunpack.c.l.b16 %v1047
        %v1060 = vpack.c.b16 %v1057, %v1056
        %v1061 = vpack.c.b16 %v1059, %v1058
        %v1065 = vsel %vm231, %v1051, 0
        %1067 = vmatpush.bf16.msra.mxu0 0
        %1068 = vmatpush.bf16.msra.mxu0 0
        %1069 = vmatpush.bf16.msra.mxu0 0
        %1070 = vmatpush.bf16.msra.mxu0 0
        %1071 = vmatpush.bf16.msra.mxu0 0
        %1072 = vmatpush.bf16.msra.mxu0 0
        %1073 = vmatpush.bf16.msra.mxu0 %v1061
        %1074 = vmatpush.bf16.msra.mxu0 %v1060
        %1075 = vmatmul.bf16.gmra.mxu0 %v1065
        %v1076 = vpop.f32.mrf.mxu0
        %v1077 = vadd.f32 0.0, %v1076
        %v1078 = vpop.f32.mrf.mxu0
        %v1079 = vadd.f32 0.0, %v1078
        %1080 = vdwg.mxu0
        %v1081 = vadd.f32 %v1040, %v1077
        %v1082 = vadd.f32 %v1041, %v1079
        %s1083 = sadd.s32 %s191, 4
        %s1084 = smul.u32 %s1083, 2
        %s1085 = smul.addr %s1084, 4
        %s1086 = scalar_lea.vmem %s165, %s1085
        %v1087 = vld [vmem:[%s1086] sm:$0xf]
        %v1088 = vld [vmem:[%s1086 + $0x4] sm:$0x1]
        %s1089 = scalar_lea.vmem %s1, 320
        %v1090 = vld [vmem:[%s1089] sm:$0xf]
        %v1091 = vld [vmem:[%s1089 + $0x4] sm:$0xf]
        %v1092 = vld [vmem:[%s1089 + $0x8] sm:$0xf]
        %v1093 = vld [vmem:[%s1089 + $0xc] sm:$0xf]
        %v1096 = vunpack.c.l.b16 %v1087
        %v1097 = vunpack.c.l.b16 %v1088
        %v1098 = vpack.c.b16 %v1097, %v1096
        %v1103 = vunpack.c.l.b16 %v1090
        %v1104 = vunpack.c.l.b16 %v1091
        %v1105 = vunpack.c.l.b16 %v1092
        %v1106 = vunpack.c.l.b16 %v1093
        %v1107 = vpack.c.b16 %v1104, %v1103
        %v1108 = vpack.c.b16 %v1106, %v1105
        %v1112 = vsel %vm231, %v1098, 0
        %1114 = vmatpush.bf16.msra.mxu0 0
        %1115 = vmatpush.bf16.msra.mxu0 0
        %1116 = vmatpush.bf16.msra.mxu0 0
        %1117 = vmatpush.bf16.msra.mxu0 0
        %1118 = vmatpush.bf16.msra.mxu0 0
        %1119 = vmatpush.bf16.msra.mxu0 0
        %1120 = vmatpush.bf16.msra.mxu0 %v1108
        %1121 = vmatpush.bf16.msra.mxu0 %v1107
        %1122 = vmatmul.bf16.gmra.mxu0 %v1112
        %v1123 = vpop.f32.mrf.mxu0
        %v1124 = vadd.f32 0.0, %v1123
        %v1125 = vpop.f32.mrf.mxu0
        %v1126 = vadd.f32 0.0, %v1125
        %1127 = vdwg.mxu0
        %v1128 = vadd.f32 %v1081, %v1124
        %v1129 = vadd.f32 %v1082, %v1126
        %v1130 = vld [vmem:[%s1086 + $0x4] sm:$0x3]
        %s1131 = scalar_lea.vmem %s1, 336
        %v1132 = vld [vmem:[%s1131] sm:$0xf]
        %v1133 = vld [vmem:[%s1131 + $0x4] sm:$0xf]
        %v1134 = vld [vmem:[%s1131 + $0x8] sm:$0xf]
        %v1135 = vld [vmem:[%s1131 + $0xc] sm:$0xf]
        %v1137 = vunpack.c.l.b16 %v1130
        %v1138 = vpack.c.b16 %v1137, %v1096
        %v1140 = vshrl.u32 %v1138, 16
        %v1142 = vshll.u32 %v1138, 16
        %v1144 = vrot.slane %v1142, 1
        %v1145 = vor.u32 %v1140, %v1144
        %v1150 = vunpack.c.l.b16 %v1132
        %v1151 = vunpack.c.l.b16 %v1133
        %v1152 = vunpack.c.l.b16 %v1134
        %v1153 = vunpack.c.l.b16 %v1135
        %v1154 = vpack.c.b16 %v1151, %v1150
        %v1155 = vpack.c.b16 %v1153, %v1152
        %v1159 = vsel %vm231, %v1145, 0
        %1161 = vmatpush.bf16.msra.mxu0 0
        %1162 = vmatpush.bf16.msra.mxu0 0
        %1163 = vmatpush.bf16.msra.mxu0 0
        %1164 = vmatpush.bf16.msra.mxu0 0
        %1165 = vmatpush.bf16.msra.mxu0 0
        %1166 = vmatpush.bf16.msra.mxu0 0
        %1167 = vmatpush.bf16.msra.mxu0 %v1155
        %1168 = vmatpush.bf16.msra.mxu0 %v1154
        %1169 = vmatmul.bf16.gmra.mxu0 %v1159
        %v1170 = vpop.f32.mrf.mxu0
        %v1171 = vadd.f32 0.0, %v1170
        %v1172 = vpop.f32.mrf.mxu0
        %v1173 = vadd.f32 0.0, %v1172
        %1174 = vdwg.mxu0
        %v1175 = vadd.f32 %v1128, %v1171
        %v1176 = vadd.f32 %v1129, %v1173
        %v1177 = vld [vmem:[%s1086] sm:$0xe]
        %s1178 = scalar_lea.vmem %s1, 352
        %v1179 = vld [vmem:[%s1178] sm:$0xf]
        %v1180 = vld [vmem:[%s1178 + $0x4] sm:$0xf]
        %v1181 = vld [vmem:[%s1178 + $0x8] sm:$0xf]
        %v1182 = vld [vmem:[%s1178 + $0xc] sm:$0xf]
        %v1184 = vunpack.c.l.b16 %v1177
        %v1185 = vpack.c.b16 %v1137, %v1184
        %v1186 = vrot.slane %v1185, 1
        %v1191 = vunpack.c.l.b16 %v1179
        %v1192 = vunpack.c.l.b16 %v1180
        %v1193 = vunpack.c.l.b16 %v1181
        %v1194 = vunpack.c.l.b16 %v1182
        %v1195 = vpack.c.b16 %v1192, %v1191
        %v1196 = vpack.c.b16 %v1194, %v1193
        %v1200 = vsel %vm231, %v1186, 0
        %1202 = vmatpush.bf16.msra.mxu0 0
        %1203 = vmatpush.bf16.msra.mxu0 0
        %1204 = vmatpush.bf16.msra.mxu0 0
        %1205 = vmatpush.bf16.msra.mxu0 0
        %1206 = vmatpush.bf16.msra.mxu0 0
        %1207 = vmatpush.bf16.msra.mxu0 0
        %1208 = vmatpush.bf16.msra.mxu0 %v1196
        %1209 = vmatpush.bf16.msra.mxu0 %v1195
        %1210 = vmatmul.bf16.gmra.mxu0 %v1200
        %v1211 = vpop.f32.mrf.mxu0
        %v1212 = vadd.f32 0.0, %v1211
        %v1213 = vpop.f32.mrf.mxu0
        %v1214 = vadd.f32 0.0, %v1213
        %1215 = vdwg.mxu0
        %v1216 = vadd.f32 %v1175, %v1212
        %v1217 = vadd.f32 %v1176, %v1214
        %v1218 = vld [vmem:[%s1086 + $0x4] sm:$0x7]
        %s1219 = scalar_lea.vmem %s1, 368
        %v1220 = vld [vmem:[%s1219] sm:$0xf]
        %v1221 = vld [vmem:[%s1219 + $0x4] sm:$0xf]
        %v1222 = vld [vmem:[%s1219 + $0x8] sm:$0xf]
        %v1223 = vld [vmem:[%s1219 + $0xc] sm:$0xf]
        %v1225 = vunpack.c.l.b16 %v1218
        %v1226 = vpack.c.b16 %v1225, %v1184
        %v1228 = vshrl.u32 %v1226, 16
        %v1230 = vrot.slane %v1228, 1
        %v1231 = vshll.u32 %v1226, 16
        %v1233 = vrot.slane %v1231, 2
        %v1234 = vor.u32 %v1230, %v1233
        %v1239 = vunpack.c.l.b16 %v1220
        %v1240 = vunpack.c.l.b16 %v1221
        %v1241 = vunpack.c.l.b16 %v1222
        %v1242 = vunpack.c.l.b16 %v1223
        %v1243 = vpack.c.b16 %v1240, %v1239
        %v1244 = vpack.c.b16 %v1242, %v1241
        %v1248 = vsel %vm231, %v1234, 0
        %1250 = vmatpush.bf16.msra.mxu0 0
        %1251 = vmatpush.bf16.msra.mxu0 0
        %1252 = vmatpush.bf16.msra.mxu0 0
        %1253 = vmatpush.bf16.msra.mxu0 0
        %1254 = vmatpush.bf16.msra.mxu0 0
        %1255 = vmatpush.bf16.msra.mxu0 0
        %1256 = vmatpush.bf16.msra.mxu0 %v1244
        %1257 = vmatpush.bf16.msra.mxu0 %v1243
        %1258 = vmatmul.bf16.gmra.mxu0 %v1248
        %v1259 = vpop.f32.mrf.mxu0
        %v1260 = vadd.f32 0.0, %v1259
        %v1261 = vpop.f32.mrf.mxu0
        %v1262 = vadd.f32 0.0, %v1261
        %1263 = vdwg.mxu0
        %v1264 = vadd.f32 %v1216, %v1260
        %v1265 = vadd.f32 %v1217, %v1262
        %v1266 = vld [vmem:[%s1086] sm:$0xc]
        %s1267 = scalar_lea.vmem %s1, 384
        %v1268 = vld [vmem:[%s1267] sm:$0xf]
        %v1269 = vld [vmem:[%s1267 + $0x4] sm:$0xf]
        %v1270 = vld [vmem:[%s1267 + $0x8] sm:$0xf]
        %v1271 = vld [vmem:[%s1267 + $0xc] sm:$0xf]
        %v1273 = vunpack.c.l.b16 %v1266
        %v1274 = vpack.c.b16 %v1225, %v1273
        %v1275 = vrot.slane %v1274, 2
        %v1280 = vunpack.c.l.b16 %v1268
        %v1281 = vunpack.c.l.b16 %v1269
        %v1282 = vunpack.c.l.b16 %v1270
        %v1283 = vunpack.c.l.b16 %v1271
        %v1284 = vpack.c.b16 %v1281, %v1280
        %v1285 = vpack.c.b16 %v1283, %v1282
        %v1289 = vsel %vm231, %v1275, 0
        %1291 = vmatpush.bf16.msra.mxu0 0
        %1292 = vmatpush.bf16.msra.mxu0 0
        %1293 = vmatpush.bf16.msra.mxu0 0
        %1294 = vmatpush.bf16.msra.mxu0 0
        %1295 = vmatpush.bf16.msra.mxu0 0
        %1296 = vmatpush.bf16.msra.mxu0 0
        %1297 = vmatpush.bf16.msra.mxu0 %v1285
        %1298 = vmatpush.bf16.msra.mxu0 %v1284
        %1299 = vmatmul.bf16.gmra.mxu0 %v1289
        %v1300 = vpop.f32.mrf.mxu0
        %v1301 = vadd.f32 0.0, %v1300
        %v1302 = vpop.f32.mrf.mxu0
        %v1303 = vadd.f32 0.0, %v1302
        %1304 = vdwg.mxu0
        %v1305 = vadd.f32 %v1264, %v1301
        %v1306 = vadd.f32 %v1265, %v1303
        %v1308 = vperm.slane %v172, 0
        %v1310 = vadd.f32 %v1305, %v1308
        %v1311 = vadd.f32 %v1306, %v1308
        %v1312 = vmax.f32 %v1310, 0.0
        %v1313 = vmax.f32 %v1311, 0.0
        %1314 = vmatpush.bf16.msra.mxu0 0
        %1315 = vmatpush.bf16.msra.mxu0 0
        %1316 = vmatpush.bf16.msra.mxu0 0
        %1317 = vmatpush.bf16.msra.mxu0 0
        %1318 = vmatpush.bf16.msra.mxu0 0
        %1319 = vmatpush.bf16.msra.mxu0 0
        %1320 = vmatpush.bf16.msra.mxu0 %v228
        %1321 = vmatpush.bf16.msra.mxu0 %v227
        %1322 = vmatmul.bf16.gmra.mxu0 %v487
        %v1323 = vpop.f32.mrf.mxu0
        %v1324 = vadd.f32 0.0, %v1323
        %v1325 = vpop.f32.mrf.mxu0
        %v1326 = vadd.f32 0.0, %v1325
        %1327 = vdwg.mxu0
        %1328 = vmatpush.bf16.msra.mxu0 0
        %1329 = vmatpush.bf16.msra.mxu0 0
        %1330 = vmatpush.bf16.msra.mxu0 0
        %1331 = vmatpush.bf16.msra.mxu0 0
        %1332 = vmatpush.bf16.msra.mxu0 0
        %1333 = vmatpush.bf16.msra.mxu0 0
        %1334 = vmatpush.bf16.msra.mxu0 %v261
        %1335 = vmatpush.bf16.msra.mxu0 %v260
        %1336 = vmatmul.bf16.gmra.mxu0 %v440
        %v1337 = vpop.f32.mrf.mxu0
        %v1338 = vadd.f32 %v1324, %v1337
        %v1339 = vpop.f32.mrf.mxu0
        %v1340 = vadd.f32 %v1326, %v1339
        %1341 = vdwg.mxu0
        %1342 = vmatpush.bf16.msra.mxu0 0
        %1343 = vmatpush.bf16.msra.mxu0 0
        %1344 = vmatpush.bf16.msra.mxu0 0
        %1345 = vmatpush.bf16.msra.mxu0 0
        %1346 = vmatpush.bf16.msra.mxu0 0
        %1347 = vmatpush.bf16.msra.mxu0 0
        %1348 = vmatpush.bf16.msra.mxu0 %v300
        %1349 = vmatpush.bf16.msra.mxu0 %v299
        %1350 = vmatmul.bf16.gmra.mxu0 %v528
        %v1351 = vpop.f32.mrf.mxu0
        %v1352 = vadd.f32 0.0, %v1351
        %v1353 = vpop.f32.mrf.mxu0
        %v1354 = vadd.f32 0.0, %v1353
        %1355 = vdwg.mxu0
        %v1356 = vadd.f32 %v1338, %v1352
        %v1357 = vadd.f32 %v1340, %v1354
        %1358 = vmatpush.bf16.msra.mxu0 0
        %1359 = vmatpush.bf16.msra.mxu0 0
        %1360 = vmatpush.bf16.msra.mxu0 0
        %1361 = vmatpush.bf16.msra.mxu0 0
        %1362 = vmatpush.bf16.msra.mxu0 0
        %1363 = vmatpush.bf16.msra.mxu0 0
        %1364 = vmatpush.bf16.msra.mxu0 %v348
        %1365 = vmatpush.bf16.msra.mxu0 %v347
        %1366 = vmatmul.bf16.gmra.mxu0 %v576
        %v1367 = vpop.f32.mrf.mxu0
        %v1368 = vadd.f32 0.0, %v1367
        %v1369 = vpop.f32.mrf.mxu0
        %v1370 = vadd.f32 0.0, %v1369
        %1371 = vdwg.mxu0
        %v1372 = vadd.f32 %v1356, %v1368
        %v1373 = vadd.f32 %v1357, %v1370
        %1374 = vmatpush.bf16.msra.mxu0 0
        %1375 = vmatpush.bf16.msra.mxu0 0
        %1376 = vmatpush.bf16.msra.mxu0 0
        %1377 = vmatpush.bf16.msra.mxu0 0
        %1378 = vmatpush.bf16.msra.mxu0 0
        %1379 = vmatpush.bf16.msra.mxu0 0
        %1380 = vmatpush.bf16.msra.mxu0 %v389
        %1381 = vmatpush.bf16.msra.mxu0 %v388
        %1382 = vmatmul.bf16.gmra.mxu0 %v617
        %v1383 = vpop.f32.mrf.mxu0
        %v1384 = vadd.f32 0.0, %v1383
        %v1385 = vpop.f32.mrf.mxu0
        %v1386 = vadd.f32 0.0, %v1385
        %1387 = vdwg.mxu0
        %v1388 = vadd.f32 %v1372, %v1384
        %v1389 = vadd.f32 %v1373, %v1386
        %1390 = vmatpush.bf16.msra.mxu0 0
        %1391 = vmatpush.bf16.msra.mxu0 0
        %1392 = vmatpush.bf16.msra.mxu0 0
        %1393 = vmatpush.bf16.msra.mxu0 0
        %1394 = vmatpush.bf16.msra.mxu0 0
        %1395 = vmatpush.bf16.msra.mxu0 0
        %1396 = vmatpush.bf16.msra.mxu0 %v436
        %1397 = vmatpush.bf16.msra.mxu0 %v435
        %1398 = vmatmul.bf16.gmra.mxu0 %v664
        %v1399 = vpop.f32.mrf.mxu0
        %v1400 = vadd.f32 0.0, %v1399
        %v1401 = vpop.f32.mrf.mxu0
        %v1402 = vadd.f32 0.0, %v1401
        %1403 = vdwg.mxu0
        %v1404 = vadd.f32 %v1388, %v1400
        %v1405 = vadd.f32 %v1389, %v1402
        %1406 = vmatpush.bf16.msra.mxu0 0
        %1407 = vmatpush.bf16.msra.mxu0 0
        %1408 = vmatpush.bf16.msra.mxu0 0
        %1409 = vmatpush.bf16.msra.mxu0 0
        %1410 = vmatpush.bf16.msra.mxu0 0
        %1411 = vmatpush.bf16.msra.mxu0 0
        %1412 = vmatpush.bf16.msra.mxu0 %v483
        %1413 = vmatpush.bf16.msra.mxu0 %v482
        %1414 = vmatmul.bf16.gmra.mxu0 %v711
        %v1415 = vpop.f32.mrf.mxu0
        %v1416 = vadd.f32 0.0, %v1415
        %v1417 = vpop.f32.mrf.mxu0
        %v1418 = vadd.f32 0.0, %v1417
        %1419 = vdwg.mxu0
        %v1420 = vadd.f32 %v1404, %v1416
        %v1421 = vadd.f32 %v1405, %v1418
        %1422 = vmatpush.bf16.msra.mxu0 0
        %1423 = vmatpush.bf16.msra.mxu0 0
        %1424 = vmatpush.bf16.msra.mxu0 0
        %1425 = vmatpush.bf16.msra.mxu0 0
        %1426 = vmatpush.bf16.msra.mxu0 0
        %1427 = vmatpush.bf16.msra.mxu0 0
        %1428 = vmatpush.bf16.msra.mxu0 %v524
        %1429 = vmatpush.bf16.msra.mxu0 %v523
        %1430 = vmatmul.bf16.gmra.mxu0 %v752
        %v1431 = vpop.f32.mrf.mxu0
        %v1432 = vadd.f32 0.0, %v1431
        %v1433 = vpop.f32.mrf.mxu0
        %v1434 = vadd.f32 0.0, %v1433
        %1435 = vdwg.mxu0
        %v1436 = vadd.f32 %v1420, %v1432
        %v1437 = vadd.f32 %v1421, %v1434
        %1438 = vmatpush.bf16.msra.mxu0 0
        %1439 = vmatpush.bf16.msra.mxu0 0
        %1440 = vmatpush.bf16.msra.mxu0 0
        %1441 = vmatpush.bf16.msra.mxu0 0
        %1442 = vmatpush.bf16.msra.mxu0 0
        %1443 = vmatpush.bf16.msra.mxu0 0
        %1444 = vmatpush.bf16.msra.mxu0 %v572
        %1445 = vmatpush.bf16.msra.mxu0 %v571
        %1446 = vmatmul.bf16.gmra.mxu0 %v800
        %v1447 = vpop.f32.mrf.mxu0
        %v1448 = vadd.f32 0.0, %v1447
        %v1449 = vpop.f32.mrf.mxu0
        %v1450 = vadd.f32 0.0, %v1449
        %1451 = vdwg.mxu0
        %v1452 = vadd.f32 %v1436, %v1448
        %v1453 = vadd.f32 %v1437, %v1450
        %1454 = vmatpush.bf16.msra.mxu0 0
        %1455 = vmatpush.bf16.msra.mxu0 0
        %1456 = vmatpush.bf16.msra.mxu0 0
        %1457 = vmatpush.bf16.msra.mxu0 0
        %1458 = vmatpush.bf16.msra.mxu0 0
        %1459 = vmatpush.bf16.msra.mxu0 0
        %1460 = vmatpush.bf16.msra.mxu0 %v613
        %1461 = vmatpush.bf16.msra.mxu0 %v612
        %1462 = vmatmul.bf16.gmra.mxu0 %v841
        %v1463 = vpop.f32.mrf.mxu0
        %v1464 = vadd.f32 0.0, %v1463
        %v1465 = vpop.f32.mrf.mxu0
        %v1466 = vadd.f32 0.0, %v1465
        %1467 = vdwg.mxu0
        %v1468 = vadd.f32 %v1452, %v1464
        %v1469 = vadd.f32 %v1453, %v1466
        %1470 = vmatpush.bf16.msra.mxu0 0
        %1471 = vmatpush.bf16.msra.mxu0 0
        %1472 = vmatpush.bf16.msra.mxu0 0
        %1473 = vmatpush.bf16.msra.mxu0 0
        %1474 = vmatpush.bf16.msra.mxu0 0
        %1475 = vmatpush.bf16.msra.mxu0 0
        %1476 = vmatpush.bf16.msra.mxu0 %v660
        %1477 = vmatpush.bf16.msra.mxu0 %v659
        %1478 = vmatmul.bf16.gmra.mxu0 %v888
        %v1479 = vpop.f32.mrf.mxu0
        %v1480 = vadd.f32 0.0, %v1479
        %v1481 = vpop.f32.mrf.mxu0
        %v1482 = vadd.f32 0.0, %v1481
        %1483 = vdwg.mxu0
        %v1484 = vadd.f32 %v1468, %v1480
        %v1485 = vadd.f32 %v1469, %v1482
        %1486 = vmatpush.bf16.msra.mxu0 0
        %1487 = vmatpush.bf16.msra.mxu0 0
        %1488 = vmatpush.bf16.msra.mxu0 0
        %1489 = vmatpush.bf16.msra.mxu0 0
        %1490 = vmatpush.bf16.msra.mxu0 0
        %1491 = vmatpush.bf16.msra.mxu0 0
        %1492 = vmatpush.bf16.msra.mxu0 %v707
        %1493 = vmatpush.bf16.msra.mxu0 %v706
        %1494 = vmatmul.bf16.gmra.mxu0 %v935
        %v1495 = vpop.f32.mrf.mxu0
        %v1496 = vadd.f32 0.0, %v1495
        %v1497 = vpop.f32.mrf.mxu0
        %v1498 = vadd.f32 0.0, %v1497
        %1499 = vdwg.mxu0
        %v1500 = vadd.f32 %v1484, %v1496
        %v1501 = vadd.f32 %v1485, %v1498
        %1502 = vmatpush.bf16.msra.mxu0 0
        %1503 = vmatpush.bf16.msra.mxu0 0
        %1504 = vmatpush.bf16.msra.mxu0 0
        %1505 = vmatpush.bf16.msra.mxu0 0
        %1506 = vmatpush.bf16.msra.mxu0 0
        %1507 = vmatpush.bf16.msra.mxu0 0
        %1508 = vmatpush.bf16.msra.mxu0 %v748
        %1509 = vmatpush.bf16.msra.mxu0 %v747
        %1510 = vmatmul.bf16.gmra.mxu0 %v976
        %v1511 = vpop.f32.mrf.mxu0
        %v1512 = vadd.f32 0.0, %v1511
        %v1513 = vpop.f32.mrf.mxu0
        %v1514 = vadd.f32 0.0, %v1513
        %1515 = vdwg.mxu0
        %v1516 = vadd.f32 %v1500, %v1512
        %v1517 = vadd.f32 %v1501, %v1514
        %1518 = vmatpush.bf16.msra.mxu0 0
        %1519 = vmatpush.bf16.msra.mxu0 0
        %1520 = vmatpush.bf16.msra.mxu0 0
        %1521 = vmatpush.bf16.msra.mxu0 0
        %1522 = vmatpush.bf16.msra.mxu0 0
        %1523 = vmatpush.bf16.msra.mxu0 0
        %1524 = vmatpush.bf16.msra.mxu0 %v796
        %1525 = vmatpush.bf16.msra.mxu0 %v795
        %1526 = vmatmul.bf16.gmra.mxu0 %v1024
        %v1527 = vpop.f32.mrf.mxu0
        %v1528 = vadd.f32 0.0, %v1527
        %v1529 = vpop.f32.mrf.mxu0
        %v1530 = vadd.f32 0.0, %v1529
        %1531 = vdwg.mxu0
        %v1532 = vadd.f32 %v1516, %v1528
        %v1533 = vadd.f32 %v1517, %v1530
        %1534 = vmatpush.bf16.msra.mxu0 0
        %1535 = vmatpush.bf16.msra.mxu0 0
        %1536 = vmatpush.bf16.msra.mxu0 0
        %1537 = vmatpush.bf16.msra.mxu0 0
        %1538 = vmatpush.bf16.msra.mxu0 0
        %1539 = vmatpush.bf16.msra.mxu0 0
        %1540 = vmatpush.bf16.msra.mxu0 %v837
        %1541 = vmatpush.bf16.msra.mxu0 %v836
        %1542 = vmatmul.bf16.gmra.mxu0 %v1065
        %v1543 = vpop.f32.mrf.mxu0
        %v1544 = vadd.f32 0.0, %v1543
        %v1545 = vpop.f32.mrf.mxu0
        %v1546 = vadd.f32 0.0, %v1545
        %1547 = vdwg.mxu0
        %v1548 = vadd.f32 %v1532, %v1544
        %v1549 = vadd.f32 %v1533, %v1546
        %1550 = vmatpush.bf16.msra.mxu0 0
        %1551 = vmatpush.bf16.msra.mxu0 0
        %1552 = vmatpush.bf16.msra.mxu0 0
        %1553 = vmatpush.bf16.msra.mxu0 0
        %1554 = vmatpush.bf16.msra.mxu0 0
        %1555 = vmatpush.bf16.msra.mxu0 0
        %1556 = vmatpush.bf16.msra.mxu0 %v884
        %1557 = vmatpush.bf16.msra.mxu0 %v883
        %1558 = vmatmul.bf16.gmra.mxu0 %v1112
        %v1559 = vpop.f32.mrf.mxu0
        %v1560 = vadd.f32 0.0, %v1559
        %v1561 = vpop.f32.mrf.mxu0
        %v1562 = vadd.f32 0.0, %v1561
        %1563 = vdwg.mxu0
        %v1564 = vadd.f32 %v1548, %v1560
        %v1565 = vadd.f32 %v1549, %v1562
        %1566 = vmatpush.bf16.msra.mxu0 0
        %1567 = vmatpush.bf16.msra.mxu0 0
        %1568 = vmatpush.bf16.msra.mxu0 0
        %1569 = vmatpush.bf16.msra.mxu0 0
        %1570 = vmatpush.bf16.msra.mxu0 0
        %1571 = vmatpush.bf16.msra.mxu0 0
        %1572 = vmatpush.bf16.msra.mxu0 %v931
        %1573 = vmatpush.bf16.msra.mxu0 %v930
        %1574 = vmatmul.bf16.gmra.mxu0 %v1159
        %v1575 = vpop.f32.mrf.mxu0
        %v1576 = vadd.f32 0.0, %v1575
        %v1577 = vpop.f32.mrf.mxu0
        %v1578 = vadd.f32 0.0, %v1577
        %1579 = vdwg.mxu0
        %v1580 = vadd.f32 %v1564, %v1576
        %v1581 = vadd.f32 %v1565, %v1578
        %1582 = vmatpush.bf16.msra.mxu0 0
        %1583 = vmatpush.bf16.msra.mxu0 0
        %1584 = vmatpush.bf16.msra.mxu0 0
        %1585 = vmatpush.bf16.msra.mxu0 0
        %1586 = vmatpush.bf16.msra.mxu0 0
        %1587 = vmatpush.bf16.msra.mxu0 0
        %1588 = vmatpush.bf16.msra.mxu0 %v972
        %1589 = vmatpush.bf16.msra.mxu0 %v971
        %1590 = vmatmul.bf16.gmra.mxu0 %v1200
        %v1591 = vpop.f32.mrf.mxu0
        %v1592 = vadd.f32 0.0, %v1591
        %v1593 = vpop.f32.mrf.mxu0
        %v1594 = vadd.f32 0.0, %v1593
        %1595 = vdwg.mxu0
        %v1596 = vadd.f32 %v1580, %v1592
        %v1597 = vadd.f32 %v1581, %v1594
        %1598 = vmatpush.bf16.msra.mxu0 0
        %1599 = vmatpush.bf16.msra.mxu0 0
        %1600 = vmatpush.bf16.msra.mxu0 0
        %1601 = vmatpush.bf16.msra.mxu0 0
        %1602 = vmatpush.bf16.msra.mxu0 0
        %1603 = vmatpush.bf16.msra.mxu0 0
        %1604 = vmatpush.bf16.msra.mxu0 %v1020
        %1605 = vmatpush.bf16.msra.mxu0 %v1019
        %1606 = vmatmul.bf16.gmra.mxu0 %v1248
        %v1607 = vpop.f32.mrf.mxu0
        %v1608 = vadd.f32 0.0, %v1607
        %v1609 = vpop.f32.mrf.mxu0
        %v1610 = vadd.f32 0.0, %v1609
        %1611 = vdwg.mxu0
        %v1612 = vadd.f32 %v1596, %v1608
        %v1613 = vadd.f32 %v1597, %v1610
        %1614 = vmatpush.bf16.msra.mxu0 0
        %1615 = vmatpush.bf16.msra.mxu0 0
        %1616 = vmatpush.bf16.msra.mxu0 0
        %1617 = vmatpush.bf16.msra.mxu0 0
        %1618 = vmatpush.bf16.msra.mxu0 0
        %1619 = vmatpush.bf16.msra.mxu0 0
        %1620 = vmatpush.bf16.msra.mxu0 %v1061
        %1621 = vmatpush.bf16.msra.mxu0 %v1060
        %1622 = vmatmul.bf16.gmra.mxu0 %v1289
        %v1623 = vpop.f32.mrf.mxu0
        %v1624 = vadd.f32 0.0, %v1623
        %v1625 = vpop.f32.mrf.mxu0
        %v1626 = vadd.f32 0.0, %v1625
        %1627 = vdwg.mxu0
        %v1628 = vadd.f32 %v1612, %v1624
        %v1629 = vadd.f32 %v1613, %v1626
        %s1630 = sadd.s32 %s191, 5
        %s1631 = smul.u32 %s1630, 2
        %s1632 = smul.addr %s1631, 4
        %s1633 = scalar_lea.vmem %s165, %s1632
        %v1634 = vld [vmem:[%s1633] sm:$0xf]
        %v1635 = vld [vmem:[%s1633 + $0x4] sm:$0x1]
        %v1638 = vunpack.c.l.b16 %v1634
        %v1639 = vunpack.c.l.b16 %v1635
        %v1640 = vpack.c.b16 %v1639, %v1638
        %v1642 = vsel %vm231, %v1640, 0
        %1644 = vmatpush.bf16.msra.mxu0 0
        %1645 = vmatpush.bf16.msra.mxu0 0
        %1646 = vmatpush.bf16.msra.mxu0 0
        %1647 = vmatpush.bf16.msra.mxu0 0
        %1648 = vmatpush.bf16.msra.mxu0 0
        %1649 = vmatpush.bf16.msra.mxu0 0
        %1650 = vmatpush.bf16.msra.mxu0 %v1108
        %1651 = vmatpush.bf16.msra.mxu0 %v1107
        %1652 = vmatmul.bf16.gmra.mxu0 %v1642
        %v1653 = vpop.f32.mrf.mxu0
        %v1654 = vadd.f32 0.0, %v1653
        %v1655 = vpop.f32.mrf.mxu0
        %v1656 = vadd.f32 0.0, %v1655
        %1657 = vdwg.mxu0
        %v1658 = vadd.f32 %v1628, %v1654
        %v1659 = vadd.f32 %v1629, %v1656
        %v1660 = vld [vmem:[%s1633 + $0x4] sm:$0x3]
        %v1662 = vunpack.c.l.b16 %v1660
        %v1663 = vpack.c.b16 %v1662, %v1638
        %v1665 = vshrl.u32 %v1663, 16
        %v1667 = vshll.u32 %v1663, 16
        %v1669 = vrot.slane %v1667, 1
        %v1670 = vor.u32 %v1665, %v1669
        %v1672 = vsel %vm231, %v1670, 0
        %1674 = vmatpush.bf16.msra.mxu0 0
        %1675 = vmatpush.bf16.msra.mxu0 0
        %1676 = vmatpush.bf16.msra.mxu0 0
        %1677 = vmatpush.bf16.msra.mxu0 0
        %1678 = vmatpush.bf16.msra.mxu0 0
        %1679 = vmatpush.bf16.msra.mxu0 0
        %1680 = vmatpush.bf16.msra.mxu0 %v1155
        %1681 = vmatpush.bf16.msra.mxu0 %v1154
        %1682 = vmatmul.bf16.gmra.mxu0 %v1672
        %v1683 = vpop.f32.mrf.mxu0
        %v1684 = vadd.f32 0.0, %v1683
        %v1685 = vpop.f32.mrf.mxu0
        %v1686 = vadd.f32 0.0, %v1685
        %1687 = vdwg.mxu0
        %v1688 = vadd.f32 %v1658, %v1684
        %v1689 = vadd.f32 %v1659, %v1686
        %v1690 = vld [vmem:[%s1633] sm:$0xe]
        %v1692 = vunpack.c.l.b16 %v1690
        %v1693 = vpack.c.b16 %v1662, %v1692
        %v1694 = vrot.slane %v1693, 1
        %v1696 = vsel %vm231, %v1694, 0
        %1698 = vmatpush.bf16.msra.mxu0 0
        %1699 = vmatpush.bf16.msra.mxu0 0
        %1700 = vmatpush.bf16.msra.mxu0 0
        %1701 = vmatpush.bf16.msra.mxu0 0
        %1702 = vmatpush.bf16.msra.mxu0 0
        %1703 = vmatpush.bf16.msra.mxu0 0
        %1704 = vmatpush.bf16.msra.mxu0 %v1196
        %1705 = vmatpush.bf16.msra.mxu0 %v1195
        %1706 = vmatmul.bf16.gmra.mxu0 %v1696
        %v1707 = vpop.f32.mrf.mxu0
        %v1708 = vadd.f32 0.0, %v1707
        %v1709 = vpop.f32.mrf.mxu0
        %v1710 = vadd.f32 0.0, %v1709
        %1711 = vdwg.mxu0
        %v1712 = vadd.f32 %v1688, %v1708
        %v1713 = vadd.f32 %v1689, %v1710
        %v1714 = vld [vmem:[%s1633 + $0x4] sm:$0x7]
        %v1716 = vunpack.c.l.b16 %v1714
        %v1717 = vpack.c.b16 %v1716, %v1692
        %v1719 = vshrl.u32 %v1717, 16
        %v1721 = vrot.slane %v1719, 1
        %v1722 = vshll.u32 %v1717, 16
        %v1724 = vrot.slane %v1722, 2
        %v1725 = vor.u32 %v1721, %v1724
        %v1727 = vsel %vm231, %v1725, 0
        %1729 = vmatpush.bf16.msra.mxu0 0
        %1730 = vmatpush.bf16.msra.mxu0 0
        %1731 = vmatpush.bf16.msra.mxu0 0
        %1732 = vmatpush.bf16.msra.mxu0 0
        %1733 = vmatpush.bf16.msra.mxu0 0
        %1734 = vmatpush.bf16.msra.mxu0 0
        %1735 = vmatpush.bf16.msra.mxu0 %v1244
        %1736 = vmatpush.bf16.msra.mxu0 %v1243
        %1737 = vmatmul.bf16.gmra.mxu0 %v1727
        %v1738 = vpop.f32.mrf.mxu0
        %v1739 = vadd.f32 0.0, %v1738
        %v1740 = vpop.f32.mrf.mxu0
        %v1741 = vadd.f32 0.0, %v1740
        %1742 = vdwg.mxu0
        %v1743 = vadd.f32 %v1712, %v1739
        %v1744 = vadd.f32 %v1713, %v1741
        %v1745 = vld [vmem:[%s1633] sm:$0xc]
        %v1747 = vunpack.c.l.b16 %v1745
        %v1748 = vpack.c.b16 %v1716, %v1747
        %v1749 = vrot.slane %v1748, 2
        %v1751 = vsel %vm231, %v1749, 0
        %1753 = vmatpush.bf16.msra.mxu0 0
        %1754 = vmatpush.bf16.msra.mxu0 0
        %1755 = vmatpush.bf16.msra.mxu0 0
        %1756 = vmatpush.bf16.msra.mxu0 0
        %1757 = vmatpush.bf16.msra.mxu0 0
        %1758 = vmatpush.bf16.msra.mxu0 0
        %1759 = vmatpush.bf16.msra.mxu0 %v1285
        %1760 = vmatpush.bf16.msra.mxu0 %v1284
        %1761 = vmatmul.bf16.gmra.mxu0 %v1751
        %v1762 = vpop.f32.mrf.mxu0
        %v1763 = vadd.f32 0.0, %v1762
        %v1764 = vpop.f32.mrf.mxu0
        %v1765 = vadd.f32 0.0, %v1764
        %1766 = vdwg.mxu0
        %v1767 = vadd.f32 %v1743, %v1763
        %v1768 = vadd.f32 %v1744, %v1765
        %v1769 = vadd.f32 %v1767, %v1308
        %v1770 = vadd.f32 %v1768, %v1308
        %v1771 = vmax.f32 %v1769, 0.0
        %v1772 = vmax.f32 %v1770, 0.0
        %v1773 = vmax.f32 %v1312, %v1771
        %v1774 = vmax.f32 %v1313, %v1772
        %vm1775 = vcmask 80896
        %v1777 = vsel %vm1775, %v180, 0
        %vm1779 = vcmask 1041408
        %v1781 = vsel %vm1779, %v1774, 0
        %1783 = vmatpush.msra.mxu0 0.0
        %1784 = vmatpush.msra.mxu0 0.0
        %1785 = vmatpush.msra.mxu0 0.0
        %1786 = vmatpush.msra.mxu0 0.0
        %1787 = vmatpush.msra.mxu0 0.0
        %1788 = vmatpush.msra.mxu0 0.0
        %1789 = vmatpush.msra.mxu0 0.0
        %1790 = vmatpush.msra.mxu0 0.0
        %1791 = vmatpush.msra.mxu0 0.0
        %1792 = vmatpush.msra.mxu0 0.0
        %1793 = vmatpush.msra.mxu0 0.0
        %1794 = vmatpush.msra.mxu0 0.0
        %1795 = vmatpush.msra.mxu0 0.0
        %1796 = vmatpush.msra.mxu0 0.0
        %1797 = vmatpush.msra.mxu0 %v1781
        %1798 = vmatpush.msra.mxu0 %v1773
        %1799 = vmatmul.f32.gmra.mxu0 %v1777
        %v1800 = vpop.f32.mrf.mxu0
        %v1801 = vadd.f32 0.0, %v1800
        %1802 = vdwg.mxu0
        %v1804 = vsel %vm1775, %v184, 0
        %1806 = vmatpush.msra.mxu0 0.0
        %1807 = vmatpush.msra.mxu0 0.0
        %1808 = vmatpush.msra.mxu0 0.0
        %1809 = vmatpush.msra.mxu0 0.0
        %1810 = vmatpush.msra.mxu0 0.0
        %1811 = vmatpush.msra.mxu0 0.0
        %1812 = vmatpush.msra.mxu0 0.0
        %1813 = vmatpush.msra.mxu0 0.0
        %1814 = vmatpush.msra.mxu0 0.0
        %1815 = vmatpush.msra.mxu0 0.0
        %1816 = vmatpush.msra.mxu0 0.0
        %1817 = vmatpush.msra.mxu0 0.0
        %1818 = vmatpush.msra.mxu0 0.0
        %1819 = vmatpush.msra.mxu0 0.0
        %1820 = vmatpush.msra.mxu0 %v1781
        %1821 = vmatpush.msra.mxu0 %v1773
        %1822 = vmatmul.f32.gmra.mxu0 %v1804
        %v1823 = vpop.f32.mrf.mxu0
        %v1824 = vadd.f32 0.0, %v1823
        %1825 = vdwg.mxu0
        %v1826 = vmax.f32 %v1801, %v1824
        %v1827 = vpack.c.bf16 %v1826, %v1826
        %s1828 = smul.addr %s186, 4
        %s1829 = scalar_lea.vmem %s170, %s1828
        %vm1830 = vcmask 518144
        %vm1831 = vsmask.f32 2304
        %vm1832 = vmand %vm1830, %vm1831
        %v1833 = vld [vmem:[%s1829] sm:$0x7]
        %v1834 = vsel %vm1832, %v1827, %v1833
        %1835 = vst [vmem:[%s1829] sm:$0x7] %v1834
      $region37: #{lenet5_tr_forward.4} parent=31 // loop_footer
        %s190 = sadd.s32 1, %s186
      $region38: #{lenet5_tr_forward.4} parent=31 // loop_footer_branch
        %185 = sbr.rel target = $region34
      $region39: #{lenet5_tr_forward.4} parent=31 // loop_exit
        _
      %p1836 = scmp.lt.s32.totalorder %s14, 1
      %s1837 = scalar_select %p1836, %s14, 1
      %s1838 = smul.addr %s1837, 5
      %s1839 = smul.addr %s1838, 4
      %s1840 = scalar_lea.vmem %s3, %s1839
      // Predicated region
      $region40: #{lenet5_tr_forward.4} parent=31 // pred_check
        %p1841 = pneg %p100
      $region41: #{lenet5_tr_forward.4} parent=31 // pred_check_branch
        %1843 = sbr.rel (%p1841) target = $region43
      $region42: #{lenet5_tr_forward.4} parent=31 // pred_region
        _
      $region43: #{lenet5_tr_forward.4} parent=31 // pred_fallthru
        _
    $region32: #{lenet5_tr_forward.4} parent=5 // pred_fallthru
      _
    %p1844 = scmp.le.s32.totalorder 2, %s9
    // Predicated region
    $region44: #{lenet5_tr_forward.4} parent=5 // pred_check
      %p1845 = pneg %p1844
    $region45: #{lenet5_tr_forward.4} parent=5 // pred_check_branch
      %1847 = sbr.rel (%p1845) target = $region47
    $region46: #{lenet5_tr_forward.4} parent=5 // pred_region
      %s1848 = ssub.s32 %s9, 2
      // Predicated region
      $region48: #{lenet5_tr_forward.4} parent=46 // pred_check
        %p1849 = pneg %p106
      $region49: #{lenet5_tr_forward.4} parent=46 // pred_check_branch
        %1851 = sbr.rel (%p1849) target = $region51
      $region50: #{lenet5_tr_forward.4} parent=46 // pred_region
        %p1852 = scmp.lt.s32.totalorder %s15, 1
        %s1853 = scalar_select %p1852, %s15, 1
        %s1854 = smul.addr %s1853, 5
        %s1855 = smul.addr %s1854, 4
        %s1856 = scalar_lea.vmem %s3, %s1855
      $region51: #{lenet5_tr_forward.4} parent=46 // pred_fallthru
        _
    $region47: #{lenet5_tr_forward.4} parent=5 // pred_fallthru
      _
  $region6: #{lenet5_tr_forward.4} parent=0 // loop_footer
    %s13 = sadd.s32 1, %s9
  $region7: #{lenet5_tr_forward.4} parent=0 // loop_footer_branch
    %8 = sbr.rel target = $region3
  $region8: #{lenet5_tr_forward.4} parent=0 // loop_exit
    _

// kernel: lenet5_tr_forward.3
$region0: #{lenet5_tr_forward.3}
  #allocation0 [shape = 'u32[]', space=smem, size = 0x4, offset = 0x4, fixed_abs, tag = 'smem constant byte address 0x4 - core index']
  #allocation1 [shape = 'u32[72,128]{1,0:T(1,128)}', space=vmem, size = 0x9000, scoped, tag = 'internal scratch']
  %s0 = inlined_call_operand.vmem [shape: bf16[2,32,32,8], index: 0, kind: input, shape index: {}]
  %s1 = inlined_call_operand.vmem [shape: bf16[25,8,32], index: 1, kind: input, shape index: {}]
  %s2 = inlined_call_operand.vmem [shape: f32[1,32], index: 2, kind: input, shape index: {}]
  %s3 = inlined_call_operand.vmem [shape: bf16[2,14,14,32], index: 3, kind: output, shape index: {}]
  %s4 = sld [smem:[#allocation0]]
  $region52: #{lenet5_tr_forward.3} parent=0
    _
  %s6 = ssub.s32 1, %s4
  %s7 = scalar_select 0, %s6, %s4
  loop: start=0, step=1, limit=4
  $region2: #{lenet5_tr_forward.3} parent=0 // loop_pre_header
    _
  $region3: #{lenet5_tr_forward.3} parent=0 // loop_header
    %s9 = sphi 0, %s13
    %p10 = scmp.ge.s32.totalorder %s9, 4
    %s19 = sphi 0, %s21
    %s22 = sphi 0, %s19
    %s23 = sphi 0, %s22
    %s39 = sphi 0, %s23
    %s43 = sphi 0, %s43
    %s45 = sphi 0, %s43
    %s46 = sphi 0, %s45
    %s60 = sphi 0, %s46
    %s64 = sphi 0, %s64
    %s66 = sphi 0, %s64
    %s67 = sphi 0, %s66
    %s81 = sphi 0, %s67
    %s87 = sphi 0, %s89
    %s90 = sphi 0, %s87
    %s91 = sphi 0, %s90
    %s107 = sphi 0, %s91
  $region4: #{lenet5_tr_forward.3} parent=0 // loop_header_branch
    %12 = sbr.rel (%p10) target = $region8
  $region5: #{lenet5_tr_forward.3} parent=0 // loop_body
    %s14 = ssub.s32 %s9, 1
    %s15 = ssub.s32 %s9, 2
    %s16 = sadd.s32 %s9, 1
    %s17 = ssub.s32 %s9, %s16
    %p18 = scmp.eq.s32.totalorder %s17, 0
    %s20 = sadd.s32 %s19, 1
    %s21 = scalar_select %p18, %s19, %s20
    %p24 = pneg %p18
    %p25 = scmp.eq.s32.totalorder %s9, 1
    %p26 = por %p24, %p25
    %p27 = scmp.ne.s32.totalorder %s19, %s22
    %p28 = scmp.eq.s32.totalorder %s9, 0
    %p29 = por %p27, %p28
    %p30 = scmp.ne.s32.totalorder %s19, %s22
    %p31 = scmp.eq.s32.totalorder %s14, 1
    %p32 = por %p30, %p31
    %p33 = scmp.ne.s32.totalorder %s22, %s23
    %p34 = scmp.eq.s32.totalorder %s14, 0
    %p35 = por %p33, %p34
    %p36 = scmp.ne.s32.totalorder %s22, %s23
    %p37 = scmp.eq.s32.totalorder %s15, 1
    %p38 = por %p36, %p37
    %p40 = scmp.ne.s32.totalorder %s23, %s39
    %p41 = scmp.eq.s32.totalorder %s15, 0
    %p42 = por %p40, %p41
    %s44 = sadd.s32 %s43, 1
    %p47 = scmp.eq.s32.totalorder %s9, 1
    %p48 = scmp.ne.s32.totalorder %s43, %s45
    %p49 = scmp.eq.s32.totalorder %s9, 0
    %p50 = por %p48, %p49
    %p51 = scmp.ne.s32.totalorder %s43, %s45
    %p52 = scmp.eq.s32.totalorder %s14, 1
    %p53 = por %p51, %p52
    %p54 = scmp.ne.s32.totalorder %s45, %s46
    %p55 = scmp.eq.s32.totalorder %s14, 0
    %p56 = por %p54, %p55
    %p57 = scmp.ne.s32.totalorder %s45, %s46
    %p58 = scmp.eq.s32.totalorder %s15, 1
    %p59 = por %p57, %p58
    %p61 = scmp.ne.s32.totalorder %s46, %s60
    %p62 = scmp.eq.s32.totalorder %s15, 0
    %p63 = por %p61, %p62
    %s65 = sadd.s32 %s64, 1
    %p68 = scmp.eq.s32.totalorder %s9, 1
    %p69 = scmp.ne.s32.totalorder %s64, %s66
    %p70 = scmp.eq.s32.totalorder %s9, 0
    %p71 = por %p69, %p70
    %p72 = scmp.ne.s32.totalorder %s64, %s66
    %p73 = scmp.eq.s32.totalorder %s14, 1
    %p74 = por %p72, %p73
    %p75 = scmp.ne.s32.totalorder %s66, %s67
    %p76 = scmp.eq.s32.totalorder %s14, 0
    %p77 = por %p75, %p76
    %p78 = scmp.ne.s32.totalorder %s66, %s67
    %p79 = scmp.eq.s32.totalorder %s15, 1
    %p80 = por %p78, %p79
    %p82 = scmp.ne.s32.totalorder %s67, %s81
    %p83 = scmp.eq.s32.totalorder %s15, 0
    %p84 = por %p82, %p83
    %s85 = ssub.s32 %s9, %s16
    %p86 = scmp.eq.s32.totalorder %s85, 0
    %s88 = sadd.s32 %s87, 1
    %s89 = scalar_select %p86, %s87, %s88
    %p92 = pneg %p86
    %p93 = scmp.eq.s32.totalorder %s9, 1
    %p94 = por %p92, %p93
    %p95 = scmp.ne.s32.totalorder %s87, %s90
    %p96 = scmp.eq.s32.totalorder %s9, 0
    %p97 = por %p95, %p96
    %p98 = scmp.ne.s32.totalorder %s87, %s90
    %p99 = scmp.eq.s32.totalorder %s14, 1
    %p100 = por %p98, %p99
    %p101 = scmp.ne.s32.totalorder %s90, %s91
    %p102 = scmp.eq.s32.totalorder %s14, 0
    %p103 = por %p101, %p102
    %p104 = scmp.ne.s32.totalorder %s90, %s91
    %p105 = scmp.eq.s32.totalorder %s15, 1
    %p106 = por %p104, %p105
    %p108 = scmp.ne.s32.totalorder %s91, %s107
    %p109 = scmp.eq.s32.totalorder %s15, 0
    %p110 = por %p108, %p109
    %p111 = scmp.le.s32.totalorder 1, %s9
    %p112 = scmp.lt.s32.totalorder %s9, 3
    %p113 = pnand %p111, %p112
    %p114 = pneg %p113
    // Predicated region
    $region9: #{lenet5_tr_forward.3} parent=5 // pred_check
      _
    $region10: #{lenet5_tr_forward.3} parent=5 // pred_check_branch
      %116 = sbr.rel (%p113) target = $region12
    $region11: #{lenet5_tr_forward.3} parent=5 // pred_region
      %s117 = ssub.s32 %s9, 1
      // Predicated region
      $region13: #{lenet5_tr_forward.3} parent=11 // pred_check
        %p118 = pneg %p56
      $region14: #{lenet5_tr_forward.3} parent=11 // pred_check_branch
        %120 = sbr.rel (%p118) target = $region16
      $region15: #{lenet5_tr_forward.3} parent=11 // pred_region
        _
      $region16: #{lenet5_tr_forward.3} parent=11 // pred_fallthru
        _
      // Predicated region
      $region17: #{lenet5_tr_forward.3} parent=11 // pred_check
        %p121 = pneg %p77
      $region18: #{lenet5_tr_forward.3} parent=11 // pred_check_branch
        %123 = sbr.rel (%p121) target = $region20
      $region19: #{lenet5_tr_forward.3} parent=11 // pred_region
        _
      $region20: #{lenet5_tr_forward.3} parent=11 // pred_fallthru
        _
    $region12: #{lenet5_tr_forward.3} parent=5 // pred_fallthru
      _
    %p124 = scmp.lt.s32.totalorder %s9, 2
    // Predicated region
    $region21: #{lenet5_tr_forward.3} parent=5 // pred_check
      %p125 = pneg %p124
    $region22: #{lenet5_tr_forward.3} parent=5 // pred_check_branch
      %127 = sbr.rel (%p125) target = $region24
    $region23: #{lenet5_tr_forward.3} parent=5 // pred_region
      // Predicated region
      $region25: #{lenet5_tr_forward.3} parent=23 // pred_check
        %p128 = pneg %p29
      $region26: #{lenet5_tr_forward.3} parent=23 // pred_check_branch
        %130 = sbr.rel (%p128) target = $region28
      $region27: #{lenet5_tr_forward.3} parent=23 // pred_region
        %p131 = scmp.lt.s32.totalorder %s9, 1
        %s132 = scalar_select %p131, %s9, 1
        %s133 = smul.addr %s132, 128
        %s134 = smul.addr %s133, 4
        %s135 = scalar_lea.vmem %s0, %s134
      $region28: #{lenet5_tr_forward.3} parent=23 // pred_fallthru
        _
    $region24: #{lenet5_tr_forward.3} parent=5 // pred_fallthru
      _
    %p136 = scmp.le.s32.totalorder 1, %s9
    %p137 = scmp.lt.s32.totalorder %s9, 3
    %p138 = pnand %p136, %p137
    %p139 = pneg %p138
    // Predicated region
    $region29: #{lenet5_tr_forward.3} parent=5 // pred_check
      _
    $region30: #{lenet5_tr_forward.3} parent=5 // pred_check_branch
      %141 = sbr.rel (%p138) target = $region32
    $region31: #{lenet5_tr_forward.3} parent=5 // pred_region
      %s142 = ssub.s32 %s9, 1
      %p143 = scmp.lt.s32.totalorder %s14, 1
      %s144 = scalar_select %p143, %s14, 1
      %s145 = smul.addr %s144, 128
      %s146 = smul.addr %s145, 4
      %s147 = scalar_lea.vmem %s0, %s146
      %p148 = pneg %p35
      %p149 = pneg %p32
      %p150 = pneg %p56
      %p151 = pneg %p53
      %p152 = pneg %p77
      %p153 = pneg %p74
      %p154 = pneg %p103
      %p155 = pneg %p100
      %p156 = scmp.lt.s32.totalorder %s14, 1
      %s157 = scalar_select %p156, %s14, 1
      %s158 = smul.addr %s157, 28
      %s159 = smul.addr %s158, 4
      %s160 = scalar_lea.vmem %s3, %s159
      %p161 = scmp.lt.s32.totalorder %s14, 1
      %s162 = scalar_select %p161, %s14, 1
      %s163 = smul.addr %s162, 128
      %s164 = smul.addr %s163, 4
      %s165 = scalar_lea.vmem %s0, %s164
      %p166 = scmp.lt.s32.totalorder %s14, 1
      %s167 = scalar_select %p166, %s14, 1
      %s168 = smul.addr %s167, 28
      %s169 = smul.addr %s168, 4
      %s170 = scalar_lea.vmem %s3, %s169
      %v172 = vld [vmem:[%s2] sm:$0x1]
      %v173 = vlaneseq
      %v174 = vand.u32 %v173, 127
      %v175 = vlaneseq
      %v176 = vshrl.u32 %v175, 7
      %v177 = vadd.s32 %v176, 8
      %v178 = vmul.u32 %v176, 2
      %v179 = vmul.u32 %v177, 2
      %vm180 = vcmp.eq.s32.totalorder %v174, %v178
      %vm181 = vcmp.eq.s32.totalorder %v174, %v179
      %v182 = vsel %vm180, 1, 0
      %v183 = vsel %vm181, 1, 0
      %v184 = vcvt.s32.f32 %v182
      %v185 = vcvt.s32.f32 %v183
      %v186 = vadd.s32 %v178, 1
      %v187 = vadd.s32 %v179, 1
      %vm188 = vcmp.eq.s32.totalorder %v174, %v186
      %vm189 = vcmp.eq.s32.totalorder %v174, %v187
      %v190 = vsel %vm188, 1, 0
      %v191 = vsel %vm189, 1, 0
      %v192 = vcvt.s32.f32 %v190
      %v193 = vcvt.s32.f32 %v191
      loop: start=0, step=1, limit=14
      $region33: #{lenet5_tr_forward.3} parent=31 // loop_pre_header
        _
      $region34: #{lenet5_tr_forward.3} parent=31 // loop_header
        %s195 = sphi 0, %s199
        %p196 = scmp.ge.s32.totalorder %s195, 14
      $region35: #{lenet5_tr_forward.3} parent=31 // loop_header_branch
        %198 = sbr.rel (%p196) target = $region39
      $region36: #{lenet5_tr_forward.3} parent=31 // loop_body
        %s200 = smul.u32 %s195, 2
        %s201 = smul.u32 %s200, 4
        %s202 = smul.addr %s201, 4
        %s203 = scalar_lea.vmem %s165, %s202
        %v204 = vld [vmem:[%s203] sm:$0xf]
        %v205 = vld [vmem:[%s203 + $0x4] sm:$0xf]
        %v206 = vld [vmem:[%s203 + $0x8] sm:$0xf]
        %v207 = vld [vmem:[%s203 + $0xc] sm:$0x3]
        %v208 = vld [vmem:[%s1] sm:$0xf]
        %v209 = vld [vmem:[%s203 + $0xc] sm:$0x7]
        %s210 = scalar_lea.vmem %s1, 4
        %v211 = vld [vmem:[%s210] sm:$0xf]
        %v216 = vunpack.c.l.b16 %v204
        %v217 = vunpack.c.l.b16 %v205
        %v218 = vunpack.c.l.b16 %v206
        %v219 = vunpack.c.l.b16 %v209
        %v220 = vpack.c.b16 %v217, %v216
        %v221 = vpack.c.b16 %v219, %v218
        %vm222 = vsmask.f32 7424
        %v224 = vshrl.u32 %v220, 16
        %v226 = vshll.u32 %v220, 16
        %v228 = vrot.slane %v226, 1
        %v229 = vor.u32 %v224, %v228
        %v231 = vshll.u32 %v221, 16
        %v233 = vrot.slane %v231, 1
        %v234 = vsel %vm222, %v229, %v233
        %v235 = vshrl.u32 %v221, 16
        %v237 = vor.u32 %v235, %v233
        %vm238 = vcmask 64512
        %v240 = vsel %vm238, %v234, 0
        %v243 = vsel %vm238, %v237, 0
        %vm245 = vcmask 1043456
        %v247 = vsel %vm245, %v211, 0
        %249 = vmatpush.bf16.msra.mxu0 0
        %250 = vmatpush.bf16.msra.mxu0 0
        %251 = vmatpush.bf16.msra.mxu0 0
        %252 = vmatpush.bf16.msra.mxu0 0
        %253 = vmatpush.bf16.msra.mxu0 0
        %254 = vmatpush.bf16.msra.mxu0 0
        %255 = vmatpush.bf16.msra.mxu0 0
        %256 = vmatpush.bf16.msra.mxu0 %v247
        %257 = vmatmul.bf16.gmra.mxu0 %v240
        %v258 = vpop.f32.mrf.mxu0
        %v259 = vadd.f32 0.0, %v258
        %v260 = vpop.f32.mrf.mxu0
        %v261 = vadd.f32 0.0, %v260
        %262 = vmatmul.bf16.gmra.mxu0 %v243
        %v263 = vpop.f32.mrf.mxu0
        %v264 = vadd.f32 0.0, %v263
        %v265 = vpop.f32.mrf.mxu0
        %v266 = vadd.f32 0.0, %v265
        %267 = vdwg.mxu0
        %v269 = vunpack.c.l.b16 %v207
        %v270 = vpack.c.b16 %v269, %v218
        %v271 = vsel %vm238, %v220, 0
        %v274 = vsel %vm238, %v270, 0
        %v277 = vsel %vm245, %v208, 0
        %279 = vmatpush.bf16.msra.mxu0 0
        %280 = vmatpush.bf16.msra.mxu0 0
        %281 = vmatpush.bf16.msra.mxu0 0
        %282 = vmatpush.bf16.msra.mxu0 0
        %283 = vmatpush.bf16.msra.mxu0 0
        %284 = vmatpush.bf16.msra.mxu0 0
        %285 = vmatpush.bf16.msra.mxu0 0
        %286 = vmatpush.bf16.msra.mxu0 %v277
        %287 = vmatmul.bf16.gmra.mxu0 %v271
        %v288 = vpop.f32.mrf.mxu0
        %v289 = vadd.f32 %v259, %v288
        %v290 = vpop.f32.mrf.mxu0
        %v291 = vadd.f32 %v261, %v290
        %292 = vmatmul.bf16.gmra.mxu0 %v274
        %v293 = vpop.f32.mrf.mxu0
        %v294 = vadd.f32 %v264, %v293
        %v295 = vpop.f32.mrf.mxu0
        %v296 = vadd.f32 %v266, %v295
        %297 = vdwg.mxu0
        %v298 = vld [vmem:[%s203] sm:$0xe]
        %s299 = scalar_lea.vmem %s1, 8
        %v300 = vld [vmem:[%s299] sm:$0xf]
        %v302 = vunpack.c.l.b16 %v298
        %v303 = vpack.c.b16 %v217, %v302
        %vm304 = vcmask 1046528
        %v305 = vrot.slane %v303, 1
        %v306 = vrot.slane %v221, 1
        %v307 = vsel %vm304, %v305, %v306
        %v309 = vsel %vm238, %v307, 0
        %v312 = vsel %vm238, %v306, 0
        %v315 = vsel %vm245, %v300, 0
        %317 = vmatpush.bf16.msra.mxu0 0
        %318 = vmatpush.bf16.msra.mxu0 0
        %319 = vmatpush.bf16.msra.mxu0 0
        %320 = vmatpush.bf16.msra.mxu0 0
        %321 = vmatpush.bf16.msra.mxu0 0
        %322 = vmatpush.bf16.msra.mxu0 0
        %323 = vmatpush.bf16.msra.mxu0 0
        %324 = vmatpush.bf16.msra.mxu0 %v315
        %325 = vmatmul.bf16.gmra.mxu0 %v309
        %v326 = vpop.f32.mrf.mxu0
        %v327 = vadd.f32 0.0, %v326
        %v328 = vpop.f32.mrf.mxu0
        %v329 = vadd.f32 0.0, %v328
        %330 = vmatmul.bf16.gmra.mxu0 %v312
        %v331 = vpop.f32.mrf.mxu0
        %v332 = vadd.f32 0.0, %v331
        %v333 = vpop.f32.mrf.mxu0
        %v334 = vadd.f32 0.0, %v333
        %335 = vdwg.mxu0
        %v336 = vadd.f32 %v289, %v327
        %v337 = vadd.f32 %v291, %v329
        %v338 = vadd.f32 %v294, %v332
        %v339 = vadd.f32 %v296, %v334
        %v340 = vld [vmem:[%s203 + $0xc] sm:$0xf]
        %s341 = scalar_lea.vmem %s1, 12
        %v342 = vld [vmem:[%s341] sm:$0xf]
        %v344 = vunpack.c.l.b16 %v340
        %v345 = vpack.c.b16 %v344, %v218
        %vm346 = vsmask.f32 6400
        %v348 = vshrl.u32 %v303, 16
        %v350 = vrot.slane %v348, 1
        %v351 = vshll.u32 %v303, 16
        %v353 = vrot.slane %v351, 2
        %v354 = vor.u32 %v350, %v353
        %v356 = vshrl.u32 %v345, 16
        %v358 = vrot.slane %v356, 1
        %v359 = vshll.u32 %v345, 16
        %v361 = vrot.slane %v359, 2
        %v362 = vor.u32 %v358, %v361
        %v363 = vsel %vm346, %v354, %v362
        %v365 = vsel %vm238, %v363, 0
        %v368 = vsel %vm238, %v362, 0
        %v371 = vsel %vm245, %v342, 0
        %373 = vmatpush.bf16.msra.mxu0 0
        %374 = vmatpush.bf16.msra.mxu0 0
        %375 = vmatpush.bf16.msra.mxu0 0
        %376 = vmatpush.bf16.msra.mxu0 0
        %377 = vmatpush.bf16.msra.mxu0 0
        %378 = vmatpush.bf16.msra.mxu0 0
        %379 = vmatpush.bf16.msra.mxu0 0
        %380 = vmatpush.bf16.msra.mxu0 %v371
        %381 = vmatmul.bf16.gmra.mxu0 %v365
        %v382 = vpop.f32.mrf.mxu0
        %v383 = vadd.f32 0.0, %v382
        %v384 = vpop.f32.mrf.mxu0
        %v385 = vadd.f32 0.0, %v384
        %386 = vmatmul.bf16.gmra.mxu0 %v368
        %v387 = vpop.f32.mrf.mxu0
        %v388 = vadd.f32 0.0, %v387
        %v389 = vpop.f32.mrf.mxu0
        %v390 = vadd.f32 0.0, %v389
        %391 = vdwg.mxu0
        %v392 = vadd.f32 %v336, %v383
        %v393 = vadd.f32 %v337, %v385
        %v394 = vadd.f32 %v338, %v388
        %v395 = vadd.f32 %v339, %v390
        %v396 = vld [vmem:[%s203] sm:$0xc]
        %s397 = scalar_lea.vmem %s1, 16
        %v398 = vld [vmem:[%s397] sm:$0xf]
        %v400 = vunpack.c.l.b16 %v396
        %v401 = vpack.c.b16 %v217, %v400
        %vm402 = vcmask 1045504
        %v403 = vrot.slane %v401, 2
        %v404 = vrot.slane %v345, 2
        %v405 = vsel %vm402, %v403, %v404
        %v407 = vsel %vm238, %v405, 0
        %v410 = vsel %vm238, %v404, 0
        %v413 = vsel %vm245, %v398, 0
        %415 = vmatpush.bf16.msra.mxu0 0
        %416 = vmatpush.bf16.msra.mxu0 0
        %417 = vmatpush.bf16.msra.mxu0 0
        %418 = vmatpush.bf16.msra.mxu0 0
        %419 = vmatpush.bf16.msra.mxu0 0
        %420 = vmatpush.bf16.msra.mxu0 0
        %421 = vmatpush.bf16.msra.mxu0 0
        %422 = vmatpush.bf16.msra.mxu0 %v413
        %423 = vmatmul.bf16.gmra.mxu0 %v407
        %v424 = vpop.f32.mrf.mxu0
        %v425 = vadd.f32 0.0, %v424
        %v426 = vpop.f32.mrf.mxu0
        %v427 = vadd.f32 0.0, %v426
        %428 = vmatmul.bf16.gmra.mxu0 %v410
        %v429 = vpop.f32.mrf.mxu0
        %v430 = vadd.f32 0.0, %v429
        %v431 = vpop.f32.mrf.mxu0
        %v432 = vadd.f32 0.0, %v431
        %433 = vdwg.mxu0
        %v434 = vadd.f32 %v392, %v425
        %v435 = vadd.f32 %v393, %v427
        %v436 = vadd.f32 %v394, %v430
        %v437 = vadd.f32 %v395, %v432
        %s438 = sadd.s32 %s200, 1
        %s439 = smul.u32 %s438, 4
        %s440 = smul.addr %s439, 4
        %s441 = scalar_lea.vmem %s165, %s440
        %v442 = vld [vmem:[%s441] sm:$0xf]
        %v443 = vld [vmem:[%s441 + $0x4] sm:$0xf]
        %v444 = vld [vmem:[%s441 + $0x8] sm:$0xf]
        %v445 = vld [vmem:[%s441 + $0xc] sm:$0x3]
        %s446 = scalar_lea.vmem %s1, 20
        %v447 = vld [vmem:[%s446] sm:$0xf]
        %v452 = vunpack.c.l.b16 %v442
        %v453 = vunpack.c.l.b16 %v443
        %v454 = vunpack.c.l.b16 %v444
        %v455 = vunpack.c.l.b16 %v445
        %v456 = vpack.c.b16 %v453, %v452
        %v457 = vpack.c.b16 %v455, %v454
        %v459 = vsel %vm238, %v456, 0
        %v462 = vsel %vm238, %v457, 0
        %v465 = vsel %vm245, %v447, 0
        %467 = vmatpush.bf16.msra.mxu0 0
        %468 = vmatpush.bf16.msra.mxu0 0
        %469 = vmatpush.bf16.msra.mxu0 0
        %470 = vmatpush.bf16.msra.mxu0 0
        %471 = vmatpush.bf16.msra.mxu0 0
        %472 = vmatpush.bf16.msra.mxu0 0
        %473 = vmatpush.bf16.msra.mxu0 0
        %474 = vmatpush.bf16.msra.mxu0 %v465
        %475 = vmatmul.bf16.gmra.mxu0 %v459
        %v476 = vpop.f32.mrf.mxu0
        %v477 = vadd.f32 0.0, %v476
        %v478 = vpop.f32.mrf.mxu0
        %v479 = vadd.f32 0.0, %v478
        %480 = vmatmul.bf16.gmra.mxu0 %v462
        %v481 = vpop.f32.mrf.mxu0
        %v482 = vadd.f32 0.0, %v481
        %v483 = vpop.f32.mrf.mxu0
        %v484 = vadd.f32 0.0, %v483
        %485 = vdwg.mxu0
        %v486 = vadd.f32 %v434, %v477
        %v487 = vadd.f32 %v435, %v479
        %v488 = vadd.f32 %v436, %v482
        %v489 = vadd.f32 %v437, %v484
        %v490 = vld [vmem:[%s441 + $0xc] sm:$0x7]
        %s491 = scalar_lea.vmem %s1, 24
        %v492 = vld [vmem:[%s491] sm:$0xf]
        %v494 = vunpack.c.l.b16 %v490
        %v495 = vpack.c.b16 %v494, %v454
        %v496 = vshrl.u32 %v456, 16
        %v498 = vshll.u32 %v456, 16
        %v500 = vrot.slane %v498, 1
        %v501 = vor.u32 %v496, %v500
        %v503 = vshll.u32 %v495, 16
        %v505 = vrot.slane %v503, 1
        %v506 = vsel %vm222, %v501, %v505
        %v507 = vshrl.u32 %v495, 16
        %v509 = vor.u32 %v507, %v505
        %v511 = vsel %vm238, %v506, 0
        %v514 = vsel %vm238, %v509, 0
        %v517 = vsel %vm245, %v492, 0
        %519 = vmatpush.bf16.msra.mxu0 0
        %520 = vmatpush.bf16.msra.mxu0 0
        %521 = vmatpush.bf16.msra.mxu0 0
        %522 = vmatpush.bf16.msra.mxu0 0
        %523 = vmatpush.bf16.msra.mxu0 0
        %524 = vmatpush.bf16.msra.mxu0 0
        %525 = vmatpush.bf16.msra.mxu0 0
        %526 = vmatpush.bf16.msra.mxu0 %v517
        %527 = vmatmul.bf16.gmra.mxu0 %v511
        %v528 = vpop.f32.mrf.mxu0
        %v529 = vadd.f32 0.0, %v528
        %v530 = vpop.f32.mrf.mxu0
        %v531 = vadd.f32 0.0, %v530
        %532 = vmatmul.bf16.gmra.mxu0 %v514
        %v533 = vpop.f32.mrf.mxu0
        %v534 = vadd.f32 0.0, %v533
        %v535 = vpop.f32.mrf.mxu0
        %v536 = vadd.f32 0.0, %v535
        %537 = vdwg.mxu0
        %v538 = vadd.f32 %v486, %v529
        %v539 = vadd.f32 %v487, %v531
        %v540 = vadd.f32 %v488, %v534
        %v541 = vadd.f32 %v489, %v536
        %v542 = vld [vmem:[%s441] sm:$0xe]
        %s543 = scalar_lea.vmem %s1, 28
        %v544 = vld [vmem:[%s543] sm:$0xf]
        %v546 = vunpack.c.l.b16 %v542
        %v547 = vpack.c.b16 %v453, %v546
        %v548 = vrot.slane %v547, 1
        %v549 = vrot.slane %v495, 1
        %v550 = vsel %vm304, %v548, %v549
        %v552 = vsel %vm238, %v550, 0
        %v555 = vsel %vm238, %v549, 0
        %v558 = vsel %vm245, %v544, 0
        %560 = vmatpush.bf16.msra.mxu0 0
        %561 = vmatpush.bf16.msra.mxu0 0
        %562 = vmatpush.bf16.msra.mxu0 0
        %563 = vmatpush.bf16.msra.mxu0 0
        %564 = vmatpush.bf16.msra.mxu0 0
        %565 = vmatpush.bf16.msra.mxu0 0
        %566 = vmatpush.bf16.msra.mxu0 0
        %567 = vmatpush.bf16.msra.mxu0 %v558
        %568 = vmatmul.bf16.gmra.mxu0 %v552
        %v569 = vpop.f32.mrf.mxu0
        %v570 = vadd.f32 0.0, %v569
        %v571 = vpop.f32.mrf.mxu0
        %v572 = vadd.f32 0.0, %v571
        %573 = vmatmul.bf16.gmra.mxu0 %v555
        %v574 = vpop.f32.mrf.mxu0
        %v575 = vadd.f32 0.0, %v574
        %v576 = vpop.f32.mrf.mxu0
        %v577 = vadd.f32 0.0, %v576
        %578 = vdwg.mxu0
        %v579 = vadd.f32 %v538, %v570
        %v580 = vadd.f32 %v539, %v572
        %v581 = vadd.f32 %v540, %v575
        %v582 = vadd.f32 %v541, %v577
        %v583 = vld [vmem:[%s441 + $0xc] sm:$0xf]
        %s584 = scalar_lea.vmem %s1, 32
        %v585 = vld [vmem:[%s584] sm:$0xf]
        %v587 = vunpack.c.l.b16 %v583
        %v588 = vpack.c.b16 %v587, %v454
        %v590 = vshrl.u32 %v547, 16
        %v592 = vrot.slane %v590, 1
        %v593 = vshll.u32 %v547, 16
        %v595 = vrot.slane %v593, 2
        %v596 = vor.u32 %v592, %v595
        %v598 = vshrl.u32 %v588, 16
        %v600 = vrot.slane %v598, 1
        %v601 = vshll.u32 %v588, 16
        %v603 = vrot.slane %v601, 2
        %v604 = vor.u32 %v600, %v603
        %v605 = vsel %vm346, %v596, %v604
        %v607 = vsel %vm238, %v605, 0
        %v610 = vsel %vm238, %v604, 0
        %v613 = vsel %vm245, %v585, 0
        %615 = vmatpush.bf16.msra.mxu0 0
        %616 = vmatpush.bf16.msra.mxu0 0
        %617 = vmatpush.bf16.msra.mxu0 0
        %618 = vmatpush.bf16.msra.mxu0 0
        %619 = vmatpush.bf16.msra.mxu0 0
        %620 = vmatpush.bf16.msra.mxu0 0
        %621 = vmatpush.bf16.msra.mxu0 0
        %622 = vmatpush.bf16.msra.mxu0 %v613
        %623 = vmatmul.bf16.gmra.mxu0 %v607
        %v624 = vpop.f32.mrf.mxu0
        %v625 = vadd.f32 0.0, %v624
        %v626 = vpop.f32.mrf.mxu0
        %v627 = vadd.f32 0.0, %v626
        %628 = vmatmul.bf16.gmra.mxu0 %v610
        %v629 = vpop.f32.mrf.mxu0
        %v630 = vadd.f32 0.0, %v629
        %v631 = vpop.f32.mrf.mxu0
        %v632 = vadd.f32 0.0, %v631
        %633 = vdwg.mxu0
        %v634 = vadd.f32 %v579, %v625
        %v635 = vadd.f32 %v580, %v627
        %v636 = vadd.f32 %v581, %v630
        %v637 = vadd.f32 %v582, %v632
        %v638 = vld [vmem:[%s441] sm:$0xc]
        %s639 = scalar_lea.vmem %s1, 36
        %v640 = vld [vmem:[%s639] sm:$0xf]
        %v642 = vunpack.c.l.b16 %v638
        %v643 = vpack.c.b16 %v453, %v642
        %v644 = vrot.slane %v643, 2
        %v645 = vrot.slane %v588, 2
        %v646 = vsel %vm402, %v644, %v645
        %v648 = vsel %vm238, %v646, 0
        %v651 = vsel %vm238, %v645, 0
        %v654 = vsel %vm245, %v640, 0
        %656 = vmatpush.bf16.msra.mxu0 0
        %657 = vmatpush.bf16.msra.mxu0 0
        %658 = vmatpush.bf16.msra.mxu0 0
        %659 = vmatpush.bf16.msra.mxu0 0
        %660 = vmatpush.bf16.msra.mxu0 0
        %661 = vmatpush.bf16.msra.mxu0 0
        %662 = vmatpush.bf16.msra.mxu0 0
        %663 = vmatpush.bf16.msra.mxu0 %v654
        %664 = vmatmul.bf16.gmra.mxu0 %v648
        %v665 = vpop.f32.mrf.mxu0
        %v666 = vadd.f32 0.0, %v665
        %v667 = vpop.f32.mrf.mxu0
        %v668 = vadd.f32 0.0, %v667
        %669 = vmatmul.bf16.gmra.mxu0 %v651
        %v670 = vpop.f32.mrf.mxu0
        %v671 = vadd.f32 0.0, %v670
        %v672 = vpop.f32.mrf.mxu0
        %v673 = vadd.f32 0.0, %v672
        %674 = vdwg.mxu0
        %v675 = vadd.f32 %v634, %v666
        %v676 = vadd.f32 %v635, %v668
        %v677 = vadd.f32 %v636, %v671
        %v678 = vadd.f32 %v637, %v673
        %s679 = sadd.s32 %s200, 2
        %s680 = smul.u32 %s679, 4
        %s681 = smul.addr %s680, 4
        %s682 = scalar_lea.vmem %s165, %s681
        %v683 = vld [vmem:[%s682] sm:$0xf]
        %v684 = vld [vmem:[%s682 + $0x4] sm:$0xf]
        %v685 = vld [vmem:[%s682 + $0x8] sm:$0xf]
        %v686 = vld [vmem:[%s682 + $0xc] sm:$0x3]
        %s687 = scalar_lea.vmem %s1, 40
        %v688 = vld [vmem:[%s687] sm:$0xf]
        %v693 = vunpack.c.l.b16 %v683
        %v694 = vunpack.c.l.b16 %v684
        %v695 = vunpack.c.l.b16 %v685
        %v696 = vunpack.c.l.b16 %v686
        %v697 = vpack.c.b16 %v694, %v693
        %v698 = vpack.c.b16 %v696, %v695
        %v700 = vsel %vm238, %v697, 0
        %v703 = vsel %vm238, %v698, 0
        %v706 = vsel %vm245, %v688, 0
        %708 = vmatpush.bf16.msra.mxu0 0
        %709 = vmatpush.bf16.msra.mxu0 0
        %710 = vmatpush.bf16.msra.mxu0 0
        %711 = vmatpush.bf16.msra.mxu0 0
        %712 = vmatpush.bf16.msra.mxu0 0
        %713 = vmatpush.bf16.msra.mxu0 0
        %714 = vmatpush.bf16.msra.mxu0 0
        %715 = vmatpush.bf16.msra.mxu0 %v706
        %716 = vmatmul.bf16.gmra.mxu0 %v700
        %v717 = vpop.f32.mrf.mxu0
        %v718 = vadd.f32 0.0, %v717
        %v719 = vpop.f32.mrf.mxu0
        %v720 = vadd.f32 0.0, %v719
        %721 = vmatmul.bf16.gmra.mxu0 %v703
        %v722 = vpop.f32.mrf.mxu0
        %v723 = vadd.f32 0.0, %v722
        %v724 = vpop.f32.mrf.mxu0
        %v725 = vadd.f32 0.0, %v724
        %726 = vdwg.mxu0
        %v727 = vadd.f32 %v675, %v718
        %v728 = vadd.f32 %v676, %v720
        %v729 = vadd.f32 %v677, %v723
        %v730 = vadd.f32 %v678, %v725
        %v731 = vld [vmem:[%s682 + $0xc] sm:$0x7]
        %s732 = scalar_lea.vmem %s1, 44
        %v733 = vld [vmem:[%s732] sm:$0xf]
        %v735 = vunpack.c.l.b16 %v731
        %v736 = vpack.c.b16 %v735, %v695
        %v737 = vshrl.u32 %v697, 16
        %v739 = vshll.u32 %v697, 16
        %v741 = vrot.slane %v739, 1
        %v742 = vor.u32 %v737, %v741
        %v744 = vshll.u32 %v736, 16
        %v746 = vrot.slane %v744, 1
        %v747 = vsel %vm222, %v742, %v746
        %v748 = vshrl.u32 %v736, 16
        %v750 = vor.u32 %v748, %v746
        %v752 = vsel %vm238, %v747, 0
        %v755 = vsel %vm238, %v750, 0
        %v758 = vsel %vm245, %v733, 0
        %760 = vmatpush.bf16.msra.mxu0 0
        %761 = vmatpush.bf16.msra.mxu0 0
        %762 = vmatpush.bf16.msra.mxu0 0
        %763 = vmatpush.bf16.msra.mxu0 0
        %764 = vmatpush.bf16.msra.mxu0 0
        %765 = vmatpush.bf16.msra.mxu0 0
        %766 = vmatpush.bf16.msra.mxu0 0
        %767 = vmatpush.bf16.msra.mxu0 %v758
        %768 = vmatmul.bf16.gmra.mxu0 %v752
        %v769 = vpop.f32.mrf.mxu0
        %v770 = vadd.f32 0.0, %v769
        %v771 = vpop.f32.mrf.mxu0
        %v772 = vadd.f32 0.0, %v771
        %773 = vmatmul.bf16.gmra.mxu0 %v755
        %v774 = vpop.f32.mrf.mxu0
        %v775 = vadd.f32 0.0, %v774
        %v776 = vpop.f32.mrf.mxu0
        %v777 = vadd.f32 0.0, %v776
        %778 = vdwg.mxu0
        %v779 = vadd.f32 %v727, %v770
        %v780 = vadd.f32 %v728, %v772
        %v781 = vadd.f32 %v729, %v775
        %v782 = vadd.f32 %v730, %v777
        %v783 = vld [vmem:[%s682] sm:$0xe]
        %s784 = scalar_lea.vmem %s1, 48
        %v785 = vld [vmem:[%s784] sm:$0xf]
        %v787 = vunpack.c.l.b16 %v783
        %v788 = vpack.c.b16 %v694, %v787
        %v789 = vrot.slane %v788, 1
        %v790 = vrot.slane %v736, 1
        %v791 = vsel %vm304, %v789, %v790
        %v793 = vsel %vm238, %v791, 0
        %v796 = vsel %vm238, %v790, 0
        %v799 = vsel %vm245, %v785, 0
        %801 = vmatpush.bf16.msra.mxu0 0
        %802 = vmatpush.bf16.msra.mxu0 0
        %803 = vmatpush.bf16.msra.mxu0 0
        %804 = vmatpush.bf16.msra.mxu0 0
        %805 = vmatpush.bf16.msra.mxu0 0
        %806 = vmatpush.bf16.msra.mxu0 0
        %807 = vmatpush.bf16.msra.mxu0 0
        %808 = vmatpush.bf16.msra.mxu0 %v799
        %809 = vmatmul.bf16.gmra.mxu0 %v793
        %v810 = vpop.f32.mrf.mxu0
        %v811 = vadd.f32 0.0, %v810
        %v812 = vpop.f32.mrf.mxu0
        %v813 = vadd.f32 0.0, %v812
        %814 = vmatmul.bf16.gmra.mxu0 %v796
        %v815 = vpop.f32.mrf.mxu0
        %v816 = vadd.f32 0.0, %v815
        %v817 = vpop.f32.mrf.mxu0
        %v818 = vadd.f32 0.0, %v817
        %819 = vdwg.mxu0
        %v820 = vadd.f32 %v779, %v811
        %v821 = vadd.f32 %v780, %v813
        %v822 = vadd.f32 %v781, %v816
        %v823 = vadd.f32 %v782, %v818
        %v824 = vld [vmem:[%s682 + $0xc] sm:$0xf]
        %s825 = scalar_lea.vmem %s1, 52
        %v826 = vld [vmem:[%s825] sm:$0xf]
        %v828 = vunpack.c.l.b16 %v824
        %v829 = vpack.c.b16 %v828, %v695
        %v831 = vshrl.u32 %v788, 16
        %v833 = vrot.slane %v831, 1
        %v834 = vshll.u32 %v788, 16
        %v836 = vrot.slane %v834, 2
        %v837 = vor.u32 %v833, %v836
        %v839 = vshrl.u32 %v829, 16
        %v841 = vrot.slane %v839, 1
        %v842 = vshll.u32 %v829, 16
        %v844 = vrot.slane %v842, 2
        %v845 = vor.u32 %v841, %v844
        %v846 = vsel %vm346, %v837, %v845
        %v848 = vsel %vm238, %v846, 0
        %v851 = vsel %vm238, %v845, 0
        %v854 = vsel %vm245, %v826, 0
        %856 = vmatpush.bf16.msra.mxu0 0
        %857 = vmatpush.bf16.msra.mxu0 0
        %858 = vmatpush.bf16.msra.mxu0 0
        %859 = vmatpush.bf16.msra.mxu0 0
        %860 = vmatpush.bf16.msra.mxu0 0
        %861 = vmatpush.bf16.msra.mxu0 0
        %862 = vmatpush.bf16.msra.mxu0 0
        %863 = vmatpush.bf16.msra.mxu0 %v854
        %864 = vmatmul.bf16.gmra.mxu0 %v848
        %v865 = vpop.f32.mrf.mxu0
        %v866 = vadd.f32 0.0, %v865
        %v867 = vpop.f32.mrf.mxu0
        %v868 = vadd.f32 0.0, %v867
        %869 = vmatmul.bf16.gmra.mxu0 %v851
        %v870 = vpop.f32.mrf.mxu0
        %v871 = vadd.f32 0.0, %v870
        %v872 = vpop.f32.mrf.mxu0
        %v873 = vadd.f32 0.0, %v872
        %874 = vdwg.mxu0
        %v875 = vadd.f32 %v820, %v866
        %v876 = vadd.f32 %v821, %v868
        %v877 = vadd.f32 %v822, %v871
        %v878 = vadd.f32 %v823, %v873
        %v879 = vld [vmem:[%s682] sm:$0xc]
        %s880 = scalar_lea.vmem %s1, 56
        %v881 = vld [vmem:[%s880] sm:$0xf]
        %v883 = vunpack.c.l.b16 %v879
        %v884 = vpack.c.b16 %v694, %v883
        %v885 = vrot.slane %v884, 2
        %v886 = vrot.slane %v829, 2
        %v887 = vsel %vm402, %v885, %v886
        %v889 = vsel %vm238, %v887, 0
        %v892 = vsel %vm238, %v886, 0
        %v895 = vsel %vm245, %v881, 0
        %897 = vmatpush.bf16.msra.mxu0 0
        %898 = vmatpush.bf16.msra.mxu0 0
        %899 = vmatpush.bf16.msra.mxu0 0
        %900 = vmatpush.bf16.msra.mxu0 0
        %901 = vmatpush.bf16.msra.mxu0 0
        %902 = vmatpush.bf16.msra.mxu0 0
        %903 = vmatpush.bf16.msra.mxu0 0
        %904 = vmatpush.bf16.msra.mxu0 %v895
        %905 = vmatmul.bf16.gmra.mxu0 %v889
        %v906 = vpop.f32.mrf.mxu0
        %v907 = vadd.f32 0.0, %v906
        %v908 = vpop.f32.mrf.mxu0
        %v909 = vadd.f32 0.0, %v908
        %910 = vmatmul.bf16.gmra.mxu0 %v892
        %v911 = vpop.f32.mrf.mxu0
        %v912 = vadd.f32 0.0, %v911
        %v913 = vpop.f32.mrf.mxu0
        %v914 = vadd.f32 0.0, %v913
        %915 = vdwg.mxu0
        %v916 = vadd.f32 %v875, %v907
        %v917 = vadd.f32 %v876, %v909
        %v918 = vadd.f32 %v877, %v912
        %v919 = vadd.f32 %v878, %v914
        %s920 = sadd.s32 %s200, 3
        %s921 = smul.u32 %s920, 4
        %s922 = smul.addr %s921, 4
        %s923 = scalar_lea.vmem %s165, %s922
        %v924 = vld [vmem:[%s923] sm:$0xf]
        %v925 = vld [vmem:[%s923 + $0x4] sm:$0xf]
        %v926 = vld [vmem:[%s923 + $0x8] sm:$0xf]
        %v927 = vld [vmem:[%s923 + $0xc] sm:$0x3]
        %s928 = scalar_lea.vmem %s1, 60
        %v929 = vld [vmem:[%s928] sm:$0xf]
        %v934 = vunpack.c.l.b16 %v924
        %v935 = vunpack.c.l.b16 %v925
        %v936 = vunpack.c.l.b16 %v926
        %v937 = vunpack.c.l.b16 %v927
        %v938 = vpack.c.b16 %v935, %v934
        %v939 = vpack.c.b16 %v937, %v936
        %v941 = vsel %vm238, %v938, 0
        %v944 = vsel %vm238, %v939, 0
        %v947 = vsel %vm245, %v929, 0
        %949 = vmatpush.bf16.msra.mxu0 0
        %950 = vmatpush.bf16.msra.mxu0 0
        %951 = vmatpush.bf16.msra.mxu0 0
        %952 = vmatpush.bf16.msra.mxu0 0
        %953 = vmatpush.bf16.msra.mxu0 0
        %954 = vmatpush.bf16.msra.mxu0 0
        %955 = vmatpush.bf16.msra.mxu0 0
        %956 = vmatpush.bf16.msra.mxu0 %v947
        %957 = vmatmul.bf16.gmra.mxu0 %v941
        %v958 = vpop.f32.mrf.mxu0
        %v959 = vadd.f32 0.0, %v958
        %v960 = vpop.f32.mrf.mxu0
        %v961 = vadd.f32 0.0, %v960
        %962 = vmatmul.bf16.gmra.mxu0 %v944
        %v963 = vpop.f32.mrf.mxu0
        %v964 = vadd.f32 0.0, %v963
        %v965 = vpop.f32.mrf.mxu0
        %v966 = vadd.f32 0.0, %v965
        %967 = vdwg.mxu0
        %v968 = vadd.f32 %v916, %v959
        %v969 = vadd.f32 %v917, %v961
        %v970 = vadd.f32 %v918, %v964
        %v971 = vadd.f32 %v919, %v966
        %v972 = vld [vmem:[%s923 + $0xc] sm:$0x7]
        %s973 = scalar_lea.vmem %s1, 64
        %v974 = vld [vmem:[%s973] sm:$0xf]
        %v976 = vunpack.c.l.b16 %v972
        %v977 = vpack.c.b16 %v976, %v936
        %v978 = vshrl.u32 %v938, 16
        %v980 = vshll.u32 %v938, 16
        %v982 = vrot.slane %v980, 1
        %v983 = vor.u32 %v978, %v982
        %v985 = vshll.u32 %v977, 16
        %v987 = vrot.slane %v985, 1
        %v988 = vsel %vm222, %v983, %v987
        %v989 = vshrl.u32 %v977, 16
        %v991 = vor.u32 %v989, %v987
        %v993 = vsel %vm238, %v988, 0
        %v996 = vsel %vm238, %v991, 0
        %v999 = vsel %vm245, %v974, 0
        %1001 = vmatpush.bf16.msra.mxu0 0
        %1002 = vmatpush.bf16.msra.mxu0 0
        %1003 = vmatpush.bf16.msra.mxu0 0
        %1004 = vmatpush.bf16.msra.mxu0 0
        %1005 = vmatpush.bf16.msra.mxu0 0
        %1006 = vmatpush.bf16.msra.mxu0 0
        %1007 = vmatpush.bf16.msra.mxu0 0
        %1008 = vmatpush.bf16.msra.mxu0 %v999
        %1009 = vmatmul.bf16.gmra.mxu0 %v993
        %v1010 = vpop.f32.mrf.mxu0
        %v1011 = vadd.f32 0.0, %v1010
        %v1012 = vpop.f32.mrf.mxu0
        %v1013 = vadd.f32 0.0, %v1012
        %1014 = vmatmul.bf16.gmra.mxu0 %v996
        %v1015 = vpop.f32.mrf.mxu0
        %v1016 = vadd.f32 0.0, %v1015
        %v1017 = vpop.f32.mrf.mxu0
        %v1018 = vadd.f32 0.0, %v1017
        %1019 = vdwg.mxu0
        %v1020 = vadd.f32 %v968, %v1011
        %v1021 = vadd.f32 %v969, %v1013
        %v1022 = vadd.f32 %v970, %v1016
        %v1023 = vadd.f32 %v971, %v1018
        %v1024 = vld [vmem:[%s923] sm:$0xe]
        %s1025 = scalar_lea.vmem %s1, 68
        %v1026 = vld [vmem:[%s1025] sm:$0xf]
        %v1028 = vunpack.c.l.b16 %v1024
        %v1029 = vpack.c.b16 %v935, %v1028
        %v1030 = vrot.slane %v1029, 1
        %v1031 = vrot.slane %v977, 1
        %v1032 = vsel %vm304, %v1030, %v1031
        %v1034 = vsel %vm238, %v1032, 0
        %v1037 = vsel %vm238, %v1031, 0
        %v1040 = vsel %vm245, %v1026, 0
        %1042 = vmatpush.bf16.msra.mxu0 0
        %1043 = vmatpush.bf16.msra.mxu0 0
        %1044 = vmatpush.bf16.msra.mxu0 0
        %1045 = vmatpush.bf16.msra.mxu0 0
        %1046 = vmatpush.bf16.msra.mxu0 0
        %1047 = vmatpush.bf16.msra.mxu0 0
        %1048 = vmatpush.bf16.msra.mxu0 0
        %1049 = vmatpush.bf16.msra.mxu0 %v1040
        %1050 = vmatmul.bf16.gmra.mxu0 %v1034
        %v1051 = vpop.f32.mrf.mxu0
        %v1052 = vadd.f32 0.0, %v1051
        %v1053 = vpop.f32.mrf.mxu0
        %v1054 = vadd.f32 0.0, %v1053
        %1055 = vmatmul.bf16.gmra.mxu0 %v1037
        %v1056 = vpop.f32.mrf.mxu0
        %v1057 = vadd.f32 0.0, %v1056
        %v1058 = vpop.f32.mrf.mxu0
        %v1059 = vadd.f32 0.0, %v1058
        %1060 = vdwg.mxu0
        %v1061 = vadd.f32 %v1020, %v1052
        %v1062 = vadd.f32 %v1021, %v1054
        %v1063 = vadd.f32 %v1022, %v1057
        %v1064 = vadd.f32 %v1023, %v1059
        %v1065 = vld [vmem:[%s923 + $0xc] sm:$0xf]
        %s1066 = scalar_lea.vmem %s1, 72
        %v1067 = vld [vmem:[%s1066] sm:$0xf]
        %v1069 = vunpack.c.l.b16 %v1065
        %v1070 = vpack.c.b16 %v1069, %v936
        %v1072 = vshrl.u32 %v1029, 16
        %v1074 = vrot.slane %v1072, 1
        %v1075 = vshll.u32 %v1029, 16
        %v1077 = vrot.slane %v1075, 2
        %v1078 = vor.u32 %v1074, %v1077
        %v1080 = vshrl.u32 %v1070, 16
        %v1082 = vrot.slane %v1080, 1
        %v1083 = vshll.u32 %v1070, 16
        %v1085 = vrot.slane %v1083, 2
        %v1086 = vor.u32 %v1082, %v1085
        %v1087 = vsel %vm346, %v1078, %v1086
        %v1089 = vsel %vm238, %v1087, 0
        %v1092 = vsel %vm238, %v1086, 0
        %v1095 = vsel %vm245, %v1067, 0
        %1097 = vmatpush.bf16.msra.mxu0 0
        %1098 = vmatpush.bf16.msra.mxu0 0
        %1099 = vmatpush.bf16.msra.mxu0 0
        %1100 = vmatpush.bf16.msra.mxu0 0
        %1101 = vmatpush.bf16.msra.mxu0 0
        %1102 = vmatpush.bf16.msra.mxu0 0
        %1103 = vmatpush.bf16.msra.mxu0 0
        %1104 = vmatpush.bf16.msra.mxu0 %v1095
        %1105 = vmatmul.bf16.gmra.mxu0 %v1089
        %v1106 = vpop.f32.mrf.mxu0
        %v1107 = vadd.f32 0.0, %v1106
        %v1108 = vpop.f32.mrf.mxu0
        %v1109 = vadd.f32 0.0, %v1108
        %1110 = vmatmul.bf16.gmra.mxu0 %v1092
        %v1111 = vpop.f32.mrf.mxu0
        %v1112 = vadd.f32 0.0, %v1111
        %v1113 = vpop.f32.mrf.mxu0
        %v1114 = vadd.f32 0.0, %v1113
        %1115 = vdwg.mxu0
        %v1116 = vadd.f32 %v1061, %v1107
        %v1117 = vadd.f32 %v1062, %v1109
        %v1118 = vadd.f32 %v1063, %v1112
        %v1119 = vadd.f32 %v1064, %v1114
        %v1120 = vld [vmem:[%s923] sm:$0xc]
        %s1121 = scalar_lea.vmem %s1, 76
        %v1122 = vld [vmem:[%s1121] sm:$0xf]
        %v1124 = vunpack.c.l.b16 %v1120
        %v1125 = vpack.c.b16 %v935, %v1124
        %v1126 = vrot.slane %v1125, 2
        %v1127 = vrot.slane %v1070, 2
        %v1128 = vsel %vm402, %v1126, %v1127
        %v1130 = vsel %vm238, %v1128, 0
        %v1133 = vsel %vm238, %v1127, 0
        %v1136 = vsel %vm245, %v1122, 0
        %1138 = vmatpush.bf16.msra.mxu0 0
        %1139 = vmatpush.bf16.msra.mxu0 0
        %1140 = vmatpush.bf16.msra.mxu0 0
        %1141 = vmatpush.bf16.msra.mxu0 0
        %1142 = vmatpush.bf16.msra.mxu0 0
        %1143 = vmatpush.bf16.msra.mxu0 0
        %1144 = vmatpush.bf16.msra.mxu0 0
        %1145 = vmatpush.bf16.msra.mxu0 %v1136
        %1146 = vmatmul.bf16.gmra.mxu0 %v1130
        %v1147 = vpop.f32.mrf.mxu0
        %v1148 = vadd.f32 0.0, %v1147
        %v1149 = vpop.f32.mrf.mxu0
        %v1150 = vadd.f32 0.0, %v1149
        %1151 = vmatmul.bf16.gmra.mxu0 %v1133
        %v1152 = vpop.f32.mrf.mxu0
        %v1153 = vadd.f32 0.0, %v1152
        %v1154 = vpop.f32.mrf.mxu0
        %v1155 = vadd.f32 0.0, %v1154
        %1156 = vdwg.mxu0
        %v1157 = vadd.f32 %v1116, %v1148
        %v1158 = vadd.f32 %v1117, %v1150
        %v1159 = vadd.f32 %v1118, %v1153
        %v1160 = vadd.f32 %v1119, %v1155
        %s1161 = sadd.s32 %s200, 4
        %s1162 = smul.u32 %s1161, 4
        %s1163 = smul.addr %s1162, 4
        %s1164 = scalar_lea.vmem %s165, %s1163
        %v1165 = vld [vmem:[%s1164] sm:$0xf]
        %v1166 = vld [vmem:[%s1164 + $0x4] sm:$0xf]
        %v1167 = vld [vmem:[%s1164 + $0x8] sm:$0xf]
        %v1168 = vld [vmem:[%s1164 + $0xc] sm:$0x3]
        %s1169 = scalar_lea.vmem %s1, 80
        %v1170 = vld [vmem:[%s1169] sm:$0xf]
        %v1175 = vunpack.c.l.b16 %v1165
        %v1176 = vunpack.c.l.b16 %v1166
        %v1177 = vunpack.c.l.b16 %v1167
        %v1178 = vunpack.c.l.b16 %v1168
        %v1179 = vpack.c.b16 %v1176, %v1175
        %v1180 = vpack.c.b16 %v1178, %v1177
        %v1182 = vsel %vm238, %v1179, 0
        %v1185 = vsel %vm238, %v1180, 0
        %v1188 = vsel %vm245, %v1170, 0
        %1190 = vmatpush.bf16.msra.mxu0 0
        %1191 = vmatpush.bf16.msra.mxu0 0
        %1192 = vmatpush.bf16.msra.mxu0 0
        %1193 = vmatpush.bf16.msra.mxu0 0
        %1194 = vmatpush.bf16.msra.mxu0 0
        %1195 = vmatpush.bf16.msra.mxu0 0
        %1196 = vmatpush.bf16.msra.mxu0 0
        %1197 = vmatpush.bf16.msra.mxu0 %v1188
        %1198 = vmatmul.bf16.gmra.mxu0 %v1182
        %v1199 = vpop.f32.mrf.mxu0
        %v1200 = vadd.f32 0.0, %v1199
        %v1201 = vpop.f32.mrf.mxu0
        %v1202 = vadd.f32 0.0, %v1201
        %1203 = vmatmul.bf16.gmra.mxu0 %v1185
        %v1204 = vpop.f32.mrf.mxu0
        %v1205 = vadd.f32 0.0, %v1204
        %v1206 = vpop.f32.mrf.mxu0
        %v1207 = vadd.f32 0.0, %v1206
        %1208 = vdwg.mxu0
        %v1209 = vadd.f32 %v1157, %v1200
        %v1210 = vadd.f32 %v1158, %v1202
        %v1211 = vadd.f32 %v1159, %v1205
        %v1212 = vadd.f32 %v1160, %v1207
        %v1213 = vld [vmem:[%s1164 + $0xc] sm:$0x7]
        %s1214 = scalar_lea.vmem %s1, 84
        %v1215 = vld [vmem:[%s1214] sm:$0xf]
        %v1217 = vunpack.c.l.b16 %v1213
        %v1218 = vpack.c.b16 %v1217, %v1177
        %v1219 = vshrl.u32 %v1179, 16
        %v1221 = vshll.u32 %v1179, 16
        %v1223 = vrot.slane %v1221, 1
        %v1224 = vor.u32 %v1219, %v1223
        %v1226 = vshll.u32 %v1218, 16
        %v1228 = vrot.slane %v1226, 1
        %v1229 = vsel %vm222, %v1224, %v1228
        %v1230 = vshrl.u32 %v1218, 16
        %v1232 = vor.u32 %v1230, %v1228
        %v1234 = vsel %vm238, %v1229, 0
        %v1237 = vsel %vm238, %v1232, 0
        %v1240 = vsel %vm245, %v1215, 0
        %1242 = vmatpush.bf16.msra.mxu0 0
        %1243 = vmatpush.bf16.msra.mxu0 0
        %1244 = vmatpush.bf16.msra.mxu0 0
        %1245 = vmatpush.bf16.msra.mxu0 0
        %1246 = vmatpush.bf16.msra.mxu0 0
        %1247 = vmatpush.bf16.msra.mxu0 0
        %1248 = vmatpush.bf16.msra.mxu0 0
        %1249 = vmatpush.bf16.msra.mxu0 %v1240
        %1250 = vmatmul.bf16.gmra.mxu0 %v1234
        %v1251 = vpop.f32.mrf.mxu0
        %v1252 = vadd.f32 0.0, %v1251
        %v1253 = vpop.f32.mrf.mxu0
        %v1254 = vadd.f32 0.0, %v1253
        %1255 = vmatmul.bf16.gmra.mxu0 %v1237
        %v1256 = vpop.f32.mrf.mxu0
        %v1257 = vadd.f32 0.0, %v1256
        %v1258 = vpop.f32.mrf.mxu0
        %v1259 = vadd.f32 0.0, %v1258
        %1260 = vdwg.mxu0
        %v1261 = vadd.f32 %v1209, %v1252
        %v1262 = vadd.f32 %v1210, %v1254
        %v1263 = vadd.f32 %v1211, %v1257
        %v1264 = vadd.f32 %v1212, %v1259
        %v1265 = vld [vmem:[%s1164] sm:$0xe]
        %s1266 = scalar_lea.vmem %s1, 88
        %v1267 = vld [vmem:[%s1266] sm:$0xf]
        %v1269 = vunpack.c.l.b16 %v1265
        %v1270 = vpack.c.b16 %v1176, %v1269
        %v1271 = vrot.slane %v1270, 1
        %v1272 = vrot.slane %v1218, 1
        %v1273 = vsel %vm304, %v1271, %v1272
        %v1275 = vsel %vm238, %v1273, 0
        %v1278 = vsel %vm238, %v1272, 0
        %v1281 = vsel %vm245, %v1267, 0
        %1283 = vmatpush.bf16.msra.mxu0 0
        %1284 = vmatpush.bf16.msra.mxu0 0
        %1285 = vmatpush.bf16.msra.mxu0 0
        %1286 = vmatpush.bf16.msra.mxu0 0
        %1287 = vmatpush.bf16.msra.mxu0 0
        %1288 = vmatpush.bf16.msra.mxu0 0
        %1289 = vmatpush.bf16.msra.mxu0 0
        %1290 = vmatpush.bf16.msra.mxu0 %v1281
        %1291 = vmatmul.bf16.gmra.mxu0 %v1275
        %v1292 = vpop.f32.mrf.mxu0
        %v1293 = vadd.f32 0.0, %v1292
        %v1294 = vpop.f32.mrf.mxu0
        %v1295 = vadd.f32 0.0, %v1294
        %1296 = vmatmul.bf16.gmra.mxu0 %v1278
        %v1297 = vpop.f32.mrf.mxu0
        %v1298 = vadd.f32 0.0, %v1297
        %v1299 = vpop.f32.mrf.mxu0
        %v1300 = vadd.f32 0.0, %v1299
        %1301 = vdwg.mxu0
        %v1302 = vadd.f32 %v1261, %v1293
        %v1303 = vadd.f32 %v1262, %v1295
        %v1304 = vadd.f32 %v1263, %v1298
        %v1305 = vadd.f32 %v1264, %v1300
        %v1306 = vld [vmem:[%s1164 + $0xc] sm:$0xf]
        %s1307 = scalar_lea.vmem %s1, 92
        %v1308 = vld [vmem:[%s1307] sm:$0xf]
        %v1310 = vunpack.c.l.b16 %v1306
        %v1311 = vpack.c.b16 %v1310, %v1177
        %v1313 = vshrl.u32 %v1270, 16
        %v1315 = vrot.slane %v1313, 1
        %v1316 = vshll.u32 %v1270, 16
        %v1318 = vrot.slane %v1316, 2
        %v1319 = vor.u32 %v1315, %v1318
        %v1321 = vshrl.u32 %v1311, 16
        %v1323 = vrot.slane %v1321, 1
        %v1324 = vshll.u32 %v1311, 16
        %v1326 = vrot.slane %v1324, 2
        %v1327 = vor.u32 %v1323, %v1326
        %v1328 = vsel %vm346, %v1319, %v1327
        %v1330 = vsel %vm238, %v1328, 0
        %v1333 = vsel %vm238, %v1327, 0
        %v1336 = vsel %vm245, %v1308, 0
        %1338 = vmatpush.bf16.msra.mxu0 0
        %1339 = vmatpush.bf16.msra.mxu0 0
        %1340 = vmatpush.bf16.msra.mxu0 0
        %1341 = vmatpush.bf16.msra.mxu0 0
        %1342 = vmatpush.bf16.msra.mxu0 0
        %1343 = vmatpush.bf16.msra.mxu0 0
        %1344 = vmatpush.bf16.msra.mxu0 0
        %1345 = vmatpush.bf16.msra.mxu0 %v1336
        %1346 = vmatmul.bf16.gmra.mxu0 %v1330
        %v1347 = vpop.f32.mrf.mxu0
        %v1348 = vadd.f32 0.0, %v1347
        %v1349 = vpop.f32.mrf.mxu0
        %v1350 = vadd.f32 0.0, %v1349
        %1351 = vmatmul.bf16.gmra.mxu0 %v1333
        %v1352 = vpop.f32.mrf.mxu0
        %v1353 = vadd.f32 0.0, %v1352
        %v1354 = vpop.f32.mrf.mxu0
        %v1355 = vadd.f32 0.0, %v1354
        %1356 = vdwg.mxu0
        %v1357 = vadd.f32 %v1302, %v1348
        %v1358 = vadd.f32 %v1303, %v1350
        %v1359 = vadd.f32 %v1304, %v1353
        %v1360 = vadd.f32 %v1305, %v1355
        %v1361 = vld [vmem:[%s1164] sm:$0xc]
        %s1362 = scalar_lea.vmem %s1, 96
        %v1363 = vld [vmem:[%s1362] sm:$0xf]
        %v1365 = vunpack.c.l.b16 %v1361
        %v1366 = vpack.c.b16 %v1176, %v1365
        %v1367 = vrot.slane %v1366, 2
        %v1368 = vrot.slane %v1311, 2
        %v1369 = vsel %vm402, %v1367, %v1368
        %v1371 = vsel %vm238, %v1369, 0
        %v1374 = vsel %vm238, %v1368, 0
        %v1377 = vsel %vm245, %v1363, 0
        %1379 = vmatpush.bf16.msra.mxu0 0
        %1380 = vmatpush.bf16.msra.mxu0 0
        %1381 = vmatpush.bf16.msra.mxu0 0
        %1382 = vmatpush.bf16.msra.mxu0 0
        %1383 = vmatpush.bf16.msra.mxu0 0
        %1384 = vmatpush.bf16.msra.mxu0 0
        %1385 = vmatpush.bf16.msra.mxu0 0
        %1386 = vmatpush.bf16.msra.mxu0 %v1377
        %1387 = vmatmul.bf16.gmra.mxu0 %v1371
        %v1388 = vpop.f32.mrf.mxu0
        %v1389 = vadd.f32 0.0, %v1388
        %v1390 = vpop.f32.mrf.mxu0
        %v1391 = vadd.f32 0.0, %v1390
        %1392 = vmatmul.bf16.gmra.mxu0 %v1374
        %v1393 = vpop.f32.mrf.mxu0
        %v1394 = vadd.f32 0.0, %v1393
        %v1395 = vpop.f32.mrf.mxu0
        %v1396 = vadd.f32 0.0, %v1395
        %1397 = vdwg.mxu0
        %v1398 = vadd.f32 %v1357, %v1389
        %v1399 = vadd.f32 %v1358, %v1391
        %v1400 = vadd.f32 %v1359, %v1394
        %v1401 = vadd.f32 %v1360, %v1396
        %v1403 = vperm.slane %v172, 0
        %v1405 = vadd.f32 %v1398, %v1403
        %v1406 = vadd.f32 %v1399, %v1403
        %v1407 = vadd.f32 %v1400, %v1403
        %v1408 = vadd.f32 %v1401, %v1403
        %v1409 = vmax.f32 %v1405, 0.0
        %v1410 = vmax.f32 %v1406, 0.0
        %v1411 = vmax.f32 %v1407, 0.0
        %v1412 = vmax.f32 %v1408, 0.0
        %1413 = vmatpush.bf16.msra.mxu0 0
        %1414 = vmatpush.bf16.msra.mxu0 0
        %1415 = vmatpush.bf16.msra.mxu0 0
        %1416 = vmatpush.bf16.msra.mxu0 0
        %1417 = vmatpush.bf16.msra.mxu0 0
        %1418 = vmatpush.bf16.msra.mxu0 0
        %1419 = vmatpush.bf16.msra.mxu0 0
        %1420 = vmatpush.bf16.msra.mxu0 %v247
        %1421 = vmatmul.bf16.gmra.mxu0 %v511
        %v1422 = vpop.f32.mrf.mxu0
        %v1423 = vadd.f32 0.0, %v1422
        %v1424 = vpop.f32.mrf.mxu0
        %v1425 = vadd.f32 0.0, %v1424
        %1426 = vmatmul.bf16.gmra.mxu0 %v514
        %v1427 = vpop.f32.mrf.mxu0
        %v1428 = vadd.f32 0.0, %v1427
        %v1429 = vpop.f32.mrf.mxu0
        %v1430 = vadd.f32 0.0, %v1429
        %1431 = vdwg.mxu0
        %1432 = vmatpush.bf16.msra.mxu0 0
        %1433 = vmatpush.bf16.msra.mxu0 0
        %1434 = vmatpush.bf16.msra.mxu0 0
        %1435 = vmatpush.bf16.msra.mxu0 0
        %1436 = vmatpush.bf16.msra.mxu0 0
        %1437 = vmatpush.bf16.msra.mxu0 0
        %1438 = vmatpush.bf16.msra.mxu0 0
        %1439 = vmatpush.bf16.msra.mxu0 %v277
        %1440 = vmatmul.bf16.gmra.mxu0 %v459
        %v1441 = vpop.f32.mrf.mxu0
        %v1442 = vadd.f32 %v1423, %v1441
        %v1443 = vpop.f32.mrf.mxu0
        %v1444 = vadd.f32 %v1425, %v1443
        %1445 = vmatmul.bf16.gmra.mxu0 %v462
        %v1446 = vpop.f32.mrf.mxu0
        %v1447 = vadd.f32 %v1428, %v1446
        %v1448 = vpop.f32.mrf.mxu0
        %v1449 = vadd.f32 %v1430, %v1448
        %1450 = vdwg.mxu0
        %1451 = vmatpush.bf16.msra.mxu0 0
        %1452 = vmatpush.bf16.msra.mxu0 0
        %1453 = vmatpush.bf16.msra.mxu0 0
        %1454 = vmatpush.bf16.msra.mxu0 0
        %1455 = vmatpush.bf16.msra.mxu0 0
        %1456 = vmatpush.bf16.msra.mxu0 0
        %1457 = vmatpush.bf16.msra.mxu0 0
        %1458 = vmatpush.bf16.msra.mxu0 %v315
        %1459 = vmatmul.bf16.gmra.mxu0 %v552
        %v1460 = vpop.f32.mrf.mxu0
        %v1461 = vadd.f32 0.0, %v1460
        %v1462 = vpop.f32.mrf.mxu0
        %v1463 = vadd.f32 0.0, %v1462
        %1464 = vmatmul.bf16.gmra.mxu0 %v555
        %v1465 = vpop.f32.mrf.mxu0
        %v1466 = vadd.f32 0.0, %v1465
        %v1467 = vpop.f32.mrf.mxu0
        %v1468 = vadd.f32 0.0, %v1467
        %1469 = vdwg.mxu0
        %v1470 = vadd.f32 %v1442, %v1461
        %v1471 = vadd.f32 %v1444, %v1463
        %v1472 = vadd.f32 %v1447, %v1466
        %v1473 = vadd.f32 %v1449, %v1468
        %1474 = vmatpush.bf16.msra.mxu0 0
        %1475 = vmatpush.bf16.msra.mxu0 0
        %1476 = vmatpush.bf16.msra.mxu0 0
        %1477 = vmatpush.bf16.msra.mxu0 0
        %1478 = vmatpush.bf16.msra.mxu0 0
        %1479 = vmatpush.bf16.msra.mxu0 0
        %1480 = vmatpush.bf16.msra.mxu0 0
        %1481 = vmatpush.bf16.msra.mxu0 %v371
        %1482 = vmatmul.bf16.gmra.mxu0 %v607
        %v1483 = vpop.f32.mrf.mxu0
        %v1484 = vadd.f32 0.0, %v1483
        %v1485 = vpop.f32.mrf.mxu0
        %v1486 = vadd.f32 0.0, %v1485
        %1487 = vmatmul.bf16.gmra.mxu0 %v610
        %v1488 = vpop.f32.mrf.mxu0
        %v1489 = vadd.f32 0.0, %v1488
        %v1490 = vpop.f32.mrf.mxu0
        %v1491 = vadd.f32 0.0, %v1490
        %1492 = vdwg.mxu0
        %v1493 = vadd.f32 %v1470, %v1484
        %v1494 = vadd.f32 %v1471, %v1486
        %v1495 = vadd.f32 %v1472, %v1489
        %v1496 = vadd.f32 %v1473, %v1491
        %1497 = vmatpush.bf16.msra.mxu0 0
        %1498 = vmatpush.bf16.msra.mxu0 0
        %1499 = vmatpush.bf16.msra.mxu0 0
        %1500 = vmatpush.bf16.msra.mxu0 0
        %1501 = vmatpush.bf16.msra.mxu0 0
        %1502 = vmatpush.bf16.msra.mxu0 0
        %1503 = vmatpush.bf16.msra.mxu0 0
        %1504 = vmatpush.bf16.msra.mxu0 %v413
        %1505 = vmatmul.bf16.gmra.mxu0 %v648
        %v1506 = vpop.f32.mrf.mxu0
        %v1507 = vadd.f32 0.0, %v1506
        %v1508 = vpop.f32.mrf.mxu0
        %v1509 = vadd.f32 0.0, %v1508
        %1510 = vmatmul.bf16.gmra.mxu0 %v651
        %v1511 = vpop.f32.mrf.mxu0
        %v1512 = vadd.f32 0.0, %v1511
        %v1513 = vpop.f32.mrf.mxu0
        %v1514 = vadd.f32 0.0, %v1513
        %1515 = vdwg.mxu0
        %v1516 = vadd.f32 %v1493, %v1507
        %v1517 = vadd.f32 %v1494, %v1509
        %v1518 = vadd.f32 %v1495, %v1512
        %v1519 = vadd.f32 %v1496, %v1514
        %1520 = vmatpush.bf16.msra.mxu0 0
        %1521 = vmatpush.bf16.msra.mxu0 0
        %1522 = vmatpush.bf16.msra.mxu0 0
        %1523 = vmatpush.bf16.msra.mxu0 0
        %1524 = vmatpush.bf16.msra.mxu0 0
        %1525 = vmatpush.bf16.msra.mxu0 0
        %1526 = vmatpush.bf16.msra.mxu0 0
        %1527 = vmatpush.bf16.msra.mxu0 %v465
        %1528 = vmatmul.bf16.gmra.mxu0 %v700
        %v1529 = vpop.f32.mrf.mxu0
        %v1530 = vadd.f32 0.0, %v1529
        %v1531 = vpop.f32.mrf.mxu0
        %v1532 = vadd.f32 0.0, %v1531
        %1533 = vmatmul.bf16.gmra.mxu0 %v703
        %v1534 = vpop.f32.mrf.mxu0
        %v1535 = vadd.f32 0.0, %v1534
        %v1536 = vpop.f32.mrf.mxu0
        %v1537 = vadd.f32 0.0, %v1536
        %1538 = vdwg.mxu0
        %v1539 = vadd.f32 %v1516, %v1530
        %v1540 = vadd.f32 %v1517, %v1532
        %v1541 = vadd.f32 %v1518, %v1535
        %v1542 = vadd.f32 %v1519, %v1537
        %1543 = vmatpush.bf16.msra.mxu0 0
        %1544 = vmatpush.bf16.msra.mxu0 0
        %1545 = vmatpush.bf16.msra.mxu0 0
        %1546 = vmatpush.bf16.msra.mxu0 0
        %1547 = vmatpush.bf16.msra.mxu0 0
        %1548 = vmatpush.bf16.msra.mxu0 0
        %1549 = vmatpush.bf16.msra.mxu0 0
        %1550 = vmatpush.bf16.msra.mxu0 %v517
        %1551 = vmatmul.bf16.gmra.mxu0 %v752
        %v1552 = vpop.f32.mrf.mxu0
        %v1553 = vadd.f32 0.0, %v1552
        %v1554 = vpop.f32.mrf.mxu0
        %v1555 = vadd.f32 0.0, %v1554
        %1556 = vmatmul.bf16.gmra.mxu0 %v755
        %v1557 = vpop.f32.mrf.mxu0
        %v1558 = vadd.f32 0.0, %v1557
        %v1559 = vpop.f32.mrf.mxu0
        %v1560 = vadd.f32 0.0, %v1559
        %1561 = vdwg.mxu0
        %v1562 = vadd.f32 %v1539, %v1553
        %v1563 = vadd.f32 %v1540, %v1555
        %v1564 = vadd.f32 %v1541, %v1558
        %v1565 = vadd.f32 %v1542, %v1560
        %1566 = vmatpush.bf16.msra.mxu0 0
        %1567 = vmatpush.bf16.msra.mxu0 0
        %1568 = vmatpush.bf16.msra.mxu0 0
        %1569 = vmatpush.bf16.msra.mxu0 0
        %1570 = vmatpush.bf16.msra.mxu0 0
        %1571 = vmatpush.bf16.msra.mxu0 0
        %1572 = vmatpush.bf16.msra.mxu0 0
        %1573 = vmatpush.bf16.msra.mxu0 %v558
        %1574 = vmatmul.bf16.gmra.mxu0 %v793
        %v1575 = vpop.f32.mrf.mxu0
        %v1576 = vadd.f32 0.0, %v1575
        %v1577 = vpop.f32.mrf.mxu0
        %v1578 = vadd.f32 0.0, %v1577
        %1579 = vmatmul.bf16.gmra.mxu0 %v796
        %v1580 = vpop.f32.mrf.mxu0
        %v1581 = vadd.f32 0.0, %v1580
        %v1582 = vpop.f32.mrf.mxu0
        %v1583 = vadd.f32 0.0, %v1582
        %1584 = vdwg.mxu0
        %v1585 = vadd.f32 %v1562, %v1576
        %v1586 = vadd.f32 %v1563, %v1578
        %v1587 = vadd.f32 %v1564, %v1581
        %v1588 = vadd.f32 %v1565, %v1583
        %1589 = vmatpush.bf16.msra.mxu0 0
        %1590 = vmatpush.bf16.msra.mxu0 0
        %1591 = vmatpush.bf16.msra.mxu0 0
        %1592 = vmatpush.bf16.msra.mxu0 0
        %1593 = vmatpush.bf16.msra.mxu0 0
        %1594 = vmatpush.bf16.msra.mxu0 0
        %1595 = vmatpush.bf16.msra.mxu0 0
        %1596 = vmatpush.bf16.msra.mxu0 %v613
        %1597 = vmatmul.bf16.gmra.mxu0 %v848
        %v1598 = vpop.f32.mrf.mxu0
        %v1599 = vadd.f32 0.0, %v1598
        %v1600 = vpop.f32.mrf.mxu0
        %v1601 = vadd.f32 0.0, %v1600
        %1602 = vmatmul.bf16.gmra.mxu0 %v851
        %v1603 = vpop.f32.mrf.mxu0
        %v1604 = vadd.f32 0.0, %v1603
        %v1605 = vpop.f32.mrf.mxu0
        %v1606 = vadd.f32 0.0, %v1605
        %1607 = vdwg.mxu0
        %v1608 = vadd.f32 %v1585, %v1599
        %v1609 = vadd.f32 %v1586, %v1601
        %v1610 = vadd.f32 %v1587, %v1604
        %v1611 = vadd.f32 %v1588, %v1606
        %1612 = vmatpush.bf16.msra.mxu0 0
        %1613 = vmatpush.bf16.msra.mxu0 0
        %1614 = vmatpush.bf16.msra.mxu0 0
        %1615 = vmatpush.bf16.msra.mxu0 0
        %1616 = vmatpush.bf16.msra.mxu0 0
        %1617 = vmatpush.bf16.msra.mxu0 0
        %1618 = vmatpush.bf16.msra.mxu0 0
        %1619 = vmatpush.bf16.msra.mxu0 %v654
        %1620 = vmatmul.bf16.gmra.mxu0 %v889
        %v1621 = vpop.f32.mrf.mxu0
        %v1622 = vadd.f32 0.0, %v1621
        %v1623 = vpop.f32.mrf.mxu0
        %v1624 = vadd.f32 0.0, %v1623
        %1625 = vmatmul.bf16.gmra.mxu0 %v892
        %v1626 = vpop.f32.mrf.mxu0
        %v1627 = vadd.f32 0.0, %v1626
        %v1628 = vpop.f32.mrf.mxu0
        %v1629 = vadd.f32 0.0, %v1628
        %1630 = vdwg.mxu0
        %v1631 = vadd.f32 %v1608, %v1622
        %v1632 = vadd.f32 %v1609, %v1624
        %v1633 = vadd.f32 %v1610, %v1627
        %v1634 = vadd.f32 %v1611, %v1629
        %1635 = vmatpush.bf16.msra.mxu0 0
        %1636 = vmatpush.bf16.msra.mxu0 0
        %1637 = vmatpush.bf16.msra.mxu0 0
        %1638 = vmatpush.bf16.msra.mxu0 0
        %1639 = vmatpush.bf16.msra.mxu0 0
        %1640 = vmatpush.bf16.msra.mxu0 0
        %1641 = vmatpush.bf16.msra.mxu0 0
        %1642 = vmatpush.bf16.msra.mxu0 %v706
        %1643 = vmatmul.bf16.gmra.mxu0 %v941
        %v1644 = vpop.f32.mrf.mxu0
        %v1645 = vadd.f32 0.0, %v1644
        %v1646 = vpop.f32.mrf.mxu0
        %v1647 = vadd.f32 0.0, %v1646
        %1648 = vmatmul.bf16.gmra.mxu0 %v944
        %v1649 = vpop.f32.mrf.mxu0
        %v1650 = vadd.f32 0.0, %v1649
        %v1651 = vpop.f32.mrf.mxu0
        %v1652 = vadd.f32 0.0, %v1651
        %1653 = vdwg.mxu0
        %v1654 = vadd.f32 %v1631, %v1645
        %v1655 = vadd.f32 %v1632, %v1647
        %v1656 = vadd.f32 %v1633, %v1650
        %v1657 = vadd.f32 %v1634, %v1652
        %1658 = vmatpush.bf16.msra.mxu0 0
        %1659 = vmatpush.bf16.msra.mxu0 0
        %1660 = vmatpush.bf16.msra.mxu0 0
        %1661 = vmatpush.bf16.msra.mxu0 0
        %1662 = vmatpush.bf16.msra.mxu0 0
        %1663 = vmatpush.bf16.msra.mxu0 0
        %1664 = vmatpush.bf16.msra.mxu0 0
        %1665 = vmatpush.bf16.msra.mxu0 %v758
        %1666 = vmatmul.bf16.gmra.mxu0 %v993
        %v1667 = vpop.f32.mrf.mxu0
        %v1668 = vadd.f32 0.0, %v1667
        %v1669 = vpop.f32.mrf.mxu0
        %v1670 = vadd.f32 0.0, %v1669
        %1671 = vmatmul.bf16.gmra.mxu0 %v996
        %v1672 = vpop.f32.mrf.mxu0
        %v1673 = vadd.f32 0.0, %v1672
        %v1674 = vpop.f32.mrf.mxu0
        %v1675 = vadd.f32 0.0, %v1674
        %1676 = vdwg.mxu0
        %v1677 = vadd.f32 %v1654, %v1668
        %v1678 = vadd.f32 %v1655, %v1670
        %v1679 = vadd.f32 %v1656, %v1673
        %v1680 = vadd.f32 %v1657, %v1675
        %1681 = vmatpush.bf16.msra.mxu0 0
        %1682 = vmatpush.bf16.msra.mxu0 0
        %1683 = vmatpush.bf16.msra.mxu0 0
        %1684 = vmatpush.bf16.msra.mxu0 0
        %1685 = vmatpush.bf16.msra.mxu0 0
        %1686 = vmatpush.bf16.msra.mxu0 0
        %1687 = vmatpush.bf16.msra.mxu0 0
        %1688 = vmatpush.bf16.msra.mxu0 %v799
        %1689 = vmatmul.bf16.gmra.mxu0 %v1034
        %v1690 = vpop.f32.mrf.mxu0
        %v1691 = vadd.f32 0.0, %v1690
        %v1692 = vpop.f32.mrf.mxu0
        %v1693 = vadd.f32 0.0, %v1692
        %1694 = vmatmul.bf16.gmra.mxu0 %v1037
        %v1695 = vpop.f32.mrf.mxu0
        %v1696 = vadd.f32 0.0, %v1695
        %v1697 = vpop.f32.mrf.mxu0
        %v1698 = vadd.f32 0.0, %v1697
        %1699 = vdwg.mxu0
        %v1700 = vadd.f32 %v1677, %v1691
        %v1701 = vadd.f32 %v1678, %v1693
        %v1702 = vadd.f32 %v1679, %v1696
        %v1703 = vadd.f32 %v1680, %v1698
        %1704 = vmatpush.bf16.msra.mxu0 0
        %1705 = vmatpush.bf16.msra.mxu0 0
        %1706 = vmatpush.bf16.msra.mxu0 0
        %1707 = vmatpush.bf16.msra.mxu0 0
        %1708 = vmatpush.bf16.msra.mxu0 0
        %1709 = vmatpush.bf16.msra.mxu0 0
        %1710 = vmatpush.bf16.msra.mxu0 0
        %1711 = vmatpush.bf16.msra.mxu0 %v854
        %1712 = vmatmul.bf16.gmra.mxu0 %v1089
        %v1713 = vpop.f32.mrf.mxu0
        %v1714 = vadd.f32 0.0, %v1713
        %v1715 = vpop.f32.mrf.mxu0
        %v1716 = vadd.f32 0.0, %v1715
        %1717 = vmatmul.bf16.gmra.mxu0 %v1092
        %v1718 = vpop.f32.mrf.mxu0
        %v1719 = vadd.f32 0.0, %v1718
        %v1720 = vpop.f32.mrf.mxu0
        %v1721 = vadd.f32 0.0, %v1720
        %1722 = vdwg.mxu0
        %v1723 = vadd.f32 %v1700, %v1714
        %v1724 = vadd.f32 %v1701, %v1716
        %v1725 = vadd.f32 %v1702, %v1719
        %v1726 = vadd.f32 %v1703, %v1721
        %1727 = vmatpush.bf16.msra.mxu0 0
        %1728 = vmatpush.bf16.msra.mxu0 0
        %1729 = vmatpush.bf16.msra.mxu0 0
        %1730 = vmatpush.bf16.msra.mxu0 0
        %1731 = vmatpush.bf16.msra.mxu0 0
        %1732 = vmatpush.bf16.msra.mxu0 0
        %1733 = vmatpush.bf16.msra.mxu0 0
        %1734 = vmatpush.bf16.msra.mxu0 %v895
        %1735 = vmatmul.bf16.gmra.mxu0 %v1130
        %v1736 = vpop.f32.mrf.mxu0
        %v1737 = vadd.f32 0.0, %v1736
        %v1738 = vpop.f32.mrf.mxu0
        %v1739 = vadd.f32 0.0, %v1738
        %1740 = vmatmul.bf16.gmra.mxu0 %v1133
        %v1741 = vpop.f32.mrf.mxu0
        %v1742 = vadd.f32 0.0, %v1741
        %v1743 = vpop.f32.mrf.mxu0
        %v1744 = vadd.f32 0.0, %v1743
        %1745 = vdwg.mxu0
        %v1746 = vadd.f32 %v1723, %v1737
        %v1747 = vadd.f32 %v1724, %v1739
        %v1748 = vadd.f32 %v1725, %v1742
        %v1749 = vadd.f32 %v1726, %v1744
        %1750 = vmatpush.bf16.msra.mxu0 0
        %1751 = vmatpush.bf16.msra.mxu0 0
        %1752 = vmatpush.bf16.msra.mxu0 0
        %1753 = vmatpush.bf16.msra.mxu0 0
        %1754 = vmatpush.bf16.msra.mxu0 0
        %1755 = vmatpush.bf16.msra.mxu0 0
        %1756 = vmatpush.bf16.msra.mxu0 0
        %1757 = vmatpush.bf16.msra.mxu0 %v947
        %1758 = vmatmul.bf16.gmra.mxu0 %v1182
        %v1759 = vpop.f32.mrf.mxu0
        %v1760 = vadd.f32 0.0, %v1759
        %v1761 = vpop.f32.mrf.mxu0
        %v1762 = vadd.f32 0.0, %v1761
        %1763 = vmatmul.bf16.gmra.mxu0 %v1185
        %v1764 = vpop.f32.mrf.mxu0
        %v1765 = vadd.f32 0.0, %v1764
        %v1766 = vpop.f32.mrf.mxu0
        %v1767 = vadd.f32 0.0, %v1766
        %1768 = vdwg.mxu0
        %v1769 = vadd.f32 %v1746, %v1760
        %v1770 = vadd.f32 %v1747, %v1762
        %v1771 = vadd.f32 %v1748, %v1765
        %v1772 = vadd.f32 %v1749, %v1767
        %1773 = vmatpush.bf16.msra.mxu0 0
        %1774 = vmatpush.bf16.msra.mxu0 0
        %1775 = vmatpush.bf16.msra.mxu0 0
        %1776 = vmatpush.bf16.msra.mxu0 0
        %1777 = vmatpush.bf16.msra.mxu0 0
        %1778 = vmatpush.bf16.msra.mxu0 0
        %1779 = vmatpush.bf16.msra.mxu0 0
        %1780 = vmatpush.bf16.msra.mxu0 %v999
        %1781 = vmatmul.bf16.gmra.mxu0 %v1234
        %v1782 = vpop.f32.mrf.mxu0
        %v1783 = vadd.f32 0.0, %v1782
        %v1784 = vpop.f32.mrf.mxu0
        %v1785 = vadd.f32 0.0, %v1784
        %1786 = vmatmul.bf16.gmra.mxu0 %v1237
        %v1787 = vpop.f32.mrf.mxu0
        %v1788 = vadd.f32 0.0, %v1787
        %v1789 = vpop.f32.mrf.mxu0
        %v1790 = vadd.f32 0.0, %v1789
        %1791 = vdwg.mxu0
        %v1792 = vadd.f32 %v1769, %v1783
        %v1793 = vadd.f32 %v1770, %v1785
        %v1794 = vadd.f32 %v1771, %v1788
        %v1795 = vadd.f32 %v1772, %v1790
        %1796 = vmatpush.bf16.msra.mxu0 0
        %1797 = vmatpush.bf16.msra.mxu0 0
        %1798 = vmatpush.bf16.msra.mxu0 0
        %1799 = vmatpush.bf16.msra.mxu0 0
        %1800 = vmatpush.bf16.msra.mxu0 0
        %1801 = vmatpush.bf16.msra.mxu0 0
        %1802 = vmatpush.bf16.msra.mxu0 0
        %1803 = vmatpush.bf16.msra.mxu0 %v1040
        %1804 = vmatmul.bf16.gmra.mxu0 %v1275
        %v1805 = vpop.f32.mrf.mxu0
        %v1806 = vadd.f32 0.0, %v1805
        %v1807 = vpop.f32.mrf.mxu0
        %v1808 = vadd.f32 0.0, %v1807
        %1809 = vmatmul.bf16.gmra.mxu0 %v1278
        %v1810 = vpop.f32.mrf.mxu0
        %v1811 = vadd.f32 0.0, %v1810
        %v1812 = vpop.f32.mrf.mxu0
        %v1813 = vadd.f32 0.0, %v1812
        %1814 = vdwg.mxu0
        %v1815 = vadd.f32 %v1792, %v1806
        %v1816 = vadd.f32 %v1793, %v1808
        %v1817 = vadd.f32 %v1794, %v1811
        %v1818 = vadd.f32 %v1795, %v1813
        %1819 = vmatpush.bf16.msra.mxu0 0
        %1820 = vmatpush.bf16.msra.mxu0 0
        %1821 = vmatpush.bf16.msra.mxu0 0
        %1822 = vmatpush.bf16.msra.mxu0 0
        %1823 = vmatpush.bf16.msra.mxu0 0
        %1824 = vmatpush.bf16.msra.mxu0 0
        %1825 = vmatpush.bf16.msra.mxu0 0
        %1826 = vmatpush.bf16.msra.mxu0 %v1095
        %1827 = vmatmul.bf16.gmra.mxu0 %v1330
        %v1828 = vpop.f32.mrf.mxu0
        %v1829 = vadd.f32 0.0, %v1828
        %v1830 = vpop.f32.mrf.mxu0
        %v1831 = vadd.f32 0.0, %v1830
        %1832 = vmatmul.bf16.gmra.mxu0 %v1333
        %v1833 = vpop.f32.mrf.mxu0
        %v1834 = vadd.f32 0.0, %v1833
        %v1835 = vpop.f32.mrf.mxu0
        %v1836 = vadd.f32 0.0, %v1835
        %1837 = vdwg.mxu0
        %v1838 = vadd.f32 %v1815, %v1829
        %v1839 = vadd.f32 %v1816, %v1831
        %v1840 = vadd.f32 %v1817, %v1834
        %v1841 = vadd.f32 %v1818, %v1836
        %1842 = vmatpush.bf16.msra.mxu0 0
        %1843 = vmatpush.bf16.msra.mxu0 0
        %1844 = vmatpush.bf16.msra.mxu0 0
        %1845 = vmatpush.bf16.msra.mxu0 0
        %1846 = vmatpush.bf16.msra.mxu0 0
        %1847 = vmatpush.bf16.msra.mxu0 0
        %1848 = vmatpush.bf16.msra.mxu0 0
        %1849 = vmatpush.bf16.msra.mxu0 %v1136
        %1850 = vmatmul.bf16.gmra.mxu0 %v1371
        %v1851 = vpop.f32.mrf.mxu0
        %v1852 = vadd.f32 0.0, %v1851
        %v1853 = vpop.f32.mrf.mxu0
        %v1854 = vadd.f32 0.0, %v1853
        %1855 = vmatmul.bf16.gmra.mxu0 %v1374
        %v1856 = vpop.f32.mrf.mxu0
        %v1857 = vadd.f32 0.0, %v1856
        %v1858 = vpop.f32.mrf.mxu0
        %v1859 = vadd.f32 0.0, %v1858
        %1860 = vdwg.mxu0
        %v1861 = vadd.f32 %v1838, %v1852
        %v1862 = vadd.f32 %v1839, %v1854
        %v1863 = vadd.f32 %v1840, %v1857
        %v1864 = vadd.f32 %v1841, %v1859
        %s1865 = sadd.s32 %s200, 5
        %s1866 = smul.u32 %s1865, 4
        %s1867 = smul.addr %s1866, 4
        %s1868 = scalar_lea.vmem %s165, %s1867
        %v1869 = vld [vmem:[%s1868] sm:$0xf]
        %v1870 = vld [vmem:[%s1868 + $0x4] sm:$0xf]
        %v1871 = vld [vmem:[%s1868 + $0x8] sm:$0xf]
        %v1872 = vld [vmem:[%s1868 + $0xc] sm:$0x3]
        %v1877 = vunpack.c.l.b16 %v1869
        %v1878 = vunpack.c.l.b16 %v1870
        %v1879 = vunpack.c.l.b16 %v1871
        %v1880 = vunpack.c.l.b16 %v1872
        %v1881 = vpack.c.b16 %v1878, %v1877
        %v1882 = vpack.c.b16 %v1880, %v1879
        %v1884 = vsel %vm238, %v1881, 0
        %v1887 = vsel %vm238, %v1882, 0
        %1889 = vmatpush.bf16.msra.mxu0 0
        %1890 = vmatpush.bf16.msra.mxu0 0
        %1891 = vmatpush.bf16.msra.mxu0 0
        %1892 = vmatpush.bf16.msra.mxu0 0
        %1893 = vmatpush.bf16.msra.mxu0 0
        %1894 = vmatpush.bf16.msra.mxu0 0
        %1895 = vmatpush.bf16.msra.mxu0 0
        %1896 = vmatpush.bf16.msra.mxu0 %v1188
        %1897 = vmatmul.bf16.gmra.mxu0 %v1884
        %v1898 = vpop.f32.mrf.mxu0
        %v1899 = vadd.f32 0.0, %v1898
        %v1900 = vpop.f32.mrf.mxu0
        %v1901 = vadd.f32 0.0, %v1900
        %1902 = vmatmul.bf16.gmra.mxu0 %v1887
        %v1903 = vpop.f32.mrf.mxu0
        %v1904 = vadd.f32 0.0, %v1903
        %v1905 = vpop.f32.mrf.mxu0
        %v1906 = vadd.f32 0.0, %v1905
        %1907 = vdwg.mxu0
        %v1908 = vadd.f32 %v1861, %v1899
        %v1909 = vadd.f32 %v1862, %v1901
        %v1910 = vadd.f32 %v1863, %v1904
        %v1911 = vadd.f32 %v1864, %v1906
        %v1912 = vld [vmem:[%s1868 + $0xc] sm:$0x7]
        %v1914 = vunpack.c.l.b16 %v1912
        %v1915 = vpack.c.b16 %v1914, %v1879
        %v1916 = vshrl.u32 %v1881, 16
        %v1918 = vshll.u32 %v1881, 16
        %v1920 = vrot.slane %v1918, 1
        %v1921 = vor.u32 %v1916, %v1920
        %v1923 = vshll.u32 %v1915, 16
        %v1925 = vrot.slane %v1923, 1
        %v1926 = vsel %vm222, %v1921, %v1925
        %v1927 = vshrl.u32 %v1915, 16
        %v1929 = vor.u32 %v1927, %v1925
        %v1931 = vsel %vm238, %v1926, 0
        %v1934 = vsel %vm238, %v1929, 0
        %1936 = vmatpush.bf16.msra.mxu0 0
        %1937 = vmatpush.bf16.msra.mxu0 0
        %1938 = vmatpush.bf16.msra.mxu0 0
        %1939 = vmatpush.bf16.msra.mxu0 0
        %1940 = vmatpush.bf16.msra.mxu0 0
        %1941 = vmatpush.bf16.msra.mxu0 0
        %1942 = vmatpush.bf16.msra.mxu0 0
        %1943 = vmatpush.bf16.msra.mxu0 %v1240
        %1944 = vmatmul.bf16.gmra.mxu0 %v1931
        %v1945 = vpop.f32.mrf.mxu0
        %v1946 = vadd.f32 0.0, %v1945
        %v1947 = vpop.f32.mrf.mxu0
        %v1948 = vadd.f32 0.0, %v1947
        %1949 = vmatmul.bf16.gmra.mxu0 %v1934
        %v1950 = vpop.f32.mrf.mxu0
        %v1951 = vadd.f32 0.0, %v1950
        %v1952 = vpop.f32.mrf.mxu0
        %v1953 = vadd.f32 0.0, %v1952
        %1954 = vdwg.mxu0
        %v1955 = vadd.f32 %v1908, %v1946
        %v1956 = vadd.f32 %v1909, %v1948
        %v1957 = vadd.f32 %v1910, %v1951
        %v1958 = vadd.f32 %v1911, %v1953
        %v1959 = vld [vmem:[%s1868] sm:$0xe]
        %v1961 = vunpack.c.l.b16 %v1959
        %v1962 = vpack.c.b16 %v1878, %v1961
        %v1963 = vrot.slane %v1962, 1
        %v1964 = vrot.slane %v1915, 1
        %v1965 = vsel %vm304, %v1963, %v1964
        %v1967 = vsel %vm238, %v1965, 0
        %v1970 = vsel %vm238, %v1964, 0
        %1972 = vmatpush.bf16.msra.mxu0 0
        %1973 = vmatpush.bf16.msra.mxu0 0
        %1974 = vmatpush.bf16.msra.mxu0 0
        %1975 = vmatpush.bf16.msra.mxu0 0
        %1976 = vmatpush.bf16.msra.mxu0 0
        %1977 = vmatpush.bf16.msra.mxu0 0
        %1978 = vmatpush.bf16.msra.mxu0 0
        %1979 = vmatpush.bf16.msra.mxu0 %v1281
        %1980 = vmatmul.bf16.gmra.mxu0 %v1967
        %v1981 = vpop.f32.mrf.mxu0
        %v1982 = vadd.f32 0.0, %v1981
        %v1983 = vpop.f32.mrf.mxu0
        %v1984 = vadd.f32 0.0, %v1983
        %1985 = vmatmul.bf16.gmra.mxu0 %v1970
        %v1986 = vpop.f32.mrf.mxu0
        %v1987 = vadd.f32 0.0, %v1986
        %v1988 = vpop.f32.mrf.mxu0
        %v1989 = vadd.f32 0.0, %v1988
        %1990 = vdwg.mxu0
        %v1991 = vadd.f32 %v1955, %v1982
        %v1992 = vadd.f32 %v1956, %v1984
        %v1993 = vadd.f32 %v1957, %v1987
        %v1994 = vadd.f32 %v1958, %v1989
        %v1995 = vld [vmem:[%s1868 + $0xc] sm:$0xf]
        %v1997 = vunpack.c.l.b16 %v1995
        %v1998 = vpack.c.b16 %v1997, %v1879
        %v2000 = vshrl.u32 %v1962, 16
        %v2002 = vrot.slane %v2000, 1
        %v2003 = vshll.u32 %v1962, 16
        %v2005 = vrot.slane %v2003, 2
        %v2006 = vor.u32 %v2002, %v2005
        %v2008 = vshrl.u32 %v1998, 16
        %v2010 = vrot.slane %v2008, 1
        %v2011 = vshll.u32 %v1998, 16
        %v2013 = vrot.slane %v2011, 2
        %v2014 = vor.u32 %v2010, %v2013
        %v2015 = vsel %vm346, %v2006, %v2014
        %v2017 = vsel %vm238, %v2015, 0
        %v2020 = vsel %vm238, %v2014, 0
        %2022 = vmatpush.bf16.msra.mxu0 0
        %2023 = vmatpush.bf16.msra.mxu0 0
        %2024 = vmatpush.bf16.msra.mxu0 0
        %2025 = vmatpush.bf16.msra.mxu0 0
        %2026 = vmatpush.bf16.msra.mxu0 0
        %2027 = vmatpush.bf16.msra.mxu0 0
        %2028 = vmatpush.bf16.msra.mxu0 0
        %2029 = vmatpush.bf16.msra.mxu0 %v1336
        %2030 = vmatmul.bf16.gmra.mxu0 %v2017
        %v2031 = vpop.f32.mrf.mxu0
        %v2032 = vadd.f32 0.0, %v2031
        %v2033 = vpop.f32.mrf.mxu0
        %v2034 = vadd.f32 0.0, %v2033
        %2035 = vmatmul.bf16.gmra.mxu0 %v2020
        %v2036 = vpop.f32.mrf.mxu0
        %v2037 = vadd.f32 0.0, %v2036
        %v2038 = vpop.f32.mrf.mxu0
        %v2039 = vadd.f32 0.0, %v2038
        %2040 = vdwg.mxu0
        %v2041 = vadd.f32 %v1991, %v2032
        %v2042 = vadd.f32 %v1992, %v2034
        %v2043 = vadd.f32 %v1993, %v2037
        %v2044 = vadd.f32 %v1994, %v2039
        %v2045 = vld [vmem:[%s1868] sm:$0xc]
        %v2047 = vunpack.c.l.b16 %v2045
        %v2048 = vpack.c.b16 %v1878, %v2047
        %v2049 = vrot.slane %v2048, 2
        %v2050 = vrot.slane %v1998, 2
        %v2051 = vsel %vm402, %v2049, %v2050
        %v2053 = vsel %vm238, %v2051, 0
        %v2056 = vsel %vm238, %v2050, 0
        %2058 = vmatpush.bf16.msra.mxu0 0
        %2059 = vmatpush.bf16.msra.mxu0 0
        %2060 = vmatpush.bf16.msra.mxu0 0
        %2061 = vmatpush.bf16.msra.mxu0 0
        %2062 = vmatpush.bf16.msra.mxu0 0
        %2063 = vmatpush.bf16.msra.mxu0 0
        %2064 = vmatpush.bf16.msra.mxu0 0
        %2065 = vmatpush.bf16.msra.mxu0 %v1377
        %2066 = vmatmul.bf16.gmra.mxu0 %v2053
        %v2067 = vpop.f32.mrf.mxu0
        %v2068 = vadd.f32 0.0, %v2067
        %v2069 = vpop.f32.mrf.mxu0
        %v2070 = vadd.f32 0.0, %v2069
        %2071 = vmatmul.bf16.gmra.mxu0 %v2056
        %v2072 = vpop.f32.mrf.mxu0
        %v2073 = vadd.f32 0.0, %v2072
        %v2074 = vpop.f32.mrf.mxu0
        %v2075 = vadd.f32 0.0, %v2074
        %2076 = vdwg.mxu0
        %v2077 = vadd.f32 %v2041, %v2068
        %v2078 = vadd.f32 %v2042, %v2070
        %v2079 = vadd.f32 %v2043, %v2073
        %v2080 = vadd.f32 %v2044, %v2075
        %v2081 = vadd.f32 %v2077, %v1403
        %v2082 = vadd.f32 %v2078, %v1403
        %v2083 = vadd.f32 %v2079, %v1403
        %v2084 = vadd.f32 %v2080, %v1403
        %v2085 = vmax.f32 %v2081, 0.0
        %v2086 = vmax.f32 %v2082, 0.0
        %v2087 = vmax.f32 %v2083, 0.0
        %v2088 = vmax.f32 %v2084, 0.0
        %v2089 = vmax.f32 %v1409, %v2085
        %v2090 = vmax.f32 %v1410, %v2086
        %v2091 = vmax.f32 %v1411, %v2087
        %v2092 = vmax.f32 %v1412, %v2088
        %vm2093 = vcmask 228352
        %v2095 = vsel %vm2093, %v184, 0
        %v2098 = vsel %vm2093, %v185, 0
        %v2101 = vsel %vm245, %v2092, 0
        %2103 = vmatpush.msra.mxu0 0.0
        %2104 = vmatpush.msra.mxu0 0.0
        %2105 = vmatpush.msra.mxu0 0.0
        %2106 = vmatpush.msra.mxu0 0.0
        %2107 = vmatpush.msra.mxu0 0.0
        %2108 = vmatpush.msra.mxu0 0.0
        %2109 = vmatpush.msra.mxu0 0.0
        %2110 = vmatpush.msra.mxu0 0.0
        %2111 = vmatpush.msra.mxu0 0.0
        %2112 = vmatpush.msra.mxu0 0.0
        %2113 = vmatpush.msra.mxu0 0.0
        %2114 = vmatpush.msra.mxu0 0.0
        %2115 = vmatpush.msra.mxu0 %v2101
        %2116 = vmatpush.msra.mxu0 %v2091
        %2117 = vmatpush.msra.mxu0 %v2090
        %2118 = vmatpush.msra.mxu0 %v2089
        %2119 = vmatmul.f32.gmra.mxu0 %v2095
        %v2120 = vpop.f32.mrf.mxu0
        %v2121 = vadd.f32 0.0, %v2120
        %2122 = vmatmul.f32.gmra.mxu0 %v2098
        %v2123 = vpop.f32.mrf.mxu0
        %v2124 = vadd.f32 0.0, %v2123
        %2125 = vdwg.mxu0
        %v2127 = vsel %vm2093, %v192, 0
        %v2130 = vsel %vm2093, %v193, 0
        %2132 = vmatpush.msra.mxu0 0.0
        %2133 = vmatpush.msra.mxu0 0.0
        %2134 = vmatpush.msra.mxu0 0.0
        %2135 = vmatpush.msra.mxu0 0.0
        %2136 = vmatpush.msra.mxu0 0.0
        %2137 = vmatpush.msra.mxu0 0.0
        %2138 = vmatpush.msra.mxu0 0.0
        %2139 = vmatpush.msra.mxu0 0.0
        %2140 = vmatpush.msra.mxu0 0.0
        %2141 = vmatpush.msra.mxu0 0.0
        %2142 = vmatpush.msra.mxu0 0.0
        %2143 = vmatpush.msra.mxu0 0.0
        %2144 = vmatpush.msra.mxu0 %v2101
        %2145 = vmatpush.msra.mxu0 %v2091
        %2146 = vmatpush.msra.mxu0 %v2090
        %2147 = vmatpush.msra.mxu0 %v2089
        %2148 = vmatmul.f32.gmra.mxu0 %v2127
        %v2149 = vpop.f32.mrf.mxu0
        %v2150 = vadd.f32 0.0, %v2149
        %2151 = vmatmul.f32.gmra.mxu0 %v2130
        %v2152 = vpop.f32.mrf.mxu0
        %v2153 = vadd.f32 0.0, %v2152
        %2154 = vdwg.mxu0
        %v2155 = vmax.f32 %v2121, %v2150
        %v2156 = vmax.f32 %v2124, %v2153
        %v2157 = vpack.c.bf16 %v2155, %v2155
        %v2158 = vpack.c.bf16 %v2156, %v2156
        %s2159 = smul.addr %s200, 4
        %s2160 = scalar_lea.vmem %s170, %s2159
        %vm2161 = vcmask 257024
        %2162 = vst.msk [vmem:[%s2160] sm:$0xf] %vm2161, %v2157
        %vm2163 = vcmask 256000
        %2164 = vst.msk [vmem:[%s2160 + $0x4] sm:$0x7] %vm2163, %v2158
      $region37: #{lenet5_tr_forward.3} parent=31 // loop_footer
        %s199 = sadd.s32 1, %s195
      $region38: #{lenet5_tr_forward.3} parent=31 // loop_footer_branch
        %194 = sbr.rel target = $region34
      $region39: #{lenet5_tr_forward.3} parent=31 // loop_exit
        _
      %p2165 = scmp.lt.s32.totalorder %s14, 1
      %s2166 = scalar_select %p2165, %s14, 1
      %s2167 = smul.addr %s2166, 28
      %s2168 = smul.addr %s2167, 4
      %s2169 = scalar_lea.vmem %s3, %s2168
      // Predicated region
      $region40: #{lenet5_tr_forward.3} parent=31 // pred_check
        %p2170 = pneg %p100
      $region41: #{lenet5_tr_forward.3} parent=31 // pred_check_branch
        %2172 = sbr.rel (%p2170) target = $region43
      $region42: #{lenet5_tr_forward.3} parent=31 // pred_region
        _
      $region43: #{lenet5_tr_forward.3} parent=31 // pred_fallthru
        _
    $region32: #{lenet5_tr_forward.3} parent=5 // pred_fallthru
      _
    %p2173 = scmp.le.s32.totalorder 2, %s9
    // Predicated region
    $region44: #{lenet5_tr_forward.3} parent=5 // pred_check
      %p2174 = pneg %p2173
    $region45: #{lenet5_tr_forward.3} parent=5 // pred_check_branch
      %2176 = sbr.rel (%p2174) target = $region47
    $region46: #{lenet5_tr_forward.3} parent=5 // pred_region
      %s2177 = ssub.s32 %s9, 2
      // Predicated region
      $region48: #{lenet5_tr_forward.3} parent=46 // pred_check
        %p2178 = pneg %p106
      $region49: #{lenet5_tr_forward.3} parent=46 // pred_check_branch
        %2180 = sbr.rel (%p2178) target = $region51
      $region50: #{lenet5_tr_forward.3} parent=46 // pred_region
        %p2181 = scmp.lt.s32.totalorder %s15, 1
        %s2182 = scalar_select %p2181, %s15, 1
        %s2183 = smul.addr %s2182, 28
        %s2184 = smul.addr %s2183, 4
        %s2185 = scalar_lea.vmem %s3, %s2184
      $region51: #{lenet5_tr_forward.3} parent=46 // pred_fallthru
        _
    $region47: #{lenet5_tr_forward.3} parent=5 // pred_fallthru
      _
  $region6: #{lenet5_tr_forward.3} parent=0 // loop_footer
    %s13 = sadd.s32 1, %s9
  $region7: #{lenet5_tr_forward.3} parent=0 // loop_footer_branch
    %8 = sbr.rel target = $region3
  $region8: #{lenet5_tr_forward.3} parent=0 // loop_exit
    _

// kernel: lenet5_tr_forward.5
$region0: #{lenet5_tr_forward.5}
  #allocation0 [shape = 'u32[]', space=smem, size = 0x4, offset = 0x4, fixed_abs, tag = 'smem constant byte address 0x4 - core index']
  #allocation1 [shape = 'u32[72,128]{1,0:T(1,128)}', space=vmem, size = 0x9000, scoped, tag = 'internal scratch']
  %s0 = inlined_call_operand.vmem [shape: bf16[2,1600], index: 0, kind: input, shape index: {}]
  %s1 = inlined_call_operand.vmem [shape: bf16[1600,320], index: 1, kind: input, shape index: {}]
  %s2 = inlined_call_operand.vmem [shape: f32[1,320], index: 2, kind: input, shape index: {}]
  %s3 = inlined_call_operand.vmem [shape: bf16[320,128], index: 3, kind: input, shape index: {}]
  %s4 = inlined_call_operand.vmem [shape: f32[1,128], index: 4, kind: input, shape index: {}]
  %s5 = inlined_call_operand.hbm [shape: f32[2,128], index: 5, kind: output, shape index: {}]
  %s6 = sld [smem:[#allocation0]]
  $region30: #{lenet5_tr_forward.5} parent=0
    _
  %s8 = ssub.s32 1, %s6
  %s9 = scalar_select 0, %s8, %s6
  $region1: #{lenet5_tr_forward.5} parent=0
    #allocation2 [shape = 'u8[1024]{0}', space=vmem, size = 0x400, scoped, tag = 'output window, operand 0, single buffered']
    #allocation3 [shape = 's32[1]{0}', space=sflag, size = 0x4, scoped, tag = 'scoped memory for lenet5_tr_forward.5']
    %10 = vsyncpa [#allocation3], 0
    // Predicated region
    $region2: #{lenet5_tr_forward.5} parent=1 // pred_check
      _
    $region3: #{lenet5_tr_forward.5} parent=1 // pred_check_branch
      %12 = sbr.rel (0) target = $region5
    $region4: #{lenet5_tr_forward.5} parent=1 // pred_region
      _
    $region5: #{lenet5_tr_forward.5} parent=1 // pred_fallthru
      _
    // Predicated region
    $region6: #{lenet5_tr_forward.5} parent=1 // pred_check
      _
    $region7: #{lenet5_tr_forward.5} parent=1 // pred_check_branch
      %14 = sbr.rel (0) target = $region9
    $region8: #{lenet5_tr_forward.5} parent=1 // pred_region
      _
    $region9: #{lenet5_tr_forward.5} parent=1 // pred_fallthru
      _
    // Predicated region
    $region10: #{lenet5_tr_forward.5} parent=1 // pred_check
      _
    $region11: #{lenet5_tr_forward.5} parent=1 // pred_check_branch
      %16 = sbr.rel (0) target = $region13
    $region12: #{lenet5_tr_forward.5} parent=1 // pred_region
      _
    $region13: #{lenet5_tr_forward.5} parent=1 // pred_fallthru
      _
    // Predicated region
    $region14: #{lenet5_tr_forward.5} parent=1 // pred_check
      _
    $region15: #{lenet5_tr_forward.5} parent=1 // pred_check_branch
      %18 = sbr.rel (0) target = $region17
    $region16: #{lenet5_tr_forward.5} parent=1 // pred_region
      _
    $region17: #{lenet5_tr_forward.5} parent=1 // pred_fallthru
      _
    // Predicated region
    $region18: #{lenet5_tr_forward.5} parent=1 // pred_check
      _
    $region19: #{lenet5_tr_forward.5} parent=1 // pred_check_branch
      %20 = sbr.rel (0) target = $region21
    $region20: #{lenet5_tr_forward.5} parent=1 // pred_region
      _
    $region21: #{lenet5_tr_forward.5} parent=1 // pred_fallthru
      _
    %v22 = vld [vmem:[%s0] sm:$0xff]
    %v23 = vld [vmem:[%s0 + $0x8] sm:$0x1f]
    %v24 = vld [vmem:[%s1] sm:$0xff]
    %v25 = vld [vmem:[%s1 + $0x8] sm:$0xf]
    %v26 = vld [vmem:[%s1 + $0xc] sm:$0xff]
    %v27 = vld [vmem:[%s1 + $0x14] sm:$0xf]
    %v28 = vld [vmem:[%s1 + $0x18] sm:$0xff]
    %v29 = vld [vmem:[%s1 + $0x20] sm:$0xf]
    %v30 = vld [vmem:[%s1 + $0x24] sm:$0xff]
    %v31 = vld [vmem:[%s1 + $0x2c] sm:$0xf]
    %v32 = vld [vmem:[%s1 + $0x30] sm:$0xff]
    %v33 = vld [vmem:[%s1 + $0x38] sm:$0xf]
    %v34 = vld [vmem:[%s1 + $0x3c] sm:$0xff]
    %v35 = vld [vmem:[%s1 + $0x44] sm:$0xf]
    %v36 = vld [vmem:[%s1 + $0x48] sm:$0xff]
    %v37 = vld [vmem:[%s1 + $0x50] sm:$0xf]
    %v38 = vld [vmem:[%s1 + $0x54] sm:$0xff]
    %v39 = vld [vmem:[%s1 + $0x5c] sm:$0xf]
    %v40 = vld [vmem:[%s1 + $0x60] sm:$0xff]
    %v41 = vld [vmem:[%s1 + $0x68] sm:$0xf]
    %v42 = vld [vmem:[%s1 + $0x6c] sm:$0xff]
    %v43 = vld [vmem:[%s1 + $0x74] sm:$0xf]
    %v44 = vld [vmem:[%s1 + $0x78] sm:$0xff]
    %v45 = vld [vmem:[%s1 + $0x80] sm:$0xf]
    %v46 = vld [vmem:[%s1 + $0x84] sm:$0xff]
    %v47 = vld [vmem:[%s1 + $0x8c] sm:$0xf]
    %v48 = vld [vmem:[%s1 + $0x90] sm:$0xff]
    %v49 = vld [vmem:[%s1 + $0x98] sm:$0xf]
    %v50 = vld [vmem:[%s1 + $0x9c] sm:$0xff]
    %v51 = vld [vmem:[%s1 + $0xa4] sm:$0xf]
    %v52 = vld [vmem:[%s1 + $0xa8] sm:$0xff]
    %v53 = vld [vmem:[%s1 + $0xb0] sm:$0xf]
    %v54 = vld [vmem:[%s1 + $0xb4] sm:$0xff]
    %v55 = vld [vmem:[%s1 + $0xbc] sm:$0xf]
    %v56 = vld [vmem:[%s1 + $0xc0] sm:$0xff]
    %v57 = vld [vmem:[%s1 + $0xc8] sm:$0xf]
    %v58 = vld [vmem:[%s1 + $0xcc] sm:$0xff]
    %v59 = vld [vmem:[%s1 + $0xd4] sm:$0xf]
    %v60 = vld [vmem:[%s1 + $0xd8] sm:$0xff]
    %v61 = vld [vmem:[%s1 + $0xe0] sm:$0xf]
    %v62 = vld [vmem:[%s1 + $0xe4] sm:$0xff]
    %v63 = vld [vmem:[%s1 + $0xec] sm:$0xf]
    %v64 = vld [vmem:[%s1 + $0xf0] sm:$0xff]
    %v65 = vld [vmem:[%s1 + $0xf8] sm:$0xf]
    %v66 = vld [vmem:[%s1 + $0xfc] sm:$0xff]
    %v67 = vld [vmem:[%s1 + $0x104] sm:$0xf]
    %v68 = vld [vmem:[%s1 + $0x108] sm:$0xff]
    %v69 = vld [vmem:[%s1 + $0x110] sm:$0xf]
    %v70 = vld [vmem:[%s1 + $0x114] sm:$0xff]
    %v71 = vld [vmem:[%s1 + $0x11c] sm:$0xf]
    %v72 = vld [vmem:[%s1 + $0x120] sm:$0xff]
    %v73 = vld [vmem:[%s1 + $0x128] sm:$0xf]
    %v74 = vld [vmem:[%s1 + $0x12c] sm:$0xff]
    %v75 = vld [vmem:[%s1 + $0x134] sm:$0xf]
    %v76 = vld [vmem:[%s1 + $0x138] sm:$0xff]
    %v77 = vld [vmem:[%s1 + $0x140] sm:$0xf]
    %v78 = vld [vmem:[%s1 + $0x144] sm:$0xff]
    %v79 = vld [vmem:[%s1 + $0x14c] sm:$0xf]
    %v80 = vld [vmem:[%s1 + $0x150] sm:$0xff]
    %v81 = vld [vmem:[%s1 + $0x158] sm:$0xf]
    %v82 = vld [vmem:[%s1 + $0x15c] sm:$0xff]
    %v83 = vld [vmem:[%s1 + $0x164] sm:$0xf]
    %v84 = vld [vmem:[%s1 + $0x168] sm:$0xff]
    %v85 = vld [vmem:[%s1 + $0x170] sm:$0xf]
    %v86 = vld [vmem:[%s1 + $0x174] sm:$0xff]
    %v87 = vld [vmem:[%s1 + $0x17c] sm:$0xf]
    %v88 = vld [vmem:[%s1 + $0x180] sm:$0xff]
    %v89 = vld [vmem:[%s1 + $0x188] sm:$0xf]
    %v90 = vld [vmem:[%s1 + $0x18c] sm:$0xff]
    %v91 = vld [vmem:[%s1 + $0x194] sm:$0xf]
    %v92 = vld [vmem:[%s1 + $0x198] sm:$0xff]
    %v93 = vld [vmem:[%s1 + $0x1a0] sm:$0xf]
    %v94 = vld [vmem:[%s1 + $0x1a4] sm:$0xff]
    %v95 = vld [vmem:[%s1 + $0x1ac] sm:$0xf]
    %v96 = vld [vmem:[%s1 + $0x1b0] sm:$0xff]
    %v97 = vld [vmem:[%s1 + $0x1b8] sm:$0xf]
    %v98 = vld [vmem:[%s1 + $0x1bc] sm:$0xff]
    %v99 = vld [vmem:[%s1 + $0x1c4] sm:$0xf]
    %v100 = vld [vmem:[%s1 + $0x1c8] sm:$0xff]
    %v101 = vld [vmem:[%s1 + $0x1d0] sm:$0xf]
    %v102 = vld [vmem:[%s1 + $0x1d4] sm:$0xff]
    %v103 = vld [vmem:[%s1 + $0x1dc] sm:$0xf]
    %v104 = vld [vmem:[%s1 + $0x1e0] sm:$0xff]
    %v105 = vld [vmem:[%s1 + $0x1e8] sm:$0xf]
    %v106 = vld [vmem:[%s1 + $0x1ec] sm:$0xff]
    %v107 = vld [vmem:[%s1 + $0x1f4] sm:$0xf]
    %v108 = vld [vmem:[%s1 + $0x1f8] sm:$0xff]
    %v109 = vld [vmem:[%s1 + $0x200] sm:$0xf]
    %v110 = vld [vmem:[%s1 + $0x204] sm:$0xff]
    %v111 = vld [vmem:[%s1 + $0x20c] sm:$0xf]
    %v112 = vld [vmem:[%s1 + $0x210] sm:$0xff]
    %v113 = vld [vmem:[%s1 + $0x218] sm:$0xf]
    %v114 = vld [vmem:[%s1 + $0x21c] sm:$0xff]
    %v115 = vld [vmem:[%s1 + $0x224] sm:$0xf]
    %v116 = vld [vmem:[%s1 + $0x228] sm:$0xff]
    %v117 = vld [vmem:[%s1 + $0x230] sm:$0xf]
    %v118 = vld [vmem:[%s1 + $0x234] sm:$0xff]
    %v119 = vld [vmem:[%s1 + $0x23c] sm:$0xf]
    %v120 = vld [vmem:[%s1 + $0x240] sm:$0xff]
    %v121 = vld [vmem:[%s1 + $0x248] sm:$0xf]
    %v122 = vld [vmem:[%s1 + $0x24c] sm:$0xff]
    %v123 = vld [vmem:[%s1 + $0x254] sm:$0xf]
    %v124 = vld [vmem:[%s1 + $0x258] sm:$0xff]
    %v125 = vld [vmem:[%s1 + $0x260] sm:$0xf]
    %v126 = vld [vmem:[%s1 + $0x264] sm:$0xff]
    %v127 = vld [vmem:[%s1 + $0x26c] sm:$0xf]
    %v128 = vld [vmem:[%s1 + $0x270] sm:$0xff]
    %v129 = vld [vmem:[%s1 + $0x278] sm:$0xf]
    %v130 = vld [vmem:[%s1 + $0x27c] sm:$0xff]
    %v131 = vld [vmem:[%s1 + $0x284] sm:$0xf]
    %v132 = vld [vmem:[%s1 + $0x288] sm:$0xff]
    %v133 = vld [vmem:[%s1 + $0x290] sm:$0xf]
    %v134 = vld [vmem:[%s1 + $0x294] sm:$0xff]
    %v135 = vld [vmem:[%s1 + $0x29c] sm:$0xf]
    %v136 = vld [vmem:[%s1 + $0x2a0] sm:$0xff]
    %v137 = vld [vmem:[%s1 + $0x2a8] sm:$0xf]
    %v138 = vld [vmem:[%s1 + $0x2ac] sm:$0xff]
    %v139 = vld [vmem:[%s1 + $0x2b4] sm:$0xf]
    %v140 = vld [vmem:[%s1 + $0x2b8] sm:$0xff]
    %v141 = vld [vmem:[%s1 + $0x2c0] sm:$0xf]
    %v142 = vld [vmem:[%s1 + $0x2c4] sm:$0xff]
    %v143 = vld [vmem:[%s1 + $0x2cc] sm:$0xf]
    %v144 = vld [vmem:[%s1 + $0x2d0] sm:$0xff]
    %v145 = vld [vmem:[%s1 + $0x2d8] sm:$0xf]
    %v146 = vld [vmem:[%s1 + $0x2dc] sm:$0xff]
    %v147 = vld [vmem:[%s1 + $0x2e4] sm:$0xf]
    %v148 = vld [vmem:[%s1 + $0x2e8] sm:$0xff]
    %v149 = vld [vmem:[%s1 + $0x2f0] sm:$0xf]
    %v150 = vld [vmem:[%s1 + $0x2f4] sm:$0xff]
    %v151 = vld [vmem:[%s1 + $0x2fc] sm:$0xf]
    %v152 = vld [vmem:[%s1 + $0x300] sm:$0xff]
    %v153 = vld [vmem:[%s1 + $0x308] sm:$0xf]
    %v154 = vld [vmem:[%s1 + $0x30c] sm:$0xff]
    %v155 = vld [vmem:[%s1 + $0x314] sm:$0xf]
    %v156 = vld [vmem:[%s1 + $0x318] sm:$0xff]
    %v157 = vld [vmem:[%s1 + $0x320] sm:$0xf]
    %v158 = vld [vmem:[%s1 + $0x324] sm:$0xff]
    %v159 = vld [vmem:[%s1 + $0x32c] sm:$0xf]
    %v160 = vld [vmem:[%s1 + $0x330] sm:$0xff]
    %v161 = vld [vmem:[%s1 + $0x338] sm:$0xf]
    %v162 = vld [vmem:[%s1 + $0x33c] sm:$0xff]
    %v163 = vld [vmem:[%s1 + $0x344] sm:$0xf]
    %v164 = vld [vmem:[%s1 + $0x348] sm:$0xff]
    %v165 = vld [vmem:[%s1 + $0x350] sm:$0xf]
    %v166 = vld [vmem:[%s1 + $0x354] sm:$0xff]
    %v167 = vld [vmem:[%s1 + $0x35c] sm:$0xf]
    %v168 = vld [vmem:[%s1 + $0x360] sm:$0xff]
    %v169 = vld [vmem:[%s1 + $0x368] sm:$0xf]
    %v170 = vld [vmem:[%s1 + $0x36c] sm:$0xff]
    %v171 = vld [vmem:[%s1 + $0x374] sm:$0xf]
    %v172 = vld [vmem:[%s1 + $0x378] sm:$0xff]
    %v173 = vld [vmem:[%s1 + $0x380] sm:$0xf]
    %v174 = vld [vmem:[%s1 + $0x384] sm:$0xff]
    %v175 = vld [vmem:[%s1 + $0x38c] sm:$0xf]
    %v176 = vld [vmem:[%s1 + $0x390] sm:$0xff]
    %v177 = vld [vmem:[%s1 + $0x398] sm:$0xf]
    %v178 = vld [vmem:[%s1 + $0x39c] sm:$0xff]
    %v179 = vld [vmem:[%s1 + $0x3a4] sm:$0xf]
    %v180 = vld [vmem:[%s1 + $0x3a8] sm:$0xff]
    %v181 = vld [vmem:[%s1 + $0x3b0] sm:$0xf]
    %v182 = vld [vmem:[%s1 + $0x3b4] sm:$0xff]
    %v183 = vld [vmem:[%s1 + $0x3bc] sm:$0xf]
    %v184 = vld [vmem:[%s1 + $0x3c0] sm:$0xff]
    %v185 = vld [vmem:[%s1 + $0x3c8] sm:$0xf]
    %v186 = vld [vmem:[%s1 + $0x3cc] sm:$0xff]
    %v187 = vld [vmem:[%s1 + $0x3d4] sm:$0xf]
    %v188 = vld [vmem:[%s1 + $0x3d8] sm:$0xff]
    %v189 = vld [vmem:[%s1 + $0x3e0] sm:$0xf]
    %v190 = vld [vmem:[%s1 + $0x3e4] sm:$0xff]
    %v191 = vld [vmem:[%s1 + $0x3ec] sm:$0xf]
    %v192 = vld [vmem:[%s1 + $0x3f0] sm:$0xff]
    %v193 = vld [vmem:[%s1 + $0x3f8] sm:$0xf]
    %v194 = vld [vmem:[%s1 + $0x3fc] sm:$0xff]
    %v195 = vld [vmem:[%s1 + $0x404] sm:$0xf]
    %v196 = vld [vmem:[%s1 + $0x408] sm:$0xff]
    %v197 = vld [vmem:[%s1 + $0x410] sm:$0xf]
    %v198 = vld [vmem:[%s1 + $0x414] sm:$0xff]
    %v199 = vld [vmem:[%s1 + $0x41c] sm:$0xf]
    %v200 = vld [vmem:[%s1 + $0x420] sm:$0xff]
    %v201 = vld [vmem:[%s1 + $0x428] sm:$0xf]
    %v202 = vld [vmem:[%s1 + $0x42c] sm:$0xff]
    %v203 = vld [vmem:[%s1 + $0x434] sm:$0xf]
    %v204 = vld [vmem:[%s1 + $0x438] sm:$0xff]
    %v205 = vld [vmem:[%s1 + $0x440] sm:$0xf]
    %v206 = vld [vmem:[%s1 + $0x444] sm:$0xff]
    %v207 = vld [vmem:[%s1 + $0x44c] sm:$0xf]
    %v208 = vld [vmem:[%s1 + $0x450] sm:$0xff]
    %v209 = vld [vmem:[%s1 + $0x458] sm:$0xf]
    %v210 = vld [vmem:[%s1 + $0x45c] sm:$0xff]
    %v211 = vld [vmem:[%s1 + $0x464] sm:$0xf]
    %v212 = vld [vmem:[%s1 + $0x468] sm:$0xff]
    %v213 = vld [vmem:[%s1 + $0x470] sm:$0xf]
    %v214 = vld [vmem:[%s1 + $0x474] sm:$0xff]
    %v215 = vld [vmem:[%s1 + $0x47c] sm:$0xf]
    %v216 = vld [vmem:[%s1 + $0x480] sm:$0xff]
    %v217 = vld [vmem:[%s1 + $0x488] sm:$0xf]
    %v218 = vld [vmem:[%s1 + $0x48c] sm:$0xff]
    %v219 = vld [vmem:[%s1 + $0x494] sm:$0xf]
    %v220 = vld [vmem:[%s1 + $0x498] sm:$0xff]
    %v221 = vld [vmem:[%s1 + $0x4a0] sm:$0xf]
    %v222 = vld [vmem:[%s1 + $0x4a4] sm:$0xff]
    %v223 = vld [vmem:[%s1 + $0x4ac] sm:$0xf]
    %v224 = vld [vmem:[%s1 + $0x4b0] sm:$0xff]
    %v225 = vld [vmem:[%s1 + $0x4b8] sm:$0xf]
    %v226 = vld [vmem:[%s1 + $0x4bc] sm:$0xff]
    %v227 = vld [vmem:[%s1 + $0x4c4] sm:$0xf]
    %v228 = vld [vmem:[%s1 + $0x4c8] sm:$0xff]
    %v229 = vld [vmem:[%s1 + $0x4d0] sm:$0xf]
    %v230 = vld [vmem:[%s1 + $0x4d4] sm:$0xff]
    %v231 = vld [vmem:[%s1 + $0x4dc] sm:$0xf]
    %v232 = vld [vmem:[%s1 + $0x4e0] sm:$0xff]
    %v233 = vld [vmem:[%s1 + $0x4e8] sm:$0xf]
    %v234 = vld [vmem:[%s1 + $0x4ec] sm:$0xff]
    %v235 = vld [vmem:[%s1 + $0x4f4] sm:$0xf]
    %v236 = vld [vmem:[%s1 + $0x4f8] sm:$0xff]
    %v237 = vld [vmem:[%s1 + $0x500] sm:$0xf]
    %v238 = vld [vmem:[%s1 + $0x504] sm:$0xff]
    %v239 = vld [vmem:[%s1 + $0x50c] sm:$0xf]
    %v240 = vld [vmem:[%s1 + $0x510] sm:$0xff]
    %v241 = vld [vmem:[%s1 + $0x518] sm:$0xf]
    %v242 = vld [vmem:[%s1 + $0x51c] sm:$0xff]
    %v243 = vld [vmem:[%s1 + $0x524] sm:$0xf]
    %v244 = vld [vmem:[%s1 + $0x528] sm:$0xff]
    %v245 = vld [vmem:[%s1 + $0x530] sm:$0xf]
    %v246 = vld [vmem:[%s1 + $0x534] sm:$0xff]
    %v247 = vld [vmem:[%s1 + $0x53c] sm:$0xf]
    %v248 = vld [vmem:[%s1 + $0x540] sm:$0xff]
    %v249 = vld [vmem:[%s1 + $0x548] sm:$0xf]
    %v250 = vld [vmem:[%s1 + $0x54c] sm:$0xff]
    %v251 = vld [vmem:[%s1 + $0x554] sm:$0xf]
    %v252 = vld [vmem:[%s1 + $0x558] sm:$0xff]
    %v253 = vld [vmem:[%s1 + $0x560] sm:$0xf]
    %v254 = vld [vmem:[%s1 + $0x564] sm:$0xff]
    %v255 = vld [vmem:[%s1 + $0x56c] sm:$0xf]
    %v256 = vld [vmem:[%s1 + $0x570] sm:$0xff]
    %v257 = vld [vmem:[%s1 + $0x578] sm:$0xf]
    %v258 = vld [vmem:[%s1 + $0x57c] sm:$0xff]
    %v259 = vld [vmem:[%s1 + $0x584] sm:$0xf]
    %v260 = vld [vmem:[%s1 + $0x588] sm:$0xff]
    %v261 = vld [vmem:[%s1 + $0x590] sm:$0xf]
    %v262 = vld [vmem:[%s1 + $0x594] sm:$0xff]
    %v263 = vld [vmem:[%s1 + $0x59c] sm:$0xf]
    %v264 = vld [vmem:[%s1 + $0x5a0] sm:$0xff]
    %v265 = vld [vmem:[%s1 + $0x5a8] sm:$0xf]
    %v266 = vld [vmem:[%s1 + $0x5ac] sm:$0xff]
    %v267 = vld [vmem:[%s1 + $0x5b4] sm:$0xf]
    %v268 = vld [vmem:[%s1 + $0x5b8] sm:$0xff]
    %v269 = vld [vmem:[%s1 + $0x5c0] sm:$0xf]
    %v270 = vld [vmem:[%s1 + $0x5c4] sm:$0xff]
    %v271 = vld [vmem:[%s1 + $0x5cc] sm:$0xf]
    %v272 = vld [vmem:[%s1 + $0x5d0] sm:$0xff]
    %v273 = vld [vmem:[%s1 + $0x5d8] sm:$0xf]
    %v274 = vld [vmem:[%s1 + $0x5dc] sm:$0xff]
    %v275 = vld [vmem:[%s1 + $0x5e4] sm:$0xf]
    %v276 = vld [vmem:[%s1 + $0x5e8] sm:$0xff]
    %v277 = vld [vmem:[%s1 + $0x5f0] sm:$0xf]
    %v278 = vld [vmem:[%s1 + $0x5f4] sm:$0xff]
    %v279 = vld [vmem:[%s1 + $0x5fc] sm:$0xf]
    %v280 = vld [vmem:[%s1 + $0x600] sm:$0xff]
    %v281 = vld [vmem:[%s1 + $0x608] sm:$0xf]
    %v282 = vld [vmem:[%s1 + $0x60c] sm:$0xff]
    %v283 = vld [vmem:[%s1 + $0x614] sm:$0xf]
    %v284 = vld [vmem:[%s1 + $0x618] sm:$0xff]
    %v285 = vld [vmem:[%s1 + $0x620] sm:$0xf]
    %v286 = vld [vmem:[%s1 + $0x624] sm:$0xff]
    %v287 = vld [vmem:[%s1 + $0x62c] sm:$0xf]
    %v288 = vld [vmem:[%s1 + $0x630] sm:$0xff]
    %v289 = vld [vmem:[%s1 + $0x638] sm:$0xf]
    %v290 = vld [vmem:[%s1 + $0x63c] sm:$0xff]
    %v291 = vld [vmem:[%s1 + $0x644] sm:$0xf]
    %v292 = vld [vmem:[%s1 + $0x648] sm:$0xff]
    %v293 = vld [vmem:[%s1 + $0x650] sm:$0xf]
    %v294 = vld [vmem:[%s1 + $0x654] sm:$0xff]
    %v295 = vld [vmem:[%s1 + $0x65c] sm:$0xf]
    %v296 = vld [vmem:[%s1 + $0x660] sm:$0xff]
    %v297 = vld [vmem:[%s1 + $0x668] sm:$0xf]
    %v298 = vld [vmem:[%s1 + $0x66c] sm:$0xff]
    %v299 = vld [vmem:[%s1 + $0x674] sm:$0xf]
    %v300 = vld [vmem:[%s1 + $0x678] sm:$0xff]
    %v301 = vld [vmem:[%s1 + $0x680] sm:$0xf]
    %v302 = vld [vmem:[%s1 + $0x684] sm:$0xff]
    %v303 = vld [vmem:[%s1 + $0x68c] sm:$0xf]
    %v304 = vld [vmem:[%s1 + $0x690] sm:$0xff]
    %v305 = vld [vmem:[%s1 + $0x698] sm:$0xf]
    %v306 = vld [vmem:[%s1 + $0x69c] sm:$0xff]
    %v307 = vld [vmem:[%s1 + $0x6a4] sm:$0xf]
    %v308 = vld [vmem:[%s1 + $0x6a8] sm:$0xff]
    %v309 = vld [vmem:[%s1 + $0x6b0] sm:$0xf]
    %v310 = vld [vmem:[%s1 + $0x6b4] sm:$0xff]
    %v311 = vld [vmem:[%s1 + $0x6bc] sm:$0xf]
    %v312 = vld [vmem:[%s1 + $0x6c0] sm:$0xff]
    %v313 = vld [vmem:[%s1 + $0x6c8] sm:$0xf]
    %v314 = vld [vmem:[%s1 + $0x6cc] sm:$0xff]
    %v315 = vld [vmem:[%s1 + $0x6d4] sm:$0xf]
    %v316 = vld [vmem:[%s1 + $0x6d8] sm:$0xff]
    %v317 = vld [vmem:[%s1 + $0x6e0] sm:$0xf]
    %v318 = vld [vmem:[%s1 + $0x6e4] sm:$0xff]
    %v319 = vld [vmem:[%s1 + $0x6ec] sm:$0xf]
    %v320 = vld [vmem:[%s1 + $0x6f0] sm:$0xff]
    %v321 = vld [vmem:[%s1 + $0x6f8] sm:$0xf]
    %v322 = vld [vmem:[%s1 + $0x6fc] sm:$0xff]
    %v323 = vld [vmem:[%s1 + $0x704] sm:$0xf]
    %v324 = vld [vmem:[%s1 + $0x708] sm:$0xff]
    %v325 = vld [vmem:[%s1 + $0x710] sm:$0xf]
    %v326 = vld [vmem:[%s1 + $0x714] sm:$0xff]
    %v327 = vld [vmem:[%s1 + $0x71c] sm:$0xf]
    %v328 = vld [vmem:[%s1 + $0x720] sm:$0xff]
    %v329 = vld [vmem:[%s1 + $0x728] sm:$0xf]
    %v330 = vld [vmem:[%s1 + $0x72c] sm:$0xff]
    %v331 = vld [vmem:[%s1 + $0x734] sm:$0xf]
    %v332 = vld [vmem:[%s1 + $0x738] sm:$0xff]
    %v333 = vld [vmem:[%s1 + $0x740] sm:$0xf]
    %v334 = vld [vmem:[%s1 + $0x744] sm:$0xff]
    %v335 = vld [vmem:[%s1 + $0x74c] sm:$0xf]
    %v336 = vld [vmem:[%s1 + $0x750] sm:$0xff]
    %v337 = vld [vmem:[%s1 + $0x758] sm:$0xf]
    %v338 = vld [vmem:[%s1 + $0x75c] sm:$0xff]
    %v339 = vld [vmem:[%s1 + $0x764] sm:$0xf]
    %v340 = vld [vmem:[%s1 + $0x768] sm:$0xff]
    %v341 = vld [vmem:[%s1 + $0x770] sm:$0xf]
    %v342 = vld [vmem:[%s1 + $0x774] sm:$0xff]
    %v343 = vld [vmem:[%s1 + $0x77c] sm:$0xf]
    %v344 = vld [vmem:[%s1 + $0x780] sm:$0xff]
    %v345 = vld [vmem:[%s1 + $0x788] sm:$0xf]
    %v346 = vld [vmem:[%s1 + $0x78c] sm:$0xff]
    %v347 = vld [vmem:[%s1 + $0x794] sm:$0xf]
    %v348 = vld [vmem:[%s1 + $0x798] sm:$0xff]
    %v349 = vld [vmem:[%s1 + $0x7a0] sm:$0xf]
    %v350 = vld [vmem:[%s1 + $0x7a4] sm:$0xff]
    %v351 = vld [vmem:[%s1 + $0x7ac] sm:$0xf]
    %v352 = vld [vmem:[%s1 + $0x7b0] sm:$0xff]
    %v353 = vld [vmem:[%s1 + $0x7b8] sm:$0xf]
    %v354 = vld [vmem:[%s1 + $0x7bc] sm:$0xff]
    %v355 = vld [vmem:[%s1 + $0x7c4] sm:$0xf]
    %v356 = vld [vmem:[%s1 + $0x7c8] sm:$0xff]
    %v357 = vld [vmem:[%s1 + $0x7d0] sm:$0xf]
    %v358 = vld [vmem:[%s1 + $0x7d4] sm:$0xff]
    %v359 = vld [vmem:[%s1 + $0x7dc] sm:$0xf]
    %v360 = vld [vmem:[%s1 + $0x7e0] sm:$0xff]
    %v361 = vld [vmem:[%s1 + $0x7e8] sm:$0xf]
    %v362 = vld [vmem:[%s1 + $0x7ec] sm:$0xff]
    %v363 = vld [vmem:[%s1 + $0x7f4] sm:$0xf]
    %v364 = vld [vmem:[%s1 + $0x7f8] sm:$0xff]
    %v365 = vld [vmem:[%s1 + $0x800] sm:$0xf]
    %v366 = vld [vmem:[%s1 + $0x804] sm:$0xff]
    %v367 = vld [vmem:[%s1 + $0x80c] sm:$0xf]
    %v368 = vld [vmem:[%s1 + $0x810] sm:$0xff]
    %v369 = vld [vmem:[%s1 + $0x818] sm:$0xf]
    %v370 = vld [vmem:[%s1 + $0x81c] sm:$0xff]
    %v371 = vld [vmem:[%s1 + $0x824] sm:$0xf]
    %v372 = vld [vmem:[%s1 + $0x828] sm:$0xff]
    %v373 = vld [vmem:[%s1 + $0x830] sm:$0xf]
    %v374 = vld [vmem:[%s1 + $0x834] sm:$0xff]
    %v375 = vld [vmem:[%s1 + $0x83c] sm:$0xf]
    %v376 = vld [vmem:[%s1 + $0x840] sm:$0xff]
    %v377 = vld [vmem:[%s1 + $0x848] sm:$0xf]
    %v378 = vld [vmem:[%s1 + $0x84c] sm:$0xff]
    %v379 = vld [vmem:[%s1 + $0x854] sm:$0xf]
    %v380 = vld [vmem:[%s1 + $0x858] sm:$0xff]
    %v381 = vld [vmem:[%s1 + $0x860] sm:$0xf]
    %v382 = vld [vmem:[%s1 + $0x864] sm:$0xff]
    %v383 = vld [vmem:[%s1 + $0x86c] sm:$0xf]
    %v384 = vld [vmem:[%s1 + $0x870] sm:$0xff]
    %v385 = vld [vmem:[%s1 + $0x878] sm:$0xf]
    %v386 = vld [vmem:[%s1 + $0x87c] sm:$0xff]
    %v387 = vld [vmem:[%s1 + $0x884] sm:$0xf]
    %v388 = vld [vmem:[%s1 + $0x888] sm:$0xff]
    %v389 = vld [vmem:[%s1 + $0x890] sm:$0xf]
    %v390 = vld [vmem:[%s1 + $0x894] sm:$0xff]
    %v391 = vld [vmem:[%s1 + $0x89c] sm:$0xf]
    %v392 = vld [vmem:[%s1 + $0x8a0] sm:$0xff]
    %v393 = vld [vmem:[%s1 + $0x8a8] sm:$0xf]
    %v394 = vld [vmem:[%s1 + $0x8ac] sm:$0xff]
    %v395 = vld [vmem:[%s1 + $0x8b4] sm:$0xf]
    %v396 = vld [vmem:[%s1 + $0x8b8] sm:$0xff]
    %v397 = vld [vmem:[%s1 + $0x8c0] sm:$0xf]
    %v398 = vld [vmem:[%s1 + $0x8c4] sm:$0xff]
    %v399 = vld [vmem:[%s1 + $0x8cc] sm:$0xf]
    %v400 = vld [vmem:[%s1 + $0x8d0] sm:$0xff]
    %v401 = vld [vmem:[%s1 + $0x8d8] sm:$0xf]
    %v402 = vld [vmem:[%s1 + $0x8dc] sm:$0xff]
    %v403 = vld [vmem:[%s1 + $0x8e4] sm:$0xf]
    %v404 = vld [vmem:[%s1 + $0x8e8] sm:$0xff]
    %v405 = vld [vmem:[%s1 + $0x8f0] sm:$0xf]
    %v406 = vld [vmem:[%s1 + $0x8f4] sm:$0xff]
    %v407 = vld [vmem:[%s1 + $0x8fc] sm:$0xf]
    %v408 = vld [vmem:[%s1 + $0x900] sm:$0xff]
    %v409 = vld [vmem:[%s1 + $0x908] sm:$0xf]
    %v410 = vld [vmem:[%s1 + $0x90c] sm:$0xff]
    %v411 = vld [vmem:[%s1 + $0x914] sm:$0xf]
    %v412 = vld [vmem:[%s1 + $0x918] sm:$0xff]
    %v413 = vld [vmem:[%s1 + $0x920] sm:$0xf]
    %v414 = vld [vmem:[%s1 + $0x924] sm:$0xff]
    %v415 = vld [vmem:[%s1 + $0x92c] sm:$0xf]
    %v416 = vld [vmem:[%s1 + $0x930] sm:$0xff]
    %v417 = vld [vmem:[%s1 + $0x938] sm:$0xf]
    %v418 = vld [vmem:[%s1 + $0x93c] sm:$0xff]
    %v419 = vld [vmem:[%s1 + $0x944] sm:$0xf]
    %v420 = vld [vmem:[%s1 + $0x948] sm:$0xff]
    %v421 = vld [vmem:[%s1 + $0x950] sm:$0xf]
    %v422 = vld [vmem:[%s1 + $0x954] sm:$0xff]
    %v423 = vld [vmem:[%s1 + $0x95c] sm:$0xf]
    %v424 = vld [vmem:[%s2] sm:$0x7]
    %v426 = vperm.slane %v424, 0
    %v427 = vperm.slane %v424, 1
    %v428 = vperm.slane %v424, 2
    %433 = vst [vmem:[#allocation1] ss:$9 sm:$0xff] %v22
    %v434 = vld [vmem:[#allocation1] sm:$0xff]
    %v435 = vld [vmem:[#allocation1 + $0x9] sm:$0xff]
    %v436 = vld [vmem:[#allocation1 + $0x12] sm:$0xff]
    %v437 = vld [vmem:[#allocation1 + $0x1b] sm:$0xff]
    %v438 = vld [vmem:[#allocation1 + $0x24] sm:$0xff]
    %v439 = vld [vmem:[#allocation1 + $0x2d] sm:$0xff]
    %v440 = vld [vmem:[#allocation1 + $0x36] sm:$0xff]
    %v441 = vld [vmem:[#allocation1 + $0x3f] sm:$0xff]
    %443 = vst [vmem:[#allocation1] ss:$9 sm:$0xff] %v23
    %v444 = vld [vmem:[#allocation1] sm:$0xff]
    %v445 = vld [vmem:[#allocation1 + $0x9] sm:$0xff]
    %v446 = vld [vmem:[#allocation1 + $0x12] sm:$0xff]
    %v447 = vld [vmem:[#allocation1 + $0x1b] sm:$0xff]
    %v448 = vld [vmem:[#allocation1 + $0x24] sm:$0xff]
    %v861 = vunpack.c.l.b16 %v24
    %v862 = vunpack.c.h.b16 %v24
    %v863 = vunpack.c.l.b16 %v25
    %v864 = vunpack.c.l.b16 %v26
    %v865 = vunpack.c.h.b16 %v26
    %v866 = vunpack.c.l.b16 %v27
    %v867 = vunpack.c.l.b16 %v28
    %v868 = vunpack.c.h.b16 %v28
    %v869 = vunpack.c.l.b16 %v29
    %v870 = vunpack.c.l.b16 %v30
    %v871 = vunpack.c.h.b16 %v30
    %v872 = vunpack.c.l.b16 %v31
    %v873 = vunpack.c.l.b16 %v32
    %v874 = vunpack.c.h.b16 %v32
    %v875 = vunpack.c.l.b16 %v33
    %v876 = vunpack.c.l.b16 %v34
    %v877 = vunpack.c.h.b16 %v34
    %v878 = vunpack.c.l.b16 %v35
    %v879 = vunpack.c.l.b16 %v36
    %v880 = vunpack.c.h.b16 %v36
    %v881 = vunpack.c.l.b16 %v37
    %v882 = vunpack.c.l.b16 %v38
    %v883 = vunpack.c.h.b16 %v38
    %v884 = vunpack.c.l.b16 %v39
    %v885 = vunpack.c.l.b16 %v40
    %v886 = vunpack.c.h.b16 %v40
    %v887 = vunpack.c.l.b16 %v41
    %v888 = vunpack.c.l.b16 %v42
    %v889 = vunpack.c.h.b16 %v42
    %v890 = vunpack.c.l.b16 %v43
    %v891 = vunpack.c.l.b16 %v44
    %v892 = vunpack.c.h.b16 %v44
    %v893 = vunpack.c.l.b16 %v45
    %v894 = vunpack.c.l.b16 %v46
    %v895 = vunpack.c.h.b16 %v46
    %v896 = vunpack.c.l.b16 %v47
    %v897 = vunpack.c.l.b16 %v48
    %v898 = vunpack.c.h.b16 %v48
    %v899 = vunpack.c.l.b16 %v49
    %v900 = vunpack.c.l.b16 %v50
    %v901 = vunpack.c.h.b16 %v50
    %v902 = vunpack.c.l.b16 %v51
    %v903 = vunpack.c.l.b16 %v52
    %v904 = vunpack.c.h.b16 %v52
    %v905 = vunpack.c.l.b16 %v53
    %v906 = vunpack.c.l.b16 %v54
    %v907 = vunpack.c.h.b16 %v54
    %v908 = vunpack.c.l.b16 %v55
    %v909 = vunpack.c.l.b16 %v56
    %v910 = vunpack.c.h.b16 %v56
    %v911 = vunpack.c.l.b16 %v57
    %v912 = vunpack.c.l.b16 %v58
    %v913 = vunpack.c.h.b16 %v58
    %v914 = vunpack.c.l.b16 %v59
    %v915 = vunpack.c.l.b16 %v60
    %v916 = vunpack.c.h.b16 %v60
    %v917 = vunpack.c.l.b16 %v61
    %v918 = vunpack.c.l.b16 %v62
    %v919 = vunpack.c.h.b16 %v62
    %v920 = vunpack.c.l.b16 %v63
    %v921 = vunpack.c.l.b16 %v64
    %v922 = vunpack.c.h.b16 %v64
    %v923 = vunpack.c.l.b16 %v65
    %v924 = vunpack.c.l.b16 %v66
    %v925 = vunpack.c.h.b16 %v66
    %v926 = vunpack.c.l.b16 %v67
    %v927 = vunpack.c.l.b16 %v68
    %v928 = vunpack.c.h.b16 %v68
    %v929 = vunpack.c.l.b16 %v69
    %v930 = vunpack.c.l.b16 %v70
    %v931 = vunpack.c.h.b16 %v70
    %v932 = vunpack.c.l.b16 %v71
    %v933 = vunpack.c.l.b16 %v72
    %v934 = vunpack.c.h.b16 %v72
    %v935 = vunpack.c.l.b16 %v73
    %v936 = vunpack.c.l.b16 %v74
    %v937 = vunpack.c.h.b16 %v74
    %v938 = vunpack.c.l.b16 %v75
    %v939 = vunpack.c.l.b16 %v76
    %v940 = vunpack.c.h.b16 %v76
    %v941 = vunpack.c.l.b16 %v77
    %v942 = vunpack.c.l.b16 %v78
    %v943 = vunpack.c.h.b16 %v78
    %v944 = vunpack.c.l.b16 %v79
    %v945 = vunpack.c.l.b16 %v80
    %v946 = vunpack.c.h.b16 %v80
    %v947 = vunpack.c.l.b16 %v81
    %v948 = vunpack.c.l.b16 %v82
    %v949 = vunpack.c.h.b16 %v82
    %v950 = vunpack.c.l.b16 %v83
    %v951 = vunpack.c.l.b16 %v84
    %v952 = vunpack.c.h.b16 %v84
    %v953 = vunpack.c.l.b16 %v85
    %v954 = vunpack.c.l.b16 %v86
    %v955 = vunpack.c.h.b16 %v86
    %v956 = vunpack.c.l.b16 %v87
    %v957 = vunpack.c.l.b16 %v88
    %v958 = vunpack.c.h.b16 %v88
    %v959 = vunpack.c.l.b16 %v89
    %v960 = vunpack.c.l.b16 %v90
    %v961 = vunpack.c.h.b16 %v90
    %v962 = vunpack.c.l.b16 %v91
    %v963 = vunpack.c.l.b16 %v92
    %v964 = vunpack.c.h.b16 %v92
    %v965 = vunpack.c.l.b16 %v93
    %v966 = vunpack.c.l.b16 %v94
    %v967 = vunpack.c.h.b16 %v94
    %v968 = vunpack.c.l.b16 %v95
    %v969 = vunpack.c.l.b16 %v96
    %v970 = vunpack.c.h.b16 %v96
    %v971 = vunpack.c.l.b16 %v97
    %v972 = vunpack.c.l.b16 %v98
    %v973 = vunpack.c.h.b16 %v98
    %v974 = vunpack.c.l.b16 %v99
    %v975 = vunpack.c.l.b16 %v100
    %v976 = vunpack.c.h.b16 %v100
    %v977 = vunpack.c.l.b16 %v101
    %v978 = vunpack.c.l.b16 %v102
    %v979 = vunpack.c.h.b16 %v102
    %v980 = vunpack.c.l.b16 %v103
    %v981 = vunpack.c.l.b16 %v104
    %v982 = vunpack.c.h.b16 %v104
    %v983 = vunpack.c.l.b16 %v105
    %v984 = vunpack.c.l.b16 %v106
    %v985 = vunpack.c.h.b16 %v106
    %v986 = vunpack.c.l.b16 %v107
    %v987 = vunpack.c.l.b16 %v108
    %v988 = vunpack.c.h.b16 %v108
    %v989 = vunpack.c.l.b16 %v109
    %v990 = vunpack.c.l.b16 %v110
    %v991 = vunpack.c.h.b16 %v110
    %v992 = vunpack.c.l.b16 %v111
    %v993 = vunpack.c.l.b16 %v112
    %v994 = vunpack.c.h.b16 %v112
    %v995 = vunpack.c.l.b16 %v113
    %v996 = vunpack.c.l.b16 %v114
    %v997 = vunpack.c.h.b16 %v114
    %v998 = vunpack.c.l.b16 %v115
    %v999 = vunpack.c.l.b16 %v116
    %v1000 = vunpack.c.h.b16 %v116
    %v1001 = vunpack.c.l.b16 %v117
    %v1002 = vunpack.c.l.b16 %v118
    %v1003 = vunpack.c.h.b16 %v118
    %v1004 = vunpack.c.l.b16 %v119
    %v1005 = vunpack.c.l.b16 %v120
    %v1006 = vunpack.c.h.b16 %v120
    %v1007 = vunpack.c.l.b16 %v121
    %v1008 = vunpack.c.l.b16 %v122
    %v1009 = vunpack.c.h.b16 %v122
    %v1010 = vunpack.c.l.b16 %v123
    %v1011 = vunpack.c.l.b16 %v124
    %v1012 = vunpack.c.h.b16 %v124
    %v1013 = vunpack.c.l.b16 %v125
    %v1014 = vunpack.c.l.b16 %v126
    %v1015 = vunpack.c.h.b16 %v126
    %v1016 = vunpack.c.l.b16 %v127
    %v1017 = vunpack.c.l.b16 %v128
    %v1018 = vunpack.c.h.b16 %v128
    %v1019 = vunpack.c.l.b16 %v129
    %v1020 = vunpack.c.l.b16 %v130
    %v1021 = vunpack.c.h.b16 %v130
    %v1022 = vunpack.c.l.b16 %v131
    %v1023 = vunpack.c.l.b16 %v132
    %v1024 = vunpack.c.h.b16 %v132
    %v1025 = vunpack.c.l.b16 %v133
    %v1026 = vunpack.c.l.b16 %v134
    %v1027 = vunpack.c.h.b16 %v134
    %v1028 = vunpack.c.l.b16 %v135
    %v1029 = vunpack.c.l.b16 %v136
    %v1030 = vunpack.c.h.b16 %v136
    %v1031 = vunpack.c.l.b16 %v137
    %v1032 = vunpack.c.l.b16 %v138
    %v1033 = vunpack.c.h.b16 %v138
    %v1034 = vunpack.c.l.b16 %v139
    %v1035 = vunpack.c.l.b16 %v140
    %v1036 = vunpack.c.h.b16 %v140
    %v1037 = vunpack.c.l.b16 %v141
    %v1038 = vunpack.c.l.b16 %v142
    %v1039 = vunpack.c.h.b16 %v142
    %v1040 = vunpack.c.l.b16 %v143
    %v1041 = vunpack.c.l.b16 %v144
    %v1042 = vunpack.c.h.b16 %v144
    %v1043 = vunpack.c.l.b16 %v145
    %v1044 = vunpack.c.l.b16 %v146
    %v1045 = vunpack.c.h.b16 %v146
    %v1046 = vunpack.c.l.b16 %v147
    %v1047 = vunpack.c.l.b16 %v148
    %v1048 = vunpack.c.h.b16 %v148
    %v1049 = vunpack.c.l.b16 %v149
    %v1050 = vunpack.c.l.b16 %v150
    %v1051 = vunpack.c.h.b16 %v150
    %v1052 = vunpack.c.l.b16 %v151
    %v1053 = vunpack.c.l.b16 %v152
    %v1054 = vunpack.c.h.b16 %v152
    %v1055 = vunpack.c.l.b16 %v153
    %v1056 = vunpack.c.l.b16 %v154
    %v1057 = vunpack.c.h.b16 %v154
    %v1058 = vunpack.c.l.b16 %v155
    %v1059 = vunpack.c.l.b16 %v156
    %v1060 = vunpack.c.h.b16 %v156
    %v1061 = vunpack.c.l.b16 %v157
    %v1062 = vunpack.c.l.b16 %v158
    %v1063 = vunpack.c.h.b16 %v158
    %v1064 = vunpack.c.l.b16 %v159
    %v1065 = vunpack.c.l.b16 %v160
    %v1066 = vunpack.c.h.b16 %v160
    %v1067 = vunpack.c.l.b16 %v161
    %v1068 = vunpack.c.l.b16 %v162
    %v1069 = vunpack.c.h.b16 %v162
    %v1070 = vunpack.c.l.b16 %v163
    %v1071 = vunpack.c.l.b16 %v164
    %v1072 = vunpack.c.h.b16 %v164
    %v1073 = vunpack.c.l.b16 %v165
    %v1074 = vunpack.c.l.b16 %v166
    %v1075 = vunpack.c.h.b16 %v166
    %v1076 = vunpack.c.l.b16 %v167
    %v1077 = vunpack.c.l.b16 %v168
    %v1078 = vunpack.c.h.b16 %v168
    %v1079 = vunpack.c.l.b16 %v169
    %v1080 = vunpack.c.l.b16 %v170
    %v1081 = vunpack.c.h.b16 %v170
    %v1082 = vunpack.c.l.b16 %v171
    %v1083 = vunpack.c.l.b16 %v172
    %v1084 = vunpack.c.h.b16 %v172
    %v1085 = vunpack.c.l.b16 %v173
    %v1086 = vunpack.c.l.b16 %v174
    %v1087 = vunpack.c.h.b16 %v174
    %v1088 = vunpack.c.l.b16 %v175
    %v1089 = vunpack.c.l.b16 %v176
    %v1090 = vunpack.c.h.b16 %v176
    %v1091 = vunpack.c.l.b16 %v177
    %v1092 = vunpack.c.l.b16 %v178
    %v1093 = vunpack.c.h.b16 %v178
    %v1094 = vunpack.c.l.b16 %v179
    %v1095 = vunpack.c.l.b16 %v180
    %v1096 = vunpack.c.h.b16 %v180
    %v1097 = vunpack.c.l.b16 %v181
    %v1098 = vunpack.c.l.b16 %v182
    %v1099 = vunpack.c.h.b16 %v182
    %v1100 = vunpack.c.l.b16 %v183
    %v1101 = vunpack.c.l.b16 %v184
    %v1102 = vunpack.c.h.b16 %v184
    %v1103 = vunpack.c.l.b16 %v185
    %v1104 = vunpack.c.l.b16 %v186
    %v1105 = vunpack.c.h.b16 %v186
    %v1106 = vunpack.c.l.b16 %v187
    %v1107 = vunpack.c.l.b16 %v188
    %v1108 = vunpack.c.h.b16 %v188
    %v1109 = vunpack.c.l.b16 %v189
    %v1110 = vunpack.c.l.b16 %v190
    %v1111 = vunpack.c.h.b16 %v190
    %v1112 = vunpack.c.l.b16 %v191
    %v1113 = vunpack.c.l.b16 %v192
    %v1114 = vunpack.c.h.b16 %v192
    %v1115 = vunpack.c.l.b16 %v193
    %v1116 = vunpack.c.l.b16 %v194
    %v1117 = vunpack.c.h.b16 %v194
    %v1118 = vunpack.c.l.b16 %v195
    %v1119 = vunpack.c.l.b16 %v196
    %v1120 = vunpack.c.h.b16 %v196
    %v1121 = vunpack.c.l.b16 %v197
    %v1122 = vunpack.c.l.b16 %v198
    %v1123 = vunpack.c.h.b16 %v198
    %v1124 = vunpack.c.l.b16 %v199
    %v1125 = vunpack.c.l.b16 %v200
    %v1126 = vunpack.c.h.b16 %v200
    %v1127 = vunpack.c.l.b16 %v201
    %v1128 = vunpack.c.l.b16 %v202
    %v1129 = vunpack.c.h.b16 %v202
    %v1130 = vunpack.c.l.b16 %v203
    %v1131 = vunpack.c.l.b16 %v204
    %v1132 = vunpack.c.h.b16 %v204
    %v1133 = vunpack.c.l.b16 %v205
    %v1134 = vunpack.c.l.b16 %v206
    %v1135 = vunpack.c.h.b16 %v206
    %v1136 = vunpack.c.l.b16 %v207
    %v1137 = vunpack.c.l.b16 %v208
    %v1138 = vunpack.c.h.b16 %v208
    %v1139 = vunpack.c.l.b16 %v209
    %v1140 = vunpack.c.l.b16 %v210
    %v1141 = vunpack.c.h.b16 %v210
    %v1142 = vunpack.c.l.b16 %v211
    %v1143 = vunpack.c.l.b16 %v212
    %v1144 = vunpack.c.h.b16 %v212
    %v1145 = vunpack.c.l.b16 %v213
    %v1146 = vunpack.c.l.b16 %v214
    %v1147 = vunpack.c.h.b16 %v214
    %v1148 = vunpack.c.l.b16 %v215
    %v1149 = vunpack.c.l.b16 %v216
    %v1150 = vunpack.c.h.b16 %v216
    %v1151 = vunpack.c.l.b16 %v217
    %v1152 = vunpack.c.l.b16 %v218
    %v1153 = vunpack.c.h.b16 %v218
    %v1154 = vunpack.c.l.b16 %v219
    %v1155 = vunpack.c.l.b16 %v220
    %v1156 = vunpack.c.h.b16 %v220
    %v1157 = vunpack.c.l.b16 %v221
    %v1158 = vunpack.c.l.b16 %v222
    %v1159 = vunpack.c.h.b16 %v222
    %v1160 = vunpack.c.l.b16 %v223
    %v1161 = vunpack.c.l.b16 %v224
    %v1162 = vunpack.c.h.b16 %v224
    %v1163 = vunpack.c.l.b16 %v225
    %v1164 = vunpack.c.l.b16 %v226
    %v1165 = vunpack.c.h.b16 %v226
    %v1166 = vunpack.c.l.b16 %v227
    %v1167 = vunpack.c.l.b16 %v228
    %v1168 = vunpack.c.h.b16 %v228
    %v1169 = vunpack.c.l.b16 %v229
    %v1170 = vunpack.c.l.b16 %v230
    %v1171 = vunpack.c.h.b16 %v230
    %v1172 = vunpack.c.l.b16 %v231
    %v1173 = vunpack.c.l.b16 %v232
    %v1174 = vunpack.c.h.b16 %v232
    %v1175 = vunpack.c.l.b16 %v233
    %v1176 = vunpack.c.l.b16 %v234
    %v1177 = vunpack.c.h.b16 %v234
    %v1178 = vunpack.c.l.b16 %v235
    %v1179 = vunpack.c.l.b16 %v236
    %v1180 = vunpack.c.h.b16 %v236
    %v1181 = vunpack.c.l.b16 %v237
    %v1182 = vunpack.c.l.b16 %v238
    %v1183 = vunpack.c.h.b16 %v238
    %v1184 = vunpack.c.l.b16 %v239
    %v1185 = vunpack.c.l.b16 %v240
    %v1186 = vunpack.c.h.b16 %v240
    %v1187 = vunpack.c.l.b16 %v241
    %v1188 = vunpack.c.l.b16 %v242
    %v1189 = vunpack.c.h.b16 %v242
    %v1190 = vunpack.c.l.b16 %v243
    %v1191 = vunpack.c.l.b16 %v244
    %v1192 = vunpack.c.h.b16 %v244
    %v1193 = vunpack.c.l.b16 %v245
    %v1194 = vunpack.c.l.b16 %v246
    %v1195 = vunpack.c.h.b16 %v246
    %v1196 = vunpack.c.l.b16 %v247
    %v1197 = vunpack.c.l.b16 %v248
    %v1198 = vunpack.c.h.b16 %v248
    %v1199 = vunpack.c.l.b16 %v249
    %v1200 = vunpack.c.l.b16 %v250
    %v1201 = vunpack.c.h.b16 %v250
    %v1202 = vunpack.c.l.b16 %v251
    %v1203 = vunpack.c.l.b16 %v252
    %v1204 = vunpack.c.h.b16 %v252
    %v1205 = vunpack.c.l.b16 %v253
    %v1206 = vunpack.c.l.b16 %v254
    %v1207 = vunpack.c.h.b16 %v254
    %v1208 = vunpack.c.l.b16 %v255
    %v1209 = vunpack.c.l.b16 %v256
    %v1210 = vunpack.c.h.b16 %v256
    %v1211 = vunpack.c.l.b16 %v257
    %v1212 = vunpack.c.l.b16 %v258
    %v1213 = vunpack.c.h.b16 %v258
    %v1214 = vunpack.c.l.b16 %v259
    %v1215 = vunpack.c.l.b16 %v260
    %v1216 = vunpack.c.h.b16 %v260
    %v1217 = vunpack.c.l.b16 %v261
    %v1218 = vunpack.c.l.b16 %v262
    %v1219 = vunpack.c.h.b16 %v262
    %v1220 = vunpack.c.l.b16 %v263
    %v1221 = vunpack.c.l.b16 %v264
    %v1222 = vunpack.c.h.b16 %v264
    %v1223 = vunpack.c.l.b16 %v265
    %v1224 = vunpack.c.l.b16 %v266
    %v1225 = vunpack.c.h.b16 %v266
    %v1226 = vunpack.c.l.b16 %v267
    %v1227 = vunpack.c.l.b16 %v268
    %v1228 = vunpack.c.h.b16 %v268
    %v1229 = vunpack.c.l.b16 %v269
    %v1230 = vunpack.c.l.b16 %v270
    %v1231 = vunpack.c.h.b16 %v270
    %v1232 = vunpack.c.l.b16 %v271
    %v1233 = vunpack.c.l.b16 %v272
    %v1234 = vunpack.c.h.b16 %v272
    %v1235 = vunpack.c.l.b16 %v273
    %v1236 = vunpack.c.l.b16 %v274
    %v1237 = vunpack.c.h.b16 %v274
    %v1238 = vunpack.c.l.b16 %v275
    %v1239 = vunpack.c.l.b16 %v276
    %v1240 = vunpack.c.h.b16 %v276
    %v1241 = vunpack.c.l.b16 %v277
    %v1242 = vunpack.c.l.b16 %v278
    %v1243 = vunpack.c.h.b16 %v278
    %v1244 = vunpack.c.l.b16 %v279
    %v1245 = vunpack.c.l.b16 %v280
    %v1246 = vunpack.c.h.b16 %v280
    %v1247 = vunpack.c.l.b16 %v281
    %v1248 = vunpack.c.l.b16 %v282
    %v1249 = vunpack.c.h.b16 %v282
    %v1250 = vunpack.c.l.b16 %v283
    %v1251 = vunpack.c.l.b16 %v284
    %v1252 = vunpack.c.h.b16 %v284
    %v1253 = vunpack.c.l.b16 %v285
    %v1254 = vunpack.c.l.b16 %v286
    %v1255 = vunpack.c.h.b16 %v286
    %v1256 = vunpack.c.l.b16 %v287
    %v1257 = vunpack.c.l.b16 %v288
    %v1258 = vunpack.c.h.b16 %v288
    %v1259 = vunpack.c.l.b16 %v289
    %v1260 = vunpack.c.l.b16 %v290
    %v1261 = vunpack.c.h.b16 %v290
    %v1262 = vunpack.c.l.b16 %v291
    %v1263 = vunpack.c.l.b16 %v292
    %v1264 = vunpack.c.h.b16 %v292
    %v1265 = vunpack.c.l.b16 %v293
    %v1266 = vunpack.c.l.b16 %v294
    %v1267 = vunpack.c.h.b16 %v294
    %v1268 = vunpack.c.l.b16 %v295
    %v1269 = vunpack.c.l.b16 %v296
    %v1270 = vunpack.c.h.b16 %v296
    %v1271 = vunpack.c.l.b16 %v297
    %v1272 = vunpack.c.l.b16 %v298
    %v1273 = vunpack.c.h.b16 %v298
    %v1274 = vunpack.c.l.b16 %v299
    %v1275 = vunpack.c.l.b16 %v300
    %v1276 = vunpack.c.h.b16 %v300
    %v1277 = vunpack.c.l.b16 %v301
    %v1278 = vunpack.c.l.b16 %v302
    %v1279 = vunpack.c.h.b16 %v302
    %v1280 = vunpack.c.l.b16 %v303
    %v1281 = vunpack.c.l.b16 %v304
    %v1282 = vunpack.c.h.b16 %v304
    %v1283 = vunpack.c.l.b16 %v305
    %v1284 = vunpack.c.l.b16 %v306
    %v1285 = vunpack.c.h.b16 %v306
    %v1286 = vunpack.c.l.b16 %v307
    %v1287 = vunpack.c.l.b16 %v308
    %v1288 = vunpack.c.h.b16 %v308
    %v1289 = vunpack.c.l.b16 %v309
    %v1290 = vunpack.c.l.b16 %v310
    %v1291 = vunpack.c.h.b16 %v310
    %v1292 = vunpack.c.l.b16 %v311
    %v1293 = vunpack.c.l.b16 %v312
    %v1294 = vunpack.c.h.b16 %v312
    %v1295 = vunpack.c.l.b16 %v313
    %v1296 = vunpack.c.l.b16 %v314
    %v1297 = vunpack.c.h.b16 %v314
    %v1298 = vunpack.c.l.b16 %v315
    %v1299 = vunpack.c.l.b16 %v316
    %v1300 = vunpack.c.h.b16 %v316
    %v1301 = vunpack.c.l.b16 %v317
    %v1302 = vunpack.c.l.b16 %v318
    %v1303 = vunpack.c.h.b16 %v318
    %v1304 = vunpack.c.l.b16 %v319
    %v1305 = vunpack.c.l.b16 %v320
    %v1306 = vunpack.c.h.b16 %v320
    %v1307 = vunpack.c.l.b16 %v321
    %v1308 = vunpack.c.l.b16 %v322
    %v1309 = vunpack.c.h.b16 %v322
    %v1310 = vunpack.c.l.b16 %v323
    %v1311 = vunpack.c.l.b16 %v324
    %v1312 = vunpack.c.h.b16 %v324
    %v1313 = vunpack.c.l.b16 %v325
    %v1314 = vunpack.c.l.b16 %v326
    %v1315 = vunpack.c.h.b16 %v326
    %v1316 = vunpack.c.l.b16 %v327
    %v1317 = vunpack.c.l.b16 %v328
    %v1318 = vunpack.c.h.b16 %v328
    %v1319 = vunpack.c.l.b16 %v329
    %v1320 = vunpack.c.l.b16 %v330
    %v1321 = vunpack.c.h.b16 %v330
    %v1322 = vunpack.c.l.b16 %v331
    %v1323 = vunpack.c.l.b16 %v332
    %v1324 = vunpack.c.h.b16 %v332
    %v1325 = vunpack.c.l.b16 %v333
    %v1326 = vunpack.c.l.b16 %v334
    %v1327 = vunpack.c.h.b16 %v334
    %v1328 = vunpack.c.l.b16 %v335
    %v1329 = vunpack.c.l.b16 %v336
    %v1330 = vunpack.c.h.b16 %v336
    %v1331 = vunpack.c.l.b16 %v337
    %v1332 = vunpack.c.l.b16 %v338
    %v1333 = vunpack.c.h.b16 %v338
    %v1334 = vunpack.c.l.b16 %v339
    %v1335 = vunpack.c.l.b16 %v340
    %v1336 = vunpack.c.h.b16 %v340
    %v1337 = vunpack.c.l.b16 %v341
    %v1338 = vunpack.c.l.b16 %v342
    %v1339 = vunpack.c.h.b16 %v342
    %v1340 = vunpack.c.l.b16 %v343
    %v1341 = vunpack.c.l.b16 %v344
    %v1342 = vunpack.c.h.b16 %v344
    %v1343 = vunpack.c.l.b16 %v345
    %v1344 = vunpack.c.l.b16 %v346
    %v1345 = vunpack.c.h.b16 %v346
    %v1346 = vunpack.c.l.b16 %v347
    %v1347 = vunpack.c.l.b16 %v348
    %v1348 = vunpack.c.h.b16 %v348
    %v1349 = vunpack.c.l.b16 %v349
    %v1350 = vunpack.c.l.b16 %v350
    %v1351 = vunpack.c.h.b16 %v350
    %v1352 = vunpack.c.l.b16 %v351
    %v1353 = vunpack.c.l.b16 %v352
    %v1354 = vunpack.c.h.b16 %v352
    %v1355 = vunpack.c.l.b16 %v353
    %v1356 = vunpack.c.l.b16 %v354
    %v1357 = vunpack.c.h.b16 %v354
    %v1358 = vunpack.c.l.b16 %v355
    %v1359 = vunpack.c.l.b16 %v356
    %v1360 = vunpack.c.h.b16 %v356
    %v1361 = vunpack.c.l.b16 %v357
    %v1362 = vunpack.c.l.b16 %v358
    %v1363 = vunpack.c.h.b16 %v358
    %v1364 = vunpack.c.l.b16 %v359
    %v1365 = vunpack.c.l.b16 %v360
    %v1366 = vunpack.c.h.b16 %v360
    %v1367 = vunpack.c.l.b16 %v361
    %v1368 = vunpack.c.l.b16 %v362
    %v1369 = vunpack.c.h.b16 %v362
    %v1370 = vunpack.c.l.b16 %v363
    %v1371 = vunpack.c.l.b16 %v364
    %v1372 = vunpack.c.h.b16 %v364
    %v1373 = vunpack.c.l.b16 %v365
    %v1374 = vunpack.c.l.b16 %v366
    %v1375 = vunpack.c.h.b16 %v366
    %v1376 = vunpack.c.l.b16 %v367
    %v1377 = vunpack.c.l.b16 %v368
    %v1378 = vunpack.c.h.b16 %v368
    %v1379 = vunpack.c.l.b16 %v369
    %v1380 = vunpack.c.l.b16 %v370
    %v1381 = vunpack.c.h.b16 %v370
    %v1382 = vunpack.c.l.b16 %v371
    %v1383 = vunpack.c.l.b16 %v372
    %v1384 = vunpack.c.h.b16 %v372
    %v1385 = vunpack.c.l.b16 %v373
    %v1386 = vunpack.c.l.b16 %v374
    %v1387 = vunpack.c.h.b16 %v374
    %v1388 = vunpack.c.l.b16 %v375
    %v1389 = vunpack.c.l.b16 %v376
    %v1390 = vunpack.c.h.b16 %v376
    %v1391 = vunpack.c.l.b16 %v377
    %v1392 = vunpack.c.l.b16 %v378
    %v1393 = vunpack.c.h.b16 %v378
    %v1394 = vunpack.c.l.b16 %v379
    %v1395 = vunpack.c.l.b16 %v380
    %v1396 = vunpack.c.h.b16 %v380
    %v1397 = vunpack.c.l.b16 %v381
    %v1398 = vunpack.c.l.b16 %v382
    %v1399 = vunpack.c.h.b16 %v382
    %v1400 = vunpack.c.l.b16 %v383
    %v1401 = vunpack.c.l.b16 %v384
    %v1402 = vunpack.c.h.b16 %v384
    %v1403 = vunpack.c.l.b16 %v385
    %v1404 = vunpack.c.l.b16 %v386
    %v1405 = vunpack.c.h.b16 %v386
    %v1406 = vunpack.c.l.b16 %v387
    %v1407 = vunpack.c.l.b16 %v388
    %v1408 = vunpack.c.h.b16 %v388
    %v1409 = vunpack.c.l.b16 %v389
    %v1410 = vunpack.c.l.b16 %v390
    %v1411 = vunpack.c.h.b16 %v390
    %v1412 = vunpack.c.l.b16 %v391
    %v1413 = vunpack.c.l.b16 %v392
    %v1414 = vunpack.c.h.b16 %v392
    %v1415 = vunpack.c.l.b16 %v393
    %v1416 = vunpack.c.l.b16 %v394
    %v1417 = vunpack.c.h.b16 %v394
    %v1418 = vunpack.c.l.b16 %v395
    %v1419 = vunpack.c.l.b16 %v396
    %v1420 = vunpack.c.h.b16 %v396
    %v1421 = vunpack.c.l.b16 %v397
    %v1422 = vunpack.c.l.b16 %v398
    %v1423 = vunpack.c.h.b16 %v398
    %v1424 = vunpack.c.l.b16 %v399
    %v1425 = vunpack.c.l.b16 %v400
    %v1426 = vunpack.c.h.b16 %v400
    %v1427 = vunpack.c.l.b16 %v401
    %v1428 = vunpack.c.l.b16 %v402
    %v1429 = vunpack.c.h.b16 %v402
    %v1430 = vunpack.c.l.b16 %v403
    %v1431 = vunpack.c.l.b16 %v404
    %v1432 = vunpack.c.h.b16 %v404
    %v1433 = vunpack.c.l.b16 %v405
    %v1434 = vunpack.c.l.b16 %v406
    %v1435 = vunpack.c.h.b16 %v406
    %v1436 = vunpack.c.l.b16 %v407
    %v1437 = vunpack.c.l.b16 %v408
    %v1438 = vunpack.c.h.b16 %v408
    %v1439 = vunpack.c.l.b16 %v409
    %v1440 = vunpack.c.l.b16 %v410
    %v1441 = vunpack.c.h.b16 %v410
    %v1442 = vunpack.c.l.b16 %v411
    %v1443 = vunpack.c.l.b16 %v412
    %v1444 = vunpack.c.h.b16 %v412
    %v1445 = vunpack.c.l.b16 %v413
    %v1446 = vunpack.c.l.b16 %v414
    %v1447 = vunpack.c.h.b16 %v414
    %v1448 = vunpack.c.l.b16 %v415
    %v1449 = vunpack.c.l.b16 %v416
    %v1450 = vunpack.c.h.b16 %v416
    %v1451 = vunpack.c.l.b16 %v417
    %v1452 = vunpack.c.l.b16 %v418
    %v1453 = vunpack.c.h.b16 %v418
    %v1454 = vunpack.c.l.b16 %v419
    %v1455 = vunpack.c.l.b16 %v420
    %v1456 = vunpack.c.h.b16 %v420
    %v1457 = vunpack.c.l.b16 %v421
    %v1458 = vunpack.c.l.b16 %v422
    %v1459 = vunpack.c.h.b16 %v422
    %v1460 = vunpack.c.l.b16 %v423
    %v1461 = vpack.c.b16 %v864, %v861
    %v1462 = vpack.c.b16 %v865, %v862
    %v1463 = vpack.c.b16 %v866, %v863
    %v1464 = vpack.c.b16 %v870, %v867
    %v1465 = vpack.c.b16 %v871, %v868
    %v1466 = vpack.c.b16 %v872, %v869
    %v1467 = vpack.c.b16 %v876, %v873
    %v1468 = vpack.c.b16 %v877, %v874
    %v1469 = vpack.c.b16 %v878, %v875
    %v1470 = vpack.c.b16 %v882, %v879
    %v1471 = vpack.c.b16 %v883, %v880
    %v1472 = vpack.c.b16 %v884, %v881
    %v1473 = vpack.c.b16 %v888, %v885
    %v1474 = vpack.c.b16 %v889, %v886
    %v1475 = vpack.c.b16 %v890, %v887
    %v1476 = vpack.c.b16 %v894, %v891
    %v1477 = vpack.c.b16 %v895, %v892
    %v1478 = vpack.c.b16 %v896, %v893
    %v1479 = vpack.c.b16 %v900, %v897
    %v1480 = vpack.c.b16 %v901, %v898
    %v1481 = vpack.c.b16 %v902, %v899
    %v1482 = vpack.c.b16 %v906, %v903
    %v1483 = vpack.c.b16 %v907, %v904
    %v1484 = vpack.c.b16 %v908, %v905
    %v1485 = vpack.c.b16 %v912, %v909
    %v1486 = vpack.c.b16 %v913, %v910
    %v1487 = vpack.c.b16 %v914, %v911
    %v1488 = vpack.c.b16 %v918, %v915
    %v1489 = vpack.c.b16 %v919, %v916
    %v1490 = vpack.c.b16 %v920, %v917
    %v1491 = vpack.c.b16 %v924, %v921
    %v1492 = vpack.c.b16 %v925, %v922
    %v1493 = vpack.c.b16 %v926, %v923
    %v1494 = vpack.c.b16 %v930, %v927
    %v1495 = vpack.c.b16 %v931, %v928
    %v1496 = vpack.c.b16 %v932, %v929
    %v1497 = vpack.c.b16 %v936, %v933
    %v1498 = vpack.c.b16 %v937, %v934
    %v1499 = vpack.c.b16 %v938, %v935
    %v1500 = vpack.c.b16 %v942, %v939
    %v1501 = vpack.c.b16 %v943, %v940
    %v1502 = vpack.c.b16 %v944, %v941
    %v1503 = vpack.c.b16 %v948, %v945
    %v1504 = vpack.c.b16 %v949, %v946
    %v1505 = vpack.c.b16 %v950, %v947
    %v1506 = vpack.c.b16 %v954, %v951
    %v1507 = vpack.c.b16 %v955, %v952
    %v1508 = vpack.c.b16 %v956, %v953
    %v1509 = vpack.c.b16 %v960, %v957
    %v1510 = vpack.c.b16 %v961, %v958
    %v1511 = vpack.c.b16 %v962, %v959
    %v1512 = vpack.c.b16 %v966, %v963
    %v1513 = vpack.c.b16 %v967, %v964
    %v1514 = vpack.c.b16 %v968, %v965
    %v1515 = vpack.c.b16 %v972, %v969
    %v1516 = vpack.c.b16 %v973, %v970
    %v1517 = vpack.c.b16 %v974, %v971
    %v1518 = vpack.c.b16 %v978, %v975
    %v1519 = vpack.c.b16 %v979, %v976
    %v1520 = vpack.c.b16 %v980, %v977
    %v1521 = vpack.c.b16 %v984, %v981
    %v1522 = vpack.c.b16 %v985, %v982
    %v1523 = vpack.c.b16 %v986, %v983
    %v1524 = vpack.c.b16 %v990, %v987
    %v1525 = vpack.c.b16 %v991, %v988
    %v1526 = vpack.c.b16 %v992, %v989
    %v1527 = vpack.c.b16 %v996, %v993
    %v1528 = vpack.c.b16 %v997, %v994
    %v1529 = vpack.c.b16 %v998, %v995
    %v1530 = vpack.c.b16 %v1002, %v999
    %v1531 = vpack.c.b16 %v1003, %v1000
    %v1532 = vpack.c.b16 %v1004, %v1001
    %v1533 = vpack.c.b16 %v1008, %v1005
    %v1534 = vpack.c.b16 %v1009, %v1006
    %v1535 = vpack.c.b16 %v1010, %v1007
    %v1536 = vpack.c.b16 %v1014, %v1011
    %v1537 = vpack.c.b16 %v1015, %v1012
    %v1538 = vpack.c.b16 %v1016, %v1013
    %v1539 = vpack.c.b16 %v1020, %v1017
    %v1540 = vpack.c.b16 %v1021, %v1018
    %v1541 = vpack.c.b16 %v1022, %v1019
    %v1542 = vpack.c.b16 %v1026, %v1023
    %v1543 = vpack.c.b16 %v1027, %v1024
    %v1544 = vpack.c.b16 %v1028, %v1025
    %v1545 = vpack.c.b16 %v1032, %v1029
    %v1546 = vpack.c.b16 %v1033, %v1030
    %v1547 = vpack.c.b16 %v1034, %v1031
    %v1548 = vpack.c.b16 %v1038, %v1035
    %v1549 = vpack.c.b16 %v1039, %v1036
    %v1550 = vpack.c.b16 %v1040, %v1037
    %v1551 = vpack.c.b16 %v1044, %v1041
    %v1552 = vpack.c.b16 %v1045, %v1042
    %v1553 = vpack.c.b16 %v1046, %v1043
    %v1554 = vpack.c.b16 %v1050, %v1047
    %v1555 = vpack.c.b16 %v1051, %v1048
    %v1556 = vpack.c.b16 %v1052, %v1049
    %v1557 = vpack.c.b16 %v1056, %v1053
    %v1558 = vpack.c.b16 %v1057, %v1054
    %v1559 = vpack.c.b16 %v1058, %v1055
    %v1560 = vpack.c.b16 %v1062, %v1059
    %v1561 = vpack.c.b16 %v1063, %v1060
    %v1562 = vpack.c.b16 %v1064, %v1061
    %v1563 = vpack.c.b16 %v1068, %v1065
    %v1564 = vpack.c.b16 %v1069, %v1066
    %v1565 = vpack.c.b16 %v1070, %v1067
    %v1566 = vpack.c.b16 %v1074, %v1071
    %v1567 = vpack.c.b16 %v1075, %v1072
    %v1568 = vpack.c.b16 %v1076, %v1073
    %v1569 = vpack.c.b16 %v1080, %v1077
    %v1570 = vpack.c.b16 %v1081, %v1078
    %v1571 = vpack.c.b16 %v1082, %v1079
    %v1572 = vpack.c.b16 %v1086, %v1083
    %v1573 = vpack.c.b16 %v1087, %v1084
    %v1574 = vpack.c.b16 %v1088, %v1085
    %v1575 = vpack.c.b16 %v1092, %v1089
    %v1576 = vpack.c.b16 %v1093, %v1090
    %v1577 = vpack.c.b16 %v1094, %v1091
    %v1578 = vpack.c.b16 %v1098, %v1095
    %v1579 = vpack.c.b16 %v1099, %v1096
    %v1580 = vpack.c.b16 %v1100, %v1097
    %v1581 = vpack.c.b16 %v1104, %v1101
    %v1582 = vpack.c.b16 %v1105, %v1102
    %v1583 = vpack.c.b16 %v1106, %v1103
    %v1584 = vpack.c.b16 %v1110, %v1107
    %v1585 = vpack.c.b16 %v1111, %v1108
    %v1586 = vpack.c.b16 %v1112, %v1109
    %v1587 = vpack.c.b16 %v1116, %v1113
    %v1588 = vpack.c.b16 %v1117, %v1114
    %v1589 = vpack.c.b16 %v1118, %v1115
    %v1590 = vpack.c.b16 %v1122, %v1119
    %v1591 = vpack.c.b16 %v1123, %v1120
    %v1592 = vpack.c.b16 %v1124, %v1121
    %v1593 = vpack.c.b16 %v1128, %v1125
    %v1594 = vpack.c.b16 %v1129, %v1126
    %v1595 = vpack.c.b16 %v1130, %v1127
    %v1596 = vpack.c.b16 %v1134, %v1131
    %v1597 = vpack.c.b16 %v1135, %v1132
    %v1598 = vpack.c.b16 %v1136, %v1133
    %v1599 = vpack.c.b16 %v1140, %v1137
    %v1600 = vpack.c.b16 %v1141, %v1138
    %v1601 = vpack.c.b16 %v1142, %v1139
    %v1602 = vpack.c.b16 %v1146, %v1143
    %v1603 = vpack.c.b16 %v1147, %v1144
    %v1604 = vpack.c.b16 %v1148, %v1145
    %v1605 = vpack.c.b16 %v1152, %v1149
    %v1606 = vpack.c.b16 %v1153, %v1150
    %v1607 = vpack.c.b16 %v1154, %v1151
    %v1608 = vpack.c.b16 %v1158, %v1155
    %v1609 = vpack.c.b16 %v1159, %v1156
    %v1610 = vpack.c.b16 %v1160, %v1157
    %v1611 = vpack.c.b16 %v1164, %v1161
    %v1612 = vpack.c.b16 %v1165, %v1162
    %v1613 = vpack.c.b16 %v1166, %v1163
    %v1614 = vpack.c.b16 %v1170, %v1167
    %v1615 = vpack.c.b16 %v1171, %v1168
    %v1616 = vpack.c.b16 %v1172, %v1169
    %v1617 = vpack.c.b16 %v1176, %v1173
    %v1618 = vpack.c.b16 %v1177, %v1174
    %v1619 = vpack.c.b16 %v1178, %v1175
    %v1620 = vpack.c.b16 %v1182, %v1179
    %v1621 = vpack.c.b16 %v1183, %v1180
    %v1622 = vpack.c.b16 %v1184, %v1181
    %v1623 = vpack.c.b16 %v1188, %v1185
    %v1624 = vpack.c.b16 %v1189, %v1186
    %v1625 = vpack.c.b16 %v1190, %v1187
    %v1626 = vpack.c.b16 %v1194, %v1191
    %v1627 = vpack.c.b16 %v1195, %v1192
    %v1628 = vpack.c.b16 %v1196, %v1193
    %v1629 = vpack.c.b16 %v1200, %v1197
    %v1630 = vpack.c.b16 %v1201, %v1198
    %v1631 = vpack.c.b16 %v1202, %v1199
    %v1632 = vpack.c.b16 %v1206, %v1203
    %v1633 = vpack.c.b16 %v1207, %v1204
    %v1634 = vpack.c.b16 %v1208, %v1205
    %v1635 = vpack.c.b16 %v1212, %v1209
    %v1636 = vpack.c.b16 %v1213, %v1210
    %v1637 = vpack.c.b16 %v1214, %v1211
    %v1638 = vpack.c.b16 %v1218, %v1215
    %v1639 = vpack.c.b16 %v1219, %v1216
    %v1640 = vpack.c.b16 %v1220, %v1217
    %v1641 = vpack.c.b16 %v1224, %v1221
    %v1642 = vpack.c.b16 %v1225, %v1222
    %v1643 = vpack.c.b16 %v1226, %v1223
    %v1644 = vpack.c.b16 %v1230, %v1227
    %v1645 = vpack.c.b16 %v1231, %v1228
    %v1646 = vpack.c.b16 %v1232, %v1229
    %v1647 = vpack.c.b16 %v1236, %v1233
    %v1648 = vpack.c.b16 %v1237, %v1234
    %v1649 = vpack.c.b16 %v1238, %v1235
    %v1650 = vpack.c.b16 %v1242, %v1239
    %v1651 = vpack.c.b16 %v1243, %v1240
    %v1652 = vpack.c.b16 %v1244, %v1241
    %v1653 = vpack.c.b16 %v1248, %v1245
    %v1654 = vpack.c.b16 %v1249, %v1246
    %v1655 = vpack.c.b16 %v1250, %v1247
    %v1656 = vpack.c.b16 %v1254, %v1251
    %v1657 = vpack.c.b16 %v1255, %v1252
    %v1658 = vpack.c.b16 %v1256, %v1253
    %v1659 = vpack.c.b16 %v1260, %v1257
    %v1660 = vpack.c.b16 %v1261, %v1258
    %v1661 = vpack.c.b16 %v1262, %v1259
    %v1662 = vpack.c.b16 %v1266, %v1263
    %v1663 = vpack.c.b16 %v1267, %v1264
    %v1664 = vpack.c.b16 %v1268, %v1265
    %v1665 = vpack.c.b16 %v1272, %v1269
    %v1666 = vpack.c.b16 %v1273, %v1270
    %v1667 = vpack.c.b16 %v1274, %v1271
    %v1668 = vpack.c.b16 %v1278, %v1275
    %v1669 = vpack.c.b16 %v1279, %v1276
    %v1670 = vpack.c.b16 %v1280, %v1277
    %v1671 = vpack.c.b16 %v1284, %v1281
    %v1672 = vpack.c.b16 %v1285, %v1282
    %v1673 = vpack.c.b16 %v1286, %v1283
    %v1674 = vpack.c.b16 %v1290, %v1287
    %v1675 = vpack.c.b16 %v1291, %v1288
    %v1676 = vpack.c.b16 %v1292, %v1289
    %v1677 = vpack.c.b16 %v1296, %v1293
    %v1678 = vpack.c.b16 %v1297, %v1294
    %v1679 = vpack.c.b16 %v1298, %v1295
    %v1680 = vpack.c.b16 %v1302, %v1299
    %v1681 = vpack.c.b16 %v1303, %v1300
    %v1682 = vpack.c.b16 %v1304, %v1301
    %v1683 = vpack.c.b16 %v1308, %v1305
    %v1684 = vpack.c.b16 %v1309, %v1306
    %v1685 = vpack.c.b16 %v1310, %v1307
    %v1686 = vpack.c.b16 %v1314, %v1311
    %v1687 = vpack.c.b16 %v1315, %v1312
    %v1688 = vpack.c.b16 %v1316, %v1313
    %v1689 = vpack.c.b16 %v1320, %v1317
    %v1690 = vpack.c.b16 %v1321, %v1318
    %v1691 = vpack.c.b16 %v1322, %v1319
    %v1692 = vpack.c.b16 %v1326, %v1323
    %v1693 = vpack.c.b16 %v1327, %v1324
    %v1694 = vpack.c.b16 %v1328, %v1325
    %v1695 = vpack.c.b16 %v1332, %v1329
    %v1696 = vpack.c.b16 %v1333, %v1330
    %v1697 = vpack.c.b16 %v1334, %v1331
    %v1698 = vpack.c.b16 %v1338, %v1335
    %v1699 = vpack.c.b16 %v1339, %v1336
    %v1700 = vpack.c.b16 %v1340, %v1337
    %v1701 = vpack.c.b16 %v1344, %v1341
    %v1702 = vpack.c.b16 %v1345, %v1342
    %v1703 = vpack.c.b16 %v1346, %v1343
    %v1704 = vpack.c.b16 %v1350, %v1347
    %v1705 = vpack.c.b16 %v1351, %v1348
    %v1706 = vpack.c.b16 %v1352, %v1349
    %v1707 = vpack.c.b16 %v1356, %v1353
    %v1708 = vpack.c.b16 %v1357, %v1354
    %v1709 = vpack.c.b16 %v1358, %v1355
    %v1710 = vpack.c.b16 %v1362, %v1359
    %v1711 = vpack.c.b16 %v1363, %v1360
    %v1712 = vpack.c.b16 %v1364, %v1361
    %v1713 = vpack.c.b16 %v1368, %v1365
    %v1714 = vpack.c.b16 %v1369, %v1366
    %v1715 = vpack.c.b16 %v1370, %v1367
    %v1716 = vpack.c.b16 %v1374, %v1371
    %v1717 = vpack.c.b16 %v1375, %v1372
    %v1718 = vpack.c.b16 %v1376, %v1373
    %v1719 = vpack.c.b16 %v1380, %v1377
    %v1720 = vpack.c.b16 %v1381, %v1378
    %v1721 = vpack.c.b16 %v1382, %v1379
    %v1722 = vpack.c.b16 %v1386, %v1383
    %v1723 = vpack.c.b16 %v1387, %v1384
    %v1724 = vpack.c.b16 %v1388, %v1385
    %v1725 = vpack.c.b16 %v1392, %v1389
    %v1726 = vpack.c.b16 %v1393, %v1390
    %v1727 = vpack.c.b16 %v1394, %v1391
    %v1728 = vpack.c.b16 %v1398, %v1395
    %v1729 = vpack.c.b16 %v1399, %v1396
    %v1730 = vpack.c.b16 %v1400, %v1397
    %v1731 = vpack.c.b16 %v1404, %v1401
    %v1732 = vpack.c.b16 %v1405, %v1402
    %v1733 = vpack.c.b16 %v1406, %v1403
    %v1734 = vpack.c.b16 %v1410, %v1407
    %v1735 = vpack.c.b16 %v1411, %v1408
    %v1736 = vpack.c.b16 %v1412, %v1409
    %v1737 = vpack.c.b16 %v1416, %v1413
    %v1738 = vpack.c.b16 %v1417, %v1414
    %v1739 = vpack.c.b16 %v1418, %v1415
    %v1740 = vpack.c.b16 %v1422, %v1419
    %v1741 = vpack.c.b16 %v1423, %v1420
    %v1742 = vpack.c.b16 %v1424, %v1421
    %v1743 = vpack.c.b16 %v1428, %v1425
    %v1744 = vpack.c.b16 %v1429, %v1426
    %v1745 = vpack.c.b16 %v1430, %v1427
    %v1746 = vpack.c.b16 %v1434, %v1431
    %v1747 = vpack.c.b16 %v1435, %v1432
    %v1748 = vpack.c.b16 %v1436, %v1433
    %v1749 = vpack.c.b16 %v1440, %v1437
    %v1750 = vpack.c.b16 %v1441, %v1438
    %v1751 = vpack.c.b16 %v1442, %v1439
    %v1752 = vpack.c.b16 %v1446, %v1443
    %v1753 = vpack.c.b16 %v1447, %v1444
    %v1754 = vpack.c.b16 %v1448, %v1445
    %v1755 = vpack.c.b16 %v1452, %v1449
    %v1756 = vpack.c.b16 %v1453, %v1450
    %v1757 = vpack.c.b16 %v1454, %v1451
    %v1758 = vpack.c.b16 %v1458, %v1455
    %v1759 = vpack.c.b16 %v1459, %v1456
    %v1760 = vpack.c.b16 %v1460, %v1457
    %vm2061 = vcmask 523264
    %v2062 = vsel %vm2061, %v448, 0
    %2064 = vmatpush.bf16.msra.mxu0 %v1482
    %2065 = vmatpush.bf16.msra.mxu0 %v1479
    %2066 = vmatpush.bf16.msra.mxu0 %v1476
    %2067 = vmatpush.bf16.msra.mxu0 %v1473
    %2068 = vmatpush.bf16.msra.mxu0 %v1470
    %2069 = vmatpush.bf16.msra.mxu0 %v1467
    %2070 = vmatpush.bf16.msra.mxu0 %v1464
    %2071 = vmatpush.bf16.msra.mxu0 %v1461
    %2072 = vmatmul.bf16.gmra.mxu0 %v434
    %v2073 = vpop.f32.mrf.mxu0
    %v2074 = vadd.f32 %v426, %v2073
    %v2075 = vpop.f32.mrf.mxu0
    %2076 = vdwg.mxu0
    %2077 = vmatpush.bf16.msra.mxu0 %v1506
    %2078 = vmatpush.bf16.msra.mxu0 %v1503
    %2079 = vmatpush.bf16.msra.mxu0 %v1500
    %2080 = vmatpush.bf16.msra.mxu0 %v1497
    %2081 = vmatpush.bf16.msra.mxu0 %v1494
    %2082 = vmatpush.bf16.msra.mxu0 %v1491
    %2083 = vmatpush.bf16.msra.mxu0 %v1488
    %2084 = vmatpush.bf16.msra.mxu0 %v1485
    %2085 = vmatmul.bf16.gmra.mxu0 %v435
    %v2086 = vpop.f32.mrf.mxu0
    %v2087 = vadd.f32 %v2074, %v2086
    %v2088 = vpop.f32.mrf.mxu0
    %2089 = vdwg.mxu0
    %2090 = vmatpush.bf16.msra.mxu0 %v1530
    %2091 = vmatpush.bf16.msra.mxu0 %v1527
    %2092 = vmatpush.bf16.msra.mxu0 %v1524
    %2093 = vmatpush.bf16.msra.mxu0 %v1521
    %2094 = vmatpush.bf16.msra.mxu0 %v1518
    %2095 = vmatpush.bf16.msra.mxu0 %v1515
    %2096 = vmatpush.bf16.msra.mxu0 %v1512
    %2097 = vmatpush.bf16.msra.mxu0 %v1509
    %2098 = vmatmul.bf16.gmra.mxu0 %v436
    %v2099 = vpop.f32.mrf.mxu0
    %v2100 = vadd.f32 %v2087, %v2099
    %v2101 = vpop.f32.mrf.mxu0
    %2102 = vdwg.mxu0
    %2103 = vmatpush.bf16.msra.mxu0 %v1554
    %2104 = vmatpush.bf16.msra.mxu0 %v1551
    %2105 = vmatpush.bf16.msra.mxu0 %v1548
    %2106 = vmatpush.bf16.msra.mxu0 %v1545
    %2107 = vmatpush.bf16.msra.mxu0 %v1542
    %2108 = vmatpush.bf16.msra.mxu0 %v1539
    %2109 = vmatpush.bf16.msra.mxu0 %v1536
    %2110 = vmatpush.bf16.msra.mxu0 %v1533
    %2111 = vmatmul.bf16.gmra.mxu0 %v437
    %v2112 = vpop.f32.mrf.mxu0
    %v2113 = vadd.f32 %v2100, %v2112
    %v2114 = vpop.f32.mrf.mxu0
    %2115 = vdwg.mxu0
    %2116 = vmatpush.bf16.msra.mxu0 %v1578
    %2117 = vmatpush.bf16.msra.mxu0 %v1575
    %2118 = vmatpush.bf16.msra.mxu0 %v1572
    %2119 = vmatpush.bf16.msra.mxu0 %v1569
    %2120 = vmatpush.bf16.msra.mxu0 %v1566
    %2121 = vmatpush.bf16.msra.mxu0 %v1563
    %2122 = vmatpush.bf16.msra.mxu0 %v1560
    %2123 = vmatpush.bf16.msra.mxu0 %v1557
    %2124 = vmatmul.bf16.gmra.mxu0 %v438
    %v2125 = vpop.f32.mrf.mxu0
    %v2126 = vadd.f32 %v2113, %v2125
    %v2127 = vpop.f32.mrf.mxu0
    %2128 = vdwg.mxu0
    %2129 = vmatpush.bf16.msra.mxu0 %v1602
    %2130 = vmatpush.bf16.msra.mxu0 %v1599
    %2131 = vmatpush.bf16.msra.mxu0 %v1596
    %2132 = vmatpush.bf16.msra.mxu0 %v1593
    %2133 = vmatpush.bf16.msra.mxu0 %v1590
    %2134 = vmatpush.bf16.msra.mxu0 %v1587
    %2135 = vmatpush.bf16.msra.mxu0 %v1584
    %2136 = vmatpush.bf16.msra.mxu0 %v1581
    %2137 = vmatmul.bf16.gmra.mxu0 %v439
    %v2138 = vpop.f32.mrf.mxu0
    %v2139 = vadd.f32 %v2126, %v2138
    %v2140 = vpop.f32.mrf.mxu0
    %2141 = vdwg.mxu0
    %2142 = vmatpush.bf16.msra.mxu0 %v1626
    %2143 = vmatpush.bf16.msra.mxu0 %v1623
    %2144 = vmatpush.bf16.msra.mxu0 %v1620
    %2145 = vmatpush.bf16.msra.mxu0 %v1617
    %2146 = vmatpush.bf16.msra.mxu0 %v1614
    %2147 = vmatpush.bf16.msra.mxu0 %v1611
    %2148 = vmatpush.bf16.msra.mxu0 %v1608
    %2149 = vmatpush.bf16.msra.mxu0 %v1605
    %2150 = vmatmul.bf16.gmra.mxu0 %v440
    %v2151 = vpop.f32.mrf.mxu0
    %v2152 = vadd.f32 %v2139, %v2151
    %v2153 = vpop.f32.mrf.mxu0
    %2154 = vdwg.mxu0
    %2155 = vmatpush.bf16.msra.mxu0 %v1650
    %2156 = vmatpush.bf16.msra.mxu0 %v1647
    %2157 = vmatpush.bf16.msra.mxu0 %v1644
    %2158 = vmatpush.bf16.msra.mxu0 %v1641
    %2159 = vmatpush.bf16.msra.mxu0 %v1638
    %2160 = vmatpush.bf16.msra.mxu0 %v1635
    %2161 = vmatpush.bf16.msra.mxu0 %v1632
    %2162 = vmatpush.bf16.msra.mxu0 %v1629
    %2163 = vmatmul.bf16.gmra.mxu0 %v441
    %v2164 = vpop.f32.mrf.mxu0
    %v2165 = vadd.f32 %v2152, %v2164
    %v2166 = vpop.f32.mrf.mxu0
    %2167 = vdwg.mxu0
    %2168 = vmatpush.bf16.msra.mxu0 %v1674
    %2169 = vmatpush.bf16.msra.mxu0 %v1671
    %2170 = vmatpush.bf16.msra.mxu0 %v1668
    %2171 = vmatpush.bf16.msra.mxu0 %v1665
    %2172 = vmatpush.bf16.msra.mxu0 %v1662
    %2173 = vmatpush.bf16.msra.mxu0 %v1659
    %2174 = vmatpush.bf16.msra.mxu0 %v1656
    %2175 = vmatpush.bf16.msra.mxu0 %v1653
    %2176 = vmatmul.bf16.gmra.mxu0 %v444
    %v2177 = vpop.f32.mrf.mxu0
    %v2178 = vadd.f32 %v2165, %v2177
    %v2179 = vpop.f32.mrf.mxu0
    %2180 = vdwg.mxu0
    %2181 = vmatpush.bf16.msra.mxu0 %v1698
    %2182 = vmatpush.bf16.msra.mxu0 %v1695
    %2183 = vmatpush.bf16.msra.mxu0 %v1692
    %2184 = vmatpush.bf16.msra.mxu0 %v1689
    %2185 = vmatpush.bf16.msra.mxu0 %v1686
    %2186 = vmatpush.bf16.msra.mxu0 %v1683
    %2187 = vmatpush.bf16.msra.mxu0 %v1680
    %2188 = vmatpush.bf16.msra.mxu0 %v1677
    %2189 = vmatmul.bf16.gmra.mxu0 %v445
    %v2190 = vpop.f32.mrf.mxu0
    %v2191 = vadd.f32 %v2178, %v2190
    %v2192 = vpop.f32.mrf.mxu0
    %2193 = vdwg.mxu0
    %2194 = vmatpush.bf16.msra.mxu0 %v1722
    %2195 = vmatpush.bf16.msra.mxu0 %v1719
    %2196 = vmatpush.bf16.msra.mxu0 %v1716
    %2197 = vmatpush.bf16.msra.mxu0 %v1713
    %2198 = vmatpush.bf16.msra.mxu0 %v1710
    %2199 = vmatpush.bf16.msra.mxu0 %v1707
    %2200 = vmatpush.bf16.msra.mxu0 %v1704
    %2201 = vmatpush.bf16.msra.mxu0 %v1701
    %2202 = vmatmul.bf16.gmra.mxu0 %v446
    %v2203 = vpop.f32.mrf.mxu0
    %v2204 = vadd.f32 %v2191, %v2203
    %v2205 = vpop.f32.mrf.mxu0
    %2206 = vdwg.mxu0
    %2207 = vmatpush.bf16.msra.mxu0 %v1746
    %2208 = vmatpush.bf16.msra.mxu0 %v1743
    %2209 = vmatpush.bf16.msra.mxu0 %v1740
    %2210 = vmatpush.bf16.msra.mxu0 %v1737
    %2211 = vmatpush.bf16.msra.mxu0 %v1734
    %2212 = vmatpush.bf16.msra.mxu0 %v1731
    %2213 = vmatpush.bf16.msra.mxu0 %v1728
    %2214 = vmatpush.bf16.msra.mxu0 %v1725
    %2215 = vmatmul.bf16.gmra.mxu0 %v447
    %v2216 = vpop.f32.mrf.mxu0
    %v2217 = vadd.f32 %v2204, %v2216
    %v2218 = vpop.f32.mrf.mxu0
    %2219 = vdwg.mxu0
    %2220 = vmatpush.bf16.msra.mxu0 0
    %2221 = vmatpush.bf16.msra.mxu0 0
    %2222 = vmatpush.bf16.msra.mxu0 0
    %2223 = vmatpush.bf16.msra.mxu0 0
    %2224 = vmatpush.bf16.msra.mxu0 %v1758
    %2225 = vmatpush.bf16.msra.mxu0 %v1755
    %2226 = vmatpush.bf16.msra.mxu0 %v1752
    %2227 = vmatpush.bf16.msra.mxu0 %v1749
    %2228 = vmatmul.bf16.gmra.mxu0 %v2062
    %v2229 = vpop.f32.mrf.mxu0
    %v2230 = vadd.f32 %v2217, %v2229
    %v2231 = vpop.f32.mrf.mxu0
    %2232 = vdwg.mxu0
    %2233 = vmatpush.bf16.msra.mxu0 %v1483
    %2234 = vmatpush.bf16.msra.mxu0 %v1480
    %2235 = vmatpush.bf16.msra.mxu0 %v1477
    %2236 = vmatpush.bf16.msra.mxu0 %v1474
    %2237 = vmatpush.bf16.msra.mxu0 %v1471
    %2238 = vmatpush.bf16.msra.mxu0 %v1468
    %2239 = vmatpush.bf16.msra.mxu0 %v1465
    %2240 = vmatpush.bf16.msra.mxu0 %v1462
    %2241 = vmatmul.bf16.gmra.mxu0 %v434
    %v2242 = vpop.f32.mrf.mxu0
    %v2243 = vadd.f32 %v427, %v2242
    %v2244 = vpop.f32.mrf.mxu0
    %2245 = vdwg.mxu0
    %2246 = vmatpush.bf16.msra.mxu0 %v1507
    %2247 = vmatpush.bf16.msra.mxu0 %v1504
    %2248 = vmatpush.bf16.msra.mxu0 %v1501
    %2249 = vmatpush.bf16.msra.mxu0 %v1498
    %2250 = vmatpush.bf16.msra.mxu0 %v1495
    %2251 = vmatpush.bf16.msra.mxu0 %v1492
    %2252 = vmatpush.bf16.msra.mxu0 %v1489
    %2253 = vmatpush.bf16.msra.mxu0 %v1486
    %2254 = vmatmul.bf16.gmra.mxu0 %v435
    %v2255 = vpop.f32.mrf.mxu0
    %v2256 = vadd.f32 %v2243, %v2255
    %v2257 = vpop.f32.mrf.mxu0
    %2258 = vdwg.mxu0
    %2259 = vmatpush.bf16.msra.mxu0 %v1531
    %2260 = vmatpush.bf16.msra.mxu0 %v1528
    %2261 = vmatpush.bf16.msra.mxu0 %v1525
    %2262 = vmatpush.bf16.msra.mxu0 %v1522
    %2263 = vmatpush.bf16.msra.mxu0 %v1519
    %2264 = vmatpush.bf16.msra.mxu0 %v1516
    %2265 = vmatpush.bf16.msra.mxu0 %v1513
    %2266 = vmatpush.bf16.msra.mxu0 %v1510
    %2267 = vmatmul.bf16.gmra.mxu0 %v436
    %v2268 = vpop.f32.mrf.mxu0
    %v2269 = vadd.f32 %v2256, %v2268
    %v2270 = vpop.f32.mrf.mxu0
    %2271 = vdwg.mxu0
    %2272 = vmatpush.bf16.msra.mxu0 %v1555
    %2273 = vmatpush.bf16.msra.mxu0 %v1552
    %2274 = vmatpush.bf16.msra.mxu0 %v1549
    %2275 = vmatpush.bf16.msra.mxu0 %v1546
    %2276 = vmatpush.bf16.msra.mxu0 %v1543
    %2277 = vmatpush.bf16.msra.mxu0 %v1540
    %2278 = vmatpush.bf16.msra.mxu0 %v1537
    %2279 = vmatpush.bf16.msra.mxu0 %v1534
    %2280 = vmatmul.bf16.gmra.mxu0 %v437
    %v2281 = vpop.f32.mrf.mxu0
    %v2282 = vadd.f32 %v2269, %v2281
    %v2283 = vpop.f32.mrf.mxu0
    %2284 = vdwg.mxu0
    %2285 = vmatpush.bf16.msra.mxu0 %v1579
    %2286 = vmatpush.bf16.msra.mxu0 %v1576
    %2287 = vmatpush.bf16.msra.mxu0 %v1573
    %2288 = vmatpush.bf16.msra.mxu0 %v1570
    %2289 = vmatpush.bf16.msra.mxu0 %v1567
    %2290 = vmatpush.bf16.msra.mxu0 %v1564
    %2291 = vmatpush.bf16.msra.mxu0 %v1561
    %2292 = vmatpush.bf16.msra.mxu0 %v1558
    %2293 = vmatmul.bf16.gmra.mxu0 %v438
    %v2294 = vpop.f32.mrf.mxu0
    %v2295 = vadd.f32 %v2282, %v2294
    %v2296 = vpop.f32.mrf.mxu0
    %2297 = vdwg.mxu0
    %2298 = vmatpush.bf16.msra.mxu0 %v1603
    %2299 = vmatpush.bf16.msra.mxu0 %v1600
    %2300 = vmatpush.bf16.msra.mxu0 %v1597
    %2301 = vmatpush.bf16.msra.mxu0 %v1594
    %2302 = vmatpush.bf16.msra.mxu0 %v1591
    %2303 = vmatpush.bf16.msra.mxu0 %v1588
    %2304 = vmatpush.bf16.msra.mxu0 %v1585
    %2305 = vmatpush.bf16.msra.mxu0 %v1582
    %2306 = vmatmul.bf16.gmra.mxu0 %v439
    %v2307 = vpop.f32.mrf.mxu0
    %v2308 = vadd.f32 %v2295, %v2307
    %v2309 = vpop.f32.mrf.mxu0
    %2310 = vdwg.mxu0
    %2311 = vmatpush.bf16.msra.mxu0 %v1627
    %2312 = vmatpush.bf16.msra.mxu0 %v1624
    %2313 = vmatpush.bf16.msra.mxu0 %v1621
    %2314 = vmatpush.bf16.msra.mxu0 %v1618
    %2315 = vmatpush.bf16.msra.mxu0 %v1615
    %2316 = vmatpush.bf16.msra.mxu0 %v1612
    %2317 = vmatpush.bf16.msra.mxu0 %v1609
    %2318 = vmatpush.bf16.msra.mxu0 %v1606
    %2319 = vmatmul.bf16.gmra.mxu0 %v440
    %v2320 = vpop.f32.mrf.mxu0
    %v2321 = vadd.f32 %v2308, %v2320
    %v2322 = vpop.f32.mrf.mxu0
    %2323 = vdwg.mxu0
    %2324 = vmatpush.bf16.msra.mxu0 %v1651
    %2325 = vmatpush.bf16.msra.mxu0 %v1648
    %2326 = vmatpush.bf16.msra.mxu0 %v1645
    %2327 = vmatpush.bf16.msra.mxu0 %v1642
    %2328 = vmatpush.bf16.msra.mxu0 %v1639
    %2329 = vmatpush.bf16.msra.mxu0 %v1636
    %2330 = vmatpush.bf16.msra.mxu0 %v1633
    %2331 = vmatpush.bf16.msra.mxu0 %v1630
    %2332 = vmatmul.bf16.gmra.mxu0 %v441
    %v2333 = vpop.f32.mrf.mxu0
    %v2334 = vadd.f32 %v2321, %v2333
    %v2335 = vpop.f32.mrf.mxu0
    %2336 = vdwg.mxu0
    %2337 = vmatpush.bf16.msra.mxu0 %v1675
    %2338 = vmatpush.bf16.msra.mxu0 %v1672
    %2339 = vmatpush.bf16.msra.mxu0 %v1669
    %2340 = vmatpush.bf16.msra.mxu0 %v1666
    %2341 = vmatpush.bf16.msra.mxu0 %v1663
    %2342 = vmatpush.bf16.msra.mxu0 %v1660
    %2343 = vmatpush.bf16.msra.mxu0 %v1657
    %2344 = vmatpush.bf16.msra.mxu0 %v1654
    %2345 = vmatmul.bf16.gmra.mxu0 %v444
    %v2346 = vpop.f32.mrf.mxu0
    %v2347 = vadd.f32 %v2334, %v2346
    %v2348 = vpop.f32.mrf.mxu0
    %2349 = vdwg.mxu0
    %2350 = vmatpush.bf16.msra.mxu0 %v1699
    %2351 = vmatpush.bf16.msra.mxu0 %v1696
    %2352 = vmatpush.bf16.msra.mxu0 %v1693
    %2353 = vmatpush.bf16.msra.mxu0 %v1690
    %2354 = vmatpush.bf16.msra.mxu0 %v1687
    %2355 = vmatpush.bf16.msra.mxu0 %v1684
    %2356 = vmatpush.bf16.msra.mxu0 %v1681
    %2357 = vmatpush.bf16.msra.mxu0 %v1678
    %2358 = vmatmul.bf16.gmra.mxu0 %v445
    %v2359 = vpop.f32.mrf.mxu0
    %v2360 = vadd.f32 %v2347, %v2359
    %v2361 = vpop.f32.mrf.mxu0
    %2362 = vdwg.mxu0
    %2363 = vmatpush.bf16.msra.mxu0 %v1723
    %2364 = vmatpush.bf16.msra.mxu0 %v1720
    %2365 = vmatpush.bf16.msra.mxu0 %v1717
    %2366 = vmatpush.bf16.msra.mxu0 %v1714
    %2367 = vmatpush.bf16.msra.mxu0 %v1711
    %2368 = vmatpush.bf16.msra.mxu0 %v1708
    %2369 = vmatpush.bf16.msra.mxu0 %v1705
    %2370 = vmatpush.bf16.msra.mxu0 %v1702
    %2371 = vmatmul.bf16.gmra.mxu0 %v446
    %v2372 = vpop.f32.mrf.mxu0
    %v2373 = vadd.f32 %v2360, %v2372
    %v2374 = vpop.f32.mrf.mxu0
    %2375 = vdwg.mxu0
    %2376 = vmatpush.bf16.msra.mxu0 %v1747
    %2377 = vmatpush.bf16.msra.mxu0 %v1744
    %2378 = vmatpush.bf16.msra.mxu0 %v1741
    %2379 = vmatpush.bf16.msra.mxu0 %v1738
    %2380 = vmatpush.bf16.msra.mxu0 %v1735
    %2381 = vmatpush.bf16.msra.mxu0 %v1732
    %2382 = vmatpush.bf16.msra.mxu0 %v1729
    %2383 = vmatpush.bf16.msra.mxu0 %v1726
    %2384 = vmatmul.bf16.gmra.mxu0 %v447
    %v2385 = vpop.f32.mrf.mxu0
    %v2386 = vadd.f32 %v2373, %v2385
    %v2387 = vpop.f32.mrf.mxu0
    %2388 = vdwg.mxu0
    %2389 = vmatpush.bf16.msra.mxu0 0
    %2390 = vmatpush.bf16.msra.mxu0 0
    %2391 = vmatpush.bf16.msra.mxu0 0
    %2392 = vmatpush.bf16.msra.mxu0 0
    %2393 = vmatpush.bf16.msra.mxu0 %v1759
    %2394 = vmatpush.bf16.msra.mxu0 %v1756
    %2395 = vmatpush.bf16.msra.mxu0 %v1753
    %2396 = vmatpush.bf16.msra.mxu0 %v1750
    %2397 = vmatmul.bf16.gmra.mxu0 %v2062
    %v2398 = vpop.f32.mrf.mxu0
    %v2399 = vadd.f32 %v2386, %v2398
    %v2400 = vpop.f32.mrf.mxu0
    %2401 = vdwg.mxu0
    %2402 = vmatpush.bf16.msra.mxu0 %v1484
    %2403 = vmatpush.bf16.msra.mxu0 %v1481
    %2404 = vmatpush.bf16.msra.mxu0 %v1478
    %2405 = vmatpush.bf16.msra.mxu0 %v1475
    %2406 = vmatpush.bf16.msra.mxu0 %v1472
    %2407 = vmatpush.bf16.msra.mxu0 %v1469
    %2408 = vmatpush.bf16.msra.mxu0 %v1466
    %2409 = vmatpush.bf16.msra.mxu0 %v1463
    %2410 = vmatmul.bf16.gmra.mxu0 %v434
    %v2411 = vpop.f32.mrf.mxu0
    %v2412 = vadd.f32 %v428, %v2411
    %v2413 = vpop.f32.mrf.mxu0
    %2414 = vdwg.mxu0
    %2415 = vmatpush.bf16.msra.mxu0 %v1508
    %2416 = vmatpush.bf16.msra.mxu0 %v1505
    %2417 = vmatpush.bf16.msra.mxu0 %v1502
    %2418 = vmatpush.bf16.msra.mxu0 %v1499
    %2419 = vmatpush.bf16.msra.mxu0 %v1496
    %2420 = vmatpush.bf16.msra.mxu0 %v1493
    %2421 = vmatpush.bf16.msra.mxu0 %v1490
    %2422 = vmatpush.bf16.msra.mxu0 %v1487
    %2423 = vmatmul.bf16.gmra.mxu0 %v435
    %v2424 = vpop.f32.mrf.mxu0
    %v2425 = vadd.f32 %v2412, %v2424
    %v2426 = vpop.f32.mrf.mxu0
    %2427 = vdwg.mxu0
    %2428 = vmatpush.bf16.msra.mxu0 %v1532
    %2429 = vmatpush.bf16.msra.mxu0 %v1529
    %2430 = vmatpush.bf16.msra.mxu0 %v1526
    %2431 = vmatpush.bf16.msra.mxu0 %v1523
    %2432 = vmatpush.bf16.msra.mxu0 %v1520
    %2433 = vmatpush.bf16.msra.mxu0 %v1517
    %2434 = vmatpush.bf16.msra.mxu0 %v1514
    %2435 = vmatpush.bf16.msra.mxu0 %v1511
    %2436 = vmatmul.bf16.gmra.mxu0 %v436
    %v2437 = vpop.f32.mrf.mxu0
    %v2438 = vadd.f32 %v2425, %v2437
    %v2439 = vpop.f32.mrf.mxu0
    %2440 = vdwg.mxu0
    %2441 = vmatpush.bf16.msra.mxu0 %v1556
    %2442 = vmatpush.bf16.msra.mxu0 %v1553
    %2443 = vmatpush.bf16.msra.mxu0 %v1550
    %2444 = vmatpush.bf16.msra.mxu0 %v1547
    %2445 = vmatpush.bf16.msra.mxu0 %v1544
    %2446 = vmatpush.bf16.msra.mxu0 %v1541
    %2447 = vmatpush.bf16.msra.mxu0 %v1538
    %2448 = vmatpush.bf16.msra.mxu0 %v1535
    %2449 = vmatmul.bf16.gmra.mxu0 %v437
    %v2450 = vpop.f32.mrf.mxu0
    %v2451 = vadd.f32 %v2438, %v2450
    %v2452 = vpop.f32.mrf.mxu0
    %2453 = vdwg.mxu0
    %2454 = vmatpush.bf16.msra.mxu0 %v1580
    %2455 = vmatpush.bf16.msra.mxu0 %v1577
    %2456 = vmatpush.bf16.msra.mxu0 %v1574
    %2457 = vmatpush.bf16.msra.mxu0 %v1571
    %2458 = vmatpush.bf16.msra.mxu0 %v1568
    %2459 = vmatpush.bf16.msra.mxu0 %v1565
    %2460 = vmatpush.bf16.msra.mxu0 %v1562
    %2461 = vmatpush.bf16.msra.mxu0 %v1559
    %2462 = vmatmul.bf16.gmra.mxu0 %v438
    %v2463 = vpop.f32.mrf.mxu0
    %v2464 = vadd.f32 %v2451, %v2463
    %v2465 = vpop.f32.mrf.mxu0
    %2466 = vdwg.mxu0
    %2467 = vmatpush.bf16.msra.mxu0 %v1604
    %2468 = vmatpush.bf16.msra.mxu0 %v1601
    %2469 = vmatpush.bf16.msra.mxu0 %v1598
    %2470 = vmatpush.bf16.msra.mxu0 %v1595
    %2471 = vmatpush.bf16.msra.mxu0 %v1592
    %2472 = vmatpush.bf16.msra.mxu0 %v1589
    %2473 = vmatpush.bf16.msra.mxu0 %v1586
    %2474 = vmatpush.bf16.msra.mxu0 %v1583
    %2475 = vmatmul.bf16.gmra.mxu0 %v439
    %v2476 = vpop.f32.mrf.mxu0
    %v2477 = vadd.f32 %v2464, %v2476
    %v2478 = vpop.f32.mrf.mxu0
    %2479 = vdwg.mxu0
    %2480 = vmatpush.bf16.msra.mxu0 %v1628
    %2481 = vmatpush.bf16.msra.mxu0 %v1625
    %2482 = vmatpush.bf16.msra.mxu0 %v1622
    %2483 = vmatpush.bf16.msra.mxu0 %v1619
    %2484 = vmatpush.bf16.msra.mxu0 %v1616
    %2485 = vmatpush.bf16.msra.mxu0 %v1613
    %2486 = vmatpush.bf16.msra.mxu0 %v1610
    %2487 = vmatpush.bf16.msra.mxu0 %v1607
    %2488 = vmatmul.bf16.gmra.mxu0 %v440
    %v2489 = vpop.f32.mrf.mxu0
    %v2490 = vadd.f32 %v2477, %v2489
    %v2491 = vpop.f32.mrf.mxu0
    %2492 = vdwg.mxu0
    %2493 = vmatpush.bf16.msra.mxu0 %v1652
    %2494 = vmatpush.bf16.msra.mxu0 %v1649
    %2495 = vmatpush.bf16.msra.mxu0 %v1646
    %2496 = vmatpush.bf16.msra.mxu0 %v1643
    %2497 = vmatpush.bf16.msra.mxu0 %v1640
    %2498 = vmatpush.bf16.msra.mxu0 %v1637
    %2499 = vmatpush.bf16.msra.mxu0 %v1634
    %2500 = vmatpush.bf16.msra.mxu0 %v1631
    %2501 = vmatmul.bf16.gmra.mxu0 %v441
    %v2502 = vpop.f32.mrf.mxu0
    %v2503 = vadd.f32 %v2490, %v2502
    %v2504 = vpop.f32.mrf.mxu0
    %2505 = vdwg.mxu0
    %2506 = vmatpush.bf16.msra.mxu0 %v1676
    %2507 = vmatpush.bf16.msra.mxu0 %v1673
    %2508 = vmatpush.bf16.msra.mxu0 %v1670
    %2509 = vmatpush.bf16.msra.mxu0 %v1667
    %2510 = vmatpush.bf16.msra.mxu0 %v1664
    %2511 = vmatpush.bf16.msra.mxu0 %v1661
    %2512 = vmatpush.bf16.msra.mxu0 %v1658
    %2513 = vmatpush.bf16.msra.mxu0 %v1655
    %2514 = vmatmul.bf16.gmra.mxu0 %v444
    %v2515 = vpop.f32.mrf.mxu0
    %v2516 = vadd.f32 %v2503, %v2515
    %v2517 = vpop.f32.mrf.mxu0
    %2518 = vdwg.mxu0
    %2519 = vmatpush.bf16.msra.mxu0 %v1700
    %2520 = vmatpush.bf16.msra.mxu0 %v1697
    %2521 = vmatpush.bf16.msra.mxu0 %v1694
    %2522 = vmatpush.bf16.msra.mxu0 %v1691
    %2523 = vmatpush.bf16.msra.mxu0 %v1688
    %2524 = vmatpush.bf16.msra.mxu0 %v1685
    %2525 = vmatpush.bf16.msra.mxu0 %v1682
    %2526 = vmatpush.bf16.msra.mxu0 %v1679
    %2527 = vmatmul.bf16.gmra.mxu0 %v445
    %v2528 = vpop.f32.mrf.mxu0
    %v2529 = vadd.f32 %v2516, %v2528
    %v2530 = vpop.f32.mrf.mxu0
    %2531 = vdwg.mxu0
    %2532 = vmatpush.bf16.msra.mxu0 %v1724
    %2533 = vmatpush.bf16.msra.mxu0 %v1721
    %2534 = vmatpush.bf16.msra.mxu0 %v1718
    %2535 = vmatpush.bf16.msra.mxu0 %v1715
    %2536 = vmatpush.bf16.msra.mxu0 %v1712
    %2537 = vmatpush.bf16.msra.mxu0 %v1709
    %2538 = vmatpush.bf16.msra.mxu0 %v1706
    %2539 = vmatpush.bf16.msra.mxu0 %v1703
    %2540 = vmatmul.bf16.gmra.mxu0 %v446
    %v2541 = vpop.f32.mrf.mxu0
    %v2542 = vadd.f32 %v2529, %v2541
    %v2543 = vpop.f32.mrf.mxu0
    %2544 = vdwg.mxu0
    %2545 = vmatpush.bf16.msra.mxu0 %v1748
    %2546 = vmatpush.bf16.msra.mxu0 %v1745
    %2547 = vmatpush.bf16.msra.mxu0 %v1742
    %2548 = vmatpush.bf16.msra.mxu0 %v1739
    %2549 = vmatpush.bf16.msra.mxu0 %v1736
    %2550 = vmatpush.bf16.msra.mxu0 %v1733
    %2551 = vmatpush.bf16.msra.mxu0 %v1730
    %2552 = vmatpush.bf16.msra.mxu0 %v1727
    %2553 = vmatmul.bf16.gmra.mxu0 %v447
    %v2554 = vpop.f32.mrf.mxu0
    %v2555 = vadd.f32 %v2542, %v2554
    %v2556 = vpop.f32.mrf.mxu0
    %2557 = vdwg.mxu0
    %2558 = vmatpush.bf16.msra.mxu0 0
    %2559 = vmatpush.bf16.msra.mxu0 0
    %2560 = vmatpush.bf16.msra.mxu0 0
    %2561 = vmatpush.bf16.msra.mxu0 0
    %2562 = vmatpush.bf16.msra.mxu0 %v1760
    %2563 = vmatpush.bf16.msra.mxu0 %v1757
    %2564 = vmatpush.bf16.msra.mxu0 %v1754
    %2565 = vmatpush.bf16.msra.mxu0 %v1751
    %2566 = vmatmul.bf16.gmra.mxu0 %v2062
    %v2567 = vpop.f32.mrf.mxu0
    %v2568 = vadd.f32 %v2555, %v2567
    %v2569 = vpop.f32.mrf.mxu0
    %2570 = vdwg.mxu0
    %v2571 = vmax.f32 %v2230, 0.0
    %v2572 = vmax.f32 %v2399, 0.0
    %v2573 = vmax.f32 %v2568, 0.0
    %v2574 = vpack.c.bf16 %v2571, %v2571
    %v2575 = vpack.c.bf16 %v2572, %v2572
    %v2576 = vpack.c.bf16 %v2573, %v2573
    %v2577 = vld [vmem:[%s3] sm:$0xf]
    %v2578 = vld [vmem:[%s3 + $0x4] sm:$0xf]
    %v2579 = vld [vmem:[%s3 + $0x8] sm:$0xf]
    %v2580 = vld [vmem:[%s3 + $0xc] sm:$0xf]
    %v2581 = vld [vmem:[%s3 + $0x10] sm:$0xf]
    %v2582 = vld [vmem:[%s3 + $0x14] sm:$0xf]
    %v2583 = vld [vmem:[%s3 + $0x18] sm:$0xf]
    %v2584 = vld [vmem:[%s3 + $0x1c] sm:$0xf]
    %v2585 = vld [vmem:[%s3 + $0x20] sm:$0xf]
    %v2586 = vld [vmem:[%s3 + $0x24] sm:$0xf]
    %v2587 = vld [vmem:[%s3 + $0x28] sm:$0xf]
    %v2588 = vld [vmem:[%s3 + $0x2c] sm:$0xf]
    %v2589 = vld [vmem:[%s3 + $0x30] sm:$0xf]
    %v2590 = vld [vmem:[%s3 + $0x34] sm:$0xf]
    %v2591 = vld [vmem:[%s3 + $0x38] sm:$0xf]
    %v2592 = vld [vmem:[%s3 + $0x3c] sm:$0xf]
    %v2593 = vld [vmem:[%s3 + $0x40] sm:$0xf]
    %v2594 = vld [vmem:[%s3 + $0x44] sm:$0xf]
    %v2595 = vld [vmem:[%s3 + $0x48] sm:$0xf]
    %v2596 = vld [vmem:[%s3 + $0x4c] sm:$0xf]
    %v2597 = vld [vmem:[%s3 + $0x50] sm:$0xf]
    %v2598 = vld [vmem:[%s3 + $0x54] sm:$0xf]
    %v2599 = vld [vmem:[%s3 + $0x58] sm:$0xf]
    %v2600 = vld [vmem:[%s3 + $0x5c] sm:$0xf]
    %v2601 = vld [vmem:[%s3 + $0x60] sm:$0xf]
    %v2602 = vld [vmem:[%s3 + $0x64] sm:$0xf]
    %v2603 = vld [vmem:[%s3 + $0x68] sm:$0xf]
    %v2604 = vld [vmem:[%s3 + $0x6c] sm:$0xf]
    %v2605 = vld [vmem:[%s3 + $0x70] sm:$0xf]
    %v2606 = vld [vmem:[%s3 + $0x74] sm:$0xf]
    %v2607 = vld [vmem:[%s3 + $0x78] sm:$0xf]
    %v2608 = vld [vmem:[%s3 + $0x7c] sm:$0xf]
    %v2609 = vld [vmem:[%s3 + $0x80] sm:$0xf]
    %v2610 = vld [vmem:[%s3 + $0x84] sm:$0xf]
    %v2611 = vld [vmem:[%s3 + $0x88] sm:$0xf]
    %v2612 = vld [vmem:[%s3 + $0x8c] sm:$0xf]
    %v2613 = vld [vmem:[%s3 + $0x90] sm:$0xf]
    %v2614 = vld [vmem:[%s3 + $0x94] sm:$0xf]
    %v2615 = vld [vmem:[%s3 + $0x98] sm:$0xf]
    %v2616 = vld [vmem:[%s3 + $0x9c] sm:$0xf]
    %v2617 = vld [vmem:[%s4] sm:$0x1]
    %v2619 = vperm.slane %v2617, 0
    %v2661 = vunpack.c.l.b16 %v2577
    %v2662 = vunpack.c.l.b16 %v2578
    %v2663 = vunpack.c.l.b16 %v2579
    %v2664 = vunpack.c.l.b16 %v2580
    %v2665 = vunpack.c.l.b16 %v2581
    %v2666 = vunpack.c.l.b16 %v2582
    %v2667 = vunpack.c.l.b16 %v2583
    %v2668 = vunpack.c.l.b16 %v2584
    %v2669 = vunpack.c.l.b16 %v2585
    %v2670 = vunpack.c.l.b16 %v2586
    %v2671 = vunpack.c.l.b16 %v2587
    %v2672 = vunpack.c.l.b16 %v2588
    %v2673 = vunpack.c.l.b16 %v2589
    %v2674 = vunpack.c.l.b16 %v2590
    %v2675 = vunpack.c.l.b16 %v2591
    %v2676 = vunpack.c.l.b16 %v2592
    %v2677 = vunpack.c.l.b16 %v2593
    %v2678 = vunpack.c.l.b16 %v2594
    %v2679 = vunpack.c.l.b16 %v2595
    %v2680 = vunpack.c.l.b16 %v2596
    %v2681 = vunpack.c.l.b16 %v2597
    %v2682 = vunpack.c.l.b16 %v2598
    %v2683 = vunpack.c.l.b16 %v2599
    %v2684 = vunpack.c.l.b16 %v2600
    %v2685 = vunpack.c.l.b16 %v2601
    %v2686 = vunpack.c.l.b16 %v2602
    %v2687 = vunpack.c.l.b16 %v2603
    %v2688 = vunpack.c.l.b16 %v2604
    %v2689 = vunpack.c.l.b16 %v2605
    %v2690 = vunpack.c.l.b16 %v2606
    %v2691 = vunpack.c.l.b16 %v2607
    %v2692 = vunpack.c.l.b16 %v2608
    %v2693 = vunpack.c.l.b16 %v2609
    %v2694 = vunpack.c.l.b16 %v2610
    %v2695 = vunpack.c.l.b16 %v2611
    %v2696 = vunpack.c.l.b16 %v2612
    %v2697 = vunpack.c.l.b16 %v2613
    %v2698 = vunpack.c.l.b16 %v2614
    %v2699 = vunpack.c.l.b16 %v2615
    %v2700 = vunpack.c.l.b16 %v2616
    %v2701 = vpack.c.b16 %v2662, %v2661
    %v2702 = vpack.c.b16 %v2664, %v2663
    %v2703 = vpack.c.b16 %v2666, %v2665
    %v2704 = vpack.c.b16 %v2668, %v2667
    %v2705 = vpack.c.b16 %v2670, %v2669
    %v2706 = vpack.c.b16 %v2672, %v2671
    %v2707 = vpack.c.b16 %v2674, %v2673
    %v2708 = vpack.c.b16 %v2676, %v2675
    %v2709 = vpack.c.b16 %v2678, %v2677
    %v2710 = vpack.c.b16 %v2680, %v2679
    %v2711 = vpack.c.b16 %v2682, %v2681
    %v2712 = vpack.c.b16 %v2684, %v2683
    %v2713 = vpack.c.b16 %v2686, %v2685
    %v2714 = vpack.c.b16 %v2688, %v2687
    %v2715 = vpack.c.b16 %v2690, %v2689
    %v2716 = vpack.c.b16 %v2692, %v2691
    %v2717 = vpack.c.b16 %v2694, %v2693
    %v2718 = vpack.c.b16 %v2696, %v2695
    %v2719 = vpack.c.b16 %v2698, %v2697
    %v2720 = vpack.c.b16 %v2700, %v2699
    %v2742 = vsel %vm2061, %v2576, 0
    %2744 = vmatpush.bf16.msra.mxu0 %v2708
    %2745 = vmatpush.bf16.msra.mxu0 %v2707
    %2746 = vmatpush.bf16.msra.mxu0 %v2706
    %2747 = vmatpush.bf16.msra.mxu0 %v2705
    %2748 = vmatpush.bf16.msra.mxu0 %v2704
    %2749 = vmatpush.bf16.msra.mxu0 %v2703
    %2750 = vmatpush.bf16.msra.mxu0 %v2702
    %2751 = vmatpush.bf16.msra.mxu0 %v2701
    %2752 = vmatmul.bf16.gmra.mxu0 %v2574
    %v2753 = vpop.f32.mrf.mxu0
    %v2754 = vadd.f32 %v2619, %v2753
    %v2755 = vpop.f32.mrf.mxu0
    %2756 = vdwg.mxu0
    %2757 = vmatpush.bf16.msra.mxu0 %v2716
    %2758 = vmatpush.bf16.msra.mxu0 %v2715
    %2759 = vmatpush.bf16.msra.mxu0 %v2714
    %2760 = vmatpush.bf16.msra.mxu0 %v2713
    %2761 = vmatpush.bf16.msra.mxu0 %v2712
    %2762 = vmatpush.bf16.msra.mxu0 %v2711
    %2763 = vmatpush.bf16.msra.mxu0 %v2710
    %2764 = vmatpush.bf16.msra.mxu0 %v2709
    %2765 = vmatmul.bf16.gmra.mxu0 %v2575
    %v2766 = vpop.f32.mrf.mxu0
    %v2767 = vadd.f32 %v2754, %v2766
    %v2768 = vpop.f32.mrf.mxu0
    %2769 = vdwg.mxu0
    %2770 = vmatpush.bf16.msra.mxu0 0
    %2771 = vmatpush.bf16.msra.mxu0 0
    %2772 = vmatpush.bf16.msra.mxu0 0
    %2773 = vmatpush.bf16.msra.mxu0 0
    %2774 = vmatpush.bf16.msra.mxu0 %v2720
    %2775 = vmatpush.bf16.msra.mxu0 %v2719
    %2776 = vmatpush.bf16.msra.mxu0 %v2718
    %2777 = vmatpush.bf16.msra.mxu0 %v2717
    %2778 = vmatmul.bf16.gmra.mxu0 %v2742
    %v2779 = vpop.f32.mrf.mxu0
    %v2780 = vadd.f32 %v2767, %v2779
    %v2781 = vpop.f32.mrf.mxu0
    %2782 = vdwg.mxu0
    %2783 = vst [vmem:[#allocation2] sm:$0x3] %v2780
    // Predicated region
    $region22: #{lenet5_tr_forward.5} parent=1 // pred_check
      _
    $region23: #{lenet5_tr_forward.5} parent=1 // pred_check_branch
      %2785 = sbr.rel (0) target = $region25
    $region24: #{lenet5_tr_forward.5} parent=1 // pred_region
      %2787 = vsyncadd [#allocation3], 0
      %s2789 = sshll.u32 [#allocation2], 4
      %s2790 = int_to_ptr.vmem [resolvable:$true] %s2789
      %s2791 = sshll.u32 %s5, 4
      %s2792 = int_to_ptr.hbm [resolvable:$true] %s2791
      %2794 = dma.vmem_to_hbm [thread:$0]  %s2790, 32, %s2792, [#allocation3]
    $region25: #{lenet5_tr_forward.5} parent=1 // pred_fallthru
      _
    // Predicated region
    $region26: #{lenet5_tr_forward.5} parent=1 // pred_check
      _
    $region27: #{lenet5_tr_forward.5} parent=1 // pred_check_branch
      %2796 = sbr.rel (0) target = $region29
    $region28: #{lenet5_tr_forward.5} parent=1 // pred_region
      %2798 = dma.done [#allocation3], 32
    $region29: #{lenet5_tr_forward.5} parent=1 // pred_fallthru
      _
    %2799 = vsyncpa [#allocation3], 1

</llo_original>
